<compile_context>
chip_gen: v6e
topology: v6e:2x2x1
jax: 0.10.0
libtpu: 0.0.40
codegen_flags: <defaults>
</compile_context>

<pallas_src>
import jax
import jax.numpy as jnp
from jax import lax
from jax.experimental import pallas as pl
from jax.experimental.pallas import tpu as pltpu

# contract last dim of lhs with last dim of rhs (A @ B^T form, MXU-native)
_NT = (((1,), (1,)), ((), ()))


def _gatv2_layer(f_nm, mask, wl_t_ref, wr_ref, bl_ref, br_ref,
                 att_lin_ref, att_abs_ref, emit):
    """One GATv2 layer on one (padded) graph.

    f_nm:        (N, F)   node-major input features (a value, not a ref)
    mask:        (N, N)   additive mask: 0 on edges j->i (incl. self loops),
                          -1e30 elsewhere
    wl_t_ref:    (HC, F)  lin_l weight, transposed       bl_ref: (HC, 1)
    wr_ref:      (F, HC)  lin_r weight                   br_ref: (1, HC)
    att_lin_ref: (H, C)   SMEM, att * (1+ns)/2   (linear part of LeakyReLU)
    att_abs_ref: (H, C)   SMEM, att * (1-ns)/2   (|.| part of LeakyReLU)
    emit(h, xl_h, p, inv): store callback; p is the UNNORMALIZED softmax
    numerator (N_i, N_j), inv the reciprocal row-sum as an (N_i, 1) column,
    xl_h the head's feature-major xl (C, N_j).
    """
    n_heads, c_dim = att_abs_ref.shape
    # xl is only ever consumed feature-major (rows -> channels, lanes -> nodes)
    # and xr only node-major, so compute each directly in its target layout:
    xl_t = lax.dot_general(wl_t_ref[...], f_nm, _NT,
                           preferred_element_type=jnp.float32) + bl_ref[...]   # (HC, N)
    xr = jnp.dot(f_nm, wr_ref[...],
                 preferred_element_type=jnp.float32) + br_ref[...]             # (N, HC)

    for h in range(n_heads):                      # H == 2, unrolled
        k0 = h * c_dim
        # ---- rank-1 (linear) part of LeakyReLU: one column + one row --------
        #   asr_i = sum_c att_lin[h,c] * xr[i, k]   (N, 1)
        #   asl_j = sum_c att_lin[h,c] * xl[j, k]   (1, N)
        asr = att_lin_ref[h, 0] * xr[:, k0:k0 + 1]
        asl = att_lin_ref[h, 0] * xl_t[k0:k0 + 1, :]
        for c in range(1, c_dim):                 # O(N*C) column/row fmas
            k = k0 + c
            asr = asr + att_lin_ref[h, c] * xr[:, k:k + 1]
            asl = asl + att_lin_ref[h, c] * xl_t[k:k + 1, :]
        # additive mask + rank-1 term folded into the accumulator init
        acc = (mask + asr) + asl                                      # (N_i, N_j)
        # ---- |z| part: add / abs / scale / accumulate per channel -----------
        for c in range(c_dim):                    # C small, unrolled
            k = k0 + c
            z = xr[:, k:k + 1] + xl_t[k:k + 1, :]                     # (N_i, N_j)
            acc = acc + att_abs_ref[h, c] * jnp.abs(z)                # SMEM scalar
        # ---- masked softmax over j with DEFERRED normalization --------------
        m = jnp.max(acc, axis=1, keepdims=True)   # finite: every row has a self-loop
        p = jnp.exp(acc - m)                      # masked entries underflow to 0
        inv = 1.0 / jnp.sum(p, axis=1, keepdims=True)                 # (N, 1)
        emit(h, xl_t[k0:k0 + c_dim, :], p, inv)


def _gcn_attn_kernel(x_ref, mask_ref,
                     wl1_ref, wr1_ref, bl1_ref, br1_ref, al1_ref, aa1_ref, bias1_ref,
                     wl2_ref, wr2_ref, bl2_ref, br2_ref, al2_ref, aa2_ref, bias2_ref,
                     o_ref, h_ref):
    # x_ref:  (1, N, Fin)  one graph's node-major features (N padded to 128k)
    # o_ref:  (1, HC2, N)  feature-major output (lane-dense: nodes on lanes)
    # h_ref:  (N, HC1)     VMEM scratch holding the layer-1 output on-chip
    f_nm = x_ref[0]                    # (N, Fin)
    mask = mask_ref[...]               # (N, N)
    c1 = aa1_ref.shape[1]
    c2 = aa2_ref.shape[1]

    # ---- layer 1: aggregate node-major into the VMEM scratch ----------------
    # Normalization applied AFTER the matmul on the small (N, C) result.
    def emit1(h, xl_h, p, inv):
        agg = lax.dot_general(p, xl_h, _NT,
                              preferred_element_type=jnp.float32)     # (N, C)
        h_ref[:, h * c1:(h + 1) * c1] = (
            agg * inv + bias1_ref[:, h * c1:(h + 1) * c1])

    _gatv2_layer(f_nm, mask, wl1_ref, wr1_ref, bl1_ref, br1_ref,
                 al1_ref, aa1_ref, emit1)

    # ---- layer 2: aggregate feature-major straight into the output ----------
    # Normalization folded into p with one O(N^2) multiply (not a divide).
    def emit2(h, xl_h, p, inv):
        alpha = p * inv
        agg = lax.dot_general(xl_h, alpha, _NT,
                              preferred_element_type=jnp.float32)     # (C, N)
        o_ref[0, h * c2:(h + 1) * c2, :] = (
            agg + bias2_ref[h * c2:(h + 1) * c2, :]).astype(o_ref.dtype)

    _gatv2_layer(h_ref[...], mask, wl2_ref, wr2_ref, bl2_ref, br2_ref,
                 al2_ref, aa2_ref, emit2)


def build_adj(edge_index, num_nodes):
    """Dense adjacency with adj[dst, src] = 1, plus self-loops (PyG default).
    NOTE: duplicate/parallel edges collapse to a single entry (multigraph edge
    multiplicity is not reproduced)."""
    src, dst = edge_index[0], edge_index[1]
    adj = jnp.zeros((num_nodes, num_nodes), jnp.float32)
    adj = adj.at[dst, src].set(1.0)
    diag = jnp.arange(num_nodes)
    adj = adj.at[diag, diag].set(1.0)
    return adj


def _prep_layer(params, *, negative_slope, feature_major_bias):
    """Re-orient / pre-scale natural (Wl, bl, Wr, br, att, bias) params."""
    Wl, bl, Wr, br, att, bias = params
    a = (1.0 + negative_slope) * 0.5          # lrelu(z) = a*z + b*|z|
    b = (1.0 - negative_slope) * 0.5
    return (Wl.T,                              # (HC, Fin)
            Wr,                                # (Fin, HC)
            bl.T,                              # (HC, 1)
            br,                                # (1, HC)
            (att * a).astype(jnp.float32),     # att_lin (H, C)
            (att * b).astype(jnp.float32),     # att_abs (H, C)
            bias.T if feature_major_bias else bias)


def gcn_attn_forward(x, edge_index, params1, params2, *, negative_slope=0.1):
    """x: [B, F, N], edge_index: [2, E] -> [B, 2*out_channels, N]."""
    B, Fin, N = x.shape
    # Pad the node axis to a multiple of 128 so nodes fully occupy the lane
    # axis (loads, stores, and the (N, N) tiles are all lane-dense).
    Np = 128 * pl.cdiv(N, 128)
    x_nm = jnp.transpose(x, (0, 2, 1))        # [B, N, F] node-major
    if Np != N:
        x_nm = jnp.pad(x_nm, ((0, 0), (0, Np - N), (0, 0)))
    # Self-loops on *all* Np nodes keep padded rows' softmax finite; real rows
    # never see padded columns (no edges reference them -> -1e30 mask).
    adj = build_adj(edge_index, Np)
    mask = (adj - 1.0) * 1e30                 # additive mask: 0 / -1e30

    wl1, wr1, bl1, br1, al1, aa1, bias1 = _prep_layer(
        params1, negative_slope=negative_slope, feature_major_bias=False)
    wl2, wr2, bl2, br2, al2, aa2, bias2 = _prep_layer(
        params2, negative_slope=negative_slope, feature_major_bias=True)
    HC1 = wl1.shape[0]
    HC2 = wl2.shape[0]
    H, C1 = aa1.shape
    _, C2 = aa2.shape

    smem = pl.BlockSpec(memory_space=pltpu.MemorySpace.SMEM)

    def rep(shape):   # VMEM-resident constant block (same block every step)
        return pl.BlockSpec(shape, lambda b: (0,) * len(shape))

    # Advisory cost estimate so XLA schedules surrounding ops sensibly.
    def _layer_cost(fin, heads, c):
        hc = heads * c
        lin = 2 * 2 * Np * fin * hc                   # lin_l + lin_r matmuls
        logits = heads * Np * Np * (4 * c + 6)        # |z| loop + base + softmax
        agg = heads * 2 * Np * Np * c                 # aggregation matmul
        return lin + logits + agg

    flops = B * (_layer_cost(Fin, H, C1) + _layer_cost(HC1, H, C2))
    transcendentals = B * 2 * H * Np * Np             # exp
    weight_elems = sum(int(a.size) for a in
                       (wl1, wr1, bl1, br1, al1, aa1, bias1,
                        wl2, wr2, bl2, br2, al2, aa2, bias2))
    bytes_accessed = 4 * (int(x_nm.size) + int(mask.size)
                          + B * HC2 * Np + weight_elems)
    cost = pl.CostEstimate(flops=int(flops),
                           transcendentals=int(transcendentals),
                           bytes_accessed=int(bytes_accessed))

    out = pl.pallas_call(
        _gcn_attn_kernel,
        out_shape=jax.ShapeDtypeStruct((B, HC2, Np), jnp.float32),
        grid_spec=pltpu.PrefetchScalarGridSpec(
            num_scalar_prefetch=0,
            grid=(B,),
            in_specs=[
                pl.BlockSpec((1, Np, Fin), lambda b: (b, 0, 0)),  # x (node-major)
                rep((Np, Np)),                                    # additive mask
                rep((HC1, Fin)), rep((Fin, HC1)),                 # layer 1 Wl^T, Wr
                rep((HC1, 1)), rep((1, HC1)),                     # layer 1 bl, br
                smem, smem,                                       # layer 1 att_lin, att_abs
                rep((1, HC1)),                                    # layer 1 bias (row)
                rep((HC2, HC1)), rep((HC1, HC2)),                 # layer 2 Wl^T, Wr
                rep((HC2, 1)), rep((1, HC2)),                     # layer 2 bl, br
                smem, smem,                                       # layer 2 att_lin, att_abs
                rep((HC2, 1)),                                    # layer 2 bias (col)
            ],
            out_specs=pl.BlockSpec((1, HC2, Np), lambda b: (b, 0, 0)),
            scratch_shapes=[pltpu.VMEM((Np, HC1), jnp.float32)],
        ),
        compiler_params=pltpu.CompilerParams(
            dimension_semantics=("parallel",),
            vmem_limit_bytes=48 * 1024 * 1024),
        cost_estimate=cost,
    )(x_nm, mask, wl1, wr1, bl1, br1, al1, aa1, bias1,
      wl2, wr2, bl2, br2, al2, aa2, bias2)

    return out[:, :, :N]                       # drop padded nodes


# ------------------------- pure-JAX reference -------------------------------
def _gatv2_ref(x, adj, params, negative_slope=0.1):
    Wl, bl, Wr, br, att, bias = params
    H, C = att.shape
    xl = (x @ Wl + bl).reshape(-1, H, C)
    xr = (x @ Wr + br).reshape(-1, H, C)
    pair = xr[:, None, :, :] + xl[None, :, :, :]          # [i, j, H, C]
    e = jnp.where(pair > 0, pair, negative_slope * pair)
    score = jnp.einsum('ijhc,hc->ijh', e, att)
    logits = jnp.where(adj[:, :, None] > 0, score, -1e30)
    m = jnp.max(logits, axis=1, keepdims=True)
    p = jnp.exp(logits - m) * adj[:, :, None]
    alpha = p / jnp.sum(p, axis=1, keepdims=True)
    out = jnp.einsum('ijh,jhc->ihc', alpha, xl).reshape(-1, H * C)
    return out + bias


def _ref_forward(x, edge_index, params1, params2):
    B, F, N = x.shape
    xp = jnp.transpose(x, (0, 2, 1))
    adj = build_adj(edge_index, N)
    outs = []
    for b in range(B):
        h = _gatv2_ref(xp[b], adj, params1)
        h = _gatv2_ref(h, adj, params2)
        outs.append(h)
    return jnp.transpose(jnp.stack(outs, 0), (0, 2, 1))


# ----------------------------- driver ---------------------------------------
if __name__ == "__main__":
    B, F, N = 2, 4, 16            # batch, num_features, num_nodes
    hidden_channels, out_channels, heads = 8, 8, 2

    key = jax.random.PRNGKey(0)
    kx, k1, k2 = jax.random.split(key, 3)
    x = jax.random.normal(kx, (B, F, N), dtype=jnp.float32)

    # deterministic ring graph, both directions: [2, 2N]
    src = jnp.arange(N, dtype=jnp.int32)
    dst = (src + 1) % N
    edge_index = jnp.stack([jnp.concatenate([src, dst]),
                            jnp.concatenate([dst, src])], axis=0)

    def glorot(k, shape):
        lim = (6.0 / (shape[0] + shape[1])) ** 0.5
        return jax.random.uniform(k, shape, jnp.float32, -lim, lim)

    def make_params(k, fin, c, h):
        ks = jax.random.split(k, 3)
        return (glorot(ks[0], (fin, h * c)),            # Wl
                jnp.zeros((1, h * c), jnp.float32),     # bl
                glorot(ks[1], (fin, h * c)),            # Wr
                jnp.zeros((1, h * c), jnp.float32),     # br
                glorot(ks[2], (h, c)),                  # att
                jnp.zeros((1, h * c), jnp.float32))     # bias

    params1 = make_params(k1, F, hidden_channels, heads)
    params2 = make_params(k2, heads * hidden_channels, out_channels, heads)

    out = gcn_attn_forward(x, edge_index, params1, params2)
    out = jax.block_until_ready(out)
    assert out.shape == (B, 2 * out_channels, N), out.shape

    ref = _ref_forward(x, edge_index, params1, params2)
    assert jnp.allclose(out, ref, atol=2e-4, rtol=2e-4), \
        float(jnp.max(jnp.abs(out - ref)))

    print("KERNEL_OK")
</pallas_src>

<mosaic_0001>
module attributes {stable_mosaic.version = 11 : i64} {
  func.func @_gcn_attn_kernel(%arg0: i32, %arg1: memref<1x128x4xf32, #tpu.memory_space<vmem>>, %arg2: memref<128x128xf32, #tpu.memory_space<vmem>>, %arg3: memref<16x4xf32, #tpu.memory_space<vmem>>, %arg4: memref<4x16xf32, #tpu.memory_space<vmem>>, %arg5: memref<16x1xf32, #tpu.memory_space<vmem>>, %arg6: memref<1x16xf32, #tpu.memory_space<vmem>>, %arg7: memref<2x8xf32, #tpu.memory_space<smem>>, %arg8: memref<2x8xf32, #tpu.memory_space<smem>>, %arg9: memref<1x16xf32, #tpu.memory_space<vmem>>, %arg10: memref<16x16xf32, #tpu.memory_space<vmem>>, %arg11: memref<16x16xf32, #tpu.memory_space<vmem>>, %arg12: memref<16x1xf32, #tpu.memory_space<vmem>>, %arg13: memref<1x16xf32, #tpu.memory_space<vmem>>, %arg14: memref<2x8xf32, #tpu.memory_space<smem>>, %arg15: memref<2x8xf32, #tpu.memory_space<smem>>, %arg16: memref<16x1xf32, #tpu.memory_space<vmem>>, %arg17: memref<1x16x128xf32, #tpu.memory_space<vmem>>, %arg18: memref<128x16xf32, #tpu.memory_space<vmem>>) attributes {dimension_semantics = [#tpu.dimension_semantics<parallel>], iteration_bounds = array<i64: 2>, scalar_prefetch = 0 : i64, scratch_operands = 1 : i64, tpu.core_type = #tpu.core_type<tc>, window_params = [{transform_indices = @transform_0, window_bounds = array<i64: 1, 128, 4>}, {pipeline_mode = #tpu.pipeline_mode<synchronous>, transform_indices = @transform_1, window_bounds = array<i64: 128, 128>}, {pipeline_mode = #tpu.pipeline_mode<synchronous>, transform_indices = @transform_2, window_bounds = array<i64: 16, 4>}, {pipeline_mode = #tpu.pipeline_mode<synchronous>, transform_indices = @transform_3, window_bounds = array<i64: 4, 16>}, {pipeline_mode = #tpu.pipeline_mode<synchronous>, transform_indices = @transform_4, window_bounds = array<i64: 16, 1>}, {pipeline_mode = #tpu.pipeline_mode<synchronous>, transform_indices = @transform_5, window_bounds = array<i64: 1, 16>}, {transform_indices = @transform_6, window_bounds = array<i64: 2, 8>}, {transform_indices = @transform_7, window_bounds = array<i64: 2, 8>}, {pipeline_mode = #tpu.pipeline_mode<synchronous>, transform_indices = @transform_8, window_bounds = array<i64: 1, 16>}, {pipeline_mode = #tpu.pipeline_mode<synchronous>, transform_indices = @transform_9, window_bounds = array<i64: 16, 16>}, {pipeline_mode = #tpu.pipeline_mode<synchronous>, transform_indices = @transform_10, window_bounds = array<i64: 16, 16>}, {pipeline_mode = #tpu.pipeline_mode<synchronous>, transform_indices = @transform_11, window_bounds = array<i64: 16, 1>}, {pipeline_mode = #tpu.pipeline_mode<synchronous>, transform_indices = @transform_12, window_bounds = array<i64: 1, 16>}, {transform_indices = @transform_13, window_bounds = array<i64: 2, 8>}, {transform_indices = @transform_14, window_bounds = array<i64: 2, 8>}, {pipeline_mode = #tpu.pipeline_mode<synchronous>, transform_indices = @transform_15, window_bounds = array<i64: 16, 1>}, {transform_indices = @transform_16, window_bounds = array<i64: 1, 16, 128>}]} {
    %c0 = arith.constant 0 : index
    %c0_0 = arith.constant 0 : index
    %c0_1 = arith.constant 0 : index
    %0 = vector.load %arg1[%c0, %c0_0, %c0_1] : memref<1x128x4xf32, #tpu.memory_space<vmem>>, vector<1x128x4xf32>
    %1 = vector.shape_cast %0 : vector<1x128x4xf32> to vector<128x4xf32>
    %c0_2 = arith.constant 0 : index
    %c0_3 = arith.constant 0 : index
    %2 = vector.load %arg2[%c0_2, %c0_3] : memref<128x128xf32, #tpu.memory_space<vmem>>, vector<128x128xf32>
    %c0_4 = arith.constant 0 : index
    %c0_5 = arith.constant 0 : index
    %3 = vector.load %arg3[%c0_4, %c0_5] : memref<16x4xf32, #tpu.memory_space<vmem>>, vector<16x4xf32>
    %cst = arith.constant dense<0.000000e+00> : vector<16x128xf32>
    %4 = tpu.matmul %3, %1, %cst {dimension_numbers = #tpu.dot_dimension_numbers<[1], [1], [0], [0], [0, 0, 1, 0], [], []>} : vector<16x4xf32>, vector<128x4xf32>, vector<16x128xf32> -> vector<16x128xf32>
    %c0_6 = arith.constant 0 : index
    %c0_7 = arith.constant 0 : index
    %5 = vector.load %arg5[%c0_6, %c0_7] : memref<16x1xf32, #tpu.memory_space<vmem>>, vector<16x1xf32>
    %6 = vector.broadcast %5 : vector<16x1xf32> to vector<16x128xf32>
    %7 = arith.addf %4, %6 : vector<16x128xf32>
    %c0_8 = arith.constant 0 : index
    %c0_9 = arith.constant 0 : index
    %8 = vector.load %arg4[%c0_8, %c0_9] : memref<4x16xf32, #tpu.memory_space<vmem>>, vector<4x16xf32>
    %cst_10 = arith.constant dense<0.000000e+00> : vector<128x16xf32>
    %9 = tpu.matmul %1, %8, %cst_10 {dimension_numbers = #tpu.dot_dimension_numbers<[1], [0], [0], [1], [0, 0, 1, 1], [], []>} : vector<128x4xf32>, vector<4x16xf32>, vector<128x16xf32> -> vector<128x16xf32>
    %c0_11 = arith.constant 0 : index
    %c0_12 = arith.constant 0 : index
    %10 = vector.load %arg6[%c0_11, %c0_12] : memref<1x16xf32, #tpu.memory_space<vmem>>, vector<1x16xf32>
    %11 = vector.broadcast %10 : vector<1x16xf32> to vector<128x16xf32>
    %12 = arith.addf %9, %11 : vector<128x16xf32>
    %c0_13 = arith.constant 0 : index
    %c0_14 = arith.constant 0 : index
    %13 = memref.load %arg7[%c0_13, %c0_14] : memref<2x8xf32, #tpu.memory_space<smem>>
    %14 = vector.extract_strided_slice %12 {offsets = [0, 0], sizes = [128, 1], strides = [1, 1]} : vector<128x16xf32> to vector<128x1xf32>
    %15 = vector.broadcast %13 : f32 to vector<128x1xf32>
    %16 = arith.mulf %15, %14 : vector<128x1xf32>
    %c0_15 = arith.constant 0 : index
    %c0_16 = arith.constant 0 : index
    %17 = memref.load %arg7[%c0_15, %c0_16] : memref<2x8xf32, #tpu.memory_space<smem>>
    %18 = vector.extract_strided_slice %7 {offsets = [0, 0], sizes = [1, 128], strides = [1, 1]} : vector<16x128xf32> to vector<1x128xf32>
    %19 = vector.broadcast %17 : f32 to vector<1x128xf32>
    %20 = arith.mulf %19, %18 : vector<1x128xf32>
    %c0_17 = arith.constant 0 : index
    %c1 = arith.constant 1 : index
    %21 = memref.load %arg7[%c0_17, %c1] : memref<2x8xf32, #tpu.memory_space<smem>>
    %22 = vector.extract_strided_slice %12 {offsets = [0, 1], sizes = [128, 1], strides = [1, 1]} : vector<128x16xf32> to vector<128x1xf32>
    %23 = vector.broadcast %21 : f32 to vector<128x1xf32>
    %24 = arith.mulf %23, %22 : vector<128x1xf32>
    %25 = arith.addf %16, %24 : vector<128x1xf32>
    %c0_18 = arith.constant 0 : index
    %c1_19 = arith.constant 1 : index
    %26 = memref.load %arg7[%c0_18, %c1_19] : memref<2x8xf32, #tpu.memory_space<smem>>
    %27 = vector.extract_strided_slice %7 {offsets = [1, 0], sizes = [1, 128], strides = [1, 1]} : vector<16x128xf32> to vector<1x128xf32>
    %28 = vector.broadcast %26 : f32 to vector<1x128xf32>
    %29 = arith.mulf %28, %27 : vector<1x128xf32>
    %30 = arith.addf %20, %29 : vector<1x128xf32>
    %c0_20 = arith.constant 0 : index
    %c2 = arith.constant 2 : index
    %31 = memref.load %arg7[%c0_20, %c2] : memref<2x8xf32, #tpu.memory_space<smem>>
    %32 = vector.extract_strided_slice %12 {offsets = [0, 2], sizes = [128, 1], strides = [1, 1]} : vector<128x16xf32> to vector<128x1xf32>
    %33 = vector.broadcast %31 : f32 to vector<128x1xf32>
    %34 = arith.mulf %33, %32 : vector<128x1xf32>
    %35 = arith.addf %25, %34 : vector<128x1xf32>
    %c0_21 = arith.constant 0 : index
    %c2_22 = arith.constant 2 : index
    %36 = memref.load %arg7[%c0_21, %c2_22] : memref<2x8xf32, #tpu.memory_space<smem>>
    %37 = vector.extract_strided_slice %7 {offsets = [2, 0], sizes = [1, 128], strides = [1, 1]} : vector<16x128xf32> to vector<1x128xf32>
    %38 = vector.broadcast %36 : f32 to vector<1x128xf32>
    %39 = arith.mulf %38, %37 : vector<1x128xf32>
    %40 = arith.addf %30, %39 : vector<1x128xf32>
    %c0_23 = arith.constant 0 : index
    %c3 = arith.constant 3 : index
    %41 = memref.load %arg7[%c0_23, %c3] : memref<2x8xf32, #tpu.memory_space<smem>>
    %42 = vector.extract_strided_slice %12 {offsets = [0, 3], sizes = [128, 1], strides = [1, 1]} : vector<128x16xf32> to vector<128x1xf32>
    %43 = vector.broadcast %41 : f32 to vector<128x1xf32>
    %44 = arith.mulf %43, %42 : vector<128x1xf32>
    %45 = arith.addf %35, %44 : vector<128x1xf32>
    %c0_24 = arith.constant 0 : index
    %c3_25 = arith.constant 3 : index
    %46 = memref.load %arg7[%c0_24, %c3_25] : memref<2x8xf32, #tpu.memory_space<smem>>
    %47 = vector.extract_strided_slice %7 {offsets = [3, 0], sizes = [1, 128], strides = [1, 1]} : vector<16x128xf32> to vector<1x128xf32>
    %48 = vector.broadcast %46 : f32 to vector<1x128xf32>
    %49 = arith.mulf %48, %47 : vector<1x128xf32>
    %50 = arith.addf %40, %49 : vector<1x128xf32>
    %c0_26 = arith.constant 0 : index
    %c4 = arith.constant 4 : index
    %51 = memref.load %arg7[%c0_26, %c4] : memref<2x8xf32, #tpu.memory_space<smem>>
    %52 = vector.extract_strided_slice %12 {offsets = [0, 4], sizes = [128, 1], strides = [1, 1]} : vector<128x16xf32> to vector<128x1xf32>
    %53 = vector.broadcast %51 : f32 to vector<128x1xf32>
    %54 = arith.mulf %53, %52 : vector<128x1xf32>
    %55 = arith.addf %45, %54 : vector<128x1xf32>
    %c0_27 = arith.constant 0 : index
    %c4_28 = arith.constant 4 : index
    %56 = memref.load %arg7[%c0_27, %c4_28] : memref<2x8xf32, #tpu.memory_space<smem>>
    %57 = vector.extract_strided_slice %7 {offsets = [4, 0], sizes = [1, 128], strides = [1, 1]} : vector<16x128xf32> to vector<1x128xf32>
    %58 = vector.broadcast %56 : f32 to vector<1x128xf32>
    %59 = arith.mulf %58, %57 : vector<1x128xf32>
    %60 = arith.addf %50, %59 : vector<1x128xf32>
    %c0_29 = arith.constant 0 : index
    %c5 = arith.constant 5 : index
    %61 = memref.load %arg7[%c0_29, %c5] : memref<2x8xf32, #tpu.memory_space<smem>>
    %62 = vector.extract_strided_slice %12 {offsets = [0, 5], sizes = [128, 1], strides = [1, 1]} : vector<128x16xf32> to vector<128x1xf32>
    %63 = vector.broadcast %61 : f32 to vector<128x1xf32>
    %64 = arith.mulf %63, %62 : vector<128x1xf32>
    %65 = arith.addf %55, %64 : vector<128x1xf32>
    %c0_30 = arith.constant 0 : index
    %c5_31 = arith.constant 5 : index
    %66 = memref.load %arg7[%c0_30, %c5_31] : memref<2x8xf32, #tpu.memory_space<smem>>
    %67 = vector.extract_strided_slice %7 {offsets = [5, 0], sizes = [1, 128], strides = [1, 1]} : vector<16x128xf32> to vector<1x128xf32>
    %68 = vector.broadcast %66 : f32 to vector<1x128xf32>
    %69 = arith.mulf %68, %67 : vector<1x128xf32>
    %70 = arith.addf %60, %69 : vector<1x128xf32>
    %c0_32 = arith.constant 0 : index
    %c6 = arith.constant 6 : index
    %71 = memref.load %arg7[%c0_32, %c6] : memref<2x8xf32, #tpu.memory_space<smem>>
    %72 = vector.extract_strided_slice %12 {offsets = [0, 6], sizes = [128, 1], strides = [1, 1]} : vector<128x16xf32> to vector<128x1xf32>
    %73 = vector.broadcast %71 : f32 to vector<128x1xf32>
    %74 = arith.mulf %73, %72 : vector<128x1xf32>
    %75 = arith.addf %65, %74 : vector<128x1xf32>
    %c0_33 = arith.constant 0 : index
    %c6_34 = arith.constant 6 : index
    %76 = memref.load %arg7[%c0_33, %c6_34] : memref<2x8xf32, #tpu.memory_space<smem>>
    %77 = vector.extract_strided_slice %7 {offsets = [6, 0], sizes = [1, 128], strides = [1, 1]} : vector<16x128xf32> to vector<1x128xf32>
    %78 = vector.broadcast %76 : f32 to vector<1x128xf32>
    %79 = arith.mulf %78, %77 : vector<1x128xf32>
    %80 = arith.addf %70, %79 : vector<1x128xf32>
    %c0_35 = arith.constant 0 : index
    %c7 = arith.constant 7 : index
    %81 = memref.load %arg7[%c0_35, %c7] : memref<2x8xf32, #tpu.memory_space<smem>>
    %82 = vector.extract_strided_slice %12 {offsets = [0, 7], sizes = [128, 1], strides = [1, 1]} : vector<128x16xf32> to vector<128x1xf32>
    %83 = vector.broadcast %81 : f32 to vector<128x1xf32>
    %84 = arith.mulf %83, %82 : vector<128x1xf32>
    %85 = arith.addf %75, %84 : vector<128x1xf32>
    %c0_36 = arith.constant 0 : index
    %c7_37 = arith.constant 7 : index
    %86 = memref.load %arg7[%c0_36, %c7_37] : memref<2x8xf32, #tpu.memory_space<smem>>
    %87 = vector.extract_strided_slice %7 {offsets = [7, 0], sizes = [1, 128], strides = [1, 1]} : vector<16x128xf32> to vector<1x128xf32>
    %88 = vector.broadcast %86 : f32 to vector<1x128xf32>
    %89 = arith.mulf %88, %87 : vector<1x128xf32>
    %90 = arith.addf %80, %89 : vector<1x128xf32>
    %91 = vector.broadcast %85 : vector<128x1xf32> to vector<128x128xf32>
    %92 = arith.addf %2, %91 : vector<128x128xf32>
    %93 = vector.broadcast %90 : vector<1x128xf32> to vector<128x128xf32>
    %94 = arith.addf %92, %93 : vector<128x128xf32>
    %95 = vector.extract_strided_slice %12 {offsets = [0, 0], sizes = [128, 1], strides = [1, 1]} : vector<128x16xf32> to vector<128x1xf32>
    %96 = vector.extract_strided_slice %7 {offsets = [0, 0], sizes = [1, 128], strides = [1, 1]} : vector<16x128xf32> to vector<1x128xf32>
    %97 = vector.broadcast %95 : vector<128x1xf32> to vector<128x128xf32>
    %98 = vector.broadcast %96 : vector<1x128xf32> to vector<128x128xf32>
    %99 = arith.addf %97, %98 : vector<128x128xf32>
    %c0_38 = arith.constant 0 : index
    %c0_39 = arith.constant 0 : index
    %100 = memref.load %arg8[%c0_38, %c0_39] : memref<2x8xf32, #tpu.memory_space<smem>>
    %101 = math.absf %99 : vector<128x128xf32>
    %102 = vector.broadcast %100 : f32 to vector<128x128xf32>
    %103 = arith.mulf %102, %101 : vector<128x128xf32>
    %104 = arith.addf %94, %103 : vector<128x128xf32>
    %105 = vector.extract_strided_slice %12 {offsets = [0, 1], sizes = [128, 1], strides = [1, 1]} : vector<128x16xf32> to vector<128x1xf32>
    %106 = vector.extract_strided_slice %7 {offsets = [1, 0], sizes = [1, 128], strides = [1, 1]} : vector<16x128xf32> to vector<1x128xf32>
    %107 = vector.broadcast %105 : vector<128x1xf32> to vector<128x128xf32>
    %108 = vector.broadcast %106 : vector<1x128xf32> to vector<128x128xf32>
    %109 = arith.addf %107, %108 : vector<128x128xf32>
    %c0_40 = arith.constant 0 : index
    %c1_41 = arith.constant 1 : index
    %110 = memref.load %arg8[%c0_40, %c1_41] : memref<2x8xf32, #tpu.memory_space<smem>>
    %111 = math.absf %109 : vector<128x128xf32>
    %112 = vector.broadcast %110 : f32 to vector<128x128xf32>
    %113 = arith.mulf %112, %111 : vector<128x128xf32>
    %114 = arith.addf %104, %113 : vector<128x128xf32>
    %115 = vector.extract_strided_slice %12 {offsets = [0, 2], sizes = [128, 1], strides = [1, 1]} : vector<128x16xf32> to vector<128x1xf32>
    %116 = vector.extract_strided_slice %7 {offsets = [2, 0], sizes = [1, 128], strides = [1, 1]} : vector<16x128xf32> to vector<1x128xf32>
    %117 = vector.broadcast %115 : vector<128x1xf32> to vector<128x128xf32>
    %118 = vector.broadcast %116 : vector<1x128xf32> to vector<128x128xf32>
    %119 = arith.addf %117, %118 : vector<128x128xf32>
    %c0_42 = arith.constant 0 : index
    %c2_43 = arith.constant 2 : index
    %120 = memref.load %arg8[%c0_42, %c2_43] : memref<2x8xf32, #tpu.memory_space<smem>>
    %121 = math.absf %119 : vector<128x128xf32>
    %122 = vector.broadcast %120 : f32 to vector<128x128xf32>
    %123 = arith.mulf %122, %121 : vector<128x128xf32>
    %124 = arith.addf %114, %123 : vector<128x128xf32>
    %125 = vector.extract_strided_slice %12 {offsets = [0, 3], sizes = [128, 1], strides = [1, 1]} : vector<128x16xf32> to vector<128x1xf32>
    %126 = vector.extract_strided_slice %7 {offsets = [3, 0], sizes = [1, 128], strides = [1, 1]} : vector<16x128xf32> to vector<1x128xf32>
    %127 = vector.broadcast %125 : vector<128x1xf32> to vector<128x128xf32>
    %128 = vector.broadcast %126 : vector<1x128xf32> to vector<128x128xf32>
    %129 = arith.addf %127, %128 : vector<128x128xf32>
    %c0_44 = arith.constant 0 : index
    %c3_45 = arith.constant 3 : index
    %130 = memref.load %arg8[%c0_44, %c3_45] : memref<2x8xf32, #tpu.memory_space<smem>>
    %131 = math.absf %129 : vector<128x128xf32>
    %132 = vector.broadcast %130 : f32 to vector<128x128xf32>
    %133 = arith.mulf %132, %131 : vector<128x128xf32>
    %134 = arith.addf %124, %133 : vector<128x128xf32>
    %135 = vector.extract_strided_slice %12 {offsets = [0, 4], sizes = [128, 1], strides = [1, 1]} : vector<128x16xf32> to vector<128x1xf32>
    %136 = vector.extract_strided_slice %7 {offsets = [4, 0], sizes = [1, 128], strides = [1, 1]} : vector<16x128xf32> to vector<1x128xf32>
    %137 = vector.broadcast %135 : vector<128x1xf32> to vector<128x128xf32>
    %138 = vector.broadcast %136 : vector<1x128xf32> to vector<128x128xf32>
    %139 = arith.addf %137, %138 : vector<128x128xf32>
    %c0_46 = arith.constant 0 : index
    %c4_47 = arith.constant 4 : index
    %140 = memref.load %arg8[%c0_46, %c4_47] : memref<2x8xf32, #tpu.memory_space<smem>>
    %141 = math.absf %139 : vector<128x128xf32>
    %142 = vector.broadcast %140 : f32 to vector<128x128xf32>
    %143 = arith.mulf %142, %141 : vector<128x128xf32>
    %144 = arith.addf %134, %143 : vector<128x128xf32>
    %145 = vector.extract_strided_slice %12 {offsets = [0, 5], sizes = [128, 1], strides = [1, 1]} : vector<128x16xf32> to vector<128x1xf32>
    %146 = vector.extract_strided_slice %7 {offsets = [5, 0], sizes = [1, 128], strides = [1, 1]} : vector<16x128xf32> to vector<1x128xf32>
    %147 = vector.broadcast %145 : vector<128x1xf32> to vector<128x128xf32>
    %148 = vector.broadcast %146 : vector<1x128xf32> to vector<128x128xf32>
    %149 = arith.addf %147, %148 : vector<128x128xf32>
    %c0_48 = arith.constant 0 : index
    %c5_49 = arith.constant 5 : index
    %150 = memref.load %arg8[%c0_48, %c5_49] : memref<2x8xf32, #tpu.memory_space<smem>>
    %151 = math.absf %149 : vector<128x128xf32>
    %152 = vector.broadcast %150 : f32 to vector<128x128xf32>
    %153 = arith.mulf %152, %151 : vector<128x128xf32>
    %154 = arith.addf %144, %153 : vector<128x128xf32>
    %155 = vector.extract_strided_slice %12 {offsets = [0, 6], sizes = [128, 1], strides = [1, 1]} : vector<128x16xf32> to vector<128x1xf32>
    %156 = vector.extract_strided_slice %7 {offsets = [6, 0], sizes = [1, 128], strides = [1, 1]} : vector<16x128xf32> to vector<1x128xf32>
    %157 = vector.broadcast %155 : vector<128x1xf32> to vector<128x128xf32>
    %158 = vector.broadcast %156 : vector<1x128xf32> to vector<128x128xf32>
    %159 = arith.addf %157, %158 : vector<128x128xf32>
    %c0_50 = arith.constant 0 : index
    %c6_51 = arith.constant 6 : index
    %160 = memref.load %arg8[%c0_50, %c6_51] : memref<2x8xf32, #tpu.memory_space<smem>>
    %161 = math.absf %159 : vector<128x128xf32>
    %162 = vector.broadcast %160 : f32 to vector<128x128xf32>
    %163 = arith.mulf %162, %161 : vector<128x128xf32>
    %164 = arith.addf %154, %163 : vector<128x128xf32>
    %165 = vector.extract_strided_slice %12 {offsets = [0, 7], sizes = [128, 1], strides = [1, 1]} : vector<128x16xf32> to vector<128x1xf32>
    %166 = vector.extract_strided_slice %7 {offsets = [7, 0], sizes = [1, 128], strides = [1, 1]} : vector<16x128xf32> to vector<1x128xf32>
    %167 = vector.broadcast %165 : vector<128x1xf32> to vector<128x128xf32>
    %168 = vector.broadcast %166 : vector<1x128xf32> to vector<128x128xf32>
    %169 = arith.addf %167, %168 : vector<128x128xf32>
    %c0_52 = arith.constant 0 : index
    %c7_53 = arith.constant 7 : index
    %170 = memref.load %arg8[%c0_52, %c7_53] : memref<2x8xf32, #tpu.memory_space<smem>>
    %171 = math.absf %169 : vector<128x128xf32>
    %172 = vector.broadcast %170 : f32 to vector<128x128xf32>
    %173 = arith.mulf %172, %171 : vector<128x128xf32>
    %174 = arith.addf %164, %173 : vector<128x128xf32>
    %cst_54 = arith.constant dense<0xFF800000> : vector<128xf32>
    %175 = vector.multi_reduction <maximumf>, %174, %cst_54 [1] : vector<128x128xf32> to vector<128xf32>
    %176 = vector.shape_cast %175 : vector<128xf32> to vector<128x1xf32>
    %177 = vector.broadcast %176 : vector<128x1xf32> to vector<128x128xf32>
    %178 = arith.subf %174, %177 : vector<128x128xf32>
    %179 = math.exp %178 : vector<128x128xf32>
    %cst_55 = arith.constant dense<0.000000e+00> : vector<128xf32>
    %180 = vector.multi_reduction <add>, %179, %cst_55 [1] : vector<128x128xf32> to vector<128xf32>
    %181 = vector.shape_cast %180 : vector<128xf32> to vector<128x1xf32>
    %cst_56 = arith.constant 1.000000e+00 : f32
    %182 = vector.broadcast %cst_56 : f32 to vector<128x1xf32>
    %183 = arith.divf %182, %181 : vector<128x1xf32>
    %184 = vector.extract_strided_slice %7 {offsets = [0, 0], sizes = [8, 128], strides = [1, 1]} : vector<16x128xf32> to vector<8x128xf32>
    %cst_57 = arith.constant dense<0.000000e+00> : vector<128x8xf32>
    %185 = tpu.matmul %179, %184, %cst_57 {dimension_numbers = #tpu.dot_dimension_numbers<[1], [1], [0], [0], [0, 0, 1, 0], [], []>} : vector<128x128xf32>, vector<8x128xf32>, vector<128x8xf32> -> vector<128x8xf32>
    %186 = vector.broadcast %183 : vector<128x1xf32> to vector<128x8xf32>
    %187 = arith.mulf %185, %186 : vector<128x8xf32>
    %c0_58 = arith.constant 0 : index
    %c0_59 = arith.constant 0 : index
    %188 = vector.load %arg9[%c0_58, %c0_59] : memref<1x16xf32, #tpu.memory_space<vmem>>, vector<1x8xf32>
    %189 = vector.broadcast %188 : vector<1x8xf32> to vector<128x8xf32>
    %190 = arith.addf %187, %189 : vector<128x8xf32>
    %c0_60 = arith.constant 0 : index
    %c0_61 = arith.constant 0 : index
    %191 = vector.load %arg18[%c0_60, %c0_61] : memref<128x16xf32, #tpu.memory_space<vmem>>, vector<128x8xf32>
    tpu.vector_store %arg18[%c0_60, %c0_61], %190 {strides = array<i32>} : memref<128x16xf32, #tpu.memory_space<vmem>>, vector<128x8xf32>,
    %c1_62 = arith.constant 1 : index
    %c0_63 = arith.constant 0 : index
    %192 = memref.load %arg7[%c1_62, %c0_63] : memref<2x8xf32, #tpu.memory_space<smem>>
    %193 = vector.extract_strided_slice %12 {offsets = [0, 8], sizes = [128, 1], strides = [1, 1]} : vector<128x16xf32> to vector<128x1xf32>
    %194 = vector.broadcast %192 : f32 to vector<128x1xf32>
    %195 = arith.mulf %194, %193 : vector<128x1xf32>
    %c1_64 = arith.constant 1 : index
    %c0_65 = arith.constant 0 : index
    %196 = memref.load %arg7[%c1_64, %c0_65] : memref<2x8xf32, #tpu.memory_space<smem>>
    %197 = vector.extract_strided_slice %7 {offsets = [8, 0], sizes = [1, 128], strides = [1, 1]} : vector<16x128xf32> to vector<1x128xf32>
    %198 = vector.broadcast %196 : f32 to vector<1x128xf32>
    %199 = arith.mulf %198, %197 : vector<1x128xf32>
    %c1_66 = arith.constant 1 : index
    %c1_67 = arith.constant 1 : index
    %200 = memref.load %arg7[%c1_66, %c1_67] : memref<2x8xf32, #tpu.memory_space<smem>>
    %201 = vector.extract_strided_slice %12 {offsets = [0, 9], sizes = [128, 1], strides = [1, 1]} : vector<128x16xf32> to vector<128x1xf32>
    %202 = vector.broadcast %200 : f32 to vector<128x1xf32>
    %203 = arith.mulf %202, %201 : vector<128x1xf32>
    %204 = arith.addf %195, %203 : vector<128x1xf32>
    %c1_68 = arith.constant 1 : index
    %c1_69 = arith.constant 1 : index
    %205 = memref.load %arg7[%c1_68, %c1_69] : memref<2x8xf32, #tpu.memory_space<smem>>
    %206 = vector.extract_strided_slice %7 {offsets = [9, 0], sizes = [1, 128], strides = [1, 1]} : vector<16x128xf32> to vector<1x128xf32>
    %207 = vector.broadcast %205 : f32 to vector<1x128xf32>
    %208 = arith.mulf %207, %206 : vector<1x128xf32>
    %209 = arith.addf %199, %208 : vector<1x128xf32>
    %c1_70 = arith.constant 1 : index
    %c2_71 = arith.constant 2 : index
    %210 = memref.load %arg7[%c1_70, %c2_71] : memref<2x8xf32, #tpu.memory_space<smem>>
    %211 = vector.extract_strided_slice %12 {offsets = [0, 10], sizes = [128, 1], strides = [1, 1]} : vector<128x16xf32> to vector<128x1xf32>
    %212 = vector.broadcast %210 : f32 to vector<128x1xf32>
    %213 = arith.mulf %212, %211 : vector<128x1xf32>
    %214 = arith.addf %204, %213 : vector<128x1xf32>
    %c1_72 = arith.constant 1 : index
    %c2_73 = arith.constant 2 : index
    %215 = memref.load %arg7[%c1_72, %c2_73] : memref<2x8xf32, #tpu.memory_space<smem>>
    %216 = vector.extract_strided_slice %7 {offsets = [10, 0], sizes = [1, 128], strides = [1, 1]} : vector<16x128xf32> to vector<1x128xf32>
    %217 = vector.broadcast %215 : f32 to vector<1x128xf32>
    %218 = arith.mulf %217, %216 : vector<1x128xf32>
    %219 = arith.addf %209, %218 : vector<1x128xf32>
    %c1_74 = arith.constant 1 : index
    %c3_75 = arith.constant 3 : index
    %220 = memref.load %arg7[%c1_74, %c3_75] : memref<2x8xf32, #tpu.memory_space<smem>>
    %221 = vector.extract_strided_slice %12 {offsets = [0, 11], sizes = [128, 1], strides = [1, 1]} : vector<128x16xf32> to vector<128x1xf32>
    %222 = vector.broadcast %220 : f32 to vector<128x1xf32>
    %223 = arith.mulf %222, %221 : vector<128x1xf32>
    %224 = arith.addf %214, %223 : vector<128x1xf32>
    %c1_76 = arith.constant 1 : index
    %c3_77 = arith.constant 3 : index
    %225 = memref.load %arg7[%c1_76, %c3_77] : memref<2x8xf32, #tpu.memory_space<smem>>
    %226 = vector.extract_strided_slice %7 {offsets = [11, 0], sizes = [1, 128], strides = [1, 1]} : vector<16x128xf32> to vector<1x128xf32>
    %227 = vector.broadcast %225 : f32 to vector<1x128xf32>
    %228 = arith.mulf %227, %226 : vector<1x128xf32>
    %229 = arith.addf %219, %228 : vector<1x128xf32>
    %c1_78 = arith.constant 1 : index
    %c4_79 = arith.constant 4 : index
    %230 = memref.load %arg7[%c1_78, %c4_79] : memref<2x8xf32, #tpu.memory_space<smem>>
    %231 = vector.extract_strided_slice %12 {offsets = [0, 12], sizes = [128, 1], strides = [1, 1]} : vector<128x16xf32> to vector<128x1xf32>
    %232 = vector.broadcast %230 : f32 to vector<128x1xf32>
    %233 = arith.mulf %232, %231 : vector<128x1xf32>
    %234 = arith.addf %224, %233 : vector<128x1xf32>
    %c1_80 = arith.constant 1 : index
    %c4_81 = arith.constant 4 : index
    %235 = memref.load %arg7[%c1_80, %c4_81] : memref<2x8xf32, #tpu.memory_space<smem>>
    %236 = vector.extract_strided_slice %7 {offsets = [12, 0], sizes = [1, 128], strides = [1, 1]} : vector<16x128xf32> to vector<1x128xf32>
    %237 = vector.broadcast %235 : f32 to vector<1x128xf32>
    %238 = arith.mulf %237, %236 : vector<1x128xf32>
    %239 = arith.addf %229, %238 : vector<1x128xf32>
    %c1_82 = arith.constant 1 : index
    %c5_83 = arith.constant 5 : index
    %240 = memref.load %arg7[%c1_82, %c5_83] : memref<2x8xf32, #tpu.memory_space<smem>>
    %241 = vector.extract_strided_slice %12 {offsets = [0, 13], sizes = [128, 1], strides = [1, 1]} : vector<128x16xf32> to vector<128x1xf32>
    %242 = vector.broadcast %240 : f32 to vector<128x1xf32>
    %243 = arith.mulf %242, %241 : vector<128x1xf32>
    %244 = arith.addf %234, %243 : vector<128x1xf32>
    %c1_84 = arith.constant 1 : index
    %c5_85 = arith.constant 5 : index
    %245 = memref.load %arg7[%c1_84, %c5_85] : memref<2x8xf32, #tpu.memory_space<smem>>
    %246 = vector.extract_strided_slice %7 {offsets = [13, 0], sizes = [1, 128], strides = [1, 1]} : vector<16x128xf32> to vector<1x128xf32>
    %247 = vector.broadcast %245 : f32 to vector<1x128xf32>
    %248 = arith.mulf %247, %246 : vector<1x128xf32>
    %249 = arith.addf %239, %248 : vector<1x128xf32>
    %c1_86 = arith.constant 1 : index
    %c6_87 = arith.constant 6 : index
    %250 = memref.load %arg7[%c1_86, %c6_87] : memref<2x8xf32, #tpu.memory_space<smem>>
    %251 = vector.extract_strided_slice %12 {offsets = [0, 14], sizes = [128, 1], strides = [1, 1]} : vector<128x16xf32> to vector<128x1xf32>
    %252 = vector.broadcast %250 : f32 to vector<128x1xf32>
    %253 = arith.mulf %252, %251 : vector<128x1xf32>
    %254 = arith.addf %244, %253 : vector<128x1xf32>
    %c1_88 = arith.constant 1 : index
    %c6_89 = arith.constant 6 : index
    %255 = memref.load %arg7[%c1_88, %c6_89] : memref<2x8xf32, #tpu.memory_space<smem>>
    %256 = vector.extract_strided_slice %7 {offsets = [14, 0], sizes = [1, 128], strides = [1, 1]} : vector<16x128xf32> to vector<1x128xf32>
    %257 = vector.broadcast %255 : f32 to vector<1x128xf32>
    %258 = arith.mulf %257, %256 : vector<1x128xf32>
    %259 = arith.addf %249, %258 : vector<1x128xf32>
    %c1_90 = arith.constant 1 : index
    %c7_91 = arith.constant 7 : index
    %260 = memref.load %arg7[%c1_90, %c7_91] : memref<2x8xf32, #tpu.memory_space<smem>>
    %261 = vector.extract_strided_slice %12 {offsets = [0, 15], sizes = [128, 1], strides = [1, 1]} : vector<128x16xf32> to vector<128x1xf32>
    %262 = vector.broadcast %260 : f32 to vector<128x1xf32>
    %263 = arith.mulf %262, %261 : vector<128x1xf32>
    %264 = arith.addf %254, %263 : vector<128x1xf32>
    %c1_92 = arith.constant 1 : index
    %c7_93 = arith.constant 7 : index
    %265 = memref.load %arg7[%c1_92, %c7_93] : memref<2x8xf32, #tpu.memory_space<smem>>
    %266 = vector.extract_strided_slice %7 {offsets = [15, 0], sizes = [1, 128], strides = [1, 1]} : vector<16x128xf32> to vector<1x128xf32>
    %267 = vector.broadcast %265 : f32 to vector<1x128xf32>
    %268 = arith.mulf %267, %266 : vector<1x128xf32>
    %269 = arith.addf %259, %268 : vector<1x128xf32>
    %270 = vector.broadcast %264 : vector<128x1xf32> to vector<128x128xf32>
    %271 = arith.addf %2, %270 : vector<128x128xf32>
    %272 = vector.broadcast %269 : vector<1x128xf32> to vector<128x128xf32>
    %273 = arith.addf %271, %272 : vector<128x128xf32>
    %274 = vector.extract_strided_slice %12 {offsets = [0, 8], sizes = [128, 1], strides = [1, 1]} : vector<128x16xf32> to vector<128x1xf32>
    %275 = vector.extract_strided_slice %7 {offsets = [8, 0], sizes = [1, 128], strides = [1, 1]} : vector<16x128xf32> to vector<1x128xf32>
    %276 = vector.broadcast %274 : vector<128x1xf32> to vector<128x128xf32>
    %277 = vector.broadcast %275 : vector<1x128xf32> to vector<128x128xf32>
    %278 = arith.addf %276, %277 : vector<128x128xf32>
    %c1_94 = arith.constant 1 : index
    %c0_95 = arith.constant 0 : index
    %279 = memref.load %arg8[%c1_94, %c0_95] : memref<2x8xf32, #tpu.memory_space<smem>>
    %280 = math.absf %278 : vector<128x128xf32>
    %281 = vector.broadcast %279 : f32 to vector<128x128xf32>
    %282 = arith.mulf %281, %280 : vector<128x128xf32>
    %283 = arith.addf %273, %282 : vector<128x128xf32>
    %284 = vector.extract_strided_slice %12 {offsets = [0, 9], sizes = [128, 1], strides = [1, 1]} : vector<128x16xf32> to vector<128x1xf32>
    %285 = vector.extract_strided_slice %7 {offsets = [9, 0], sizes = [1, 128], strides = [1, 1]} : vector<16x128xf32> to vector<1x128xf32>
    %286 = vector.broadcast %284 : vector<128x1xf32> to vector<128x128xf32>
    %287 = vector.broadcast %285 : vector<1x128xf32> to vector<128x128xf32>
    %288 = arith.addf %286, %287 : vector<128x128xf32>
    %c1_96 = arith.constant 1 : index
    %c1_97 = arith.constant 1 : index
    %289 = memref.load %arg8[%c1_96, %c1_97] : memref<2x8xf32, #tpu.memory_space<smem>>
    %290 = math.absf %288 : vector<128x128xf32>
    %291 = vector.broadcast %289 : f32 to vector<128x128xf32>
    %292 = arith.mulf %291, %290 : vector<128x128xf32>
    %293 = arith.addf %283, %292 : vector<128x128xf32>
    %294 = vector.extract_strided_slice %12 {offsets = [0, 10], sizes = [128, 1], strides = [1, 1]} : vector<128x16xf32> to vector<128x1xf32>
    %295 = vector.extract_strided_slice %7 {offsets = [10, 0], sizes = [1, 128], strides = [1, 1]} : vector<16x128xf32> to vector<1x128xf32>
    %296 = vector.broadcast %294 : vector<128x1xf32> to vector<128x128xf32>
    %297 = vector.broadcast %295 : vector<1x128xf32> to vector<128x128xf32>
    %298 = arith.addf %296, %297 : vector<128x128xf32>
    %c1_98 = arith.constant 1 : index
    %c2_99 = arith.constant 2 : index
    %299 = memref.load %arg8[%c1_98, %c2_99] : memref<2x8xf32, #tpu.memory_space<smem>>
    %300 = math.absf %298 : vector<128x128xf32>
    %301 = vector.broadcast %299 : f32 to vector<128x128xf32>
    %302 = arith.mulf %301, %300 : vector<128x128xf32>
    %303 = arith.addf %293, %302 : vector<128x128xf32>
    %304 = vector.extract_strided_slice %12 {offsets = [0, 11], sizes = [128, 1], strides = [1, 1]} : vector<128x16xf32> to vector<128x1xf32>
    %305 = vector.extract_strided_slice %7 {offsets = [11, 0], sizes = [1, 128], strides = [1, 1]} : vector<16x128xf32> to vector<1x128xf32>
    %306 = vector.broadcast %304 : vector<128x1xf32> to vector<128x128xf32>
    %307 = vector.broadcast %305 : vector<1x128xf32> to vector<128x128xf32>
    %308 = arith.addf %306, %307 : vector<128x128xf32>
    %c1_100 = arith.constant 1 : index
    %c3_101 = arith.constant 3 : index
    %309 = memref.load %arg8[%c1_100, %c3_101] : memref<2x8xf32, #tpu.memory_space<smem>>
    %310 = math.absf %308 : vector<128x128xf32>
    %311 = vector.broadcast %309 : f32 to vector<128x128xf32>
    %312 = arith.mulf %311, %310 : vector<128x128xf32>
    %313 = arith.addf %303, %312 : vector<128x128xf32>
    %314 = vector.extract_strided_slice %12 {offsets = [0, 12], sizes = [128, 1], strides = [1, 1]} : vector<128x16xf32> to vector<128x1xf32>
    %315 = vector.extract_strided_slice %7 {offsets = [12, 0], sizes = [1, 128], strides = [1, 1]} : vector<16x128xf32> to vector<1x128xf32>
    %316 = vector.broadcast %314 : vector<128x1xf32> to vector<128x128xf32>
    %317 = vector.broadcast %315 : vector<1x128xf32> to vector<128x128xf32>
    %318 = arith.addf %316, %317 : vector<128x128xf32>
    %c1_102 = arith.constant 1 : index
    %c4_103 = arith.constant 4 : index
    %319 = memref.load %arg8[%c1_102, %c4_103] : memref<2x8xf32, #tpu.memory_space<smem>>
    %320 = math.absf %318 : vector<128x128xf32>
    %321 = vector.broadcast %319 : f32 to vector<128x128xf32>
    %322 = arith.mulf %321, %320 : vector<128x128xf32>
    %323 = arith.addf %313, %322 : vector<128x128xf32>
    %324 = vector.extract_strided_slice %12 {offsets = [0, 13], sizes = [128, 1], strides = [1, 1]} : vector<128x16xf32> to vector<128x1xf32>
    %325 = vector.extract_strided_slice %7 {offsets = [13, 0], sizes = [1, 128], strides = [1, 1]} : vector<16x128xf32> to vector<1x128xf32>
    %326 = vector.broadcast %324 : vector<128x1xf32> to vector<128x128xf32>
    %327 = vector.broadcast %325 : vector<1x128xf32> to vector<128x128xf32>
    %328 = arith.addf %326, %327 : vector<128x128xf32>
    %c1_104 = arith.constant 1 : index
    %c5_105 = arith.constant 5 : index
    %329 = memref.load %arg8[%c1_104, %c5_105] : memref<2x8xf32, #tpu.memory_space<smem>>
    %330 = math.absf %328 : vector<128x128xf32>
    %331 = vector.broadcast %329 : f32 to vector<128x128xf32>
    %332 = arith.mulf %331, %330 : vector<128x128xf32>
    %333 = arith.addf %323, %332 : vector<128x128xf32>
    %334 = vector.extract_strided_slice %12 {offsets = [0, 14], sizes = [128, 1], strides = [1, 1]} : vector<128x16xf32> to vector<128x1xf32>
    %335 = vector.extract_strided_slice %7 {offsets = [14, 0], sizes = [1, 128], strides = [1, 1]} : vector<16x128xf32> to vector<1x128xf32>
    %336 = vector.broadcast %334 : vector<128x1xf32> to vector<128x128xf32>
    %337 = vector.broadcast %335 : vector<1x128xf32> to vector<128x128xf32>
    %338 = arith.addf %336, %337 : vector<128x128xf32>
    %c1_106 = arith.constant 1 : index
    %c6_107 = arith.constant 6 : index
    %339 = memref.load %arg8[%c1_106, %c6_107] : memref<2x8xf32, #tpu.memory_space<smem>>
    %340 = math.absf %338 : vector<128x128xf32>
    %341 = vector.broadcast %339 : f32 to vector<128x128xf32>
    %342 = arith.mulf %341, %340 : vector<128x128xf32>
    %343 = arith.addf %333, %342 : vector<128x128xf32>
    %344 = vector.extract_strided_slice %12 {offsets = [0, 15], sizes = [128, 1], strides = [1, 1]} : vector<128x16xf32> to vector<128x1xf32>
    %345 = vector.extract_strided_slice %7 {offsets = [15, 0], sizes = [1, 128], strides = [1, 1]} : vector<16x128xf32> to vector<1x128xf32>
    %346 = vector.broadcast %344 : vector<128x1xf32> to vector<128x128xf32>
    %347 = vector.broadcast %345 : vector<1x128xf32> to vector<128x128xf32>
    %348 = arith.addf %346, %347 : vector<128x128xf32>
    %c1_108 = arith.constant 1 : index
    %c7_109 = arith.constant 7 : index
    %349 = memref.load %arg8[%c1_108, %c7_109] : memref<2x8xf32, #tpu.memory_space<smem>>
    %350 = math.absf %348 : vector<128x128xf32>
    %351 = vector.broadcast %349 : f32 to vector<128x128xf32>
    %352 = arith.mulf %351, %350 : vector<128x128xf32>
    %353 = arith.addf %343, %352 : vector<128x128xf32>
    %cst_110 = arith.constant dense<0xFF800000> : vector<128xf32>
    %354 = vector.multi_reduction <maximumf>, %353, %cst_110 [1] : vector<128x128xf32> to vector<128xf32>
    %355 = vector.shape_cast %354 : vector<128xf32> to vector<128x1xf32>
    %356 = vector.broadcast %355 : vector<128x1xf32> to vector<128x128xf32>
    %357 = arith.subf %353, %356 : vector<128x128xf32>
    %358 = math.exp %357 : vector<128x128xf32>
    %cst_111 = arith.constant dense<0.000000e+00> : vector<128xf32>
    %359 = vector.multi_reduction <add>, %358, %cst_111 [1] : vector<128x128xf32> to vector<128xf32>
    %360 = vector.shape_cast %359 : vector<128xf32> to vector<128x1xf32>
    %cst_112 = arith.constant 1.000000e+00 : f32
    %361 = vector.broadcast %cst_112 : f32 to vector<128x1xf32>
    %362 = arith.divf %361, %360 : vector<128x1xf32>
    %363 = vector.extract_strided_slice %7 {offsets = [8, 0], sizes = [8, 128], strides = [1, 1]} : vector<16x128xf32> to vector<8x128xf32>
    %cst_113 = arith.constant dense<0.000000e+00> : vector<128x8xf32>
    %364 = tpu.matmul %358, %363, %cst_113 {dimension_numbers = #tpu.dot_dimension_numbers<[1], [1], [0], [0], [0, 0, 1, 0], [], []>} : vector<128x128xf32>, vector<8x128xf32>, vector<128x8xf32> -> vector<128x8xf32>
    %365 = vector.broadcast %362 : vector<128x1xf32> to vector<128x8xf32>
    %366 = arith.mulf %364, %365 : vector<128x8xf32>
    %c0_114 = arith.constant 0 : index
    %c8 = arith.constant 8 : index
    %367 = vector.load %arg9[%c0_114, %c8] : memref<1x16xf32, #tpu.memory_space<vmem>>, vector<1x8xf32>
    %368 = vector.broadcast %367 : vector<1x8xf32> to vector<128x8xf32>
    %369 = arith.addf %366, %368 : vector<128x8xf32>
    %c0_115 = arith.constant 0 : index
    %c8_116 = arith.constant 8 : index
    %370 = vector.load %arg18[%c0_115, %c8_116] : memref<128x16xf32, #tpu.memory_space<vmem>>, vector<128x8xf32>
    tpu.vector_store %arg18[%c0_115, %c8_116], %369 {strides = array<i32>} : memref<128x16xf32, #tpu.memory_space<vmem>>, vector<128x8xf32>,
    %c0_117 = arith.constant 0 : index
    %c0_118 = arith.constant 0 : index
    %371 = vector.load %arg18[%c0_117, %c0_118] : memref<128x16xf32, #tpu.memory_space<vmem>>, vector<128x16xf32>
    %c0_119 = arith.constant 0 : index
    %c0_120 = arith.constant 0 : index
    %372 = vector.load %arg10[%c0_119, %c0_120] : memref<16x16xf32, #tpu.memory_space<vmem>>, vector<16x16xf32>
    %cst_121 = arith.constant dense<0.000000e+00> : vector<16x128xf32>
    %373 = tpu.matmul %372, %371, %cst_121 {dimension_numbers = #tpu.dot_dimension_numbers<[1], [1], [0], [0], [0, 0, 1, 0], [], []>} : vector<16x16xf32>, vector<128x16xf32>, vector<16x128xf32> -> vector<16x128xf32>
    %c0_122 = arith.constant 0 : index
    %c0_123 = arith.constant 0 : index
    %374 = vector.load %arg12[%c0_122, %c0_123] : memref<16x1xf32, #tpu.memory_space<vmem>>, vector<16x1xf32>
    %375 = vector.broadcast %374 : vector<16x1xf32> to vector<16x128xf32>
    %376 = arith.addf %373, %375 : vector<16x128xf32>
    %c0_124 = arith.constant 0 : index
    %c0_125 = arith.constant 0 : index
    %377 = vector.load %arg11[%c0_124, %c0_125] : memref<16x16xf32, #tpu.memory_space<vmem>>, vector<16x16xf32>
    %cst_126 = arith.constant dense<0.000000e+00> : vector<128x16xf32>
    %378 = tpu.matmul %371, %377, %cst_126 {dimension_numbers = #tpu.dot_dimension_numbers<[1], [0], [0], [1], [0, 0, 1, 1], [], []>} : vector<128x16xf32>, vector<16x16xf32>, vector<128x16xf32> -> vector<128x16xf32>
    %c0_127 = arith.constant 0 : index
    %c0_128 = arith.constant 0 : index
    %379 = vector.load %arg13[%c0_127, %c0_128] : memref<1x16xf32, #tpu.memory_space<vmem>>, vector<1x16xf32>
    %380 = vector.broadcast %379 : vector<1x16xf32> to vector<128x16xf32>
    %381 = arith.addf %378, %380 : vector<128x16xf32>
    %c0_129 = arith.constant 0 : index
    %c0_130 = arith.constant 0 : index
    %382 = memref.load %arg14[%c0_129, %c0_130] : memref<2x8xf32, #tpu.memory_space<smem>>
    %383 = vector.extract_strided_slice %381 {offsets = [0, 0], sizes = [128, 1], strides = [1, 1]} : vector<128x16xf32> to vector<128x1xf32>
    %384 = vector.broadcast %382 : f32 to vector<128x1xf32>
    %385 = arith.mulf %384, %383 : vector<128x1xf32>
    %c0_131 = arith.constant 0 : index
    %c0_132 = arith.constant 0 : index
    %386 = memref.load %arg14[%c0_131, %c0_132] : memref<2x8xf32, #tpu.memory_space<smem>>
    %387 = vector.extract_strided_slice %376 {offsets = [0, 0], sizes = [1, 128], strides = [1, 1]} : vector<16x128xf32> to vector<1x128xf32>
    %388 = vector.broadcast %386 : f32 to vector<1x128xf32>
    %389 = arith.mulf %388, %387 : vector<1x128xf32>
    %c0_133 = arith.constant 0 : index
    %c1_134 = arith.constant 1 : index
    %390 = memref.load %arg14[%c0_133, %c1_134] : memref<2x8xf32, #tpu.memory_space<smem>>
    %391 = vector.extract_strided_slice %381 {offsets = [0, 1], sizes = [128, 1], strides = [1, 1]} : vector<128x16xf32> to vector<128x1xf32>
    %392 = vector.broadcast %390 : f32 to vector<128x1xf32>
    %393 = arith.mulf %392, %391 : vector<128x1xf32>
    %394 = arith.addf %385, %393 : vector<128x1xf32>
    %c0_135 = arith.constant 0 : index
    %c1_136 = arith.constant 1 : index
    %395 = memref.load %arg14[%c0_135, %c1_136] : memref<2x8xf32, #tpu.memory_space<smem>>
    %396 = vector.extract_strided_slice %376 {offsets = [1, 0], sizes = [1, 128], strides = [1, 1]} : vector<16x128xf32> to vector<1x128xf32>
    %397 = vector.broadcast %395 : f32 to vector<1x128xf32>
    %398 = arith.mulf %397, %396 : vector<1x128xf32>
    %399 = arith.addf %389, %398 : vector<1x128xf32>
    %c0_137 = arith.constant 0 : index
    %c2_138 = arith.constant 2 : index
    %400 = memref.load %arg14[%c0_137, %c2_138] : memref<2x8xf32, #tpu.memory_space<smem>>
    %401 = vector.extract_strided_slice %381 {offsets = [0, 2], sizes = [128, 1], strides = [1, 1]} : vector<128x16xf32> to vector<128x1xf32>
    %402 = vector.broadcast %400 : f32 to vector<128x1xf32>
    %403 = arith.mulf %402, %401 : vector<128x1xf32>
    %404 = arith.addf %394, %403 : vector<128x1xf32>
    %c0_139 = arith.constant 0 : index
    %c2_140 = arith.constant 2 : index
    %405 = memref.load %arg14[%c0_139, %c2_140] : memref<2x8xf32, #tpu.memory_space<smem>>
    %406 = vector.extract_strided_slice %376 {offsets = [2, 0], sizes = [1, 128], strides = [1, 1]} : vector<16x128xf32> to vector<1x128xf32>
    %407 = vector.broadcast %405 : f32 to vector<1x128xf32>
    %408 = arith.mulf %407, %406 : vector<1x128xf32>
    %409 = arith.addf %399, %408 : vector<1x128xf32>
    %c0_141 = arith.constant 0 : index
    %c3_142 = arith.constant 3 : index
    %410 = memref.load %arg14[%c0_141, %c3_142] : memref<2x8xf32, #tpu.memory_space<smem>>
    %411 = vector.extract_strided_slice %381 {offsets = [0, 3], sizes = [128, 1], strides = [1, 1]} : vector<128x16xf32> to vector<128x1xf32>
    %412 = vector.broadcast %410 : f32 to vector<128x1xf32>
    %413 = arith.mulf %412, %411 : vector<128x1xf32>
    %414 = arith.addf %404, %413 : vector<128x1xf32>
    %c0_143 = arith.constant 0 : index
    %c3_144 = arith.constant 3 : index
    %415 = memref.load %arg14[%c0_143, %c3_144] : memref<2x8xf32, #tpu.memory_space<smem>>
    %416 = vector.extract_strided_slice %376 {offsets = [3, 0], sizes = [1, 128], strides = [1, 1]} : vector<16x128xf32> to vector<1x128xf32>
    %417 = vector.broadcast %415 : f32 to vector<1x128xf32>
    %418 = arith.mulf %417, %416 : vector<1x128xf32>
    %419 = arith.addf %409, %418 : vector<1x128xf32>
    %c0_145 = arith.constant 0 : index
    %c4_146 = arith.constant 4 : index
    %420 = memref.load %arg14[%c0_145, %c4_146] : memref<2x8xf32, #tpu.memory_space<smem>>
    %421 = vector.extract_strided_slice %381 {offsets = [0, 4], sizes = [128, 1], strides = [1, 1]} : vector<128x16xf32> to vector<128x1xf32>
    %422 = vector.broadcast %420 : f32 to vector<128x1xf32>
    %423 = arith.mulf %422, %421 : vector<128x1xf32>
    %424 = arith.addf %414, %423 : vector<128x1xf32>
    %c0_147 = arith.constant 0 : index
    %c4_148 = arith.constant 4 : index
    %425 = memref.load %arg14[%c0_147, %c4_148] : memref<2x8xf32, #tpu.memory_space<smem>>
    %426 = vector.extract_strided_slice %376 {offsets = [4, 0], sizes = [1, 128], strides = [1, 1]} : vector<16x128xf32> to vector<1x128xf32>
    %427 = vector.broadcast %425 : f32 to vector<1x128xf32>
    %428 = arith.mulf %427, %426 : vector<1x128xf32>
    %429 = arith.addf %419, %428 : vector<1x128xf32>
    %c0_149 = arith.constant 0 : index
    %c5_150 = arith.constant 5 : index
    %430 = memref.load %arg14[%c0_149, %c5_150] : memref<2x8xf32, #tpu.memory_space<smem>>
    %431 = vector.extract_strided_slice %381 {offsets = [0, 5], sizes = [128, 1], strides = [1, 1]} : vector<128x16xf32> to vector<128x1xf32>
    %432 = vector.broadcast %430 : f32 to vector<128x1xf32>
    %433 = arith.mulf %432, %431 : vector<128x1xf32>
    %434 = arith.addf %424, %433 : vector<128x1xf32>
    %c0_151 = arith.constant 0 : index
    %c5_152 = arith.constant 5 : index
    %435 = memref.load %arg14[%c0_151, %c5_152] : memref<2x8xf32, #tpu.memory_space<smem>>
    %436 = vector.extract_strided_slice %376 {offsets = [5, 0], sizes = [1, 128], strides = [1, 1]} : vector<16x128xf32> to vector<1x128xf32>
    %437 = vector.broadcast %435 : f32 to vector<1x128xf32>
    %438 = arith.mulf %437, %436 : vector<1x128xf32>
    %439 = arith.addf %429, %438 : vector<1x128xf32>
    %c0_153 = arith.constant 0 : index
    %c6_154 = arith.constant 6 : index
    %440 = memref.load %arg14[%c0_153, %c6_154] : memref<2x8xf32, #tpu.memory_space<smem>>
    %441 = vector.extract_strided_slice %381 {offsets = [0, 6], sizes = [128, 1], strides = [1, 1]} : vector<128x16xf32> to vector<128x1xf32>
    %442 = vector.broadcast %440 : f32 to vector<128x1xf32>
    %443 = arith.mulf %442, %441 : vector<128x1xf32>
    %444 = arith.addf %434, %443 : vector<128x1xf32>
    %c0_155 = arith.constant 0 : index
    %c6_156 = arith.constant 6 : index
    %445 = memref.load %arg14[%c0_155, %c6_156] : memref<2x8xf32, #tpu.memory_space<smem>>
    %446 = vector.extract_strided_slice %376 {offsets = [6, 0], sizes = [1, 128], strides = [1, 1]} : vector<16x128xf32> to vector<1x128xf32>
    %447 = vector.broadcast %445 : f32 to vector<1x128xf32>
    %448 = arith.mulf %447, %446 : vector<1x128xf32>
    %449 = arith.addf %439, %448 : vector<1x128xf32>
    %c0_157 = arith.constant 0 : index
    %c7_158 = arith.constant 7 : index
    %450 = memref.load %arg14[%c0_157, %c7_158] : memref<2x8xf32, #tpu.memory_space<smem>>
    %451 = vector.extract_strided_slice %381 {offsets = [0, 7], sizes = [128, 1], strides = [1, 1]} : vector<128x16xf32> to vector<128x1xf32>
    %452 = vector.broadcast %450 : f32 to vector<128x1xf32>
    %453 = arith.mulf %452, %451 : vector<128x1xf32>
    %454 = arith.addf %444, %453 : vector<128x1xf32>
    %c0_159 = arith.constant 0 : index
    %c7_160 = arith.constant 7 : index
    %455 = memref.load %arg14[%c0_159, %c7_160] : memref<2x8xf32, #tpu.memory_space<smem>>
    %456 = vector.extract_strided_slice %376 {offsets = [7, 0], sizes = [1, 128], strides = [1, 1]} : vector<16x128xf32> to vector<1x128xf32>
    %457 = vector.broadcast %455 : f32 to vector<1x128xf32>
    %458 = arith.mulf %457, %456 : vector<1x128xf32>
    %459 = arith.addf %449, %458 : vector<1x128xf32>
    %460 = vector.broadcast %454 : vector<128x1xf32> to vector<128x128xf32>
    %461 = arith.addf %2, %460 : vector<128x128xf32>
    %462 = vector.broadcast %459 : vector<1x128xf32> to vector<128x128xf32>
    %463 = arith.addf %461, %462 : vector<128x128xf32>
    %464 = vector.extract_strided_slice %381 {offsets = [0, 0], sizes = [128, 1], strides = [1, 1]} : vector<128x16xf32> to vector<128x1xf32>
    %465 = vector.extract_strided_slice %376 {offsets = [0, 0], sizes = [1, 128], strides = [1, 1]} : vector<16x128xf32> to vector<1x128xf32>
    %466 = vector.broadcast %464 : vector<128x1xf32> to vector<128x128xf32>
    %467 = vector.broadcast %465 : vector<1x128xf32> to vector<128x128xf32>
    %468 = arith.addf %466, %467 : vector<128x128xf32>
    %c0_161 = arith.constant 0 : index
    %c0_162 = arith.constant 0 : index
    %469 = memref.load %arg15[%c0_161, %c0_162] : memref<2x8xf32, #tpu.memory_space<smem>>
    %470 = math.absf %468 : vector<128x128xf32>
    %471 = vector.broadcast %469 : f32 to vector<128x128xf32>
    %472 = arith.mulf %471, %470 : vector<128x128xf32>
    %473 = arith.addf %463, %472 : vector<128x128xf32>
    %474 = vector.extract_strided_slice %381 {offsets = [0, 1], sizes = [128, 1], strides = [1, 1]} : vector<128x16xf32> to vector<128x1xf32>
    %475 = vector.extract_strided_slice %376 {offsets = [1, 0], sizes = [1, 128], strides = [1, 1]} : vector<16x128xf32> to vector<1x128xf32>
    %476 = vector.broadcast %474 : vector<128x1xf32> to vector<128x128xf32>
    %477 = vector.broadcast %475 : vector<1x128xf32> to vector<128x128xf32>
    %478 = arith.addf %476, %477 : vector<128x128xf32>
    %c0_163 = arith.constant 0 : index
    %c1_164 = arith.constant 1 : index
    %479 = memref.load %arg15[%c0_163, %c1_164] : memref<2x8xf32, #tpu.memory_space<smem>>
    %480 = math.absf %478 : vector<128x128xf32>
    %481 = vector.broadcast %479 : f32 to vector<128x128xf32>
    %482 = arith.mulf %481, %480 : vector<128x128xf32>
    %483 = arith.addf %473, %482 : vector<128x128xf32>
    %484 = vector.extract_strided_slice %381 {offsets = [0, 2], sizes = [128, 1], strides = [1, 1]} : vector<128x16xf32> to vector<128x1xf32>
    %485 = vector.extract_strided_slice %376 {offsets = [2, 0], sizes = [1, 128], strides = [1, 1]} : vector<16x128xf32> to vector<1x128xf32>
    %486 = vector.broadcast %484 : vector<128x1xf32> to vector<128x128xf32>
    %487 = vector.broadcast %485 : vector<1x128xf32> to vector<128x128xf32>
    %488 = arith.addf %486, %487 : vector<128x128xf32>
    %c0_165 = arith.constant 0 : index
    %c2_166 = arith.constant 2 : index
    %489 = memref.load %arg15[%c0_165, %c2_166] : memref<2x8xf32, #tpu.memory_space<smem>>
    %490 = math.absf %488 : vector<128x128xf32>
    %491 = vector.broadcast %489 : f32 to vector<128x128xf32>
    %492 = arith.mulf %491, %490 : vector<128x128xf32>
    %493 = arith.addf %483, %492 : vector<128x128xf32>
    %494 = vector.extract_strided_slice %381 {offsets = [0, 3], sizes = [128, 1], strides = [1, 1]} : vector<128x16xf32> to vector<128x1xf32>
    %495 = vector.extract_strided_slice %376 {offsets = [3, 0], sizes = [1, 128], strides = [1, 1]} : vector<16x128xf32> to vector<1x128xf32>
    %496 = vector.broadcast %494 : vector<128x1xf32> to vector<128x128xf32>
    %497 = vector.broadcast %495 : vector<1x128xf32> to vector<128x128xf32>
    %498 = arith.addf %496, %497 : vector<128x128xf32>
    %c0_167 = arith.constant 0 : index
    %c3_168 = arith.constant 3 : index
    %499 = memref.load %arg15[%c0_167, %c3_168] : memref<2x8xf32, #tpu.memory_space<smem>>
    %500 = math.absf %498 : vector<128x128xf32>
    %501 = vector.broadcast %499 : f32 to vector<128x128xf32>
    %502 = arith.mulf %501, %500 : vector<128x128xf32>
    %503 = arith.addf %493, %502 : vector<128x128xf32>
    %504 = vector.extract_strided_slice %381 {offsets = [0, 4], sizes = [128, 1], strides = [1, 1]} : vector<128x16xf32> to vector<128x1xf32>
    %505 = vector.extract_strided_slice %376 {offsets = [4, 0], sizes = [1, 128], strides = [1, 1]} : vector<16x128xf32> to vector<1x128xf32>
    %506 = vector.broadcast %504 : vector<128x1xf32> to vector<128x128xf32>
    %507 = vector.broadcast %505 : vector<1x128xf32> to vector<128x128xf32>
    %508 = arith.addf %506, %507 : vector<128x128xf32>
    %c0_169 = arith.constant 0 : index
    %c4_170 = arith.constant 4 : index
    %509 = memref.load %arg15[%c0_169, %c4_170] : memref<2x8xf32, #tpu.memory_space<smem>>
    %510 = math.absf %508 : vector<128x128xf32>
    %511 = vector.broadcast %509 : f32 to vector<128x128xf32>
    %512 = arith.mulf %511, %510 : vector<128x128xf32>
    %513 = arith.addf %503, %512 : vector<128x128xf32>
    %514 = vector.extract_strided_slice %381 {offsets = [0, 5], sizes = [128, 1], strides = [1, 1]} : vector<128x16xf32> to vector<128x1xf32>
    %515 = vector.extract_strided_slice %376 {offsets = [5, 0], sizes = [1, 128], strides = [1, 1]} : vector<16x128xf32> to vector<1x128xf32>
    %516 = vector.broadcast %514 : vector<128x1xf32> to vector<128x128xf32>
    %517 = vector.broadcast %515 : vector<1x128xf32> to vector<128x128xf32>
    %518 = arith.addf %516, %517 : vector<128x128xf32>
    %c0_171 = arith.constant 0 : index
    %c5_172 = arith.constant 5 : index
    %519 = memref.load %arg15[%c0_171, %c5_172] : memref<2x8xf32, #tpu.memory_space<smem>>
    %520 = math.absf %518 : vector<128x128xf32>
    %521 = vector.broadcast %519 : f32 to vector<128x128xf32>
    %522 = arith.mulf %521, %520 : vector<128x128xf32>
    %523 = arith.addf %513, %522 : vector<128x128xf32>
    %524 = vector.extract_strided_slice %381 {offsets = [0, 6], sizes = [128, 1], strides = [1, 1]} : vector<128x16xf32> to vector<128x1xf32>
    %525 = vector.extract_strided_slice %376 {offsets = [6, 0], sizes = [1, 128], strides = [1, 1]} : vector<16x128xf32> to vector<1x128xf32>
    %526 = vector.broadcast %524 : vector<128x1xf32> to vector<128x128xf32>
    %527 = vector.broadcast %525 : vector<1x128xf32> to vector<128x128xf32>
    %528 = arith.addf %526, %527 : vector<128x128xf32>
    %c0_173 = arith.constant 0 : index
    %c6_174 = arith.constant 6 : index
    %529 = memref.load %arg15[%c0_173, %c6_174] : memref<2x8xf32, #tpu.memory_space<smem>>
    %530 = math.absf %528 : vector<128x128xf32>
    %531 = vector.broadcast %529 : f32 to vector<128x128xf32>
    %532 = arith.mulf %531, %530 : vector<128x128xf32>
    %533 = arith.addf %523, %532 : vector<128x128xf32>
    %534 = vector.extract_strided_slice %381 {offsets = [0, 7], sizes = [128, 1], strides = [1, 1]} : vector<128x16xf32> to vector<128x1xf32>
    %535 = vector.extract_strided_slice %376 {offsets = [7, 0], sizes = [1, 128], strides = [1, 1]} : vector<16x128xf32> to vector<1x128xf32>
    %536 = vector.broadcast %534 : vector<128x1xf32> to vector<128x128xf32>
    %537 = vector.broadcast %535 : vector<1x128xf32> to vector<128x128xf32>
    %538 = arith.addf %536, %537 : vector<128x128xf32>
    %c0_175 = arith.constant 0 : index
    %c7_176 = arith.constant 7 : index
    %539 = memref.load %arg15[%c0_175, %c7_176] : memref<2x8xf32, #tpu.memory_space<smem>>
    %540 = math.absf %538 : vector<128x128xf32>
    %541 = vector.broadcast %539 : f32 to vector<128x128xf32>
    %542 = arith.mulf %541, %540 : vector<128x128xf32>
    %543 = arith.addf %533, %542 : vector<128x128xf32>
    %cst_177 = arith.constant dense<0xFF800000> : vector<128xf32>
    %544 = vector.multi_reduction <maximumf>, %543, %cst_177 [1] : vector<128x128xf32> to vector<128xf32>
    %545 = vector.shape_cast %544 : vector<128xf32> to vector<128x1xf32>
    %546 = vector.broadcast %545 : vector<128x1xf32> to vector<128x128xf32>
    %547 = arith.subf %543, %546 : vector<128x128xf32>
    %548 = math.exp %547 : vector<128x128xf32>
    %cst_178 = arith.constant dense<0.000000e+00> : vector<128xf32>
    %549 = vector.multi_reduction <add>, %548, %cst_178 [1] : vector<128x128xf32> to vector<128xf32>
    %550 = vector.shape_cast %549 : vector<128xf32> to vector<128x1xf32>
    %cst_179 = arith.constant 1.000000e+00 : f32
    %551 = vector.broadcast %cst_179 : f32 to vector<128x1xf32>
    %552 = arith.divf %551, %550 : vector<128x1xf32>
    %553 = vector.extract_strided_slice %376 {offsets = [0, 0], sizes = [8, 128], strides = [1, 1]} : vector<16x128xf32> to vector<8x128xf32>
    %554 = vector.broadcast %552 : vector<128x1xf32> to vector<128x128xf32>
    %555 = arith.mulf %548, %554 : vector<128x128xf32>
    %cst_180 = arith.constant dense<0.000000e+00> : vector<8x128xf32>
    %556 = tpu.matmul %553, %555, %cst_180 {dimension_numbers = #tpu.dot_dimension_numbers<[1], [1], [0], [0], [0, 0, 1, 0], [], []>} : vector<8x128xf32>, vector<128x128xf32>, vector<8x128xf32> -> vector<8x128xf32>
    %c0_181 = arith.constant 0 : index
    %c0_182 = arith.constant 0 : index
    %557 = vector.load %arg16[%c0_181, %c0_182] : memref<16x1xf32, #tpu.memory_space<vmem>>, vector<8x1xf32>
    %558 = vector.broadcast %557 : vector<8x1xf32> to vector<8x128xf32>
    %559 = arith.addf %556, %558 : vector<8x128xf32>
    %c0_183 = arith.constant 0 : index
    %c0_184 = arith.constant 0 : index
    %c0_185 = arith.constant 0 : index
    %560 = vector.load %arg17[%c0_183, %c0_184, %c0_185] : memref<1x16x128xf32, #tpu.memory_space<vmem>>, vector<1x8x128xf32>
    %561 = vector.shape_cast %560 : vector<1x8x128xf32> to vector<8x128xf32>
    %562 = vector.shape_cast %559 : vector<8x128xf32> to vector<1x8x128xf32>
    tpu.vector_store %arg17[%c0_183, %c0_184, %c0_185], %562 {strides = array<i32>} : memref<1x16x128xf32, #tpu.memory_space<vmem>>, vector<1x8x128xf32>,
    %c1_186 = arith.constant 1 : index
    %c0_187 = arith.constant 0 : index
    %563 = memref.load %arg14[%c1_186, %c0_187] : memref<2x8xf32, #tpu.memory_space<smem>>
    %564 = vector.extract_strided_slice %381 {offsets = [0, 8], sizes = [128, 1], strides = [1, 1]} : vector<128x16xf32> to vector<128x1xf32>
    %565 = vector.broadcast %563 : f32 to vector<128x1xf32>
    %566 = arith.mulf %565, %564 : vector<128x1xf32>
    %c1_188 = arith.constant 1 : index
    %c0_189 = arith.constant 0 : index
    %567 = memref.load %arg14[%c1_188, %c0_189] : memref<2x8xf32, #tpu.memory_space<smem>>
    %568 = vector.extract_strided_slice %376 {offsets = [8, 0], sizes = [1, 128], strides = [1, 1]} : vector<16x128xf32> to vector<1x128xf32>
    %569 = vector.broadcast %567 : f32 to vector<1x128xf32>
    %570 = arith.mulf %569, %568 : vector<1x128xf32>
    %c1_190 = arith.constant 1 : index
    %c1_191 = arith.constant 1 : index
    %571 = memref.load %arg14[%c1_190, %c1_191] : memref<2x8xf32, #tpu.memory_space<smem>>
    %572 = vector.extract_strided_slice %381 {offsets = [0, 9], sizes = [128, 1], strides = [1, 1]} : vector<128x16xf32> to vector<128x1xf32>
    %573 = vector.broadcast %571 : f32 to vector<128x1xf32>
    %574 = arith.mulf %573, %572 : vector<128x1xf32>
    %575 = arith.addf %566, %574 : vector<128x1xf32>
    %c1_192 = arith.constant 1 : index
    %c1_193 = arith.constant 1 : index
    %576 = memref.load %arg14[%c1_192, %c1_193] : memref<2x8xf32, #tpu.memory_space<smem>>
    %577 = vector.extract_strided_slice %376 {offsets = [9, 0], sizes = [1, 128], strides = [1, 1]} : vector<16x128xf32> to vector<1x128xf32>
    %578 = vector.broadcast %576 : f32 to vector<1x128xf32>
    %579 = arith.mulf %578, %577 : vector<1x128xf32>
    %580 = arith.addf %570, %579 : vector<1x128xf32>
    %c1_194 = arith.constant 1 : index
    %c2_195 = arith.constant 2 : index
    %581 = memref.load %arg14[%c1_194, %c2_195] : memref<2x8xf32, #tpu.memory_space<smem>>
    %582 = vector.extract_strided_slice %381 {offsets = [0, 10], sizes = [128, 1], strides = [1, 1]} : vector<128x16xf32> to vector<128x1xf32>
    %583 = vector.broadcast %581 : f32 to vector<128x1xf32>
    %584 = arith.mulf %583, %582 : vector<128x1xf32>
    %585 = arith.addf %575, %584 : vector<128x1xf32>
    %c1_196 = arith.constant 1 : index
    %c2_197 = arith.constant 2 : index
    %586 = memref.load %arg14[%c1_196, %c2_197] : memref<2x8xf32, #tpu.memory_space<smem>>
    %587 = vector.extract_strided_slice %376 {offsets = [10, 0], sizes = [1, 128], strides = [1, 1]} : vector<16x128xf32> to vector<1x128xf32>
    %588 = vector.broadcast %586 : f32 to vector<1x128xf32>
    %589 = arith.mulf %588, %587 : vector<1x128xf32>
    %590 = arith.addf %580, %589 : vector<1x128xf32>
    %c1_198 = arith.constant 1 : index
    %c3_199 = arith.constant 3 : index
    %591 = memref.load %arg14[%c1_198, %c3_199] : memref<2x8xf32, #tpu.memory_space<smem>>
    %592 = vector.extract_strided_slice %381 {offsets = [0, 11], sizes = [128, 1], strides = [1, 1]} : vector<128x16xf32> to vector<128x1xf32>
    %593 = vector.broadcast %591 : f32 to vector<128x1xf32>
    %594 = arith.mulf %593, %592 : vector<128x1xf32>
    %595 = arith.addf %585, %594 : vector<128x1xf32>
    %c1_200 = arith.constant 1 : index
    %c3_201 = arith.constant 3 : index
    %596 = memref.load %arg14[%c1_200, %c3_201] : memref<2x8xf32, #tpu.memory_space<smem>>
    %597 = vector.extract_strided_slice %376 {offsets = [11, 0], sizes = [1, 128], strides = [1, 1]} : vector<16x128xf32> to vector<1x128xf32>
    %598 = vector.broadcast %596 : f32 to vector<1x128xf32>
    %599 = arith.mulf %598, %597 : vector<1x128xf32>
    %600 = arith.addf %590, %599 : vector<1x128xf32>
    %c1_202 = arith.constant 1 : index
    %c4_203 = arith.constant 4 : index
    %601 = memref.load %arg14[%c1_202, %c4_203] : memref<2x8xf32, #tpu.memory_space<smem>>
    %602 = vector.extract_strided_slice %381 {offsets = [0, 12], sizes = [128, 1], strides = [1, 1]} : vector<128x16xf32> to vector<128x1xf32>
    %603 = vector.broadcast %601 : f32 to vector<128x1xf32>
    %604 = arith.mulf %603, %602 : vector<128x1xf32>
    %605 = arith.addf %595, %604 : vector<128x1xf32>
    %c1_204 = arith.constant 1 : index
    %c4_205 = arith.constant 4 : index
    %606 = memref.load %arg14[%c1_204, %c4_205] : memref<2x8xf32, #tpu.memory_space<smem>>
    %607 = vector.extract_strided_slice %376 {offsets = [12, 0], sizes = [1, 128], strides = [1, 1]} : vector<16x128xf32> to vector<1x128xf32>
    %608 = vector.broadcast %606 : f32 to vector<1x128xf32>
    %609 = arith.mulf %608, %607 : vector<1x128xf32>
    %610 = arith.addf %600, %609 : vector<1x128xf32>
    %c1_206 = arith.constant 1 : index
    %c5_207 = arith.constant 5 : index
    %611 = memref.load %arg14[%c1_206, %c5_207] : memref<2x8xf32, #tpu.memory_space<smem>>
    %612 = vector.extract_strided_slice %381 {offsets = [0, 13], sizes = [128, 1], strides = [1, 1]} : vector<128x16xf32> to vector<128x1xf32>
    %613 = vector.broadcast %611 : f32 to vector<128x1xf32>
    %614 = arith.mulf %613, %612 : vector<128x1xf32>
    %615 = arith.addf %605, %614 : vector<128x1xf32>
    %c1_208 = arith.constant 1 : index
    %c5_209 = arith.constant 5 : index
    %616 = memref.load %arg14[%c1_208, %c5_209] : memref<2x8xf32, #tpu.memory_space<smem>>
    %617 = vector.extract_strided_slice %376 {offsets = [13, 0], sizes = [1, 128], strides = [1, 1]} : vector<16x128xf32> to vector<1x128xf32>
    %618 = vector.broadcast %616 : f32 to vector<1x128xf32>
    %619 = arith.mulf %618, %617 : vector<1x128xf32>
    %620 = arith.addf %610, %619 : vector<1x128xf32>
    %c1_210 = arith.constant 1 : index
    %c6_211 = arith.constant 6 : index
    %621 = memref.load %arg14[%c1_210, %c6_211] : memref<2x8xf32, #tpu.memory_space<smem>>
    %622 = vector.extract_strided_slice %381 {offsets = [0, 14], sizes = [128, 1], strides = [1, 1]} : vector<128x16xf32> to vector<128x1xf32>
    %623 = vector.broadcast %621 : f32 to vector<128x1xf32>
    %624 = arith.mulf %623, %622 : vector<128x1xf32>
    %625 = arith.addf %615, %624 : vector<128x1xf32>
    %c1_212 = arith.constant 1 : index
    %c6_213 = arith.constant 6 : index
    %626 = memref.load %arg14[%c1_212, %c6_213] : memref<2x8xf32, #tpu.memory_space<smem>>
    %627 = vector.extract_strided_slice %376 {offsets = [14, 0], sizes = [1, 128], strides = [1, 1]} : vector<16x128xf32> to vector<1x128xf32>
    %628 = vector.broadcast %626 : f32 to vector<1x128xf32>
    %629 = arith.mulf %628, %627 : vector<1x128xf32>
    %630 = arith.addf %620, %629 : vector<1x128xf32>
    %c1_214 = arith.constant 1 : index
    %c7_215 = arith.constant 7 : index
    %631 = memref.load %arg14[%c1_214, %c7_215] : memref<2x8xf32, #tpu.memory_space<smem>>
    %632 = vector.extract_strided_slice %381 {offsets = [0, 15], sizes = [128, 1], strides = [1, 1]} : vector<128x16xf32> to vector<128x1xf32>
    %633 = vector.broadcast %631 : f32 to vector<128x1xf32>
    %634 = arith.mulf %633, %632 : vector<128x1xf32>
    %635 = arith.addf %625, %634 : vector<128x1xf32>
    %c1_216 = arith.constant 1 : index
    %c7_217 = arith.constant 7 : index
    %636 = memref.load %arg14[%c1_216, %c7_217] : memref<2x8xf32, #tpu.memory_space<smem>>
    %637 = vector.extract_strided_slice %376 {offsets = [15, 0], sizes = [1, 128], strides = [1, 1]} : vector<16x128xf32> to vector<1x128xf32>
    %638 = vector.broadcast %636 : f32 to vector<1x128xf32>
    %639 = arith.mulf %638, %637 : vector<1x128xf32>
    %640 = arith.addf %630, %639 : vector<1x128xf32>
    %641 = vector.broadcast %635 : vector<128x1xf32> to vector<128x128xf32>
    %642 = arith.addf %2, %641 : vector<128x128xf32>
    %643 = vector.broadcast %640 : vector<1x128xf32> to vector<128x128xf32>
    %644 = arith.addf %642, %643 : vector<128x128xf32>
    %645 = vector.extract_strided_slice %381 {offsets = [0, 8], sizes = [128, 1], strides = [1, 1]} : vector<128x16xf32> to vector<128x1xf32>
    %646 = vector.extract_strided_slice %376 {offsets = [8, 0], sizes = [1, 128], strides = [1, 1]} : vector<16x128xf32> to vector<1x128xf32>
    %647 = vector.broadcast %645 : vector<128x1xf32> to vector<128x128xf32>
    %648 = vector.broadcast %646 : vector<1x128xf32> to vector<128x128xf32>
    %649 = arith.addf %647, %648 : vector<128x128xf32>
    %c1_218 = arith.constant 1 : index
    %c0_219 = arith.constant 0 : index
    %650 = memref.load %arg15[%c1_218, %c0_219] : memref<2x8xf32, #tpu.memory_space<smem>>
    %651 = math.absf %649 : vector<128x128xf32>
    %652 = vector.broadcast %650 : f32 to vector<128x128xf32>
    %653 = arith.mulf %652, %651 : vector<128x128xf32>
    %654 = arith.addf %644, %653 : vector<128x128xf32>
    %655 = vector.extract_strided_slice %381 {offsets = [0, 9], sizes = [128, 1], strides = [1, 1]} : vector<128x16xf32> to vector<128x1xf32>
    %656 = vector.extract_strided_slice %376 {offsets = [9, 0], sizes = [1, 128], strides = [1, 1]} : vector<16x128xf32> to vector<1x128xf32>
    %657 = vector.broadcast %655 : vector<128x1xf32> to vector<128x128xf32>
    %658 = vector.broadcast %656 : vector<1x128xf32> to vector<128x128xf32>
    %659 = arith.addf %657, %658 : vector<128x128xf32>
    %c1_220 = arith.constant 1 : index
    %c1_221 = arith.constant 1 : index
    %660 = memref.load %arg15[%c1_220, %c1_221] : memref<2x8xf32, #tpu.memory_space<smem>>
    %661 = math.absf %659 : vector<128x128xf32>
    %662 = vector.broadcast %660 : f32 to vector<128x128xf32>
    %663 = arith.mulf %662, %661 : vector<128x128xf32>
    %664 = arith.addf %654, %663 : vector<128x128xf32>
    %665 = vector.extract_strided_slice %381 {offsets = [0, 10], sizes = [128, 1], strides = [1, 1]} : vector<128x16xf32> to vector<128x1xf32>
    %666 = vector.extract_strided_slice %376 {offsets = [10, 0], sizes = [1, 128], strides = [1, 1]} : vector<16x128xf32> to vector<1x128xf32>
    %667 = vector.broadcast %665 : vector<128x1xf32> to vector<128x128xf32>
    %668 = vector.broadcast %666 : vector<1x128xf32> to vector<128x128xf32>
    %669 = arith.addf %667, %668 : vector<128x128xf32>
    %c1_222 = arith.constant 1 : index
    %c2_223 = arith.constant 2 : index
    %670 = memref.load %arg15[%c1_222, %c2_223] : memref<2x8xf32, #tpu.memory_space<smem>>
    %671 = math.absf %669 : vector<128x128xf32>
    %672 = vector.broadcast %670 : f32 to vector<128x128xf32>
    %673 = arith.mulf %672, %671 : vector<128x128xf32>
    %674 = arith.addf %664, %673 : vector<128x128xf32>
    %675 = vector.extract_strided_slice %381 {offsets = [0, 11], sizes = [128, 1], strides = [1, 1]} : vector<128x16xf32> to vector<128x1xf32>
    %676 = vector.extract_strided_slice %376 {offsets = [11, 0], sizes = [1, 128], strides = [1, 1]} : vector<16x128xf32> to vector<1x128xf32>
    %677 = vector.broadcast %675 : vector<128x1xf32> to vector<128x128xf32>
    %678 = vector.broadcast %676 : vector<1x128xf32> to vector<128x128xf32>
    %679 = arith.addf %677, %678 : vector<128x128xf32>
    %c1_224 = arith.constant 1 : index
    %c3_225 = arith.constant 3 : index
    %680 = memref.load %arg15[%c1_224, %c3_225] : memref<2x8xf32, #tpu.memory_space<smem>>
    %681 = math.absf %679 : vector<128x128xf32>
    %682 = vector.broadcast %680 : f32 to vector<128x128xf32>
    %683 = arith.mulf %682, %681 : vector<128x128xf32>
    %684 = arith.addf %674, %683 : vector<128x128xf32>
    %685 = vector.extract_strided_slice %381 {offsets = [0, 12], sizes = [128, 1], strides = [1, 1]} : vector<128x16xf32> to vector<128x1xf32>
    %686 = vector.extract_strided_slice %376 {offsets = [12, 0], sizes = [1, 128], strides = [1, 1]} : vector<16x128xf32> to vector<1x128xf32>
    %687 = vector.broadcast %685 : vector<128x1xf32> to vector<128x128xf32>
    %688 = vector.broadcast %686 : vector<1x128xf32> to vector<128x128xf32>
    %689 = arith.addf %687, %688 : vector<128x128xf32>
    %c1_226 = arith.constant 1 : index
    %c4_227 = arith.constant 4 : index
    %690 = memref.load %arg15[%c1_226, %c4_227] : memref<2x8xf32, #tpu.memory_space<smem>>
    %691 = math.absf %689 : vector<128x128xf32>
    %692 = vector.broadcast %690 : f32 to vector<128x128xf32>
    %693 = arith.mulf %692, %691 : vector<128x128xf32>
    %694 = arith.addf %684, %693 : vector<128x128xf32>
    %695 = vector.extract_strided_slice %381 {offsets = [0, 13], sizes = [128, 1], strides = [1, 1]} : vector<128x16xf32> to vector<128x1xf32>
    %696 = vector.extract_strided_slice %376 {offsets = [13, 0], sizes = [1, 128], strides = [1, 1]} : vector<16x128xf32> to vector<1x128xf32>
    %697 = vector.broadcast %695 : vector<128x1xf32> to vector<128x128xf32>
    %698 = vector.broadcast %696 : vector<1x128xf32> to vector<128x128xf32>
    %699 = arith.addf %697, %698 : vector<128x128xf32>
    %c1_228 = arith.constant 1 : index
    %c5_229 = arith.constant 5 : index
    %700 = memref.load %arg15[%c1_228, %c5_229] : memref<2x8xf32, #tpu.memory_space<smem>>
    %701 = math.absf %699 : vector<128x128xf32>
    %702 = vector.broadcast %700 : f32 to vector<128x128xf32>
    %703 = arith.mulf %702, %701 : vector<128x128xf32>
    %704 = arith.addf %694, %703 : vector<128x128xf32>
    %705 = vector.extract_strided_slice %381 {offsets = [0, 14], sizes = [128, 1], strides = [1, 1]} : vector<128x16xf32> to vector<128x1xf32>
    %706 = vector.extract_strided_slice %376 {offsets = [14, 0], sizes = [1, 128], strides = [1, 1]} : vector<16x128xf32> to vector<1x128xf32>
    %707 = vector.broadcast %705 : vector<128x1xf32> to vector<128x128xf32>
    %708 = vector.broadcast %706 : vector<1x128xf32> to vector<128x128xf32>
    %709 = arith.addf %707, %708 : vector<128x128xf32>
    %c1_230 = arith.constant 1 : index
    %c6_231 = arith.constant 6 : index
    %710 = memref.load %arg15[%c1_230, %c6_231] : memref<2x8xf32, #tpu.memory_space<smem>>
    %711 = math.absf %709 : vector<128x128xf32>
    %712 = vector.broadcast %710 : f32 to vector<128x128xf32>
    %713 = arith.mulf %712, %711 : vector<128x128xf32>
    %714 = arith.addf %704, %713 : vector<128x128xf32>
    %715 = vector.extract_strided_slice %381 {offsets = [0, 15], sizes = [128, 1], strides = [1, 1]} : vector<128x16xf32> to vector<128x1xf32>
    %716 = vector.extract_strided_slice %376 {offsets = [15, 0], sizes = [1, 128], strides = [1, 1]} : vector<16x128xf32> to vector<1x128xf32>
    %717 = vector.broadcast %715 : vector<128x1xf32> to vector<128x128xf32>
    %718 = vector.broadcast %716 : vector<1x128xf32> to vector<128x128xf32>
    %719 = arith.addf %717, %718 : vector<128x128xf32>
    %c1_232 = arith.constant 1 : index
    %c7_233 = arith.constant 7 : index
    %720 = memref.load %arg15[%c1_232, %c7_233] : memref<2x8xf32, #tpu.memory_space<smem>>
    %721 = math.absf %719 : vector<128x128xf32>
    %722 = vector.broadcast %720 : f32 to vector<128x128xf32>
    %723 = arith.mulf %722, %721 : vector<128x128xf32>
    %724 = arith.addf %714, %723 : vector<128x128xf32>
    %cst_234 = arith.constant dense<0xFF800000> : vector<128xf32>
    %725 = vector.multi_reduction <maximumf>, %724, %cst_234 [1] : vector<128x128xf32> to vector<128xf32>
    %726 = vector.shape_cast %725 : vector<128xf32> to vector<128x1xf32>
    %727 = vector.broadcast %726 : vector<128x1xf32> to vector<128x128xf32>
    %728 = arith.subf %724, %727 : vector<128x128xf32>
    %729 = math.exp %728 : vector<128x128xf32>
    %cst_235 = arith.constant dense<0.000000e+00> : vector<128xf32>
    %730 = vector.multi_reduction <add>, %729, %cst_235 [1] : vector<128x128xf32> to vector<128xf32>
    %731 = vector.shape_cast %730 : vector<128xf32> to vector<128x1xf32>
    %cst_236 = arith.constant 1.000000e+00 : f32
    %732 = vector.broadcast %cst_236 : f32 to vector<128x1xf32>
    %733 = arith.divf %732, %731 : vector<128x1xf32>
    %734 = vector.extract_strided_slice %376 {offsets = [8, 0], sizes = [8, 128], strides = [1, 1]} : vector<16x128xf32> to vector<8x128xf32>
    %735 = vector.broadcast %733 : vector<128x1xf32> to vector<128x128xf32>
    %736 = arith.mulf %729, %735 : vector<128x128xf32>
    %cst_237 = arith.constant dense<0.000000e+00> : vector<8x128xf32>
    %737 = tpu.matmul %734, %736, %cst_237 {dimension_numbers = #tpu.dot_dimension_numbers<[1], [1], [0], [0], [0, 0, 1, 0], [], []>} : vector<8x128xf32>, vector<128x128xf32>, vector<8x128xf32> -> vector<8x128xf32>
    %c8_238 = arith.constant 8 : index
    %c0_239 = arith.constant 0 : index
    %738 = vector.load %arg16[%c8_238, %c0_239] : memref<16x1xf32, #tpu.memory_space<vmem>>, vector<8x1xf32>
    %739 = vector.broadcast %738 : vector<8x1xf32> to vector<8x128xf32>
    %740 = arith.addf %737, %739 : vector<8x128xf32>
    %c0_240 = arith.constant 0 : index
    %c8_241 = arith.constant 8 : index
    %c0_242 = arith.constant 0 : index
    %741 = vector.load %arg17[%c0_240, %c8_241, %c0_242] : memref<1x16x128xf32, #tpu.memory_space<vmem>>, vector<1x8x128xf32>
    %742 = vector.shape_cast %741 : vector<1x8x128xf32> to vector<8x128xf32>
    %743 = vector.shape_cast %740 : vector<8x128xf32> to vector<1x8x128xf32>
    tpu.vector_store %arg17[%c0_240, %c8_241, %c0_242], %743 {strides = array<i32>} : memref<1x16x128xf32, #tpu.memory_space<vmem>>, vector<1x8x128xf32>,
    return
  }
  func.func @transform_0(%arg0: i32) -> (i32, i32, i32) {
    %c0_i32 = arith.constant 0 : i32
    %c0_i32_0 = arith.constant 0 : i32
    %c0_i32_1 = arith.constant 0 : i32
    return %arg0, %c0_i32, %c0_i32_0 : i32, i32, i32
  }
  func.func @transform_1(%arg0: i32) -> (i32, i32) {
    %c0_i32 = arith.constant 0 : i32
    %c0_i32_0 = arith.constant 0 : i32
    %c0_i32_1 = arith.constant 0 : i32
    return %c0_i32, %c0_i32_0 : i32, i32
  }
  func.func @transform_2(%arg0: i32) -> (i32, i32) {
    %c0_i32 = arith.constant 0 : i32
    %c0_i32_0 = arith.constant 0 : i32
    %c0_i32_1 = arith.constant 0 : i32
    return %c0_i32, %c0_i32_0 : i32, i32
  }
  func.func @transform_3(%arg0: i32) -> (i32, i32) {
    %c0_i32 = arith.constant 0 : i32
    %c0_i32_0 = arith.constant 0 : i32
    %c0_i32_1 = arith.constant 0 : i32
    return %c0_i32, %c0_i32_0 : i32, i32
  }
  func.func @transform_4(%arg0: i32) -> (i32, i32) {
    %c0_i32 = arith.constant 0 : i32
    %c0_i32_0 = arith.constant 0 : i32
    %c0_i32_1 = arith.constant 0 : i32
    return %c0_i32, %c0_i32_0 : i32, i32
  }
  func.func @transform_5(%arg0: i32) -> (i32, i32) {
    %c0_i32 = arith.constant 0 : i32
    %c0_i32_0 = arith.constant 0 : i32
    %c0_i32_1 = arith.constant 0 : i32
    return %c0_i32, %c0_i32_0 : i32, i32
  }
  func.func @transform_6(%arg0: i32) -> (i32, i32) {
    %c0_i32 = arith.constant 0 : i32
    %c0_i32_0 = arith.constant 0 : i32
    %c0_i32_1 = arith.constant 0 : i32
    return %c0_i32, %c0_i32_0 : i32, i32
  }
  func.func @transform_7(%arg0: i32) -> (i32, i32) {
    %c0_i32 = arith.constant 0 : i32
    %c0_i32_0 = arith.constant 0 : i32
    %c0_i32_1 = arith.constant 0 : i32
    return %c0_i32, %c0_i32_0 : i32, i32
  }
  func.func @transform_8(%arg0: i32) -> (i32, i32) {
    %c0_i32 = arith.constant 0 : i32
    %c0_i32_0 = arith.constant 0 : i32
    %c0_i32_1 = arith.constant 0 : i32
    return %c0_i32, %c0_i32_0 : i32, i32
  }
  func.func @transform_9(%arg0: i32) -> (i32, i32) {
    %c0_i32 = arith.constant 0 : i32
    %c0_i32_0 = arith.constant 0 : i32
    %c0_i32_1 = arith.constant 0 : i32
    return %c0_i32, %c0_i32_0 : i32, i32
  }
  func.func @transform_10(%arg0: i32) -> (i32, i32) {
    %c0_i32 = arith.constant 0 : i32
    %c0_i32_0 = arith.constant 0 : i32
    %c0_i32_1 = arith.constant 0 : i32
    return %c0_i32, %c0_i32_0 : i32, i32
  }
  func.func @transform_11(%arg0: i32) -> (i32, i32) {
    %c0_i32 = arith.constant 0 : i32
    %c0_i32_0 = arith.constant 0 : i32
    %c0_i32_1 = arith.constant 0 : i32
    return %c0_i32, %c0_i32_0 : i32, i32
  }
  func.func @transform_12(%arg0: i32) -> (i32, i32) {
    %c0_i32 = arith.constant 0 : i32
    %c0_i32_0 = arith.constant 0 : i32
    %c0_i32_1 = arith.constant 0 : i32
    return %c0_i32, %c0_i32_0 : i32, i32
  }
  func.func @transform_13(%arg0: i32) -> (i32, i32) {
    %c0_i32 = arith.constant 0 : i32
    %c0_i32_0 = arith.constant 0 : i32
    %c0_i32_1 = arith.constant 0 : i32
    return %c0_i32, %c0_i32_0 : i32, i32
  }
  func.func @transform_14(%arg0: i32) -> (i32, i32) {
    %c0_i32 = arith.constant 0 : i32
    %c0_i32_0 = arith.constant 0 : i32
    %c0_i32_1 = arith.constant 0 : i32
    return %c0_i32, %c0_i32_0 : i32, i32
  }
  func.func @transform_15(%arg0: i32) -> (i32, i32) {
    %c0_i32 = arith.constant 0 : i32
    %c0_i32_0 = arith.constant 0 : i32
    %c0_i32_1 = arith.constant 0 : i32
    return %c0_i32, %c0_i32_0 : i32, i32
  }
  func.func @transform_16(%arg0: i32) -> (i32, i32, i32) {
    %c0_i32 = arith.constant 0 : i32
    %c0_i32_0 = arith.constant 0 : i32
    %c0_i32_1 = arith.constant 0 : i32
    return %arg0, %c0_i32, %c0_i32_0 : i32, i32, i32
  }
}

</mosaic_0001>

<llo_original>
// kernel: tpu_custom_call.1
$region0: #{tpu_custom_call.1}
  #allocation0 [shape = 'u32[]', space=smem, size = 0x4, offset = 0x4, fixed_abs, tag = 'smem constant byte address 0x4 - core index']
  #allocation1 [shape = 'u32[144,128]{1,0:T(1,128)}', space=vmem, size = 0x12000, scoped, tag = 'internal scratch']
  #allocation2 [shape = 'f32[128,16]{1,0:T(8,128)}', space=vmem, size = 0x10000, scoped, tag = 'scratch operand']
  %s0 = inlined_call_operand.vmem [shape: f32[2,128,4], index: 0, kind: input, shape index: {}]
  %s1 = inlined_call_operand.vmem [shape: f32[128,128], index: 1, kind: input, shape index: {}]
  %s2 = inlined_call_operand.vmem [shape: f32[16,4], index: 2, kind: input, shape index: {}]
  %s3 = inlined_call_operand.vmem [shape: f32[4,16], index: 3, kind: input, shape index: {}]
  %s4 = inlined_call_operand.vmem [shape: f32[16,1], index: 4, kind: input, shape index: {}]
  %s5 = inlined_call_operand.vmem [shape: f32[1,16], index: 5, kind: input, shape index: {}]
  %s6 = inlined_call_operand.vmem [shape: f32[2,8], index: 6, kind: input, shape index: {}]
  %s7 = inlined_call_operand.vmem [shape: f32[2,8], index: 7, kind: input, shape index: {}]
  %s8 = inlined_call_operand.vmem [shape: f32[1,16], index: 8, kind: input, shape index: {}]
  %s9 = inlined_call_operand.vmem [shape: f32[16,16], index: 9, kind: input, shape index: {}]
  %s10 = inlined_call_operand.vmem [shape: f32[16,16], index: 10, kind: input, shape index: {}]
  %s11 = inlined_call_operand.vmem [shape: f32[16,1], index: 11, kind: input, shape index: {}]
  %s12 = inlined_call_operand.vmem [shape: f32[1,16], index: 12, kind: input, shape index: {}]
  %s13 = inlined_call_operand.vmem [shape: f32[2,8], index: 13, kind: input, shape index: {}]
  %s14 = inlined_call_operand.vmem [shape: f32[2,8], index: 14, kind: input, shape index: {}]
  %s15 = inlined_call_operand.vmem [shape: f32[16,1], index: 15, kind: input, shape index: {}]
  %s16 = inlined_call_operand.hbm [shape: f32[2,16,128], index: 16, kind: output, shape index: {}]
  %s17 = sld [smem:[#allocation0]]
  $region113: #{tpu_custom_call.1} parent=0
    _
  %s19 = ssub.s32 1, %s17
  %s20 = scalar_select 0, %s19, %s17
  $region1: #{tpu_custom_call.1} parent=0
    #allocation3 [shape = 'u8[1024]{0}', space=smem, size = 0x400, scoped, tag = 'input window, operand 6, single buffered']
    #allocation4 [shape = 's32[2]{0}', space=sflag, size = 0x8, scoped, tag = 'scoped memory for tpu_custom_call.1']
    #allocation5 [shape = 's32[2]{0}', space=sflag, size = 0x8, scoped, tag = 'scoped memory for tpu_custom_call.1']
    #allocation6 [shape = 'u8[1024]{0}', space=smem, size = 0x400, scoped, tag = 'input window, operand 7, single buffered']
    #allocation7 [shape = 's32[1]{0}', space=sflag, size = 0x4, scoped, tag = 'scoped memory for tpu_custom_call.1']
    #allocation8 [shape = 'u8[1024]{0}', space=smem, size = 0x400, scoped, tag = 'input window, operand 13, single buffered']
    #allocation9 [shape = 'u8[1024]{0}', space=smem, size = 0x400, scoped, tag = 'input window, operand 14, single buffered']
    #allocation10 [shape = 's32[1]{0}', space=sflag, size = 0x4, scoped, tag = 'scoped memory for tpu_custom_call.1']
    #allocation11 [shape = 'u8[16384]{0}', space=vmem, size = 0x4000, scoped, tag = 'output window, operand 0']
    %21 = vsyncpa [#allocation5], 0
    %22 = vsyncpa [#allocation7], 0
    %23 = vsyncpa [#allocation10], 0
    %24 = vsyncpa [#allocation4], 0
    %s25 = scalar_lea.sflag [#allocation4], 1
    %26 = vsyncpa %s25, 0
    loop: start=0, step=1, limit=4
    $region2: #{tpu_custom_call.1} parent=1 // loop_pre_header
      _
    $region3: #{tpu_custom_call.1} parent=1 // loop_header
      %s28 = sphi 0, %s32
      %p29 = scmp.ge.s32.totalorder %s28, 4
      %s38 = sphi 0, %s40
      %s41 = sphi 0, %s38
      %s42 = sphi 0, %s41
      %s58 = sphi 0, %s42
      %s62 = sphi 0, %s62
      %s64 = sphi 0, %s62
      %s65 = sphi 0, %s64
      %s79 = sphi 0, %s65
      %s83 = sphi 0, %s83
      %s85 = sphi 0, %s83
      %s86 = sphi 0, %s85
      %s100 = sphi 0, %s86
      %s104 = sphi 0, %s104
      %s106 = sphi 0, %s104
      %s107 = sphi 0, %s106
      %s121 = sphi 0, %s107
      %s125 = sphi 0, %s125
      %s127 = sphi 0, %s125
      %s128 = sphi 0, %s127
      %s142 = sphi 0, %s128
      %s146 = sphi 0, %s146
      %s148 = sphi 0, %s146
      %s149 = sphi 0, %s148
      %s163 = sphi 0, %s149
      %s167 = sphi 0, %s167
      %s169 = sphi 0, %s167
      %s170 = sphi 0, %s169
      %s184 = sphi 0, %s170
      %s188 = sphi 0, %s188
      %s190 = sphi 0, %s188
      %s191 = sphi 0, %s190
      %s205 = sphi 0, %s191
      %s209 = sphi 0, %s209
      %s211 = sphi 0, %s209
      %s212 = sphi 0, %s211
      %s226 = sphi 0, %s212
      %s230 = sphi 0, %s230
      %s232 = sphi 0, %s230
      %s233 = sphi 0, %s232
      %s247 = sphi 0, %s233
      %s251 = sphi 0, %s251
      %s253 = sphi 0, %s251
      %s254 = sphi 0, %s253
      %s268 = sphi 0, %s254
      %s272 = sphi 0, %s272
      %s274 = sphi 0, %s272
      %s275 = sphi 0, %s274
      %s289 = sphi 0, %s275
      %s293 = sphi 0, %s293
      %s295 = sphi 0, %s293
      %s296 = sphi 0, %s295
      %s310 = sphi 0, %s296
      %s314 = sphi 0, %s314
      %s316 = sphi 0, %s314
      %s317 = sphi 0, %s316
      %s331 = sphi 0, %s317
      %s335 = sphi 0, %s335
      %s337 = sphi 0, %s335
      %s338 = sphi 0, %s337
      %s352 = sphi 0, %s338
      %s356 = sphi 0, %s356
      %s358 = sphi 0, %s356
      %s359 = sphi 0, %s358
      %s373 = sphi 0, %s359
      %s379 = sphi 0, %s381
      %s382 = sphi 0, %s379
      %s383 = sphi 0, %s382
      %s399 = sphi 0, %s383
    $region4: #{tpu_custom_call.1} parent=1 // loop_header_branch
      %31 = sbr.rel (%p29) target = $region8
    $region5: #{tpu_custom_call.1} parent=1 // loop_body
      %s33 = ssub.s32 %s28, 1
      %s34 = ssub.s32 %s28, 2
      %s35 = sadd.s32 %s28, 1
      %s36 = ssub.s32 %s28, %s35
      %p37 = scmp.eq.s32.totalorder %s36, 0
      %s39 = sadd.s32 %s38, 1
      %s40 = scalar_select %p37, %s38, %s39
      %p43 = pneg %p37
      %p44 = scmp.eq.s32.totalorder %s28, 1
      %p45 = por %p43, %p44
      %p46 = scmp.ne.s32.totalorder %s38, %s41
      %p47 = scmp.eq.s32.totalorder %s28, 0
      %p48 = por %p46, %p47
      %p49 = scmp.ne.s32.totalorder %s38, %s41
      %p50 = scmp.eq.s32.totalorder %s33, 1
      %p51 = por %p49, %p50
      %p52 = scmp.ne.s32.totalorder %s41, %s42
      %p53 = scmp.eq.s32.totalorder %s33, 0
      %p54 = por %p52, %p53
      %p55 = scmp.ne.s32.totalorder %s41, %s42
      %p56 = scmp.eq.s32.totalorder %s34, 1
      %p57 = por %p55, %p56
      %p59 = scmp.ne.s32.totalorder %s42, %s58
      %p60 = scmp.eq.s32.totalorder %s34, 0
      %p61 = por %p59, %p60
      %s63 = sadd.s32 %s62, 1
      %p66 = scmp.eq.s32.totalorder %s28, 1
      %p67 = scmp.ne.s32.totalorder %s62, %s64
      %p68 = scmp.eq.s32.totalorder %s28, 0
      %p69 = por %p67, %p68
      %p70 = scmp.ne.s32.totalorder %s62, %s64
      %p71 = scmp.eq.s32.totalorder %s33, 1
      %p72 = por %p70, %p71
      %p73 = scmp.ne.s32.totalorder %s64, %s65
      %p74 = scmp.eq.s32.totalorder %s33, 0
      %p75 = por %p73, %p74
      %p76 = scmp.ne.s32.totalorder %s64, %s65
      %p77 = scmp.eq.s32.totalorder %s34, 1
      %p78 = por %p76, %p77
      %p80 = scmp.ne.s32.totalorder %s65, %s79
      %p81 = scmp.eq.s32.totalorder %s34, 0
      %p82 = por %p80, %p81
      %s84 = sadd.s32 %s83, 1
      %p87 = scmp.eq.s32.totalorder %s28, 1
      %p88 = scmp.ne.s32.totalorder %s83, %s85
      %p89 = scmp.eq.s32.totalorder %s28, 0
      %p90 = por %p88, %p89
      %p91 = scmp.ne.s32.totalorder %s83, %s85
      %p92 = scmp.eq.s32.totalorder %s33, 1
      %p93 = por %p91, %p92
      %p94 = scmp.ne.s32.totalorder %s85, %s86
      %p95 = scmp.eq.s32.totalorder %s33, 0
      %p96 = por %p94, %p95
      %p97 = scmp.ne.s32.totalorder %s85, %s86
      %p98 = scmp.eq.s32.totalorder %s34, 1
      %p99 = por %p97, %p98
      %p101 = scmp.ne.s32.totalorder %s86, %s100
      %p102 = scmp.eq.s32.totalorder %s34, 0
      %p103 = por %p101, %p102
      %s105 = sadd.s32 %s104, 1
      %p108 = scmp.eq.s32.totalorder %s28, 1
      %p109 = scmp.ne.s32.totalorder %s104, %s106
      %p110 = scmp.eq.s32.totalorder %s28, 0
      %p111 = por %p109, %p110
      %p112 = scmp.ne.s32.totalorder %s104, %s106
      %p113 = scmp.eq.s32.totalorder %s33, 1
      %p114 = por %p112, %p113
      %p115 = scmp.ne.s32.totalorder %s106, %s107
      %p116 = scmp.eq.s32.totalorder %s33, 0
      %p117 = por %p115, %p116
      %p118 = scmp.ne.s32.totalorder %s106, %s107
      %p119 = scmp.eq.s32.totalorder %s34, 1
      %p120 = por %p118, %p119
      %p122 = scmp.ne.s32.totalorder %s107, %s121
      %p123 = scmp.eq.s32.totalorder %s34, 0
      %p124 = por %p122, %p123
      %s126 = sadd.s32 %s125, 1
      %p129 = scmp.eq.s32.totalorder %s28, 1
      %p130 = scmp.ne.s32.totalorder %s125, %s127
      %p131 = scmp.eq.s32.totalorder %s28, 0
      %p132 = por %p130, %p131
      %p133 = scmp.ne.s32.totalorder %s125, %s127
      %p134 = scmp.eq.s32.totalorder %s33, 1
      %p135 = por %p133, %p134
      %p136 = scmp.ne.s32.totalorder %s127, %s128
      %p137 = scmp.eq.s32.totalorder %s33, 0
      %p138 = por %p136, %p137
      %p139 = scmp.ne.s32.totalorder %s127, %s128
      %p140 = scmp.eq.s32.totalorder %s34, 1
      %p141 = por %p139, %p140
      %p143 = scmp.ne.s32.totalorder %s128, %s142
      %p144 = scmp.eq.s32.totalorder %s34, 0
      %p145 = por %p143, %p144
      %s147 = sadd.s32 %s146, 1
      %p150 = scmp.eq.s32.totalorder %s28, 1
      %p151 = scmp.ne.s32.totalorder %s146, %s148
      %p152 = scmp.eq.s32.totalorder %s28, 0
      %p153 = por %p151, %p152
      %p154 = scmp.ne.s32.totalorder %s146, %s148
      %p155 = scmp.eq.s32.totalorder %s33, 1
      %p156 = por %p154, %p155
      %p157 = scmp.ne.s32.totalorder %s148, %s149
      %p158 = scmp.eq.s32.totalorder %s33, 0
      %p159 = por %p157, %p158
      %p160 = scmp.ne.s32.totalorder %s148, %s149
      %p161 = scmp.eq.s32.totalorder %s34, 1
      %p162 = por %p160, %p161
      %p164 = scmp.ne.s32.totalorder %s149, %s163
      %p165 = scmp.eq.s32.totalorder %s34, 0
      %p166 = por %p164, %p165
      %s168 = sadd.s32 %s167, 1
      %p171 = scmp.eq.s32.totalorder %s28, 1
      %p172 = scmp.ne.s32.totalorder %s167, %s169
      %p173 = scmp.eq.s32.totalorder %s28, 0
      %p174 = por %p172, %p173
      %p175 = scmp.ne.s32.totalorder %s167, %s169
      %p176 = scmp.eq.s32.totalorder %s33, 1
      %p177 = por %p175, %p176
      %p178 = scmp.ne.s32.totalorder %s169, %s170
      %p179 = scmp.eq.s32.totalorder %s33, 0
      %p180 = por %p178, %p179
      %p181 = scmp.ne.s32.totalorder %s169, %s170
      %p182 = scmp.eq.s32.totalorder %s34, 1
      %p183 = por %p181, %p182
      %p185 = scmp.ne.s32.totalorder %s170, %s184
      %p186 = scmp.eq.s32.totalorder %s34, 0
      %p187 = por %p185, %p186
      %s189 = sadd.s32 %s188, 1
      %p192 = scmp.eq.s32.totalorder %s28, 1
      %p193 = scmp.ne.s32.totalorder %s188, %s190
      %p194 = scmp.eq.s32.totalorder %s28, 0
      %p195 = por %p193, %p194
      %p196 = scmp.ne.s32.totalorder %s188, %s190
      %p197 = scmp.eq.s32.totalorder %s33, 1
      %p198 = por %p196, %p197
      %p199 = scmp.ne.s32.totalorder %s190, %s191
      %p200 = scmp.eq.s32.totalorder %s33, 0
      %p201 = por %p199, %p200
      %p202 = scmp.ne.s32.totalorder %s190, %s191
      %p203 = scmp.eq.s32.totalorder %s34, 1
      %p204 = por %p202, %p203
      %p206 = scmp.ne.s32.totalorder %s191, %s205
      %p207 = scmp.eq.s32.totalorder %s34, 0
      %p208 = por %p206, %p207
      %s210 = sadd.s32 %s209, 1
      %p213 = scmp.eq.s32.totalorder %s28, 1
      %p214 = scmp.ne.s32.totalorder %s209, %s211
      %p215 = scmp.eq.s32.totalorder %s28, 0
      %p216 = por %p214, %p215
      %p217 = scmp.ne.s32.totalorder %s209, %s211
      %p218 = scmp.eq.s32.totalorder %s33, 1
      %p219 = por %p217, %p218
      %p220 = scmp.ne.s32.totalorder %s211, %s212
      %p221 = scmp.eq.s32.totalorder %s33, 0
      %p222 = por %p220, %p221
      %p223 = scmp.ne.s32.totalorder %s211, %s212
      %p224 = scmp.eq.s32.totalorder %s34, 1
      %p225 = por %p223, %p224
      %p227 = scmp.ne.s32.totalorder %s212, %s226
      %p228 = scmp.eq.s32.totalorder %s34, 0
      %p229 = por %p227, %p228
      %s231 = sadd.s32 %s230, 1
      %p234 = scmp.eq.s32.totalorder %s28, 1
      %p235 = scmp.ne.s32.totalorder %s230, %s232
      %p236 = scmp.eq.s32.totalorder %s28, 0
      %p237 = por %p235, %p236
      %p238 = scmp.ne.s32.totalorder %s230, %s232
      %p239 = scmp.eq.s32.totalorder %s33, 1
      %p240 = por %p238, %p239
      %p241 = scmp.ne.s32.totalorder %s232, %s233
      %p242 = scmp.eq.s32.totalorder %s33, 0
      %p243 = por %p241, %p242
      %p244 = scmp.ne.s32.totalorder %s232, %s233
      %p245 = scmp.eq.s32.totalorder %s34, 1
      %p246 = por %p244, %p245
      %p248 = scmp.ne.s32.totalorder %s233, %s247
      %p249 = scmp.eq.s32.totalorder %s34, 0
      %p250 = por %p248, %p249
      %s252 = sadd.s32 %s251, 1
      %p255 = scmp.eq.s32.totalorder %s28, 1
      %p256 = scmp.ne.s32.totalorder %s251, %s253
      %p257 = scmp.eq.s32.totalorder %s28, 0
      %p258 = por %p256, %p257
      %p259 = scmp.ne.s32.totalorder %s251, %s253
      %p260 = scmp.eq.s32.totalorder %s33, 1
      %p261 = por %p259, %p260
      %p262 = scmp.ne.s32.totalorder %s253, %s254
      %p263 = scmp.eq.s32.totalorder %s33, 0
      %p264 = por %p262, %p263
      %p265 = scmp.ne.s32.totalorder %s253, %s254
      %p266 = scmp.eq.s32.totalorder %s34, 1
      %p267 = por %p265, %p266
      %p269 = scmp.ne.s32.totalorder %s254, %s268
      %p270 = scmp.eq.s32.totalorder %s34, 0
      %p271 = por %p269, %p270
      %s273 = sadd.s32 %s272, 1
      %p276 = scmp.eq.s32.totalorder %s28, 1
      %p277 = scmp.ne.s32.totalorder %s272, %s274
      %p278 = scmp.eq.s32.totalorder %s28, 0
      %p279 = por %p277, %p278
      %p280 = scmp.ne.s32.totalorder %s272, %s274
      %p281 = scmp.eq.s32.totalorder %s33, 1
      %p282 = por %p280, %p281
      %p283 = scmp.ne.s32.totalorder %s274, %s275
      %p284 = scmp.eq.s32.totalorder %s33, 0
      %p285 = por %p283, %p284
      %p286 = scmp.ne.s32.totalorder %s274, %s275
      %p287 = scmp.eq.s32.totalorder %s34, 1
      %p288 = por %p286, %p287
      %p290 = scmp.ne.s32.totalorder %s275, %s289
      %p291 = scmp.eq.s32.totalorder %s34, 0
      %p292 = por %p290, %p291
      %s294 = sadd.s32 %s293, 1
      %p297 = scmp.eq.s32.totalorder %s28, 1
      %p298 = scmp.ne.s32.totalorder %s293, %s295
      %p299 = scmp.eq.s32.totalorder %s28, 0
      %p300 = por %p298, %p299
      %p301 = scmp.ne.s32.totalorder %s293, %s295
      %p302 = scmp.eq.s32.totalorder %s33, 1
      %p303 = por %p301, %p302
      %p304 = scmp.ne.s32.totalorder %s295, %s296
      %p305 = scmp.eq.s32.totalorder %s33, 0
      %p306 = por %p304, %p305
      %p307 = scmp.ne.s32.totalorder %s295, %s296
      %p308 = scmp.eq.s32.totalorder %s34, 1
      %p309 = por %p307, %p308
      %p311 = scmp.ne.s32.totalorder %s296, %s310
      %p312 = scmp.eq.s32.totalorder %s34, 0
      %p313 = por %p311, %p312
      %s315 = sadd.s32 %s314, 1
      %p318 = scmp.eq.s32.totalorder %s28, 1
      %p319 = scmp.ne.s32.totalorder %s314, %s316
      %p320 = scmp.eq.s32.totalorder %s28, 0
      %p321 = por %p319, %p320
      %p322 = scmp.ne.s32.totalorder %s314, %s316
      %p323 = scmp.eq.s32.totalorder %s33, 1
      %p324 = por %p322, %p323
      %p325 = scmp.ne.s32.totalorder %s316, %s317
      %p326 = scmp.eq.s32.totalorder %s33, 0
      %p327 = por %p325, %p326
      %p328 = scmp.ne.s32.totalorder %s316, %s317
      %p329 = scmp.eq.s32.totalorder %s34, 1
      %p330 = por %p328, %p329
      %p332 = scmp.ne.s32.totalorder %s317, %s331
      %p333 = scmp.eq.s32.totalorder %s34, 0
      %p334 = por %p332, %p333
      %s336 = sadd.s32 %s335, 1
      %p339 = scmp.eq.s32.totalorder %s28, 1
      %p340 = scmp.ne.s32.totalorder %s335, %s337
      %p341 = scmp.eq.s32.totalorder %s28, 0
      %p342 = por %p340, %p341
      %p343 = scmp.ne.s32.totalorder %s335, %s337
      %p344 = scmp.eq.s32.totalorder %s33, 1
      %p345 = por %p343, %p344
      %p346 = scmp.ne.s32.totalorder %s337, %s338
      %p347 = scmp.eq.s32.totalorder %s33, 0
      %p348 = por %p346, %p347
      %p349 = scmp.ne.s32.totalorder %s337, %s338
      %p350 = scmp.eq.s32.totalorder %s34, 1
      %p351 = por %p349, %p350
      %p353 = scmp.ne.s32.totalorder %s338, %s352
      %p354 = scmp.eq.s32.totalorder %s34, 0
      %p355 = por %p353, %p354
      %s357 = sadd.s32 %s356, 1
      %p360 = scmp.eq.s32.totalorder %s28, 1
      %p361 = scmp.ne.s32.totalorder %s356, %s358
      %p362 = scmp.eq.s32.totalorder %s28, 0
      %p363 = por %p361, %p362
      %p364 = scmp.ne.s32.totalorder %s356, %s358
      %p365 = scmp.eq.s32.totalorder %s33, 1
      %p366 = por %p364, %p365
      %p367 = scmp.ne.s32.totalorder %s358, %s359
      %p368 = scmp.eq.s32.totalorder %s33, 0
      %p369 = por %p367, %p368
      %p370 = scmp.ne.s32.totalorder %s358, %s359
      %p371 = scmp.eq.s32.totalorder %s34, 1
      %p372 = por %p370, %p371
      %p374 = scmp.ne.s32.totalorder %s359, %s373
      %p375 = scmp.eq.s32.totalorder %s34, 0
      %p376 = por %p374, %p375
      %s377 = ssub.s32 %s28, %s35
      %p378 = scmp.eq.s32.totalorder %s377, 0
      %s380 = sadd.s32 %s379, 1
      %s381 = scalar_select %p378, %s379, %s380
      %p384 = pneg %p378
      %p385 = scmp.eq.s32.totalorder %s28, 1
      %p386 = por %p384, %p385
      %p387 = scmp.ne.s32.totalorder %s379, %s382
      %p388 = scmp.eq.s32.totalorder %s28, 0
      %p389 = por %p387, %p388
      %p390 = scmp.ne.s32.totalorder %s379, %s382
      %p391 = scmp.eq.s32.totalorder %s33, 1
      %p392 = por %p390, %p391
      %p393 = scmp.ne.s32.totalorder %s382, %s383
      %p394 = scmp.eq.s32.totalorder %s33, 0
      %p395 = por %p393, %p394
      %p396 = scmp.ne.s32.totalorder %s382, %s383
      %p397 = scmp.eq.s32.totalorder %s34, 1
      %p398 = por %p396, %p397
      %p400 = scmp.ne.s32.totalorder %s383, %s399
      %p401 = scmp.eq.s32.totalorder %s34, 0
      %p402 = por %p400, %p401
      %p403 = scmp.le.s32.totalorder 1, %s28
      %p404 = scmp.lt.s32.totalorder %s28, 3
      %p405 = pnand %p403, %p404
      %p406 = pneg %p405
      // Predicated region
      $region9: #{tpu_custom_call.1} parent=5 // pred_check
        _
      $region10: #{tpu_custom_call.1} parent=5 // pred_check_branch
        %408 = sbr.rel (%p405) target = $region12
      $region11: #{tpu_custom_call.1} parent=5 // pred_region
        %s409 = ssub.s32 %s28, 1
        // Predicated region
        $region13: #{tpu_custom_call.1} parent=11 // pred_check
          %p410 = pneg %p75
        $region14: #{tpu_custom_call.1} parent=11 // pred_check_branch
          %412 = sbr.rel (%p410) target = $region16
        $region15: #{tpu_custom_call.1} parent=11 // pred_region
          _
        $region16: #{tpu_custom_call.1} parent=11 // pred_fallthru
          _
        // Predicated region
        $region17: #{tpu_custom_call.1} parent=11 // pred_check
          %p413 = pneg %p96
        $region18: #{tpu_custom_call.1} parent=11 // pred_check_branch
          %415 = sbr.rel (%p413) target = $region20
        $region19: #{tpu_custom_call.1} parent=11 // pred_region
          _
        $region20: #{tpu_custom_call.1} parent=11 // pred_fallthru
          _
        // Predicated region
        $region21: #{tpu_custom_call.1} parent=11 // pred_check
          %p416 = pneg %p117
        $region22: #{tpu_custom_call.1} parent=11 // pred_check_branch
          %418 = sbr.rel (%p416) target = $region24
        $region23: #{tpu_custom_call.1} parent=11 // pred_region
          _
        $region24: #{tpu_custom_call.1} parent=11 // pred_fallthru
          _
        // Predicated region
        $region25: #{tpu_custom_call.1} parent=11 // pred_check
          %p419 = pneg %p138
        $region26: #{tpu_custom_call.1} parent=11 // pred_check_branch
          %421 = sbr.rel (%p419) target = $region28
        $region27: #{tpu_custom_call.1} parent=11 // pred_region
          _
        $region28: #{tpu_custom_call.1} parent=11 // pred_fallthru
          _
        // Predicated region
        $region29: #{tpu_custom_call.1} parent=11 // pred_check
          %p422 = pneg %p159
        $region30: #{tpu_custom_call.1} parent=11 // pred_check_branch
          %424 = sbr.rel (%p422) target = $region32
        $region31: #{tpu_custom_call.1} parent=11 // pred_region
          _
        $region32: #{tpu_custom_call.1} parent=11 // pred_fallthru
          _
        // Predicated region
        $region33: #{tpu_custom_call.1} parent=11 // pred_check
          %p425 = pneg %p180
        $region34: #{tpu_custom_call.1} parent=11 // pred_check_branch
          %427 = sbr.rel (%p425) target = $region36
        $region35: #{tpu_custom_call.1} parent=11 // pred_region
          %s429 = ssub.s32 32, 32
          %430 = vsyncadd [#allocation5], %s429
          %s432 = sshll.u32 %s6, 4
          %s433 = int_to_ptr.vmem [resolvable:$true] %s432
          %435 = dma.vmem_to_smem %s433, 32, [#allocation3], [#allocation5]
        $region36: #{tpu_custom_call.1} parent=11 // pred_fallthru
          _
        // Predicated region
        $region37: #{tpu_custom_call.1} parent=11 // pred_check
          %p436 = pneg %p201
        $region38: #{tpu_custom_call.1} parent=11 // pred_check_branch
          %438 = sbr.rel (%p436) target = $region40
        $region39: #{tpu_custom_call.1} parent=11 // pred_region
          %s440 = ssub.s32 32, 32
          %441 = vsyncadd [#allocation7], %s440
          %s443 = sshll.u32 %s7, 4
          %s444 = int_to_ptr.vmem [resolvable:$true] %s443
          %446 = dma.vmem_to_smem %s444, 32, [#allocation6], [#allocation7]
        $region40: #{tpu_custom_call.1} parent=11 // pred_fallthru
          _
        // Predicated region
        $region41: #{tpu_custom_call.1} parent=11 // pred_check
          %p447 = pneg %p222
        $region42: #{tpu_custom_call.1} parent=11 // pred_check_branch
          %449 = sbr.rel (%p447) target = $region44
        $region43: #{tpu_custom_call.1} parent=11 // pred_region
          _
        $region44: #{tpu_custom_call.1} parent=11 // pred_fallthru
          _
        // Predicated region
        $region45: #{tpu_custom_call.1} parent=11 // pred_check
          %p450 = pneg %p243
        $region46: #{tpu_custom_call.1} parent=11 // pred_check_branch
          %452 = sbr.rel (%p450) target = $region48
        $region47: #{tpu_custom_call.1} parent=11 // pred_region
          _
        $region48: #{tpu_custom_call.1} parent=11 // pred_fallthru
          _
        // Predicated region
        $region49: #{tpu_custom_call.1} parent=11 // pred_check
          %p453 = pneg %p264
        $region50: #{tpu_custom_call.1} parent=11 // pred_check_branch
          %455 = sbr.rel (%p453) target = $region52
        $region51: #{tpu_custom_call.1} parent=11 // pred_region
          _
        $region52: #{tpu_custom_call.1} parent=11 // pred_fallthru
          _
        // Predicated region
        $region53: #{tpu_custom_call.1} parent=11 // pred_check
          %p456 = pneg %p285
        $region54: #{tpu_custom_call.1} parent=11 // pred_check_branch
          %458 = sbr.rel (%p456) target = $region56
        $region55: #{tpu_custom_call.1} parent=11 // pred_region
          _
        $region56: #{tpu_custom_call.1} parent=11 // pred_fallthru
          _
        // Predicated region
        $region57: #{tpu_custom_call.1} parent=11 // pred_check
          %p459 = pneg %p306
        $region58: #{tpu_custom_call.1} parent=11 // pred_check_branch
          %461 = sbr.rel (%p459) target = $region60
        $region59: #{tpu_custom_call.1} parent=11 // pred_region
          _
        $region60: #{tpu_custom_call.1} parent=11 // pred_fallthru
          _
        // Predicated region
        $region61: #{tpu_custom_call.1} parent=11 // pred_check
          %p462 = pneg %p327
        $region62: #{tpu_custom_call.1} parent=11 // pred_check_branch
          %464 = sbr.rel (%p462) target = $region64
        $region63: #{tpu_custom_call.1} parent=11 // pred_region
          %s466 = ssub.s32 32, 32
          %467 = vsyncadd [#allocation7], %s466
          %s469 = sshll.u32 %s13, 4
          %s470 = int_to_ptr.vmem [resolvable:$true] %s469
          %472 = dma.vmem_to_smem %s470, 32, [#allocation8], [#allocation7]
        $region64: #{tpu_custom_call.1} parent=11 // pred_fallthru
          _
        // Predicated region
        $region65: #{tpu_custom_call.1} parent=11 // pred_check
          %p473 = pneg %p348
        $region66: #{tpu_custom_call.1} parent=11 // pred_check_branch
          %475 = sbr.rel (%p473) target = $region68
        $region67: #{tpu_custom_call.1} parent=11 // pred_region
          %s477 = ssub.s32 32, 32
          %478 = vsyncadd [#allocation10], %s477
          %s480 = sshll.u32 %s14, 4
          %s481 = int_to_ptr.vmem [resolvable:$true] %s480
          %483 = dma.vmem_to_smem %s481, 32, [#allocation9], [#allocation10]
        $region68: #{tpu_custom_call.1} parent=11 // pred_fallthru
          _
        // Predicated region
        $region69: #{tpu_custom_call.1} parent=11 // pred_check
          %p484 = pneg %p369
        $region70: #{tpu_custom_call.1} parent=11 // pred_check_branch
          %486 = sbr.rel (%p484) target = $region72
        $region71: #{tpu_custom_call.1} parent=11 // pred_region
          _
        $region72: #{tpu_custom_call.1} parent=11 // pred_fallthru
          _
      $region12: #{tpu_custom_call.1} parent=5 // pred_fallthru
        _
      %p487 = scmp.lt.s32.totalorder %s28, 2
      // Predicated region
      $region73: #{tpu_custom_call.1} parent=5 // pred_check
        %p488 = pneg %p487
      $region74: #{tpu_custom_call.1} parent=5 // pred_check_branch
        %490 = sbr.rel (%p488) target = $region76
      $region75: #{tpu_custom_call.1} parent=5 // pred_region
        // Predicated region
        $region77: #{tpu_custom_call.1} parent=75 // pred_check
          %p491 = pneg %p48
        $region78: #{tpu_custom_call.1} parent=75 // pred_check_branch
          %493 = sbr.rel (%p491) target = $region80
        $region79: #{tpu_custom_call.1} parent=75 // pred_region
          %p494 = scmp.lt.s32.totalorder %s28, 1
          %s495 = scalar_select %p494, %s28, 1
          %s496 = smul.addr %s495, 16
          %s497 = smul.addr %s496, 8
          %s498 = scalar_lea.vmem %s0, %s497
        $region80: #{tpu_custom_call.1} parent=75 // pred_fallthru
          _
      $region76: #{tpu_custom_call.1} parent=5 // pred_fallthru
        _
      %p499 = scmp.le.s32.totalorder 1, %s28
      %p500 = scmp.lt.s32.totalorder %s28, 3
      %p501 = pnand %p499, %p500
      %p502 = pneg %p501
      // Predicated region
      $region81: #{tpu_custom_call.1} parent=5 // pred_check
        _
      $region82: #{tpu_custom_call.1} parent=5 // pred_check_branch
        %504 = sbr.rel (%p501) target = $region84
      $region83: #{tpu_custom_call.1} parent=5 // pred_region
        %s505 = ssub.s32 %s28, 1
        // Predicated region
        $region85: #{tpu_custom_call.1} parent=83 // pred_check
          %p506 = pneg %p180
        $region86: #{tpu_custom_call.1} parent=83 // pred_check_branch
          %508 = sbr.rel (%p506) target = $region88
        $region87: #{tpu_custom_call.1} parent=83 // pred_region
          %509 = dma.done [#allocation5], 32
        $region88: #{tpu_custom_call.1} parent=83 // pred_fallthru
          _
        // Predicated region
        $region89: #{tpu_custom_call.1} parent=83 // pred_check
          %p510 = pneg %p201
        $region90: #{tpu_custom_call.1} parent=83 // pred_check_branch
          %512 = sbr.rel (%p510) target = $region92
        $region91: #{tpu_custom_call.1} parent=83 // pred_region
          %513 = dma.done [#allocation7], 32
        $region92: #{tpu_custom_call.1} parent=83 // pred_fallthru
          _
        // Predicated region
        $region93: #{tpu_custom_call.1} parent=83 // pred_check
          %p514 = pneg %p327
        $region94: #{tpu_custom_call.1} parent=83 // pred_check_branch
          %516 = sbr.rel (%p514) target = $region96
        $region95: #{tpu_custom_call.1} parent=83 // pred_region
          %517 = dma.done [#allocation7], 32
        $region96: #{tpu_custom_call.1} parent=83 // pred_fallthru
          _
        // Predicated region
        $region97: #{tpu_custom_call.1} parent=83 // pred_check
          %p518 = pneg %p348
        $region98: #{tpu_custom_call.1} parent=83 // pred_check_branch
          %520 = sbr.rel (%p518) target = $region100
        $region99: #{tpu_custom_call.1} parent=83 // pred_region
          %521 = dma.done [#allocation10], 32
        $region100: #{tpu_custom_call.1} parent=83 // pred_fallthru
          _
        %522 = sfence
        %p523 = scmp.lt.s32.totalorder %s33, 1
        %s524 = scalar_select %p523, %s33, 1
        %s525 = smul.addr %s524, 16
        %s526 = smul.addr %s525, 8
        %s527 = scalar_lea.vmem %s0, %s526
        %p528 = pneg %p54
        %p529 = pneg %p51
        %p530 = pneg %p75
        %p531 = pneg %p72
        %p532 = pneg %p96
        %p533 = pneg %p93
        %p534 = pneg %p117
        %p535 = pneg %p114
        %p536 = pneg %p138
        %p537 = pneg %p135
        %p538 = pneg %p159
        %p539 = pneg %p156
        %p540 = pneg %p180
        %p541 = pneg %p177
        %p542 = pneg %p201
        %p543 = pneg %p198
        %p544 = pneg %p222
        %p545 = pneg %p219
        %p546 = pneg %p243
        %p547 = pneg %p240
        %p548 = pneg %p264
        %p549 = pneg %p261
        %p550 = pneg %p285
        %p551 = pneg %p282
        %p552 = pneg %p306
        %p553 = pneg %p303
        %p554 = pneg %p327
        %p555 = pneg %p324
        %p556 = pneg %p348
        %p557 = pneg %p345
        %p558 = pneg %p369
        %p559 = pneg %p366
        %p560 = pneg %p395
        %p561 = pneg %p392
        %s562 = sand.u32 %s382, 1
        %s563 = scalar_lea.sflag [#allocation4], %s562
        %s564 = sand.u32 %s382, 1
        %s565 = smul.addr %s564, 16
        %s566 = scalar_lea.vmem [#allocation11], %s565
        %p567 = scmp.lt.s32.totalorder %s33, 1
        %s568 = scalar_select %p567, %s33, 1
        %s569 = smul.addr %s568, 16
        %s570 = smul.addr %s569, 8
        %s571 = scalar_lea.vmem %s0, %s570
        %v572 = vld [vmem:[%s571] sm:$0xff]
        %v573 = vld [vmem:[%s571 + $0x8] sm:$0xff]
        %v574 = vld [vmem:[%s571 + $0x10] sm:$0xff]
        %v575 = vld [vmem:[%s571 + $0x18] sm:$0xff]
        %v576 = vld [vmem:[%s571 + $0x20] sm:$0xff]
        %v577 = vld [vmem:[%s571 + $0x28] sm:$0xff]
        %v578 = vld [vmem:[%s571 + $0x30] sm:$0xff]
        %v579 = vld [vmem:[%s571 + $0x38] sm:$0xff]
        %v580 = vld [vmem:[%s571 + $0x40] sm:$0xff]
        %v581 = vld [vmem:[%s571 + $0x48] sm:$0xff]
        %v582 = vld [vmem:[%s571 + $0x50] sm:$0xff]
        %v583 = vld [vmem:[%s571 + $0x58] sm:$0xff]
        %v584 = vld [vmem:[%s571 + $0x60] sm:$0xff]
        %v585 = vld [vmem:[%s571 + $0x68] sm:$0xff]
        %v586 = vld [vmem:[%s571 + $0x70] sm:$0xff]
        %v587 = vld [vmem:[%s571 + $0x78] sm:$0xff]
        %v588 = vld [vmem:[%s1] sm:$0xff]
        %v589 = vld [vmem:[%s1 + $0x8] sm:$0xff]
        %v590 = vld [vmem:[%s1 + $0x10] sm:$0xff]
        %v591 = vld [vmem:[%s1 + $0x18] sm:$0xff]
        %v592 = vld [vmem:[%s1 + $0x20] sm:$0xff]
        %v593 = vld [vmem:[%s1 + $0x28] sm:$0xff]
        %v594 = vld [vmem:[%s1 + $0x30] sm:$0xff]
        %v595 = vld [vmem:[%s1 + $0x38] sm:$0xff]
        %v596 = vld [vmem:[%s1 + $0x40] sm:$0xff]
        %v597 = vld [vmem:[%s1 + $0x48] sm:$0xff]
        %v598 = vld [vmem:[%s1 + $0x50] sm:$0xff]
        %v599 = vld [vmem:[%s1 + $0x58] sm:$0xff]
        %v600 = vld [vmem:[%s1 + $0x60] sm:$0xff]
        %v601 = vld [vmem:[%s1 + $0x68] sm:$0xff]
        %v602 = vld [vmem:[%s1 + $0x70] sm:$0xff]
        %v603 = vld [vmem:[%s1 + $0x78] sm:$0xff]
        %v604 = vld [vmem:[%s2] sm:$0xff]
        %v605 = vld [vmem:[%s2 + $0x8] sm:$0xff]
        %v606 = vld [vmem:[%s4] sm:$0xff]
        %v607 = vld [vmem:[%s4 + $0x8] sm:$0xff]
        %609 = vset.pattern.permute.xlu0 0
        %610 = vperm.xlu0 %609, %v606
        %v611 = vpop.permute.xlu0 %610
        %614 = vset.pattern.permute.xlu0 0
        %615 = vperm.xlu0 %614, %v607
        %v616 = vpop.permute.xlu0 %615
        %vm618 = vcmask 31744
        %v620 = vsel %vm618, %v604, 0
        %v623 = vsel %vm618, %v605, 0
        %v626 = vsel %vm618, %v572, 0
        %v629 = vsel %vm618, %v573, 0
        %v632 = vsel %vm618, %v574, 0
        %v635 = vsel %vm618, %v575, 0
        %v638 = vsel %vm618, %v576, 0
        %v641 = vsel %vm618, %v577, 0
        %v644 = vsel %vm618, %v578, 0
        %v647 = vsel %vm618, %v579, 0
        %v650 = vsel %vm618, %v580, 0
        %v653 = vsel %vm618, %v581, 0
        %v656 = vsel %vm618, %v582, 0
        %v659 = vsel %vm618, %v583, 0
        %v662 = vsel %vm618, %v584, 0
        %v665 = vsel %vm618, %v585, 0
        %v668 = vsel %vm618, %v586, 0
        %v671 = vsel %vm618, %v587, 0
        %673 = vmatprep.subr.mxu0 0.0
        %674 = vmatpush1.xpose.msra.mxu0 %v671
        %675 = vmatprep.subr.mxu0 0.0
        %676 = vmatpush1.xpose.msra.mxu0 %v668
        %677 = vmatprep.subr.mxu0 0.0
        %678 = vmatpush1.xpose.msra.mxu0 %v665
        %679 = vmatprep.subr.mxu0 0.0
        %680 = vmatpush1.xpose.msra.mxu0 %v662
        %681 = vmatprep.subr.mxu0 0.0
        %682 = vmatpush1.xpose.msra.mxu0 %v659
        %683 = vmatprep.subr.mxu0 0.0
        %684 = vmatpush1.xpose.msra.mxu0 %v656
        %685 = vmatprep.subr.mxu0 0.0
        %686 = vmatpush1.xpose.msra.mxu0 %v653
        %687 = vmatprep.subr.mxu0 0.0
        %688 = vmatpush1.xpose.msra.mxu0 %v650
        %689 = vmatprep.subr.mxu0 0.0
        %690 = vmatpush1.xpose.msra.mxu0 %v647
        %691 = vmatprep.subr.mxu0 0.0
        %692 = vmatpush1.xpose.msra.mxu0 %v644
        %693 = vmatprep.subr.mxu0 0.0
        %694 = vmatpush1.xpose.msra.mxu0 %v641
        %695 = vmatprep.subr.mxu0 0.0
        %696 = vmatpush1.xpose.msra.mxu0 %v638
        %697 = vmatprep.subr.mxu0 0.0
        %698 = vmatpush1.xpose.msra.mxu0 %v635
        %699 = vmatprep.subr.mxu0 0.0
        %700 = vmatpush1.xpose.msra.mxu0 %v632
        %701 = vmatprep.subr.mxu0 0.0
        %702 = vmatpush1.xpose.msra.mxu0 %v629
        %703 = vmatprep.subr.mxu0 0.0
        %704 = vmatpush1.xpose.msra.mxu0 %v626
        %705 = vmatprep.subr.mxu0 0.0
        %706 = vmatpush2.xpose.msra.mxu0 0.0
        %707 = vmatprep.subr.mxu0 0.0
        %708 = vmatpush2.xpose.msra.mxu0 0.0
        %709 = vmatprep.subr.mxu0 0.0
        %710 = vmatpush2.xpose.msra.mxu0 0.0
        %711 = vmatprep.subr.mxu0 0.0
        %712 = vmatpush2.xpose.msra.mxu0 0.0
        %713 = vmatprep.subr.mxu0 0.0
        %714 = vmatpush2.xpose.msra.mxu0 0.0
        %715 = vmatprep.subr.mxu0 0.0
        %716 = vmatpush2.xpose.msra.mxu0 0.0
        %717 = vmatprep.subr.mxu0 0.0
        %718 = vmatpush2.xpose.msra.mxu0 0.0
        %719 = vmatprep.subr.mxu0 0.0
        %720 = vmatpush2.xpose.msra.mxu0 0.0
        %721 = vmatprep.subr.mxu0 0.0
        %722 = vmatpush2.xpose.msra.mxu0 0.0
        %723 = vmatprep.subr.mxu0 0.0
        %724 = vmatpush2.xpose.msra.mxu0 0.0
        %725 = vmatprep.subr.mxu0 0.0
        %726 = vmatpush2.xpose.msra.mxu0 0.0
        %727 = vmatprep.subr.mxu0 0.0
        %728 = vmatpush2.xpose.msra.mxu0 0.0
        %729 = vmatprep.subr.mxu0 0.0
        %730 = vmatpush2.xpose.msra.mxu0 0.0
        %731 = vmatprep.subr.mxu0 0.0
        %732 = vmatpush2.xpose.msra.mxu0 0.0
        %733 = vmatprep.subr.mxu0 0.0
        %734 = vmatpush2.xpose.msra.mxu0 0.0
        %735 = vmatprep.subr.mxu0 0.0
        %736 = vmatpush2.xpose.msra.mxu0 0.0
        %737 = vmatprep.mubr.f32.mxu0 0.0
        %738 = vmatmul.mubr.f32.gmra.mxu0 %v620
        %v739 = vpop.f32.mrf.mxu0
        %v740 = vadd.f32 %v611, %v739
        %v741 = vpop.f32.mrf.mxu0
        %742 = vmatprep.mubr.f32.mxu0 0.0
        %743 = vmatmul.mubr.f32.gmra.mxu0 %v623
        %v744 = vpop.f32.mrf.mxu0
        %v745 = vadd.f32 %v616, %v744
        %v746 = vpop.f32.mrf.mxu0
        %747 = vdwg.mxu0
        %v748 = vld [vmem:[%s3] sm:$0xf]
        %v749 = vld [vmem:[%s5] sm:$0x1]
        %v751 = vlaneseq
        %v752 = vshrl.u32 %v751, 7
        %v753 = vsub.s32 0, %v752
        %v754 = vrot.slane %v749, %v753
        %vm756 = vcmask 1043456
        %v758 = vsel %vm756, %v748, 0
        %760 = vmatprep.subr.mxu0 0.0
        %761 = vmatpush1.msra.mxu0 0.0
        %762 = vmatprep.subr.mxu0 0.0
        %763 = vmatpush1.msra.mxu0 0.0
        %764 = vmatprep.subr.mxu0 0.0
        %765 = vmatpush1.msra.mxu0 0.0
        %766 = vmatprep.subr.mxu0 0.0
        %767 = vmatpush1.msra.mxu0 0.0
        %768 = vmatprep.subr.mxu0 0.0
        %769 = vmatpush1.msra.mxu0 0.0
        %770 = vmatprep.subr.mxu0 0.0
        %771 = vmatpush1.msra.mxu0 0.0
        %772 = vmatprep.subr.mxu0 0.0
        %773 = vmatpush1.msra.mxu0 0.0
        %774 = vmatprep.subr.mxu0 0.0
        %775 = vmatpush1.msra.mxu0 0.0
        %776 = vmatprep.subr.mxu0 0.0
        %777 = vmatpush1.msra.mxu0 0.0
        %778 = vmatprep.subr.mxu0 0.0
        %779 = vmatpush1.msra.mxu0 0.0
        %780 = vmatprep.subr.mxu0 0.0
        %781 = vmatpush1.msra.mxu0 0.0
        %782 = vmatprep.subr.mxu0 0.0
        %783 = vmatpush1.msra.mxu0 0.0
        %784 = vmatprep.subr.mxu0 0.0
        %785 = vmatpush1.msra.mxu0 0.0
        %786 = vmatprep.subr.mxu0 0.0
        %787 = vmatpush1.msra.mxu0 0.0
        %788 = vmatprep.subr.mxu0 0.0
        %789 = vmatpush1.msra.mxu0 0.0
        %790 = vmatprep.subr.mxu0 0.0
        %791 = vmatpush1.msra.mxu0 %v758
        %792 = vmatprep.subr.mxu0 0.0
        %793 = vmatpush2.msra.mxu0 0.0
        %794 = vmatprep.subr.mxu0 0.0
        %795 = vmatpush2.msra.mxu0 0.0
        %796 = vmatprep.subr.mxu0 0.0
        %797 = vmatpush2.msra.mxu0 0.0
        %798 = vmatprep.subr.mxu0 0.0
        %799 = vmatpush2.msra.mxu0 0.0
        %800 = vmatprep.subr.mxu0 0.0
        %801 = vmatpush2.msra.mxu0 0.0
        %802 = vmatprep.subr.mxu0 0.0
        %803 = vmatpush2.msra.mxu0 0.0
        %804 = vmatprep.subr.mxu0 0.0
        %805 = vmatpush2.msra.mxu0 0.0
        %806 = vmatprep.subr.mxu0 0.0
        %807 = vmatpush2.msra.mxu0 0.0
        %808 = vmatprep.subr.mxu0 0.0
        %809 = vmatpush2.msra.mxu0 0.0
        %810 = vmatprep.subr.mxu0 0.0
        %811 = vmatpush2.msra.mxu0 0.0
        %812 = vmatprep.subr.mxu0 0.0
        %813 = vmatpush2.msra.mxu0 0.0
        %814 = vmatprep.subr.mxu0 0.0
        %815 = vmatpush2.msra.mxu0 0.0
        %816 = vmatprep.subr.mxu0 0.0
        %817 = vmatpush2.msra.mxu0 0.0
        %818 = vmatprep.subr.mxu0 0.0
        %819 = vmatpush2.msra.mxu0 0.0
        %820 = vmatprep.subr.mxu0 0.0
        %821 = vmatpush2.msra.mxu0 0.0
        %822 = vmatprep.subr.mxu0 0.0
        %823 = vmatpush2.msra.mxu0 0.0
        %824 = vmatprep.mubr.f32.mxu0 0.0
        %825 = vmatmul.mubr.f32.gmra.mxu0 %v626
        %v826 = vpop.f32.mrf.mxu0
        %v827 = vadd.f32 %v754, %v826
        %v828 = vpop.f32.mrf.mxu0
        %829 = vmatprep.mubr.f32.mxu0 0.0
        %830 = vmatmul.mubr.f32.gmra.mxu0 %v629
        %v831 = vpop.f32.mrf.mxu0
        %v832 = vadd.f32 %v754, %v831
        %v833 = vpop.f32.mrf.mxu0
        %834 = vmatprep.mubr.f32.mxu0 0.0
        %835 = vmatmul.mubr.f32.gmra.mxu0 %v632
        %v836 = vpop.f32.mrf.mxu0
        %v837 = vadd.f32 %v754, %v836
        %v838 = vpop.f32.mrf.mxu0
        %839 = vmatprep.mubr.f32.mxu0 0.0
        %840 = vmatmul.mubr.f32.gmra.mxu0 %v635
        %v841 = vpop.f32.mrf.mxu0
        %v842 = vadd.f32 %v754, %v841
        %v843 = vpop.f32.mrf.mxu0
        %844 = vmatprep.mubr.f32.mxu0 0.0
        %845 = vmatmul.mubr.f32.gmra.mxu0 %v638
        %v846 = vpop.f32.mrf.mxu0
        %v847 = vadd.f32 %v754, %v846
        %v848 = vpop.f32.mrf.mxu0
        %849 = vmatprep.mubr.f32.mxu0 0.0
        %850 = vmatmul.mubr.f32.gmra.mxu0 %v641
        %v851 = vpop.f32.mrf.mxu0
        %v852 = vadd.f32 %v754, %v851
        %v853 = vpop.f32.mrf.mxu0
        %854 = vmatprep.mubr.f32.mxu0 0.0
        %855 = vmatmul.mubr.f32.gmra.mxu0 %v644
        %v856 = vpop.f32.mrf.mxu0
        %v857 = vadd.f32 %v754, %v856
        %v858 = vpop.f32.mrf.mxu0
        %859 = vmatprep.mubr.f32.mxu0 0.0
        %860 = vmatmul.mubr.f32.gmra.mxu0 %v647
        %v861 = vpop.f32.mrf.mxu0
        %v862 = vadd.f32 %v754, %v861
        %v863 = vpop.f32.mrf.mxu0
        %864 = vmatprep.mubr.f32.mxu0 0.0
        %865 = vmatmul.mubr.f32.gmra.mxu0 %v650
        %v866 = vpop.f32.mrf.mxu0
        %v867 = vadd.f32 %v754, %v866
        %v868 = vpop.f32.mrf.mxu0
        %869 = vmatprep.mubr.f32.mxu0 0.0
        %870 = vmatmul.mubr.f32.gmra.mxu0 %v653
        %v871 = vpop.f32.mrf.mxu0
        %v872 = vadd.f32 %v754, %v871
        %v873 = vpop.f32.mrf.mxu0
        %874 = vmatprep.mubr.f32.mxu0 0.0
        %875 = vmatmul.mubr.f32.gmra.mxu0 %v656
        %v876 = vpop.f32.mrf.mxu0
        %v877 = vadd.f32 %v754, %v876
        %v878 = vpop.f32.mrf.mxu0
        %879 = vmatprep.mubr.f32.mxu0 0.0
        %880 = vmatmul.mubr.f32.gmra.mxu0 %v659
        %v881 = vpop.f32.mrf.mxu0
        %v882 = vadd.f32 %v754, %v881
        %v883 = vpop.f32.mrf.mxu0
        %884 = vmatprep.mubr.f32.mxu0 0.0
        %885 = vmatmul.mubr.f32.gmra.mxu0 %v662
        %v886 = vpop.f32.mrf.mxu0
        %v887 = vadd.f32 %v754, %v886
        %v888 = vpop.f32.mrf.mxu0
        %889 = vmatprep.mubr.f32.mxu0 0.0
        %890 = vmatmul.mubr.f32.gmra.mxu0 %v665
        %v891 = vpop.f32.mrf.mxu0
        %v892 = vadd.f32 %v754, %v891
        %v893 = vpop.f32.mrf.mxu0
        %894 = vmatprep.mubr.f32.mxu0 0.0
        %895 = vmatmul.mubr.f32.gmra.mxu0 %v668
        %v896 = vpop.f32.mrf.mxu0
        %v897 = vadd.f32 %v754, %v896
        %v898 = vpop.f32.mrf.mxu0
        %899 = vmatprep.mubr.f32.mxu0 0.0
        %900 = vmatmul.mubr.f32.gmra.mxu0 %v671
        %v901 = vpop.f32.mrf.mxu0
        %v902 = vadd.f32 %v754, %v901
        %v903 = vpop.f32.mrf.mxu0
        %904 = vdwg.mxu0
        %s905 = sld [smem:[#allocation3]]
        %v906 = vstv %s905
        %v907 = vmul.f32 %v906, %v827
        %v908 = vmul.f32 %v906, %v832
        %v909 = vmul.f32 %v906, %v837
        %v910 = vmul.f32 %v906, %v842
        %v911 = vmul.f32 %v906, %v847
        %v912 = vmul.f32 %v906, %v852
        %v913 = vmul.f32 %v906, %v857
        %v914 = vmul.f32 %v906, %v862
        %v915 = vmul.f32 %v906, %v867
        %v916 = vmul.f32 %v906, %v872
        %v917 = vmul.f32 %v906, %v877
        %v918 = vmul.f32 %v906, %v882
        %v919 = vmul.f32 %v906, %v887
        %v920 = vmul.f32 %v906, %v892
        %v921 = vmul.f32 %v906, %v897
        %v922 = vmul.f32 %v906, %v902
        %v923 = vmul.f32 %v906, %v740
        %s924 = sld [smem:[#allocation3 + $0x1]]
        %v925 = vstv %s924
        %v926 = vmul.f32 %v925, %v827
        %v927 = vmul.f32 %v925, %v832
        %v928 = vmul.f32 %v925, %v837
        %v929 = vmul.f32 %v925, %v842
        %v930 = vmul.f32 %v925, %v847
        %v931 = vmul.f32 %v925, %v852
        %v932 = vmul.f32 %v925, %v857
        %v933 = vmul.f32 %v925, %v862
        %v934 = vmul.f32 %v925, %v867
        %v935 = vmul.f32 %v925, %v872
        %v936 = vmul.f32 %v925, %v877
        %v937 = vmul.f32 %v925, %v882
        %v938 = vmul.f32 %v925, %v887
        %v939 = vmul.f32 %v925, %v892
        %v940 = vmul.f32 %v925, %v897
        %v941 = vmul.f32 %v925, %v902
        %958 = vrot.lane.b32.xlu0 %v926, 127
        %v959 = vpop.permute.xlu0 %958
        %960 = vrot.lane.b32.xlu0 %v927, 127
        %v961 = vpop.permute.xlu0 %960
        %962 = vrot.lane.b32.xlu0 %v928, 127
        %v963 = vpop.permute.xlu0 %962
        %964 = vrot.lane.b32.xlu0 %v929, 127
        %v965 = vpop.permute.xlu0 %964
        %966 = vrot.lane.b32.xlu0 %v930, 127
        %v967 = vpop.permute.xlu0 %966
        %968 = vrot.lane.b32.xlu0 %v931, 127
        %v969 = vpop.permute.xlu0 %968
        %970 = vrot.lane.b32.xlu0 %v932, 127
        %v971 = vpop.permute.xlu0 %970
        %972 = vrot.lane.b32.xlu0 %v933, 127
        %v973 = vpop.permute.xlu0 %972
        %974 = vrot.lane.b32.xlu0 %v934, 127
        %v975 = vpop.permute.xlu0 %974
        %976 = vrot.lane.b32.xlu0 %v935, 127
        %v977 = vpop.permute.xlu0 %976
        %978 = vrot.lane.b32.xlu0 %v936, 127
        %v979 = vpop.permute.xlu0 %978
        %980 = vrot.lane.b32.xlu0 %v937, 127
        %v981 = vpop.permute.xlu0 %980
        %982 = vrot.lane.b32.xlu0 %v938, 127
        %v983 = vpop.permute.xlu0 %982
        %984 = vrot.lane.b32.xlu0 %v939, 127
        %v985 = vpop.permute.xlu0 %984
        %986 = vrot.lane.b32.xlu0 %v940, 127
        %v987 = vpop.permute.xlu0 %986
        %988 = vrot.lane.b32.xlu0 %v941, 127
        %v989 = vpop.permute.xlu0 %988
        %v1006 = vadd.f32 %v907, %v959
        %v1007 = vadd.f32 %v908, %v961
        %v1008 = vadd.f32 %v909, %v963
        %v1009 = vadd.f32 %v910, %v965
        %v1010 = vadd.f32 %v911, %v967
        %v1011 = vadd.f32 %v912, %v969
        %v1012 = vadd.f32 %v913, %v971
        %v1013 = vadd.f32 %v914, %v973
        %v1014 = vadd.f32 %v915, %v975
        %v1015 = vadd.f32 %v916, %v977
        %v1016 = vadd.f32 %v917, %v979
        %v1017 = vadd.f32 %v918, %v981
        %v1018 = vadd.f32 %v919, %v983
        %v1019 = vadd.f32 %v920, %v985
        %v1020 = vadd.f32 %v921, %v987
        %v1021 = vadd.f32 %v922, %v989
        %v1022 = vmul.f32 %v925, %v740
        %v1024 = vrot.slane %v1022, 1
        %v1026 = vadd.f32 %v923, %v1024
        %s1027 = sld [smem:[#allocation3 + $0x2]]
        %v1028 = vstv %s1027
        %v1029 = vmul.f32 %v1028, %v827
        %v1030 = vmul.f32 %v1028, %v832
        %v1031 = vmul.f32 %v1028, %v837
        %v1032 = vmul.f32 %v1028, %v842
        %v1033 = vmul.f32 %v1028, %v847
        %v1034 = vmul.f32 %v1028, %v852
        %v1035 = vmul.f32 %v1028, %v857
        %v1036 = vmul.f32 %v1028, %v862
        %v1037 = vmul.f32 %v1028, %v867
        %v1038 = vmul.f32 %v1028, %v872
        %v1039 = vmul.f32 %v1028, %v877
        %v1040 = vmul.f32 %v1028, %v882
        %v1041 = vmul.f32 %v1028, %v887
        %v1042 = vmul.f32 %v1028, %v892
        %v1043 = vmul.f32 %v1028, %v897
        %v1044 = vmul.f32 %v1028, %v902
        %1061 = vrot.lane.b32.xlu0 %v1029, 126
        %v1062 = vpop.permute.xlu0 %1061
        %1063 = vrot.lane.b32.xlu0 %v1030, 126
        %v1064 = vpop.permute.xlu0 %1063
        %1065 = vrot.lane.b32.xlu0 %v1031, 126
        %v1066 = vpop.permute.xlu0 %1065
        %1067 = vrot.lane.b32.xlu0 %v1032, 126
        %v1068 = vpop.permute.xlu0 %1067
        %1069 = vrot.lane.b32.xlu0 %v1033, 126
        %v1070 = vpop.permute.xlu0 %1069
        %1071 = vrot.lane.b32.xlu0 %v1034, 126
        %v1072 = vpop.permute.xlu0 %1071
        %1073 = vrot.lane.b32.xlu0 %v1035, 126
        %v1074 = vpop.permute.xlu0 %1073
        %1075 = vrot.lane.b32.xlu0 %v1036, 126
        %v1076 = vpop.permute.xlu0 %1075
        %1077 = vrot.lane.b32.xlu0 %v1037, 126
        %v1078 = vpop.permute.xlu0 %1077
        %1079 = vrot.lane.b32.xlu0 %v1038, 126
        %v1080 = vpop.permute.xlu0 %1079
        %1081 = vrot.lane.b32.xlu0 %v1039, 126
        %v1082 = vpop.permute.xlu0 %1081
        %1083 = vrot.lane.b32.xlu0 %v1040, 126
        %v1084 = vpop.permute.xlu0 %1083
        %1085 = vrot.lane.b32.xlu0 %v1041, 126
        %v1086 = vpop.permute.xlu0 %1085
        %1087 = vrot.lane.b32.xlu0 %v1042, 126
        %v1088 = vpop.permute.xlu0 %1087
        %1089 = vrot.lane.b32.xlu0 %v1043, 126
        %v1090 = vpop.permute.xlu0 %1089
        %1091 = vrot.lane.b32.xlu0 %v1044, 126
        %v1092 = vpop.permute.xlu0 %1091
        %v1109 = vadd.f32 %v1006, %v1062
        %v1110 = vadd.f32 %v1007, %v1064
        %v1111 = vadd.f32 %v1008, %v1066
        %v1112 = vadd.f32 %v1009, %v1068
        %v1113 = vadd.f32 %v1010, %v1070
        %v1114 = vadd.f32 %v1011, %v1072
        %v1115 = vadd.f32 %v1012, %v1074
        %v1116 = vadd.f32 %v1013, %v1076
        %v1117 = vadd.f32 %v1014, %v1078
        %v1118 = vadd.f32 %v1015, %v1080
        %v1119 = vadd.f32 %v1016, %v1082
        %v1120 = vadd.f32 %v1017, %v1084
        %v1121 = vadd.f32 %v1018, %v1086
        %v1122 = vadd.f32 %v1019, %v1088
        %v1123 = vadd.f32 %v1020, %v1090
        %v1124 = vadd.f32 %v1021, %v1092
        %v1125 = vmul.f32 %v1028, %v740
        %v1127 = vrot.slane %v1125, 2
        %v1129 = vadd.f32 %v1026, %v1127
        %s1130 = sld [smem:[#allocation3 + $0x3]]
        %v1131 = vstv %s1130
        %v1132 = vmul.f32 %v1131, %v827
        %v1133 = vmul.f32 %v1131, %v832
        %v1134 = vmul.f32 %v1131, %v837
        %v1135 = vmul.f32 %v1131, %v842
        %v1136 = vmul.f32 %v1131, %v847
        %v1137 = vmul.f32 %v1131, %v852
        %v1138 = vmul.f32 %v1131, %v857
        %v1139 = vmul.f32 %v1131, %v862
        %v1140 = vmul.f32 %v1131, %v867
        %v1141 = vmul.f32 %v1131, %v872
        %v1142 = vmul.f32 %v1131, %v877
        %v1143 = vmul.f32 %v1131, %v882
        %v1144 = vmul.f32 %v1131, %v887
        %v1145 = vmul.f32 %v1131, %v892
        %v1146 = vmul.f32 %v1131, %v897
        %v1147 = vmul.f32 %v1131, %v902
        %1164 = vrot.lane.b32.xlu0 %v1132, 125
        %v1165 = vpop.permute.xlu0 %1164
        %1166 = vrot.lane.b32.xlu0 %v1133, 125
        %v1167 = vpop.permute.xlu0 %1166
        %1168 = vrot.lane.b32.xlu0 %v1134, 125
        %v1169 = vpop.permute.xlu0 %1168
        %1170 = vrot.lane.b32.xlu0 %v1135, 125
        %v1171 = vpop.permute.xlu0 %1170
        %1172 = vrot.lane.b32.xlu0 %v1136, 125
        %v1173 = vpop.permute.xlu0 %1172
        %1174 = vrot.lane.b32.xlu0 %v1137, 125
        %v1175 = vpop.permute.xlu0 %1174
        %1176 = vrot.lane.b32.xlu0 %v1138, 125
        %v1177 = vpop.permute.xlu0 %1176
        %1178 = vrot.lane.b32.xlu0 %v1139, 125
        %v1179 = vpop.permute.xlu0 %1178
        %1180 = vrot.lane.b32.xlu0 %v1140, 125
        %v1181 = vpop.permute.xlu0 %1180
        %1182 = vrot.lane.b32.xlu0 %v1141, 125
        %v1183 = vpop.permute.xlu0 %1182
        %1184 = vrot.lane.b32.xlu0 %v1142, 125
        %v1185 = vpop.permute.xlu0 %1184
        %1186 = vrot.lane.b32.xlu0 %v1143, 125
        %v1187 = vpop.permute.xlu0 %1186
        %1188 = vrot.lane.b32.xlu0 %v1144, 125
        %v1189 = vpop.permute.xlu0 %1188
        %1190 = vrot.lane.b32.xlu0 %v1145, 125
        %v1191 = vpop.permute.xlu0 %1190
        %1192 = vrot.lane.b32.xlu0 %v1146, 125
        %v1193 = vpop.permute.xlu0 %1192
        %1194 = vrot.lane.b32.xlu0 %v1147, 125
        %v1195 = vpop.permute.xlu0 %1194
        %v1212 = vadd.f32 %v1109, %v1165
        %v1213 = vadd.f32 %v1110, %v1167
        %v1214 = vadd.f32 %v1111, %v1169
        %v1215 = vadd.f32 %v1112, %v1171
        %v1216 = vadd.f32 %v1113, %v1173
        %v1217 = vadd.f32 %v1114, %v1175
        %v1218 = vadd.f32 %v1115, %v1177
        %v1219 = vadd.f32 %v1116, %v1179
        %v1220 = vadd.f32 %v1117, %v1181
        %v1221 = vadd.f32 %v1118, %v1183
        %v1222 = vadd.f32 %v1119, %v1185
        %v1223 = vadd.f32 %v1120, %v1187
        %v1224 = vadd.f32 %v1121, %v1189
        %v1225 = vadd.f32 %v1122, %v1191
        %v1226 = vadd.f32 %v1123, %v1193
        %v1227 = vadd.f32 %v1124, %v1195
        %v1228 = vmul.f32 %v1131, %v740
        %v1230 = vrot.slane %v1228, 3
        %v1232 = vadd.f32 %v1129, %v1230
        %s1233 = sld [smem:[#allocation3 + $0x4]]
        %v1234 = vstv %s1233
        %v1235 = vmul.f32 %v1234, %v827
        %v1236 = vmul.f32 %v1234, %v832
        %v1237 = vmul.f32 %v1234, %v837
        %v1238 = vmul.f32 %v1234, %v842
        %v1239 = vmul.f32 %v1234, %v847
        %v1240 = vmul.f32 %v1234, %v852
        %v1241 = vmul.f32 %v1234, %v857
        %v1242 = vmul.f32 %v1234, %v862
        %v1243 = vmul.f32 %v1234, %v867
        %v1244 = vmul.f32 %v1234, %v872
        %v1245 = vmul.f32 %v1234, %v877
        %v1246 = vmul.f32 %v1234, %v882
        %v1247 = vmul.f32 %v1234, %v887
        %v1248 = vmul.f32 %v1234, %v892
        %v1249 = vmul.f32 %v1234, %v897
        %v1250 = vmul.f32 %v1234, %v902
        %1267 = vrot.lane.b32.xlu0 %v1235, 124
        %v1268 = vpop.permute.xlu0 %1267
        %1269 = vrot.lane.b32.xlu0 %v1236, 124
        %v1270 = vpop.permute.xlu0 %1269
        %1271 = vrot.lane.b32.xlu0 %v1237, 124
        %v1272 = vpop.permute.xlu0 %1271
        %1273 = vrot.lane.b32.xlu0 %v1238, 124
        %v1274 = vpop.permute.xlu0 %1273
        %1275 = vrot.lane.b32.xlu0 %v1239, 124
        %v1276 = vpop.permute.xlu0 %1275
        %1277 = vrot.lane.b32.xlu0 %v1240, 124
        %v1278 = vpop.permute.xlu0 %1277
        %1279 = vrot.lane.b32.xlu0 %v1241, 124
        %v1280 = vpop.permute.xlu0 %1279
        %1281 = vrot.lane.b32.xlu0 %v1242, 124
        %v1282 = vpop.permute.xlu0 %1281
        %1283 = vrot.lane.b32.xlu0 %v1243, 124
        %v1284 = vpop.permute.xlu0 %1283
        %1285 = vrot.lane.b32.xlu0 %v1244, 124
        %v1286 = vpop.permute.xlu0 %1285
        %1287 = vrot.lane.b32.xlu0 %v1245, 124
        %v1288 = vpop.permute.xlu0 %1287
        %1289 = vrot.lane.b32.xlu0 %v1246, 124
        %v1290 = vpop.permute.xlu0 %1289
        %1291 = vrot.lane.b32.xlu0 %v1247, 124
        %v1292 = vpop.permute.xlu0 %1291
        %1293 = vrot.lane.b32.xlu0 %v1248, 124
        %v1294 = vpop.permute.xlu0 %1293
        %1295 = vrot.lane.b32.xlu0 %v1249, 124
        %v1296 = vpop.permute.xlu0 %1295
        %1297 = vrot.lane.b32.xlu0 %v1250, 124
        %v1298 = vpop.permute.xlu0 %1297
        %v1315 = vadd.f32 %v1212, %v1268
        %v1316 = vadd.f32 %v1213, %v1270
        %v1317 = vadd.f32 %v1214, %v1272
        %v1318 = vadd.f32 %v1215, %v1274
        %v1319 = vadd.f32 %v1216, %v1276
        %v1320 = vadd.f32 %v1217, %v1278
        %v1321 = vadd.f32 %v1218, %v1280
        %v1322 = vadd.f32 %v1219, %v1282
        %v1323 = vadd.f32 %v1220, %v1284
        %v1324 = vadd.f32 %v1221, %v1286
        %v1325 = vadd.f32 %v1222, %v1288
        %v1326 = vadd.f32 %v1223, %v1290
        %v1327 = vadd.f32 %v1224, %v1292
        %v1328 = vadd.f32 %v1225, %v1294
        %v1329 = vadd.f32 %v1226, %v1296
        %v1330 = vadd.f32 %v1227, %v1298
        %v1331 = vmul.f32 %v1234, %v740
        %v1333 = vrot.slane %v1331, 4
        %v1335 = vadd.f32 %v1232, %v1333
        %s1336 = sld [smem:[#allocation3 + $0x5]]
        %v1337 = vstv %s1336
        %v1338 = vmul.f32 %v1337, %v827
        %v1339 = vmul.f32 %v1337, %v832
        %v1340 = vmul.f32 %v1337, %v837
        %v1341 = vmul.f32 %v1337, %v842
        %v1342 = vmul.f32 %v1337, %v847
        %v1343 = vmul.f32 %v1337, %v852
        %v1344 = vmul.f32 %v1337, %v857
        %v1345 = vmul.f32 %v1337, %v862
        %v1346 = vmul.f32 %v1337, %v867
        %v1347 = vmul.f32 %v1337, %v872
        %v1348 = vmul.f32 %v1337, %v877
        %v1349 = vmul.f32 %v1337, %v882
        %v1350 = vmul.f32 %v1337, %v887
        %v1351 = vmul.f32 %v1337, %v892
        %v1352 = vmul.f32 %v1337, %v897
        %v1353 = vmul.f32 %v1337, %v902
        %1370 = vrot.lane.b32.xlu0 %v1338, 123
        %v1371 = vpop.permute.xlu0 %1370
        %1372 = vrot.lane.b32.xlu0 %v1339, 123
        %v1373 = vpop.permute.xlu0 %1372
        %1374 = vrot.lane.b32.xlu0 %v1340, 123
        %v1375 = vpop.permute.xlu0 %1374
        %1376 = vrot.lane.b32.xlu0 %v1341, 123
        %v1377 = vpop.permute.xlu0 %1376
        %1378 = vrot.lane.b32.xlu0 %v1342, 123
        %v1379 = vpop.permute.xlu0 %1378
        %1380 = vrot.lane.b32.xlu0 %v1343, 123
        %v1381 = vpop.permute.xlu0 %1380
        %1382 = vrot.lane.b32.xlu0 %v1344, 123
        %v1383 = vpop.permute.xlu0 %1382
        %1384 = vrot.lane.b32.xlu0 %v1345, 123
        %v1385 = vpop.permute.xlu0 %1384
        %1386 = vrot.lane.b32.xlu0 %v1346, 123
        %v1387 = vpop.permute.xlu0 %1386
        %1388 = vrot.lane.b32.xlu0 %v1347, 123
        %v1389 = vpop.permute.xlu0 %1388
        %1390 = vrot.lane.b32.xlu0 %v1348, 123
        %v1391 = vpop.permute.xlu0 %1390
        %1392 = vrot.lane.b32.xlu0 %v1349, 123
        %v1393 = vpop.permute.xlu0 %1392
        %1394 = vrot.lane.b32.xlu0 %v1350, 123
        %v1395 = vpop.permute.xlu0 %1394
        %1396 = vrot.lane.b32.xlu0 %v1351, 123
        %v1397 = vpop.permute.xlu0 %1396
        %1398 = vrot.lane.b32.xlu0 %v1352, 123
        %v1399 = vpop.permute.xlu0 %1398
        %1400 = vrot.lane.b32.xlu0 %v1353, 123
        %v1401 = vpop.permute.xlu0 %1400
        %v1418 = vadd.f32 %v1315, %v1371
        %v1419 = vadd.f32 %v1316, %v1373
        %v1420 = vadd.f32 %v1317, %v1375
        %v1421 = vadd.f32 %v1318, %v1377
        %v1422 = vadd.f32 %v1319, %v1379
        %v1423 = vadd.f32 %v1320, %v1381
        %v1424 = vadd.f32 %v1321, %v1383
        %v1425 = vadd.f32 %v1322, %v1385
        %v1426 = vadd.f32 %v1323, %v1387
        %v1427 = vadd.f32 %v1324, %v1389
        %v1428 = vadd.f32 %v1325, %v1391
        %v1429 = vadd.f32 %v1326, %v1393
        %v1430 = vadd.f32 %v1327, %v1395
        %v1431 = vadd.f32 %v1328, %v1397
        %v1432 = vadd.f32 %v1329, %v1399
        %v1433 = vadd.f32 %v1330, %v1401
        %v1434 = vmul.f32 %v1337, %v740
        %v1436 = vrot.slane %v1434, 5
        %v1438 = vadd.f32 %v1335, %v1436
        %s1439 = sld [smem:[#allocation3 + $0x6]]
        %v1440 = vstv %s1439
        %v1441 = vmul.f32 %v1440, %v827
        %v1442 = vmul.f32 %v1440, %v832
        %v1443 = vmul.f32 %v1440, %v837
        %v1444 = vmul.f32 %v1440, %v842
        %v1445 = vmul.f32 %v1440, %v847
        %v1446 = vmul.f32 %v1440, %v852
        %v1447 = vmul.f32 %v1440, %v857
        %v1448 = vmul.f32 %v1440, %v862
        %v1449 = vmul.f32 %v1440, %v867
        %v1450 = vmul.f32 %v1440, %v872
        %v1451 = vmul.f32 %v1440, %v877
        %v1452 = vmul.f32 %v1440, %v882
        %v1453 = vmul.f32 %v1440, %v887
        %v1454 = vmul.f32 %v1440, %v892
        %v1455 = vmul.f32 %v1440, %v897
        %v1456 = vmul.f32 %v1440, %v902
        %1473 = vrot.lane.b32.xlu0 %v1441, 122
        %v1474 = vpop.permute.xlu0 %1473
        %1475 = vrot.lane.b32.xlu0 %v1442, 122
        %v1476 = vpop.permute.xlu0 %1475
        %1477 = vrot.lane.b32.xlu0 %v1443, 122
        %v1478 = vpop.permute.xlu0 %1477
        %1479 = vrot.lane.b32.xlu0 %v1444, 122
        %v1480 = vpop.permute.xlu0 %1479
        %1481 = vrot.lane.b32.xlu0 %v1445, 122
        %v1482 = vpop.permute.xlu0 %1481
        %1483 = vrot.lane.b32.xlu0 %v1446, 122
        %v1484 = vpop.permute.xlu0 %1483
        %1485 = vrot.lane.b32.xlu0 %v1447, 122
        %v1486 = vpop.permute.xlu0 %1485
        %1487 = vrot.lane.b32.xlu0 %v1448, 122
        %v1488 = vpop.permute.xlu0 %1487
        %1489 = vrot.lane.b32.xlu0 %v1449, 122
        %v1490 = vpop.permute.xlu0 %1489
        %1491 = vrot.lane.b32.xlu0 %v1450, 122
        %v1492 = vpop.permute.xlu0 %1491
        %1493 = vrot.lane.b32.xlu0 %v1451, 122
        %v1494 = vpop.permute.xlu0 %1493
        %1495 = vrot.lane.b32.xlu0 %v1452, 122
        %v1496 = vpop.permute.xlu0 %1495
        %1497 = vrot.lane.b32.xlu0 %v1453, 122
        %v1498 = vpop.permute.xlu0 %1497
        %1499 = vrot.lane.b32.xlu0 %v1454, 122
        %v1500 = vpop.permute.xlu0 %1499
        %1501 = vrot.lane.b32.xlu0 %v1455, 122
        %v1502 = vpop.permute.xlu0 %1501
        %1503 = vrot.lane.b32.xlu0 %v1456, 122
        %v1504 = vpop.permute.xlu0 %1503
        %v1521 = vadd.f32 %v1418, %v1474
        %v1522 = vadd.f32 %v1419, %v1476
        %v1523 = vadd.f32 %v1420, %v1478
        %v1524 = vadd.f32 %v1421, %v1480
        %v1525 = vadd.f32 %v1422, %v1482
        %v1526 = vadd.f32 %v1423, %v1484
        %v1527 = vadd.f32 %v1424, %v1486
        %v1528 = vadd.f32 %v1425, %v1488
        %v1529 = vadd.f32 %v1426, %v1490
        %v1530 = vadd.f32 %v1427, %v1492
        %v1531 = vadd.f32 %v1428, %v1494
        %v1532 = vadd.f32 %v1429, %v1496
        %v1533 = vadd.f32 %v1430, %v1498
        %v1534 = vadd.f32 %v1431, %v1500
        %v1535 = vadd.f32 %v1432, %v1502
        %v1536 = vadd.f32 %v1433, %v1504
        %v1537 = vmul.f32 %v1440, %v740
        %v1539 = vrot.slane %v1537, 6
        %v1541 = vadd.f32 %v1438, %v1539
        %s1542 = sld [smem:[#allocation3 + $0x7]]
        %v1543 = vstv %s1542
        %v1544 = vmul.f32 %v1543, %v827
        %v1545 = vmul.f32 %v1543, %v832
        %v1546 = vmul.f32 %v1543, %v837
        %v1547 = vmul.f32 %v1543, %v842
        %v1548 = vmul.f32 %v1543, %v847
        %v1549 = vmul.f32 %v1543, %v852
        %v1550 = vmul.f32 %v1543, %v857
        %v1551 = vmul.f32 %v1543, %v862
        %v1552 = vmul.f32 %v1543, %v867
        %v1553 = vmul.f32 %v1543, %v872
        %v1554 = vmul.f32 %v1543, %v877
        %v1555 = vmul.f32 %v1543, %v882
        %v1556 = vmul.f32 %v1543, %v887
        %v1557 = vmul.f32 %v1543, %v892
        %v1558 = vmul.f32 %v1543, %v897
        %v1559 = vmul.f32 %v1543, %v902
        %1576 = vrot.lane.b32.xlu0 %v1544, 121
        %v1577 = vpop.permute.xlu0 %1576
        %1578 = vrot.lane.b32.xlu0 %v1545, 121
        %v1579 = vpop.permute.xlu0 %1578
        %1580 = vrot.lane.b32.xlu0 %v1546, 121
        %v1581 = vpop.permute.xlu0 %1580
        %1582 = vrot.lane.b32.xlu0 %v1547, 121
        %v1583 = vpop.permute.xlu0 %1582
        %1584 = vrot.lane.b32.xlu0 %v1548, 121
        %v1585 = vpop.permute.xlu0 %1584
        %1586 = vrot.lane.b32.xlu0 %v1549, 121
        %v1587 = vpop.permute.xlu0 %1586
        %1588 = vrot.lane.b32.xlu0 %v1550, 121
        %v1589 = vpop.permute.xlu0 %1588
        %1590 = vrot.lane.b32.xlu0 %v1551, 121
        %v1591 = vpop.permute.xlu0 %1590
        %1592 = vrot.lane.b32.xlu0 %v1552, 121
        %v1593 = vpop.permute.xlu0 %1592
        %1594 = vrot.lane.b32.xlu0 %v1553, 121
        %v1595 = vpop.permute.xlu0 %1594
        %1596 = vrot.lane.b32.xlu0 %v1554, 121
        %v1597 = vpop.permute.xlu0 %1596
        %1598 = vrot.lane.b32.xlu0 %v1555, 121
        %v1599 = vpop.permute.xlu0 %1598
        %1600 = vrot.lane.b32.xlu0 %v1556, 121
        %v1601 = vpop.permute.xlu0 %1600
        %1602 = vrot.lane.b32.xlu0 %v1557, 121
        %v1603 = vpop.permute.xlu0 %1602
        %1604 = vrot.lane.b32.xlu0 %v1558, 121
        %v1605 = vpop.permute.xlu0 %1604
        %1606 = vrot.lane.b32.xlu0 %v1559, 121
        %v1607 = vpop.permute.xlu0 %1606
        %v1624 = vadd.f32 %v1521, %v1577
        %v1625 = vadd.f32 %v1522, %v1579
        %v1626 = vadd.f32 %v1523, %v1581
        %v1627 = vadd.f32 %v1524, %v1583
        %v1628 = vadd.f32 %v1525, %v1585
        %v1629 = vadd.f32 %v1526, %v1587
        %v1630 = vadd.f32 %v1527, %v1589
        %v1631 = vadd.f32 %v1528, %v1591
        %v1632 = vadd.f32 %v1529, %v1593
        %v1633 = vadd.f32 %v1530, %v1595
        %v1634 = vadd.f32 %v1531, %v1597
        %v1635 = vadd.f32 %v1532, %v1599
        %v1636 = vadd.f32 %v1533, %v1601
        %v1637 = vadd.f32 %v1534, %v1603
        %v1638 = vadd.f32 %v1535, %v1605
        %v1639 = vadd.f32 %v1536, %v1607
        %v1640 = vmul.f32 %v1543, %v740
        %v1642 = vrot.slane %v1640, 7
        %v1644 = vadd.f32 %v1541, %v1642
        %1646 = vset.pattern.permute.xlu0 0
        %1647 = vperm.xlu0 %1646, %v1624
        %v1648 = vpop.permute.xlu0 %1647
        %1651 = vset.pattern.permute.xlu0 0
        %1652 = vperm.xlu0 %1651, %v1625
        %v1653 = vpop.permute.xlu0 %1652
        %1656 = vset.pattern.permute.xlu0 0
        %1657 = vperm.xlu0 %1656, %v1626
        %v1658 = vpop.permute.xlu0 %1657
        %1661 = vset.pattern.permute.xlu0 0
        %1662 = vperm.xlu0 %1661, %v1627
        %v1663 = vpop.permute.xlu0 %1662
        %1666 = vset.pattern.permute.xlu0 0
        %1667 = vperm.xlu0 %1666, %v1628
        %v1668 = vpop.permute.xlu0 %1667
        %1671 = vset.pattern.permute.xlu0 0
        %1672 = vperm.xlu0 %1671, %v1629
        %v1673 = vpop.permute.xlu0 %1672
        %1676 = vset.pattern.permute.xlu0 0
        %1677 = vperm.xlu0 %1676, %v1630
        %v1678 = vpop.permute.xlu0 %1677
        %1681 = vset.pattern.permute.xlu0 0
        %1682 = vperm.xlu0 %1681, %v1631
        %v1683 = vpop.permute.xlu0 %1682
        %1686 = vset.pattern.permute.xlu0 0
        %1687 = vperm.xlu0 %1686, %v1632
        %v1688 = vpop.permute.xlu0 %1687
        %1691 = vset.pattern.permute.xlu0 0
        %1692 = vperm.xlu0 %1691, %v1633
        %v1693 = vpop.permute.xlu0 %1692
        %1696 = vset.pattern.permute.xlu0 0
        %1697 = vperm.xlu0 %1696, %v1634
        %v1698 = vpop.permute.xlu0 %1697
        %1701 = vset.pattern.permute.xlu0 0
        %1702 = vperm.xlu0 %1701, %v1635
        %v1703 = vpop.permute.xlu0 %1702
        %1706 = vset.pattern.permute.xlu0 0
        %1707 = vperm.xlu0 %1706, %v1636
        %v1708 = vpop.permute.xlu0 %1707
        %1711 = vset.pattern.permute.xlu0 0
        %1712 = vperm.xlu0 %1711, %v1637
        %v1713 = vpop.permute.xlu0 %1712
        %1716 = vset.pattern.permute.xlu0 0
        %1717 = vperm.xlu0 %1716, %v1638
        %v1718 = vpop.permute.xlu0 %1717
        %1721 = vset.pattern.permute.xlu0 0
        %1722 = vperm.xlu0 %1721, %v1639
        %v1723 = vpop.permute.xlu0 %1722
        %v1725 = vadd.f32 %v588, %v1648
        %v1726 = vadd.f32 %v589, %v1653
        %v1727 = vadd.f32 %v590, %v1658
        %v1728 = vadd.f32 %v591, %v1663
        %v1729 = vadd.f32 %v592, %v1668
        %v1730 = vadd.f32 %v593, %v1673
        %v1731 = vadd.f32 %v594, %v1678
        %v1732 = vadd.f32 %v595, %v1683
        %v1733 = vadd.f32 %v596, %v1688
        %v1734 = vadd.f32 %v597, %v1693
        %v1735 = vadd.f32 %v598, %v1698
        %v1736 = vadd.f32 %v599, %v1703
        %v1737 = vadd.f32 %v600, %v1708
        %v1738 = vadd.f32 %v601, %v1713
        %v1739 = vadd.f32 %v602, %v1718
        %v1740 = vadd.f32 %v603, %v1723
        %v1741 = vlaneseq
        %v1742 = vshrl.u32 %v1741, 7
        %v1743 = vsub.s32 0, %v1742
        %v1744 = vrot.slane %v1644, %v1743
        %v1745 = vadd.f32 %v1725, %v1744
        %v1746 = vadd.f32 %v1726, %v1744
        %v1747 = vadd.f32 %v1727, %v1744
        %v1748 = vadd.f32 %v1728, %v1744
        %v1749 = vadd.f32 %v1729, %v1744
        %v1750 = vadd.f32 %v1730, %v1744
        %v1751 = vadd.f32 %v1731, %v1744
        %v1752 = vadd.f32 %v1732, %v1744
        %v1753 = vadd.f32 %v1733, %v1744
        %v1754 = vadd.f32 %v1734, %v1744
        %v1755 = vadd.f32 %v1735, %v1744
        %v1756 = vadd.f32 %v1736, %v1744
        %v1757 = vadd.f32 %v1737, %v1744
        %v1758 = vadd.f32 %v1738, %v1744
        %v1759 = vadd.f32 %v1739, %v1744
        %v1760 = vadd.f32 %v1740, %v1744
        %1762 = vset.pattern.permute.xlu0 0
        %1763 = vperm.xlu0 %1762, %v827
        %v1764 = vpop.permute.xlu0 %1763
        %1767 = vset.pattern.permute.xlu0 0
        %1768 = vperm.xlu0 %1767, %v832
        %v1769 = vpop.permute.xlu0 %1768
        %1772 = vset.pattern.permute.xlu0 0
        %1773 = vperm.xlu0 %1772, %v837
        %v1774 = vpop.permute.xlu0 %1773
        %1777 = vset.pattern.permute.xlu0 0
        %1778 = vperm.xlu0 %1777, %v842
        %v1779 = vpop.permute.xlu0 %1778
        %1782 = vset.pattern.permute.xlu0 0
        %1783 = vperm.xlu0 %1782, %v847
        %v1784 = vpop.permute.xlu0 %1783
        %1787 = vset.pattern.permute.xlu0 0
        %1788 = vperm.xlu0 %1787, %v852
        %v1789 = vpop.permute.xlu0 %1788
        %1792 = vset.pattern.permute.xlu0 0
        %1793 = vperm.xlu0 %1792, %v857
        %v1794 = vpop.permute.xlu0 %1793
        %1797 = vset.pattern.permute.xlu0 0
        %1798 = vperm.xlu0 %1797, %v862
        %v1799 = vpop.permute.xlu0 %1798
        %1802 = vset.pattern.permute.xlu0 0
        %1803 = vperm.xlu0 %1802, %v867
        %v1804 = vpop.permute.xlu0 %1803
        %1807 = vset.pattern.permute.xlu0 0
        %1808 = vperm.xlu0 %1807, %v872
        %v1809 = vpop.permute.xlu0 %1808
        %1812 = vset.pattern.permute.xlu0 0
        %1813 = vperm.xlu0 %1812, %v877
        %v1814 = vpop.permute.xlu0 %1813
        %1817 = vset.pattern.permute.xlu0 0
        %1818 = vperm.xlu0 %1817, %v882
        %v1819 = vpop.permute.xlu0 %1818
        %1822 = vset.pattern.permute.xlu0 0
        %1823 = vperm.xlu0 %1822, %v887
        %v1824 = vpop.permute.xlu0 %1823
        %1827 = vset.pattern.permute.xlu0 0
        %1828 = vperm.xlu0 %1827, %v892
        %v1829 = vpop.permute.xlu0 %1828
        %1832 = vset.pattern.permute.xlu0 0
        %1833 = vperm.xlu0 %1832, %v897
        %v1834 = vpop.permute.xlu0 %1833
        %1837 = vset.pattern.permute.xlu0 0
        %1838 = vperm.xlu0 %1837, %v902
        %v1839 = vpop.permute.xlu0 %1838
        %v1841 = vlaneseq
        %v1842 = vshrl.u32 %v1841, 7
        %v1843 = vsub.s32 0, %v1842
        %v1844 = vrot.slane %v740, %v1843
        %v1845 = vadd.f32 %v1764, %v1844
        %v1846 = vadd.f32 %v1769, %v1844
        %v1847 = vadd.f32 %v1774, %v1844
        %v1848 = vadd.f32 %v1779, %v1844
        %v1849 = vadd.f32 %v1784, %v1844
        %v1850 = vadd.f32 %v1789, %v1844
        %v1851 = vadd.f32 %v1794, %v1844
        %v1852 = vadd.f32 %v1799, %v1844
        %v1853 = vadd.f32 %v1804, %v1844
        %v1854 = vadd.f32 %v1809, %v1844
        %v1855 = vadd.f32 %v1814, %v1844
        %v1856 = vadd.f32 %v1819, %v1844
        %v1857 = vadd.f32 %v1824, %v1844
        %v1858 = vadd.f32 %v1829, %v1844
        %v1859 = vadd.f32 %v1834, %v1844
        %v1860 = vadd.f32 %v1839, %v1844
        %s1861 = sld [smem:[#allocation6]]
        %v1862 = vand.u32 2147483647, %v1845
        %v1863 = vand.u32 2147483647, %v1846
        %v1864 = vand.u32 2147483647, %v1847
        %v1865 = vand.u32 2147483647, %v1848
        %v1866 = vand.u32 2147483647, %v1849
        %v1867 = vand.u32 2147483647, %v1850
        %v1868 = vand.u32 2147483647, %v1851
        %v1869 = vand.u32 2147483647, %v1852
        %v1870 = vand.u32 2147483647, %v1853
        %v1871 = vand.u32 2147483647, %v1854
        %v1872 = vand.u32 2147483647, %v1855
        %v1873 = vand.u32 2147483647, %v1856
        %v1874 = vand.u32 2147483647, %v1857
        %v1875 = vand.u32 2147483647, %v1858
        %v1876 = vand.u32 2147483647, %v1859
        %v1877 = vand.u32 2147483647, %v1860
        %v1878 = vstv %s1861
        %v1879 = vmul.f32 %v1878, %v1862
        %v1880 = vmul.f32 %v1878, %v1863
        %v1881 = vmul.f32 %v1878, %v1864
        %v1882 = vmul.f32 %v1878, %v1865
        %v1883 = vmul.f32 %v1878, %v1866
        %v1884 = vmul.f32 %v1878, %v1867
        %v1885 = vmul.f32 %v1878, %v1868
        %v1886 = vmul.f32 %v1878, %v1869
        %v1887 = vmul.f32 %v1878, %v1870
        %v1888 = vmul.f32 %v1878, %v1871
        %v1889 = vmul.f32 %v1878, %v1872
        %v1890 = vmul.f32 %v1878, %v1873
        %v1891 = vmul.f32 %v1878, %v1874
        %v1892 = vmul.f32 %v1878, %v1875
        %v1893 = vmul.f32 %v1878, %v1876
        %v1894 = vmul.f32 %v1878, %v1877
        %v1895 = vadd.f32 %v1745, %v1879
        %v1896 = vadd.f32 %v1746, %v1880
        %v1897 = vadd.f32 %v1747, %v1881
        %v1898 = vadd.f32 %v1748, %v1882
        %v1899 = vadd.f32 %v1749, %v1883
        %v1900 = vadd.f32 %v1750, %v1884
        %v1901 = vadd.f32 %v1751, %v1885
        %v1902 = vadd.f32 %v1752, %v1886
        %v1903 = vadd.f32 %v1753, %v1887
        %v1904 = vadd.f32 %v1754, %v1888
        %v1905 = vadd.f32 %v1755, %v1889
        %v1906 = vadd.f32 %v1756, %v1890
        %v1907 = vadd.f32 %v1757, %v1891
        %v1908 = vadd.f32 %v1758, %v1892
        %v1909 = vadd.f32 %v1759, %v1893
        %v1910 = vadd.f32 %v1760, %v1894
        %1911 = vset.pattern.permute.xlu0 1
        %1912 = vperm.xlu0 %1911, %v827
        %v1913 = vpop.permute.xlu0 %1912
        %1915 = vset.pattern.permute.xlu0 1
        %1916 = vperm.xlu0 %1915, %v832
        %v1917 = vpop.permute.xlu0 %1916
        %1919 = vset.pattern.permute.xlu0 1
        %1920 = vperm.xlu0 %1919, %v837
        %v1921 = vpop.permute.xlu0 %1920
        %1923 = vset.pattern.permute.xlu0 1
        %1924 = vperm.xlu0 %1923, %v842
        %v1925 = vpop.permute.xlu0 %1924
        %1927 = vset.pattern.permute.xlu0 1
        %1928 = vperm.xlu0 %1927, %v847
        %v1929 = vpop.permute.xlu0 %1928
        %1931 = vset.pattern.permute.xlu0 1
        %1932 = vperm.xlu0 %1931, %v852
        %v1933 = vpop.permute.xlu0 %1932
        %1935 = vset.pattern.permute.xlu0 1
        %1936 = vperm.xlu0 %1935, %v857
        %v1937 = vpop.permute.xlu0 %1936
        %1939 = vset.pattern.permute.xlu0 1
        %1940 = vperm.xlu0 %1939, %v862
        %v1941 = vpop.permute.xlu0 %1940
        %1943 = vset.pattern.permute.xlu0 1
        %1944 = vperm.xlu0 %1943, %v867
        %v1945 = vpop.permute.xlu0 %1944
        %1947 = vset.pattern.permute.xlu0 1
        %1948 = vperm.xlu0 %1947, %v872
        %v1949 = vpop.permute.xlu0 %1948
        %1951 = vset.pattern.permute.xlu0 1
        %1952 = vperm.xlu0 %1951, %v877
        %v1953 = vpop.permute.xlu0 %1952
        %1955 = vset.pattern.permute.xlu0 1
        %1956 = vperm.xlu0 %1955, %v882
        %v1957 = vpop.permute.xlu0 %1956
        %1959 = vset.pattern.permute.xlu0 1
        %1960 = vperm.xlu0 %1959, %v887
        %v1961 = vpop.permute.xlu0 %1960
        %1963 = vset.pattern.permute.xlu0 1
        %1964 = vperm.xlu0 %1963, %v892
        %v1965 = vpop.permute.xlu0 %1964
        %1967 = vset.pattern.permute.xlu0 1
        %1968 = vperm.xlu0 %1967, %v897
        %v1969 = vpop.permute.xlu0 %1968
        %1971 = vset.pattern.permute.xlu0 1
        %1972 = vperm.xlu0 %1971, %v902
        %v1973 = vpop.permute.xlu0 %1972
        %v1975 = vlaneseq
        %v1976 = vshrl.u32 %v1975, 7
        %v1977 = vsub.s32 1, %v1976
        %v1978 = vrot.slane %v740, %v1977
        %v1979 = vadd.f32 %v1913, %v1978
        %v1980 = vadd.f32 %v1917, %v1978
        %v1981 = vadd.f32 %v1921, %v1978
        %v1982 = vadd.f32 %v1925, %v1978
        %v1983 = vadd.f32 %v1929, %v1978
        %v1984 = vadd.f32 %v1933, %v1978
        %v1985 = vadd.f32 %v1937, %v1978
        %v1986 = vadd.f32 %v1941, %v1978
        %v1987 = vadd.f32 %v1945, %v1978
        %v1988 = vadd.f32 %v1949, %v1978
        %v1989 = vadd.f32 %v1953, %v1978
        %v1990 = vadd.f32 %v1957, %v1978
        %v1991 = vadd.f32 %v1961, %v1978
        %v1992 = vadd.f32 %v1965, %v1978
        %v1993 = vadd.f32 %v1969, %v1978
        %v1994 = vadd.f32 %v1973, %v1978
        %s1995 = sld [smem:[#allocation6 + $0x1]]
        %v1996 = vand.u32 2147483647, %v1979
        %v1997 = vand.u32 2147483647, %v1980
        %v1998 = vand.u32 2147483647, %v1981
        %v1999 = vand.u32 2147483647, %v1982
        %v2000 = vand.u32 2147483647, %v1983
        %v2001 = vand.u32 2147483647, %v1984
        %v2002 = vand.u32 2147483647, %v1985
        %v2003 = vand.u32 2147483647, %v1986
        %v2004 = vand.u32 2147483647, %v1987
        %v2005 = vand.u32 2147483647, %v1988
        %v2006 = vand.u32 2147483647, %v1989
        %v2007 = vand.u32 2147483647, %v1990
        %v2008 = vand.u32 2147483647, %v1991
        %v2009 = vand.u32 2147483647, %v1992
        %v2010 = vand.u32 2147483647, %v1993
        %v2011 = vand.u32 2147483647, %v1994
        %v2012 = vstv %s1995
        %v2013 = vmul.f32 %v2012, %v1996
        %v2014 = vmul.f32 %v2012, %v1997
        %v2015 = vmul.f32 %v2012, %v1998
        %v2016 = vmul.f32 %v2012, %v1999
        %v2017 = vmul.f32 %v2012, %v2000
        %v2018 = vmul.f32 %v2012, %v2001
        %v2019 = vmul.f32 %v2012, %v2002
        %v2020 = vmul.f32 %v2012, %v2003
        %v2021 = vmul.f32 %v2012, %v2004
        %v2022 = vmul.f32 %v2012, %v2005
        %v2023 = vmul.f32 %v2012, %v2006
        %v2024 = vmul.f32 %v2012, %v2007
        %v2025 = vmul.f32 %v2012, %v2008
        %v2026 = vmul.f32 %v2012, %v2009
        %v2027 = vmul.f32 %v2012, %v2010
        %v2028 = vmul.f32 %v2012, %v2011
        %v2029 = vadd.f32 %v1895, %v2013
        %v2030 = vadd.f32 %v1896, %v2014
        %v2031 = vadd.f32 %v1897, %v2015
        %v2032 = vadd.f32 %v1898, %v2016
        %v2033 = vadd.f32 %v1899, %v2017
        %v2034 = vadd.f32 %v1900, %v2018
        %v2035 = vadd.f32 %v1901, %v2019
        %v2036 = vadd.f32 %v1902, %v2020
        %v2037 = vadd.f32 %v1903, %v2021
        %v2038 = vadd.f32 %v1904, %v2022
        %v2039 = vadd.f32 %v1905, %v2023
        %v2040 = vadd.f32 %v1906, %v2024
        %v2041 = vadd.f32 %v1907, %v2025
        %v2042 = vadd.f32 %v1908, %v2026
        %v2043 = vadd.f32 %v1909, %v2027
        %v2044 = vadd.f32 %v1910, %v2028
        %2045 = vset.pattern.permute.xlu0 2
        %2046 = vperm.xlu0 %2045, %v827
        %v2047 = vpop.permute.xlu0 %2046
        %2049 = vset.pattern.permute.xlu0 2
        %2050 = vperm.xlu0 %2049, %v832
        %v2051 = vpop.permute.xlu0 %2050
        %2053 = vset.pattern.permute.xlu0 2
        %2054 = vperm.xlu0 %2053, %v837
        %v2055 = vpop.permute.xlu0 %2054
        %2057 = vset.pattern.permute.xlu0 2
        %2058 = vperm.xlu0 %2057, %v842
        %v2059 = vpop.permute.xlu0 %2058
        %2061 = vset.pattern.permute.xlu0 2
        %2062 = vperm.xlu0 %2061, %v847
        %v2063 = vpop.permute.xlu0 %2062
        %2065 = vset.pattern.permute.xlu0 2
        %2066 = vperm.xlu0 %2065, %v852
        %v2067 = vpop.permute.xlu0 %2066
        %2069 = vset.pattern.permute.xlu0 2
        %2070 = vperm.xlu0 %2069, %v857
        %v2071 = vpop.permute.xlu0 %2070
        %2073 = vset.pattern.permute.xlu0 2
        %2074 = vperm.xlu0 %2073, %v862
        %v2075 = vpop.permute.xlu0 %2074
        %2077 = vset.pattern.permute.xlu0 2
        %2078 = vperm.xlu0 %2077, %v867
        %v2079 = vpop.permute.xlu0 %2078
        %2081 = vset.pattern.permute.xlu0 2
        %2082 = vperm.xlu0 %2081, %v872
        %v2083 = vpop.permute.xlu0 %2082
        %2085 = vset.pattern.permute.xlu0 2
        %2086 = vperm.xlu0 %2085, %v877
        %v2087 = vpop.permute.xlu0 %2086
        %2089 = vset.pattern.permute.xlu0 2
        %2090 = vperm.xlu0 %2089, %v882
        %v2091 = vpop.permute.xlu0 %2090
        %2093 = vset.pattern.permute.xlu0 2
        %2094 = vperm.xlu0 %2093, %v887
        %v2095 = vpop.permute.xlu0 %2094
        %2097 = vset.pattern.permute.xlu0 2
        %2098 = vperm.xlu0 %2097, %v892
        %v2099 = vpop.permute.xlu0 %2098
        %2101 = vset.pattern.permute.xlu0 2
        %2102 = vperm.xlu0 %2101, %v897
        %v2103 = vpop.permute.xlu0 %2102
        %2105 = vset.pattern.permute.xlu0 2
        %2106 = vperm.xlu0 %2105, %v902
        %v2107 = vpop.permute.xlu0 %2106
        %v2109 = vlaneseq
        %v2110 = vshrl.u32 %v2109, 7
        %v2111 = vsub.s32 2, %v2110
        %v2112 = vrot.slane %v740, %v2111
        %v2113 = vadd.f32 %v2047, %v2112
        %v2114 = vadd.f32 %v2051, %v2112
        %v2115 = vadd.f32 %v2055, %v2112
        %v2116 = vadd.f32 %v2059, %v2112
        %v2117 = vadd.f32 %v2063, %v2112
        %v2118 = vadd.f32 %v2067, %v2112
        %v2119 = vadd.f32 %v2071, %v2112
        %v2120 = vadd.f32 %v2075, %v2112
        %v2121 = vadd.f32 %v2079, %v2112
        %v2122 = vadd.f32 %v2083, %v2112
        %v2123 = vadd.f32 %v2087, %v2112
        %v2124 = vadd.f32 %v2091, %v2112
        %v2125 = vadd.f32 %v2095, %v2112
        %v2126 = vadd.f32 %v2099, %v2112
        %v2127 = vadd.f32 %v2103, %v2112
        %v2128 = vadd.f32 %v2107, %v2112
        %s2129 = sld [smem:[#allocation6 + $0x2]]
        %v2130 = vand.u32 2147483647, %v2113
        %v2131 = vand.u32 2147483647, %v2114
        %v2132 = vand.u32 2147483647, %v2115
        %v2133 = vand.u32 2147483647, %v2116
        %v2134 = vand.u32 2147483647, %v2117
        %v2135 = vand.u32 2147483647, %v2118
        %v2136 = vand.u32 2147483647, %v2119
        %v2137 = vand.u32 2147483647, %v2120
        %v2138 = vand.u32 2147483647, %v2121
        %v2139 = vand.u32 2147483647, %v2122
        %v2140 = vand.u32 2147483647, %v2123
        %v2141 = vand.u32 2147483647, %v2124
        %v2142 = vand.u32 2147483647, %v2125
        %v2143 = vand.u32 2147483647, %v2126
        %v2144 = vand.u32 2147483647, %v2127
        %v2145 = vand.u32 2147483647, %v2128
        %v2146 = vstv %s2129
        %v2147 = vmul.f32 %v2146, %v2130
        %v2148 = vmul.f32 %v2146, %v2131
        %v2149 = vmul.f32 %v2146, %v2132
        %v2150 = vmul.f32 %v2146, %v2133
        %v2151 = vmul.f32 %v2146, %v2134
        %v2152 = vmul.f32 %v2146, %v2135
        %v2153 = vmul.f32 %v2146, %v2136
        %v2154 = vmul.f32 %v2146, %v2137
        %v2155 = vmul.f32 %v2146, %v2138
        %v2156 = vmul.f32 %v2146, %v2139
        %v2157 = vmul.f32 %v2146, %v2140
        %v2158 = vmul.f32 %v2146, %v2141
        %v2159 = vmul.f32 %v2146, %v2142
        %v2160 = vmul.f32 %v2146, %v2143
        %v2161 = vmul.f32 %v2146, %v2144
        %v2162 = vmul.f32 %v2146, %v2145
        %v2163 = vadd.f32 %v2029, %v2147
        %v2164 = vadd.f32 %v2030, %v2148
        %v2165 = vadd.f32 %v2031, %v2149
        %v2166 = vadd.f32 %v2032, %v2150
        %v2167 = vadd.f32 %v2033, %v2151
        %v2168 = vadd.f32 %v2034, %v2152
        %v2169 = vadd.f32 %v2035, %v2153
        %v2170 = vadd.f32 %v2036, %v2154
        %v2171 = vadd.f32 %v2037, %v2155
        %v2172 = vadd.f32 %v2038, %v2156
        %v2173 = vadd.f32 %v2039, %v2157
        %v2174 = vadd.f32 %v2040, %v2158
        %v2175 = vadd.f32 %v2041, %v2159
        %v2176 = vadd.f32 %v2042, %v2160
        %v2177 = vadd.f32 %v2043, %v2161
        %v2178 = vadd.f32 %v2044, %v2162
        %2179 = vset.pattern.permute.xlu0 3
        %2180 = vperm.xlu0 %2179, %v827
        %v2181 = vpop.permute.xlu0 %2180
        %2183 = vset.pattern.permute.xlu0 3
        %2184 = vperm.xlu0 %2183, %v832
        %v2185 = vpop.permute.xlu0 %2184
        %2187 = vset.pattern.permute.xlu0 3
        %2188 = vperm.xlu0 %2187, %v837
        %v2189 = vpop.permute.xlu0 %2188
        %2191 = vset.pattern.permute.xlu0 3
        %2192 = vperm.xlu0 %2191, %v842
        %v2193 = vpop.permute.xlu0 %2192
        %2195 = vset.pattern.permute.xlu0 3
        %2196 = vperm.xlu0 %2195, %v847
        %v2197 = vpop.permute.xlu0 %2196
        %2199 = vset.pattern.permute.xlu0 3
        %2200 = vperm.xlu0 %2199, %v852
        %v2201 = vpop.permute.xlu0 %2200
        %2203 = vset.pattern.permute.xlu0 3
        %2204 = vperm.xlu0 %2203, %v857
        %v2205 = vpop.permute.xlu0 %2204
        %2207 = vset.pattern.permute.xlu0 3
        %2208 = vperm.xlu0 %2207, %v862
        %v2209 = vpop.permute.xlu0 %2208
        %2211 = vset.pattern.permute.xlu0 3
        %2212 = vperm.xlu0 %2211, %v867
        %v2213 = vpop.permute.xlu0 %2212
        %2215 = vset.pattern.permute.xlu0 3
        %2216 = vperm.xlu0 %2215, %v872
        %v2217 = vpop.permute.xlu0 %2216
        %2219 = vset.pattern.permute.xlu0 3
        %2220 = vperm.xlu0 %2219, %v877
        %v2221 = vpop.permute.xlu0 %2220
        %2223 = vset.pattern.permute.xlu0 3
        %2224 = vperm.xlu0 %2223, %v882
        %v2225 = vpop.permute.xlu0 %2224
        %2227 = vset.pattern.permute.xlu0 3
        %2228 = vperm.xlu0 %2227, %v887
        %v2229 = vpop.permute.xlu0 %2228
        %2231 = vset.pattern.permute.xlu0 3
        %2232 = vperm.xlu0 %2231, %v892
        %v2233 = vpop.permute.xlu0 %2232
        %2235 = vset.pattern.permute.xlu0 3
        %2236 = vperm.xlu0 %2235, %v897
        %v2237 = vpop.permute.xlu0 %2236
        %2239 = vset.pattern.permute.xlu0 3
        %2240 = vperm.xlu0 %2239, %v902
        %v2241 = vpop.permute.xlu0 %2240
        %v2243 = vlaneseq
        %v2244 = vshrl.u32 %v2243, 7
        %v2245 = vsub.s32 3, %v2244
        %v2246 = vrot.slane %v740, %v2245
        %v2247 = vadd.f32 %v2181, %v2246
        %v2248 = vadd.f32 %v2185, %v2246
        %v2249 = vadd.f32 %v2189, %v2246
        %v2250 = vadd.f32 %v2193, %v2246
        %v2251 = vadd.f32 %v2197, %v2246
        %v2252 = vadd.f32 %v2201, %v2246
        %v2253 = vadd.f32 %v2205, %v2246
        %v2254 = vadd.f32 %v2209, %v2246
        %v2255 = vadd.f32 %v2213, %v2246
        %v2256 = vadd.f32 %v2217, %v2246
        %v2257 = vadd.f32 %v2221, %v2246
        %v2258 = vadd.f32 %v2225, %v2246
        %v2259 = vadd.f32 %v2229, %v2246
        %v2260 = vadd.f32 %v2233, %v2246
        %v2261 = vadd.f32 %v2237, %v2246
        %v2262 = vadd.f32 %v2241, %v2246
        %s2263 = sld [smem:[#allocation6 + $0x3]]
        %v2264 = vand.u32 2147483647, %v2247
        %v2265 = vand.u32 2147483647, %v2248
        %v2266 = vand.u32 2147483647, %v2249
        %v2267 = vand.u32 2147483647, %v2250
        %v2268 = vand.u32 2147483647, %v2251
        %v2269 = vand.u32 2147483647, %v2252
        %v2270 = vand.u32 2147483647, %v2253
        %v2271 = vand.u32 2147483647, %v2254
        %v2272 = vand.u32 2147483647, %v2255
        %v2273 = vand.u32 2147483647, %v2256
        %v2274 = vand.u32 2147483647, %v2257
        %v2275 = vand.u32 2147483647, %v2258
        %v2276 = vand.u32 2147483647, %v2259
        %v2277 = vand.u32 2147483647, %v2260
        %v2278 = vand.u32 2147483647, %v2261
        %v2279 = vand.u32 2147483647, %v2262
        %v2280 = vstv %s2263
        %v2281 = vmul.f32 %v2280, %v2264
        %v2282 = vmul.f32 %v2280, %v2265
        %v2283 = vmul.f32 %v2280, %v2266
        %v2284 = vmul.f32 %v2280, %v2267
        %v2285 = vmul.f32 %v2280, %v2268
        %v2286 = vmul.f32 %v2280, %v2269
        %v2287 = vmul.f32 %v2280, %v2270
        %v2288 = vmul.f32 %v2280, %v2271
        %v2289 = vmul.f32 %v2280, %v2272
        %v2290 = vmul.f32 %v2280, %v2273
        %v2291 = vmul.f32 %v2280, %v2274
        %v2292 = vmul.f32 %v2280, %v2275
        %v2293 = vmul.f32 %v2280, %v2276
        %v2294 = vmul.f32 %v2280, %v2277
        %v2295 = vmul.f32 %v2280, %v2278
        %v2296 = vmul.f32 %v2280, %v2279
        %v2297 = vadd.f32 %v2163, %v2281
        %v2298 = vadd.f32 %v2164, %v2282
        %v2299 = vadd.f32 %v2165, %v2283
        %v2300 = vadd.f32 %v2166, %v2284
        %v2301 = vadd.f32 %v2167, %v2285
        %v2302 = vadd.f32 %v2168, %v2286
        %v2303 = vadd.f32 %v2169, %v2287
        %v2304 = vadd.f32 %v2170, %v2288
        %v2305 = vadd.f32 %v2171, %v2289
        %v2306 = vadd.f32 %v2172, %v2290
        %v2307 = vadd.f32 %v2173, %v2291
        %v2308 = vadd.f32 %v2174, %v2292
        %v2309 = vadd.f32 %v2175, %v2293
        %v2310 = vadd.f32 %v2176, %v2294
        %v2311 = vadd.f32 %v2177, %v2295
        %v2312 = vadd.f32 %v2178, %v2296
        %2313 = vset.pattern.permute.xlu0 4
        %2314 = vperm.xlu0 %2313, %v827
        %v2315 = vpop.permute.xlu0 %2314
        %2317 = vset.pattern.permute.xlu0 4
        %2318 = vperm.xlu0 %2317, %v832
        %v2319 = vpop.permute.xlu0 %2318
        %2321 = vset.pattern.permute.xlu0 4
        %2322 = vperm.xlu0 %2321, %v837
        %v2323 = vpop.permute.xlu0 %2322
        %2325 = vset.pattern.permute.xlu0 4
        %2326 = vperm.xlu0 %2325, %v842
        %v2327 = vpop.permute.xlu0 %2326
        %2329 = vset.pattern.permute.xlu0 4
        %2330 = vperm.xlu0 %2329, %v847
        %v2331 = vpop.permute.xlu0 %2330
        %2333 = vset.pattern.permute.xlu0 4
        %2334 = vperm.xlu0 %2333, %v852
        %v2335 = vpop.permute.xlu0 %2334
        %2337 = vset.pattern.permute.xlu0 4
        %2338 = vperm.xlu0 %2337, %v857
        %v2339 = vpop.permute.xlu0 %2338
        %2341 = vset.pattern.permute.xlu0 4
        %2342 = vperm.xlu0 %2341, %v862
        %v2343 = vpop.permute.xlu0 %2342
        %2345 = vset.pattern.permute.xlu0 4
        %2346 = vperm.xlu0 %2345, %v867
        %v2347 = vpop.permute.xlu0 %2346
        %2349 = vset.pattern.permute.xlu0 4
        %2350 = vperm.xlu0 %2349, %v872
        %v2351 = vpop.permute.xlu0 %2350
        %2353 = vset.pattern.permute.xlu0 4
        %2354 = vperm.xlu0 %2353, %v877
        %v2355 = vpop.permute.xlu0 %2354
        %2357 = vset.pattern.permute.xlu0 4
        %2358 = vperm.xlu0 %2357, %v882
        %v2359 = vpop.permute.xlu0 %2358
        %2361 = vset.pattern.permute.xlu0 4
        %2362 = vperm.xlu0 %2361, %v887
        %v2363 = vpop.permute.xlu0 %2362
        %2365 = vset.pattern.permute.xlu0 4
        %2366 = vperm.xlu0 %2365, %v892
        %v2367 = vpop.permute.xlu0 %2366
        %2369 = vset.pattern.permute.xlu0 4
        %2370 = vperm.xlu0 %2369, %v897
        %v2371 = vpop.permute.xlu0 %2370
        %2373 = vset.pattern.permute.xlu0 4
        %2374 = vperm.xlu0 %2373, %v902
        %v2375 = vpop.permute.xlu0 %2374
        %v2377 = vlaneseq
        %v2378 = vshrl.u32 %v2377, 7
        %v2379 = vsub.s32 4, %v2378
        %v2380 = vrot.slane %v740, %v2379
        %v2381 = vadd.f32 %v2315, %v2380
        %v2382 = vadd.f32 %v2319, %v2380
        %v2383 = vadd.f32 %v2323, %v2380
        %v2384 = vadd.f32 %v2327, %v2380
        %v2385 = vadd.f32 %v2331, %v2380
        %v2386 = vadd.f32 %v2335, %v2380
        %v2387 = vadd.f32 %v2339, %v2380
        %v2388 = vadd.f32 %v2343, %v2380
        %v2389 = vadd.f32 %v2347, %v2380
        %v2390 = vadd.f32 %v2351, %v2380
        %v2391 = vadd.f32 %v2355, %v2380
        %v2392 = vadd.f32 %v2359, %v2380
        %v2393 = vadd.f32 %v2363, %v2380
        %v2394 = vadd.f32 %v2367, %v2380
        %v2395 = vadd.f32 %v2371, %v2380
        %v2396 = vadd.f32 %v2375, %v2380
        %s2397 = sld [smem:[#allocation6 + $0x4]]
        %v2398 = vand.u32 2147483647, %v2381
        %v2399 = vand.u32 2147483647, %v2382
        %v2400 = vand.u32 2147483647, %v2383
        %v2401 = vand.u32 2147483647, %v2384
        %v2402 = vand.u32 2147483647, %v2385
        %v2403 = vand.u32 2147483647, %v2386
        %v2404 = vand.u32 2147483647, %v2387
        %v2405 = vand.u32 2147483647, %v2388
        %v2406 = vand.u32 2147483647, %v2389
        %v2407 = vand.u32 2147483647, %v2390
        %v2408 = vand.u32 2147483647, %v2391
        %v2409 = vand.u32 2147483647, %v2392
        %v2410 = vand.u32 2147483647, %v2393
        %v2411 = vand.u32 2147483647, %v2394
        %v2412 = vand.u32 2147483647, %v2395
        %v2413 = vand.u32 2147483647, %v2396
        %v2414 = vstv %s2397
        %v2415 = vmul.f32 %v2414, %v2398
        %v2416 = vmul.f32 %v2414, %v2399
        %v2417 = vmul.f32 %v2414, %v2400
        %v2418 = vmul.f32 %v2414, %v2401
        %v2419 = vmul.f32 %v2414, %v2402
        %v2420 = vmul.f32 %v2414, %v2403
        %v2421 = vmul.f32 %v2414, %v2404
        %v2422 = vmul.f32 %v2414, %v2405
        %v2423 = vmul.f32 %v2414, %v2406
        %v2424 = vmul.f32 %v2414, %v2407
        %v2425 = vmul.f32 %v2414, %v2408
        %v2426 = vmul.f32 %v2414, %v2409
        %v2427 = vmul.f32 %v2414, %v2410
        %v2428 = vmul.f32 %v2414, %v2411
        %v2429 = vmul.f32 %v2414, %v2412
        %v2430 = vmul.f32 %v2414, %v2413
        %v2431 = vadd.f32 %v2297, %v2415
        %v2432 = vadd.f32 %v2298, %v2416
        %v2433 = vadd.f32 %v2299, %v2417
        %v2434 = vadd.f32 %v2300, %v2418
        %v2435 = vadd.f32 %v2301, %v2419
        %v2436 = vadd.f32 %v2302, %v2420
        %v2437 = vadd.f32 %v2303, %v2421
        %v2438 = vadd.f32 %v2304, %v2422
        %v2439 = vadd.f32 %v2305, %v2423
        %v2440 = vadd.f32 %v2306, %v2424
        %v2441 = vadd.f32 %v2307, %v2425
        %v2442 = vadd.f32 %v2308, %v2426
        %v2443 = vadd.f32 %v2309, %v2427
        %v2444 = vadd.f32 %v2310, %v2428
        %v2445 = vadd.f32 %v2311, %v2429
        %v2446 = vadd.f32 %v2312, %v2430
        %2447 = vset.pattern.permute.xlu0 5
        %2448 = vperm.xlu0 %2447, %v827
        %v2449 = vpop.permute.xlu0 %2448
        %2451 = vset.pattern.permute.xlu0 5
        %2452 = vperm.xlu0 %2451, %v832
        %v2453 = vpop.permute.xlu0 %2452
        %2455 = vset.pattern.permute.xlu0 5
        %2456 = vperm.xlu0 %2455, %v837
        %v2457 = vpop.permute.xlu0 %2456
        %2459 = vset.pattern.permute.xlu0 5
        %2460 = vperm.xlu0 %2459, %v842
        %v2461 = vpop.permute.xlu0 %2460
        %2463 = vset.pattern.permute.xlu0 5
        %2464 = vperm.xlu0 %2463, %v847
        %v2465 = vpop.permute.xlu0 %2464
        %2467 = vset.pattern.permute.xlu0 5
        %2468 = vperm.xlu0 %2467, %v852
        %v2469 = vpop.permute.xlu0 %2468
        %2471 = vset.pattern.permute.xlu0 5
        %2472 = vperm.xlu0 %2471, %v857
        %v2473 = vpop.permute.xlu0 %2472
        %2475 = vset.pattern.permute.xlu0 5
        %2476 = vperm.xlu0 %2475, %v862
        %v2477 = vpop.permute.xlu0 %2476
        %2479 = vset.pattern.permute.xlu0 5
        %2480 = vperm.xlu0 %2479, %v867
        %v2481 = vpop.permute.xlu0 %2480
        %2483 = vset.pattern.permute.xlu0 5
        %2484 = vperm.xlu0 %2483, %v872
        %v2485 = vpop.permute.xlu0 %2484
        %2487 = vset.pattern.permute.xlu0 5
        %2488 = vperm.xlu0 %2487, %v877
        %v2489 = vpop.permute.xlu0 %2488
        %2491 = vset.pattern.permute.xlu0 5
        %2492 = vperm.xlu0 %2491, %v882
        %v2493 = vpop.permute.xlu0 %2492
        %2495 = vset.pattern.permute.xlu0 5
        %2496 = vperm.xlu0 %2495, %v887
        %v2497 = vpop.permute.xlu0 %2496
        %2499 = vset.pattern.permute.xlu0 5
        %2500 = vperm.xlu0 %2499, %v892
        %v2501 = vpop.permute.xlu0 %2500
        %2503 = vset.pattern.permute.xlu0 5
        %2504 = vperm.xlu0 %2503, %v897
        %v2505 = vpop.permute.xlu0 %2504
        %2507 = vset.pattern.permute.xlu0 5
        %2508 = vperm.xlu0 %2507, %v902
        %v2509 = vpop.permute.xlu0 %2508
        %v2511 = vlaneseq
        %v2512 = vshrl.u32 %v2511, 7
        %v2513 = vsub.s32 5, %v2512
        %v2514 = vrot.slane %v740, %v2513
        %v2515 = vadd.f32 %v2449, %v2514
        %v2516 = vadd.f32 %v2453, %v2514
        %v2517 = vadd.f32 %v2457, %v2514
        %v2518 = vadd.f32 %v2461, %v2514
        %v2519 = vadd.f32 %v2465, %v2514
        %v2520 = vadd.f32 %v2469, %v2514
        %v2521 = vadd.f32 %v2473, %v2514
        %v2522 = vadd.f32 %v2477, %v2514
        %v2523 = vadd.f32 %v2481, %v2514
        %v2524 = vadd.f32 %v2485, %v2514
        %v2525 = vadd.f32 %v2489, %v2514
        %v2526 = vadd.f32 %v2493, %v2514
        %v2527 = vadd.f32 %v2497, %v2514
        %v2528 = vadd.f32 %v2501, %v2514
        %v2529 = vadd.f32 %v2505, %v2514
        %v2530 = vadd.f32 %v2509, %v2514
        %s2531 = sld [smem:[#allocation6 + $0x5]]
        %v2532 = vand.u32 2147483647, %v2515
        %v2533 = vand.u32 2147483647, %v2516
        %v2534 = vand.u32 2147483647, %v2517
        %v2535 = vand.u32 2147483647, %v2518
        %v2536 = vand.u32 2147483647, %v2519
        %v2537 = vand.u32 2147483647, %v2520
        %v2538 = vand.u32 2147483647, %v2521
        %v2539 = vand.u32 2147483647, %v2522
        %v2540 = vand.u32 2147483647, %v2523
        %v2541 = vand.u32 2147483647, %v2524
        %v2542 = vand.u32 2147483647, %v2525
        %v2543 = vand.u32 2147483647, %v2526
        %v2544 = vand.u32 2147483647, %v2527
        %v2545 = vand.u32 2147483647, %v2528
        %v2546 = vand.u32 2147483647, %v2529
        %v2547 = vand.u32 2147483647, %v2530
        %v2548 = vstv %s2531
        %v2549 = vmul.f32 %v2548, %v2532
        %v2550 = vmul.f32 %v2548, %v2533
        %v2551 = vmul.f32 %v2548, %v2534
        %v2552 = vmul.f32 %v2548, %v2535
        %v2553 = vmul.f32 %v2548, %v2536
        %v2554 = vmul.f32 %v2548, %v2537
        %v2555 = vmul.f32 %v2548, %v2538
        %v2556 = vmul.f32 %v2548, %v2539
        %v2557 = vmul.f32 %v2548, %v2540
        %v2558 = vmul.f32 %v2548, %v2541
        %v2559 = vmul.f32 %v2548, %v2542
        %v2560 = vmul.f32 %v2548, %v2543
        %v2561 = vmul.f32 %v2548, %v2544
        %v2562 = vmul.f32 %v2548, %v2545
        %v2563 = vmul.f32 %v2548, %v2546
        %v2564 = vmul.f32 %v2548, %v2547
        %v2565 = vadd.f32 %v2431, %v2549
        %v2566 = vadd.f32 %v2432, %v2550
        %v2567 = vadd.f32 %v2433, %v2551
        %v2568 = vadd.f32 %v2434, %v2552
        %v2569 = vadd.f32 %v2435, %v2553
        %v2570 = vadd.f32 %v2436, %v2554
        %v2571 = vadd.f32 %v2437, %v2555
        %v2572 = vadd.f32 %v2438, %v2556
        %v2573 = vadd.f32 %v2439, %v2557
        %v2574 = vadd.f32 %v2440, %v2558
        %v2575 = vadd.f32 %v2441, %v2559
        %v2576 = vadd.f32 %v2442, %v2560
        %v2577 = vadd.f32 %v2443, %v2561
        %v2578 = vadd.f32 %v2444, %v2562
        %v2579 = vadd.f32 %v2445, %v2563
        %v2580 = vadd.f32 %v2446, %v2564
        %2581 = vset.pattern.permute.xlu0 6
        %2582 = vperm.xlu0 %2581, %v827
        %v2583 = vpop.permute.xlu0 %2582
        %2585 = vset.pattern.permute.xlu0 6
        %2586 = vperm.xlu0 %2585, %v832
        %v2587 = vpop.permute.xlu0 %2586
        %2589 = vset.pattern.permute.xlu0 6
        %2590 = vperm.xlu0 %2589, %v837
        %v2591 = vpop.permute.xlu0 %2590
        %2593 = vset.pattern.permute.xlu0 6
        %2594 = vperm.xlu0 %2593, %v842
        %v2595 = vpop.permute.xlu0 %2594
        %2597 = vset.pattern.permute.xlu0 6
        %2598 = vperm.xlu0 %2597, %v847
        %v2599 = vpop.permute.xlu0 %2598
        %2601 = vset.pattern.permute.xlu0 6
        %2602 = vperm.xlu0 %2601, %v852
        %v2603 = vpop.permute.xlu0 %2602
        %2605 = vset.pattern.permute.xlu0 6
        %2606 = vperm.xlu0 %2605, %v857
        %v2607 = vpop.permute.xlu0 %2606
        %2609 = vset.pattern.permute.xlu0 6
        %2610 = vperm.xlu0 %2609, %v862
        %v2611 = vpop.permute.xlu0 %2610
        %2613 = vset.pattern.permute.xlu0 6
        %2614 = vperm.xlu0 %2613, %v867
        %v2615 = vpop.permute.xlu0 %2614
        %2617 = vset.pattern.permute.xlu0 6
        %2618 = vperm.xlu0 %2617, %v872
        %v2619 = vpop.permute.xlu0 %2618
        %2621 = vset.pattern.permute.xlu0 6
        %2622 = vperm.xlu0 %2621, %v877
        %v2623 = vpop.permute.xlu0 %2622
        %2625 = vset.pattern.permute.xlu0 6
        %2626 = vperm.xlu0 %2625, %v882
        %v2627 = vpop.permute.xlu0 %2626
        %2629 = vset.pattern.permute.xlu0 6
        %2630 = vperm.xlu0 %2629, %v887
        %v2631 = vpop.permute.xlu0 %2630
        %2633 = vset.pattern.permute.xlu0 6
        %2634 = vperm.xlu0 %2633, %v892
        %v2635 = vpop.permute.xlu0 %2634
        %2637 = vset.pattern.permute.xlu0 6
        %2638 = vperm.xlu0 %2637, %v897
        %v2639 = vpop.permute.xlu0 %2638
        %2641 = vset.pattern.permute.xlu0 6
        %2642 = vperm.xlu0 %2641, %v902
        %v2643 = vpop.permute.xlu0 %2642
        %v2645 = vlaneseq
        %v2646 = vshrl.u32 %v2645, 7
        %v2647 = vsub.s32 6, %v2646
        %v2648 = vrot.slane %v740, %v2647
        %v2649 = vadd.f32 %v2583, %v2648
        %v2650 = vadd.f32 %v2587, %v2648
        %v2651 = vadd.f32 %v2591, %v2648
        %v2652 = vadd.f32 %v2595, %v2648
        %v2653 = vadd.f32 %v2599, %v2648
        %v2654 = vadd.f32 %v2603, %v2648
        %v2655 = vadd.f32 %v2607, %v2648
        %v2656 = vadd.f32 %v2611, %v2648
        %v2657 = vadd.f32 %v2615, %v2648
        %v2658 = vadd.f32 %v2619, %v2648
        %v2659 = vadd.f32 %v2623, %v2648
        %v2660 = vadd.f32 %v2627, %v2648
        %v2661 = vadd.f32 %v2631, %v2648
        %v2662 = vadd.f32 %v2635, %v2648
        %v2663 = vadd.f32 %v2639, %v2648
        %v2664 = vadd.f32 %v2643, %v2648
        %s2665 = sld [smem:[#allocation6 + $0x6]]
        %v2666 = vand.u32 2147483647, %v2649
        %v2667 = vand.u32 2147483647, %v2650
        %v2668 = vand.u32 2147483647, %v2651
        %v2669 = vand.u32 2147483647, %v2652
        %v2670 = vand.u32 2147483647, %v2653
        %v2671 = vand.u32 2147483647, %v2654
        %v2672 = vand.u32 2147483647, %v2655
        %v2673 = vand.u32 2147483647, %v2656
        %v2674 = vand.u32 2147483647, %v2657
        %v2675 = vand.u32 2147483647, %v2658
        %v2676 = vand.u32 2147483647, %v2659
        %v2677 = vand.u32 2147483647, %v2660
        %v2678 = vand.u32 2147483647, %v2661
        %v2679 = vand.u32 2147483647, %v2662
        %v2680 = vand.u32 2147483647, %v2663
        %v2681 = vand.u32 2147483647, %v2664
        %v2682 = vstv %s2665
        %v2683 = vmul.f32 %v2682, %v2666
        %v2684 = vmul.f32 %v2682, %v2667
        %v2685 = vmul.f32 %v2682, %v2668
        %v2686 = vmul.f32 %v2682, %v2669
        %v2687 = vmul.f32 %v2682, %v2670
        %v2688 = vmul.f32 %v2682, %v2671
        %v2689 = vmul.f32 %v2682, %v2672
        %v2690 = vmul.f32 %v2682, %v2673
        %v2691 = vmul.f32 %v2682, %v2674
        %v2692 = vmul.f32 %v2682, %v2675
        %v2693 = vmul.f32 %v2682, %v2676
        %v2694 = vmul.f32 %v2682, %v2677
        %v2695 = vmul.f32 %v2682, %v2678
        %v2696 = vmul.f32 %v2682, %v2679
        %v2697 = vmul.f32 %v2682, %v2680
        %v2698 = vmul.f32 %v2682, %v2681
        %v2699 = vadd.f32 %v2565, %v2683
        %v2700 = vadd.f32 %v2566, %v2684
        %v2701 = vadd.f32 %v2567, %v2685
        %v2702 = vadd.f32 %v2568, %v2686
        %v2703 = vadd.f32 %v2569, %v2687
        %v2704 = vadd.f32 %v2570, %v2688
        %v2705 = vadd.f32 %v2571, %v2689
        %v2706 = vadd.f32 %v2572, %v2690
        %v2707 = vadd.f32 %v2573, %v2691
        %v2708 = vadd.f32 %v2574, %v2692
        %v2709 = vadd.f32 %v2575, %v2693
        %v2710 = vadd.f32 %v2576, %v2694
        %v2711 = vadd.f32 %v2577, %v2695
        %v2712 = vadd.f32 %v2578, %v2696
        %v2713 = vadd.f32 %v2579, %v2697
        %v2714 = vadd.f32 %v2580, %v2698
        %2715 = vset.pattern.permute.xlu0 7
        %2716 = vperm.xlu0 %2715, %v827
        %v2717 = vpop.permute.xlu0 %2716
        %2719 = vset.pattern.permute.xlu0 7
        %2720 = vperm.xlu0 %2719, %v832
        %v2721 = vpop.permute.xlu0 %2720
        %2723 = vset.pattern.permute.xlu0 7
        %2724 = vperm.xlu0 %2723, %v837
        %v2725 = vpop.permute.xlu0 %2724
        %2727 = vset.pattern.permute.xlu0 7
        %2728 = vperm.xlu0 %2727, %v842
        %v2729 = vpop.permute.xlu0 %2728
        %2731 = vset.pattern.permute.xlu0 7
        %2732 = vperm.xlu0 %2731, %v847
        %v2733 = vpop.permute.xlu0 %2732
        %2735 = vset.pattern.permute.xlu0 7
        %2736 = vperm.xlu0 %2735, %v852
        %v2737 = vpop.permute.xlu0 %2736
        %2739 = vset.pattern.permute.xlu0 7
        %2740 = vperm.xlu0 %2739, %v857
        %v2741 = vpop.permute.xlu0 %2740
        %2743 = vset.pattern.permute.xlu0 7
        %2744 = vperm.xlu0 %2743, %v862
        %v2745 = vpop.permute.xlu0 %2744
        %2747 = vset.pattern.permute.xlu0 7
        %2748 = vperm.xlu0 %2747, %v867
        %v2749 = vpop.permute.xlu0 %2748
        %2751 = vset.pattern.permute.xlu0 7
        %2752 = vperm.xlu0 %2751, %v872
        %v2753 = vpop.permute.xlu0 %2752
        %2755 = vset.pattern.permute.xlu0 7
        %2756 = vperm.xlu0 %2755, %v877
        %v2757 = vpop.permute.xlu0 %2756
        %2759 = vset.pattern.permute.xlu0 7
        %2760 = vperm.xlu0 %2759, %v882
        %v2761 = vpop.permute.xlu0 %2760
        %2763 = vset.pattern.permute.xlu0 7
        %2764 = vperm.xlu0 %2763, %v887
        %v2765 = vpop.permute.xlu0 %2764
        %2767 = vset.pattern.permute.xlu0 7
        %2768 = vperm.xlu0 %2767, %v892
        %v2769 = vpop.permute.xlu0 %2768
        %2771 = vset.pattern.permute.xlu0 7
        %2772 = vperm.xlu0 %2771, %v897
        %v2773 = vpop.permute.xlu0 %2772
        %2775 = vset.pattern.permute.xlu0 7
        %2776 = vperm.xlu0 %2775, %v902
        %v2777 = vpop.permute.xlu0 %2776
        %v2779 = vlaneseq
        %v2780 = vshrl.u32 %v2779, 7
        %v2781 = vsub.s32 7, %v2780
        %v2782 = vrot.slane %v740, %v2781
        %v2783 = vadd.f32 %v2717, %v2782
        %v2784 = vadd.f32 %v2721, %v2782
        %v2785 = vadd.f32 %v2725, %v2782
        %v2786 = vadd.f32 %v2729, %v2782
        %v2787 = vadd.f32 %v2733, %v2782
        %v2788 = vadd.f32 %v2737, %v2782
        %v2789 = vadd.f32 %v2741, %v2782
        %v2790 = vadd.f32 %v2745, %v2782
        %v2791 = vadd.f32 %v2749, %v2782
        %v2792 = vadd.f32 %v2753, %v2782
        %v2793 = vadd.f32 %v2757, %v2782
        %v2794 = vadd.f32 %v2761, %v2782
        %v2795 = vadd.f32 %v2765, %v2782
        %v2796 = vadd.f32 %v2769, %v2782
        %v2797 = vadd.f32 %v2773, %v2782
        %v2798 = vadd.f32 %v2777, %v2782
        %s2799 = sld [smem:[#allocation6 + $0x7]]
        %v2800 = vand.u32 2147483647, %v2783
        %v2801 = vand.u32 2147483647, %v2784
        %v2802 = vand.u32 2147483647, %v2785
        %v2803 = vand.u32 2147483647, %v2786
        %v2804 = vand.u32 2147483647, %v2787
        %v2805 = vand.u32 2147483647, %v2788
        %v2806 = vand.u32 2147483647, %v2789
        %v2807 = vand.u32 2147483647, %v2790
        %v2808 = vand.u32 2147483647, %v2791
        %v2809 = vand.u32 2147483647, %v2792
        %v2810 = vand.u32 2147483647, %v2793
        %v2811 = vand.u32 2147483647, %v2794
        %v2812 = vand.u32 2147483647, %v2795
        %v2813 = vand.u32 2147483647, %v2796
        %v2814 = vand.u32 2147483647, %v2797
        %v2815 = vand.u32 2147483647, %v2798
        %v2816 = vstv %s2799
        %v2817 = vmul.f32 %v2816, %v2800
        %v2818 = vmul.f32 %v2816, %v2801
        %v2819 = vmul.f32 %v2816, %v2802
        %v2820 = vmul.f32 %v2816, %v2803
        %v2821 = vmul.f32 %v2816, %v2804
        %v2822 = vmul.f32 %v2816, %v2805
        %v2823 = vmul.f32 %v2816, %v2806
        %v2824 = vmul.f32 %v2816, %v2807
        %v2825 = vmul.f32 %v2816, %v2808
        %v2826 = vmul.f32 %v2816, %v2809
        %v2827 = vmul.f32 %v2816, %v2810
        %v2828 = vmul.f32 %v2816, %v2811
        %v2829 = vmul.f32 %v2816, %v2812
        %v2830 = vmul.f32 %v2816, %v2813
        %v2831 = vmul.f32 %v2816, %v2814
        %v2832 = vmul.f32 %v2816, %v2815
        %v2833 = vadd.f32 %v2699, %v2817
        %v2834 = vadd.f32 %v2700, %v2818
        %v2835 = vadd.f32 %v2701, %v2819
        %v2836 = vadd.f32 %v2702, %v2820
        %v2837 = vadd.f32 %v2703, %v2821
        %v2838 = vadd.f32 %v2704, %v2822
        %v2839 = vadd.f32 %v2705, %v2823
        %v2840 = vadd.f32 %v2706, %v2824
        %v2841 = vadd.f32 %v2707, %v2825
        %v2842 = vadd.f32 %v2708, %v2826
        %v2843 = vadd.f32 %v2709, %v2827
        %v2844 = vadd.f32 %v2710, %v2828
        %v2845 = vadd.f32 %v2711, %v2829
        %v2846 = vadd.f32 %v2712, %v2830
        %v2847 = vadd.f32 %v2713, %v2831
        %v2848 = vadd.f32 %v2714, %v2832
        %2849 = vmax.xlane.f32.xlu0 %v2833
        %v2850 = vpop.xlane.xlu0 %2849
        %2851 = vmax.xlane.f32.xlu0 %v2834
        %v2852 = vpop.xlane.xlu0 %2851
        %2853 = vmax.xlane.f32.xlu0 %v2835
        %v2854 = vpop.xlane.xlu0 %2853
        %2855 = vmax.xlane.f32.xlu0 %v2836
        %v2856 = vpop.xlane.xlu0 %2855
        %2857 = vmax.xlane.f32.xlu0 %v2837
        %v2858 = vpop.xlane.xlu0 %2857
        %2859 = vmax.xlane.f32.xlu0 %v2838
        %v2860 = vpop.xlane.xlu0 %2859
        %2861 = vmax.xlane.f32.xlu0 %v2839
        %v2862 = vpop.xlane.xlu0 %2861
        %2863 = vmax.xlane.f32.xlu0 %v2840
        %v2864 = vpop.xlane.xlu0 %2863
        %2865 = vmax.xlane.f32.xlu0 %v2841
        %v2866 = vpop.xlane.xlu0 %2865
        %2867 = vmax.xlane.f32.xlu0 %v2842
        %v2868 = vpop.xlane.xlu0 %2867
        %2869 = vmax.xlane.f32.xlu0 %v2843
        %v2870 = vpop.xlane.xlu0 %2869
        %2871 = vmax.xlane.f32.xlu0 %v2844
        %v2872 = vpop.xlane.xlu0 %2871
        %2873 = vmax.xlane.f32.xlu0 %v2845
        %v2874 = vpop.xlane.xlu0 %2873
        %2875 = vmax.xlane.f32.xlu0 %v2846
        %v2876 = vpop.xlane.xlu0 %2875
        %2877 = vmax.xlane.f32.xlu0 %v2847
        %v2878 = vpop.xlane.xlu0 %2877
        %2879 = vmax.xlane.f32.xlu0 %v2848
        %v2880 = vpop.xlane.xlu0 %2879
        %v2881 = vsub.f32 %v2833, %v2850
        %v2882 = vsub.f32 %v2834, %v2852
        %v2883 = vsub.f32 %v2835, %v2854
        %v2884 = vsub.f32 %v2836, %v2856
        %v2885 = vsub.f32 %v2837, %v2858
        %v2886 = vsub.f32 %v2838, %v2860
        %v2887 = vsub.f32 %v2839, %v2862
        %v2888 = vsub.f32 %v2840, %v2864
        %v2889 = vsub.f32 %v2841, %v2866
        %v2890 = vsub.f32 %v2842, %v2868
        %v2891 = vsub.f32 %v2843, %v2870
        %v2892 = vsub.f32 %v2844, %v2872
        %v2893 = vsub.f32 %v2845, %v2874
        %v2894 = vsub.f32 %v2846, %v2876
        %v2895 = vsub.f32 %v2847, %v2878
        %v2896 = vsub.f32 %v2848, %v2880
        %v2897 = vmul.f32 %v2881, 1.442695
        %v2898 = vpow.pop %v2897
        %v2899 = vmul.f32 %v2882, 1.442695
        %v2900 = vpow.pop %v2899
        %v2901 = vmul.f32 %v2883, 1.442695
        %v2902 = vpow.pop %v2901
        %v2903 = vmul.f32 %v2884, 1.442695
        %v2904 = vpow.pop %v2903
        %v2905 = vmul.f32 %v2885, 1.442695
        %v2906 = vpow.pop %v2905
        %v2907 = vmul.f32 %v2886, 1.442695
        %v2908 = vpow.pop %v2907
        %v2909 = vmul.f32 %v2887, 1.442695
        %v2910 = vpow.pop %v2909
        %v2911 = vmul.f32 %v2888, 1.442695
        %v2912 = vpow.pop %v2911
        %v2913 = vmul.f32 %v2889, 1.442695
        %v2914 = vpow.pop %v2913
        %v2915 = vmul.f32 %v2890, 1.442695
        %v2916 = vpow.pop %v2915
        %v2917 = vmul.f32 %v2891, 1.442695
        %v2918 = vpow.pop %v2917
        %v2919 = vmul.f32 %v2892, 1.442695
        %v2920 = vpow.pop %v2919
        %v2921 = vmul.f32 %v2893, 1.442695
        %v2922 = vpow.pop %v2921
        %v2923 = vmul.f32 %v2894, 1.442695
        %v2924 = vpow.pop %v2923
        %v2925 = vmul.f32 %v2895, 1.442695
        %v2926 = vpow.pop %v2925
        %v2927 = vmul.f32 %v2896, 1.442695
        %v2928 = vpow.pop %v2927
        %2929 = vadd.xlane.f32.xlu0 %v2898
        %v2930 = vpop.xlane.xlu0 %2929
        %2931 = vadd.xlane.f32.xlu0 %v2900
        %v2932 = vpop.xlane.xlu0 %2931
        %2933 = vadd.xlane.f32.xlu0 %v2902
        %v2934 = vpop.xlane.xlu0 %2933
        %2935 = vadd.xlane.f32.xlu0 %v2904
        %v2936 = vpop.xlane.xlu0 %2935
        %2937 = vadd.xlane.f32.xlu0 %v2906
        %v2938 = vpop.xlane.xlu0 %2937
        %2939 = vadd.xlane.f32.xlu0 %v2908
        %v2940 = vpop.xlane.xlu0 %2939
        %2941 = vadd.xlane.f32.xlu0 %v2910
        %v2942 = vpop.xlane.xlu0 %2941
        %2943 = vadd.xlane.f32.xlu0 %v2912
        %v2944 = vpop.xlane.xlu0 %2943
        %2945 = vadd.xlane.f32.xlu0 %v2914
        %v2946 = vpop.xlane.xlu0 %2945
        %2947 = vadd.xlane.f32.xlu0 %v2916
        %v2948 = vpop.xlane.xlu0 %2947
        %2949 = vadd.xlane.f32.xlu0 %v2918
        %v2950 = vpop.xlane.xlu0 %2949
        %2951 = vadd.xlane.f32.xlu0 %v2920
        %v2952 = vpop.xlane.xlu0 %2951
        %2953 = vadd.xlane.f32.xlu0 %v2922
        %v2954 = vpop.xlane.xlu0 %2953
        %2955 = vadd.xlane.f32.xlu0 %v2924
        %v2956 = vpop.xlane.xlu0 %2955
        %2957 = vadd.xlane.f32.xlu0 %v2926
        %v2958 = vpop.xlane.xlu0 %2957
        %2959 = vadd.xlane.f32.xlu0 %v2928
        %v2960 = vpop.xlane.xlu0 %2959
        %v2961 = vrcp.pop %v2930
        %v2962 = vmul.f32 1.0, %v2961
        %v2963 = vrcp.pop %v2932
        %v2964 = vmul.f32 1.0, %v2963
        %v2965 = vrcp.pop %v2934
        %v2966 = vmul.f32 1.0, %v2965
        %v2967 = vrcp.pop %v2936
        %v2968 = vmul.f32 1.0, %v2967
        %v2969 = vrcp.pop %v2938
        %v2970 = vmul.f32 1.0, %v2969
        %v2971 = vrcp.pop %v2940
        %v2972 = vmul.f32 1.0, %v2971
        %v2973 = vrcp.pop %v2942
        %v2974 = vmul.f32 1.0, %v2973
        %v2975 = vrcp.pop %v2944
        %v2976 = vmul.f32 1.0, %v2975
        %v2977 = vrcp.pop %v2946
        %v2978 = vmul.f32 1.0, %v2977
        %v2979 = vrcp.pop %v2948
        %v2980 = vmul.f32 1.0, %v2979
        %v2981 = vrcp.pop %v2950
        %v2982 = vmul.f32 1.0, %v2981
        %v2983 = vrcp.pop %v2952
        %v2984 = vmul.f32 1.0, %v2983
        %v2985 = vrcp.pop %v2954
        %v2986 = vmul.f32 1.0, %v2985
        %v2987 = vrcp.pop %v2956
        %v2988 = vmul.f32 1.0, %v2987
        %v2989 = vrcp.pop %v2958
        %v2990 = vmul.f32 1.0, %v2989
        %v2991 = vrcp.pop %v2960
        %v2992 = vmul.f32 1.0, %v2991
        %2993 = vmatprep.subr.mxu0 0.0
        %2994 = vmatpush1.xpose.msra.mxu0 0.0
        %2995 = vmatprep.subr.mxu0 0.0
        %2996 = vmatpush1.xpose.msra.mxu0 0.0
        %2997 = vmatprep.subr.mxu0 0.0
        %2998 = vmatpush1.xpose.msra.mxu0 0.0
        %2999 = vmatprep.subr.mxu0 0.0
        %3000 = vmatpush1.xpose.msra.mxu0 0.0
        %3001 = vmatprep.subr.mxu0 0.0
        %3002 = vmatpush1.xpose.msra.mxu0 0.0
        %3003 = vmatprep.subr.mxu0 0.0
        %3004 = vmatpush1.xpose.msra.mxu0 0.0
        %3005 = vmatprep.subr.mxu0 0.0
        %3006 = vmatpush1.xpose.msra.mxu0 0.0
        %3007 = vmatprep.subr.mxu0 0.0
        %3008 = vmatpush1.xpose.msra.mxu0 0.0
        %3009 = vmatprep.subr.mxu0 0.0
        %3010 = vmatpush1.xpose.msra.mxu0 0.0
        %3011 = vmatprep.subr.mxu0 0.0
        %3012 = vmatpush1.xpose.msra.mxu0 0.0
        %3013 = vmatprep.subr.mxu0 0.0
        %3014 = vmatpush1.xpose.msra.mxu0 0.0
        %3015 = vmatprep.subr.mxu0 0.0
        %3016 = vmatpush1.xpose.msra.mxu0 0.0
        %3017 = vmatprep.subr.mxu0 0.0
        %3018 = vmatpush1.xpose.msra.mxu0 0.0
        %3019 = vmatprep.subr.mxu0 0.0
        %3020 = vmatpush1.xpose.msra.mxu0 0.0
        %3021 = vmatprep.subr.mxu0 0.0
        %3022 = vmatpush1.xpose.msra.mxu0 0.0
        %3023 = vmatprep.subr.mxu0 0.0
        %3024 = vmatpush1.xpose.msra.mxu0 %v740
        %3025 = vmatprep.subr.mxu0 0.0
        %3026 = vmatpush2.xpose.msra.mxu0 0.0
        %3027 = vmatprep.subr.mxu0 0.0
        %3028 = vmatpush2.xpose.msra.mxu0 0.0
        %3029 = vmatprep.subr.mxu0 0.0
        %3030 = vmatpush2.xpose.msra.mxu0 0.0
        %3031 = vmatprep.subr.mxu0 0.0
        %3032 = vmatpush2.xpose.msra.mxu0 0.0
        %3033 = vmatprep.subr.mxu0 0.0
        %3034 = vmatpush2.xpose.msra.mxu0 0.0
        %3035 = vmatprep.subr.mxu0 0.0
        %3036 = vmatpush2.xpose.msra.mxu0 0.0
        %3037 = vmatprep.subr.mxu0 0.0
        %3038 = vmatpush2.xpose.msra.mxu0 0.0
        %3039 = vmatprep.subr.mxu0 0.0
        %3040 = vmatpush2.xpose.msra.mxu0 0.0
        %3041 = vmatprep.subr.mxu0 0.0
        %3042 = vmatpush2.xpose.msra.mxu0 0.0
        %3043 = vmatprep.subr.mxu0 0.0
        %3044 = vmatpush2.xpose.msra.mxu0 0.0
        %3045 = vmatprep.subr.mxu0 0.0
        %3046 = vmatpush2.xpose.msra.mxu0 0.0
        %3047 = vmatprep.subr.mxu0 0.0
        %3048 = vmatpush2.xpose.msra.mxu0 0.0
        %3049 = vmatprep.subr.mxu0 0.0
        %3050 = vmatpush2.xpose.msra.mxu0 0.0
        %3051 = vmatprep.subr.mxu0 0.0
        %3052 = vmatpush2.xpose.msra.mxu0 0.0
        %3053 = vmatprep.subr.mxu0 0.0
        %3054 = vmatpush2.xpose.msra.mxu0 0.0
        %3055 = vmatprep.subr.mxu0 0.0
        %3056 = vmatpush2.xpose.msra.mxu0 0.0
        %3057 = vmatprep.mubr.f32.mxu0 0.0
        %3058 = vmatmul.mubr.f32.gmra.mxu0 %v2898
        %v3059 = vpop.f32.mrf.mxu0
        %v3060 = vadd.f32 0.0, %v3059
        %v3061 = vpop.f32.mrf.mxu0
        %3062 = vmatprep.mubr.f32.mxu0 0.0
        %3063 = vmatmul.mubr.f32.gmra.mxu0 %v2900
        %v3064 = vpop.f32.mrf.mxu0
        %v3065 = vadd.f32 0.0, %v3064
        %v3066 = vpop.f32.mrf.mxu0
        %3067 = vmatprep.mubr.f32.mxu0 0.0
        %3068 = vmatmul.mubr.f32.gmra.mxu0 %v2902
        %v3069 = vpop.f32.mrf.mxu0
        %v3070 = vadd.f32 0.0, %v3069
        %v3071 = vpop.f32.mrf.mxu0
        %3072 = vmatprep.mubr.f32.mxu0 0.0
        %3073 = vmatmul.mubr.f32.gmra.mxu0 %v2904
        %v3074 = vpop.f32.mrf.mxu0
        %v3075 = vadd.f32 0.0, %v3074
        %v3076 = vpop.f32.mrf.mxu0
        %3077 = vmatprep.mubr.f32.mxu0 0.0
        %3078 = vmatmul.mubr.f32.gmra.mxu0 %v2906
        %v3079 = vpop.f32.mrf.mxu0
        %v3080 = vadd.f32 0.0, %v3079
        %v3081 = vpop.f32.mrf.mxu0
        %3082 = vmatprep.mubr.f32.mxu0 0.0
        %3083 = vmatmul.mubr.f32.gmra.mxu0 %v2908
        %v3084 = vpop.f32.mrf.mxu0
        %v3085 = vadd.f32 0.0, %v3084
        %v3086 = vpop.f32.mrf.mxu0
        %3087 = vmatprep.mubr.f32.mxu0 0.0
        %3088 = vmatmul.mubr.f32.gmra.mxu0 %v2910
        %v3089 = vpop.f32.mrf.mxu0
        %v3090 = vadd.f32 0.0, %v3089
        %v3091 = vpop.f32.mrf.mxu0
        %3092 = vmatprep.mubr.f32.mxu0 0.0
        %3093 = vmatmul.mubr.f32.gmra.mxu0 %v2912
        %v3094 = vpop.f32.mrf.mxu0
        %v3095 = vadd.f32 0.0, %v3094
        %v3096 = vpop.f32.mrf.mxu0
        %3097 = vmatprep.mubr.f32.mxu0 0.0
        %3098 = vmatmul.mubr.f32.gmra.mxu0 %v2914
        %v3099 = vpop.f32.mrf.mxu0
        %v3100 = vadd.f32 0.0, %v3099
        %v3101 = vpop.f32.mrf.mxu0
        %3102 = vmatprep.mubr.f32.mxu0 0.0
        %3103 = vmatmul.mubr.f32.gmra.mxu0 %v2916
        %v3104 = vpop.f32.mrf.mxu0
        %v3105 = vadd.f32 0.0, %v3104
        %v3106 = vpop.f32.mrf.mxu0
        %3107 = vmatprep.mubr.f32.mxu0 0.0
        %3108 = vmatmul.mubr.f32.gmra.mxu0 %v2918
        %v3109 = vpop.f32.mrf.mxu0
        %v3110 = vadd.f32 0.0, %v3109
        %v3111 = vpop.f32.mrf.mxu0
        %3112 = vmatprep.mubr.f32.mxu0 0.0
        %3113 = vmatmul.mubr.f32.gmra.mxu0 %v2920
        %v3114 = vpop.f32.mrf.mxu0
        %v3115 = vadd.f32 0.0, %v3114
        %v3116 = vpop.f32.mrf.mxu0
        %3117 = vmatprep.mubr.f32.mxu0 0.0
        %3118 = vmatmul.mubr.f32.gmra.mxu0 %v2922
        %v3119 = vpop.f32.mrf.mxu0
        %v3120 = vadd.f32 0.0, %v3119
        %v3121 = vpop.f32.mrf.mxu0
        %3122 = vmatprep.mubr.f32.mxu0 0.0
        %3123 = vmatmul.mubr.f32.gmra.mxu0 %v2924
        %v3124 = vpop.f32.mrf.mxu0
        %v3125 = vadd.f32 0.0, %v3124
        %v3126 = vpop.f32.mrf.mxu0
        %3127 = vmatprep.mubr.f32.mxu0 0.0
        %3128 = vmatmul.mubr.f32.gmra.mxu0 %v2926
        %v3129 = vpop.f32.mrf.mxu0
        %v3130 = vadd.f32 0.0, %v3129
        %v3131 = vpop.f32.mrf.mxu0
        %3132 = vmatprep.mubr.f32.mxu0 0.0
        %3133 = vmatmul.mubr.f32.gmra.mxu0 %v2928
        %v3134 = vpop.f32.mrf.mxu0
        %v3135 = vadd.f32 0.0, %v3134
        %v3136 = vpop.f32.mrf.mxu0
        %3137 = vdwg.mxu0
        %v3138 = vmul.f32 %v3060, %v2962
        %v3139 = vmul.f32 %v3065, %v2964
        %v3140 = vmul.f32 %v3070, %v2966
        %v3141 = vmul.f32 %v3075, %v2968
        %v3142 = vmul.f32 %v3080, %v2970
        %v3143 = vmul.f32 %v3085, %v2972
        %v3144 = vmul.f32 %v3090, %v2974
        %v3145 = vmul.f32 %v3095, %v2976
        %v3146 = vmul.f32 %v3100, %v2978
        %v3147 = vmul.f32 %v3105, %v2980
        %v3148 = vmul.f32 %v3110, %v2982
        %v3149 = vmul.f32 %v3115, %v2984
        %v3150 = vmul.f32 %v3120, %v2986
        %v3151 = vmul.f32 %v3125, %v2988
        %v3152 = vmul.f32 %v3130, %v2990
        %v3153 = vmul.f32 %v3135, %v2992
        %v3154 = vld [vmem:[%s8] sm:$0x1]
        %v3156 = vlaneseq
        %v3157 = vshrl.u32 %v3156, 7
        %v3158 = vsub.s32 0, %v3157
        %v3159 = vrot.slane %v3154, %v3158
        %v3161 = vadd.f32 %v3138, %v3159
        %v3162 = vadd.f32 %v3139, %v3159
        %v3163 = vadd.f32 %v3140, %v3159
        %v3164 = vadd.f32 %v3141, %v3159
        %v3165 = vadd.f32 %v3142, %v3159
        %v3166 = vadd.f32 %v3143, %v3159
        %v3167 = vadd.f32 %v3144, %v3159
        %v3168 = vadd.f32 %v3145, %v3159
        %v3169 = vadd.f32 %v3146, %v3159
        %v3170 = vadd.f32 %v3147, %v3159
        %v3171 = vadd.f32 %v3148, %v3159
        %v3172 = vadd.f32 %v3149, %v3159
        %v3173 = vadd.f32 %v3150, %v3159
        %v3174 = vadd.f32 %v3151, %v3159
        %v3175 = vadd.f32 %v3152, %v3159
        %v3176 = vadd.f32 %v3153, %v3159
        %vm3177 = vcmask 64512
        %3178 = vst.msk [vmem:[#allocation2] sm:$0xff] %vm3177, %v3161
        %3179 = vst.msk [vmem:[#allocation2 + $0x8] sm:$0xff] %vm3177, %v3162
        %3180 = vst.msk [vmem:[#allocation2 + $0x10] sm:$0xff] %vm3177, %v3163
        %3181 = vst.msk [vmem:[#allocation2 + $0x18] sm:$0xff] %vm3177, %v3164
        %3182 = vst.msk [vmem:[#allocation2 + $0x20] sm:$0xff] %vm3177, %v3165
        %3183 = vst.msk [vmem:[#allocation2 + $0x28] sm:$0xff] %vm3177, %v3166
        %3184 = vst.msk [vmem:[#allocation2 + $0x30] sm:$0xff] %vm3177, %v3167
        %3185 = vst.msk [vmem:[#allocation2 + $0x38] sm:$0xff] %vm3177, %v3168
        %3186 = vst.msk [vmem:[#allocation2 + $0x40] sm:$0xff] %vm3177, %v3169
        %3187 = vst.msk [vmem:[#allocation2 + $0x48] sm:$0xff] %vm3177, %v3170
        %3188 = vst.msk [vmem:[#allocation2 + $0x50] sm:$0xff] %vm3177, %v3171
        %3189 = vst.msk [vmem:[#allocation2 + $0x58] sm:$0xff] %vm3177, %v3172
        %3190 = vst.msk [vmem:[#allocation2 + $0x60] sm:$0xff] %vm3177, %v3173
        %3191 = vst.msk [vmem:[#allocation2 + $0x68] sm:$0xff] %vm3177, %v3174
        %3192 = vst.msk [vmem:[#allocation2 + $0x70] sm:$0xff] %vm3177, %v3175
        %3193 = vst.msk [vmem:[#allocation2 + $0x78] sm:$0xff] %vm3177, %v3176
        %s3194 = sld [smem:[#allocation3 + $0x80]]
        %v3195 = vstv %s3194
        %v3196 = vmul.f32 %v3195, %v827
        %v3197 = vmul.f32 %v3195, %v832
        %v3198 = vmul.f32 %v3195, %v837
        %v3199 = vmul.f32 %v3195, %v842
        %v3200 = vmul.f32 %v3195, %v847
        %v3201 = vmul.f32 %v3195, %v852
        %v3202 = vmul.f32 %v3195, %v857
        %v3203 = vmul.f32 %v3195, %v862
        %v3204 = vmul.f32 %v3195, %v867
        %v3205 = vmul.f32 %v3195, %v872
        %v3206 = vmul.f32 %v3195, %v877
        %v3207 = vmul.f32 %v3195, %v882
        %v3208 = vmul.f32 %v3195, %v887
        %v3209 = vmul.f32 %v3195, %v892
        %v3210 = vmul.f32 %v3195, %v897
        %v3211 = vmul.f32 %v3195, %v902
        %v3212 = vmul.f32 %v3195, %v745
        %s3213 = sld [smem:[#allocation3 + $0x81]]
        %v3214 = vstv %s3213
        %v3215 = vmul.f32 %v3214, %v827
        %v3216 = vmul.f32 %v3214, %v832
        %v3217 = vmul.f32 %v3214, %v837
        %v3218 = vmul.f32 %v3214, %v842
        %v3219 = vmul.f32 %v3214, %v847
        %v3220 = vmul.f32 %v3214, %v852
        %v3221 = vmul.f32 %v3214, %v857
        %v3222 = vmul.f32 %v3214, %v862
        %v3223 = vmul.f32 %v3214, %v867
        %v3224 = vmul.f32 %v3214, %v872
        %v3225 = vmul.f32 %v3214, %v877
        %v3226 = vmul.f32 %v3214, %v882
        %v3227 = vmul.f32 %v3214, %v887
        %v3228 = vmul.f32 %v3214, %v892
        %v3229 = vmul.f32 %v3214, %v897
        %v3230 = vmul.f32 %v3214, %v902
        %3247 = vrot.lane.b32.xlu0 %v3215, 127
        %v3248 = vpop.permute.xlu0 %3247
        %3249 = vrot.lane.b32.xlu0 %v3216, 127
        %v3250 = vpop.permute.xlu0 %3249
        %3251 = vrot.lane.b32.xlu0 %v3217, 127
        %v3252 = vpop.permute.xlu0 %3251
        %3253 = vrot.lane.b32.xlu0 %v3218, 127
        %v3254 = vpop.permute.xlu0 %3253
        %3255 = vrot.lane.b32.xlu0 %v3219, 127
        %v3256 = vpop.permute.xlu0 %3255
        %3257 = vrot.lane.b32.xlu0 %v3220, 127
        %v3258 = vpop.permute.xlu0 %3257
        %3259 = vrot.lane.b32.xlu0 %v3221, 127
        %v3260 = vpop.permute.xlu0 %3259
        %3261 = vrot.lane.b32.xlu0 %v3222, 127
        %v3262 = vpop.permute.xlu0 %3261
        %3263 = vrot.lane.b32.xlu0 %v3223, 127
        %v3264 = vpop.permute.xlu0 %3263
        %3265 = vrot.lane.b32.xlu0 %v3224, 127
        %v3266 = vpop.permute.xlu0 %3265
        %3267 = vrot.lane.b32.xlu0 %v3225, 127
        %v3268 = vpop.permute.xlu0 %3267
        %3269 = vrot.lane.b32.xlu0 %v3226, 127
        %v3270 = vpop.permute.xlu0 %3269
        %3271 = vrot.lane.b32.xlu0 %v3227, 127
        %v3272 = vpop.permute.xlu0 %3271
        %3273 = vrot.lane.b32.xlu0 %v3228, 127
        %v3274 = vpop.permute.xlu0 %3273
        %3275 = vrot.lane.b32.xlu0 %v3229, 127
        %v3276 = vpop.permute.xlu0 %3275
        %3277 = vrot.lane.b32.xlu0 %v3230, 127
        %v3278 = vpop.permute.xlu0 %3277
        %v3295 = vadd.f32 %v3196, %v3248
        %v3296 = vadd.f32 %v3197, %v3250
        %v3297 = vadd.f32 %v3198, %v3252
        %v3298 = vadd.f32 %v3199, %v3254
        %v3299 = vadd.f32 %v3200, %v3256
        %v3300 = vadd.f32 %v3201, %v3258
        %v3301 = vadd.f32 %v3202, %v3260
        %v3302 = vadd.f32 %v3203, %v3262
        %v3303 = vadd.f32 %v3204, %v3264
        %v3304 = vadd.f32 %v3205, %v3266
        %v3305 = vadd.f32 %v3206, %v3268
        %v3306 = vadd.f32 %v3207, %v3270
        %v3307 = vadd.f32 %v3208, %v3272
        %v3308 = vadd.f32 %v3209, %v3274
        %v3309 = vadd.f32 %v3210, %v3276
        %v3310 = vadd.f32 %v3211, %v3278
        %v3311 = vmul.f32 %v3214, %v745
        %v3313 = vrot.slane %v3311, 1
        %v3315 = vadd.f32 %v3212, %v3313
        %s3316 = sld [smem:[#allocation3 + $0x82]]
        %v3317 = vstv %s3316
        %v3318 = vmul.f32 %v3317, %v827
        %v3319 = vmul.f32 %v3317, %v832
        %v3320 = vmul.f32 %v3317, %v837
        %v3321 = vmul.f32 %v3317, %v842
        %v3322 = vmul.f32 %v3317, %v847
        %v3323 = vmul.f32 %v3317, %v852
        %v3324 = vmul.f32 %v3317, %v857
        %v3325 = vmul.f32 %v3317, %v862
        %v3326 = vmul.f32 %v3317, %v867
        %v3327 = vmul.f32 %v3317, %v872
        %v3328 = vmul.f32 %v3317, %v877
        %v3329 = vmul.f32 %v3317, %v882
        %v3330 = vmul.f32 %v3317, %v887
        %v3331 = vmul.f32 %v3317, %v892
        %v3332 = vmul.f32 %v3317, %v897
        %v3333 = vmul.f32 %v3317, %v902
        %3350 = vrot.lane.b32.xlu0 %v3318, 126
        %v3351 = vpop.permute.xlu0 %3350
        %3352 = vrot.lane.b32.xlu0 %v3319, 126
        %v3353 = vpop.permute.xlu0 %3352
        %3354 = vrot.lane.b32.xlu0 %v3320, 126
        %v3355 = vpop.permute.xlu0 %3354
        %3356 = vrot.lane.b32.xlu0 %v3321, 126
        %v3357 = vpop.permute.xlu0 %3356
        %3358 = vrot.lane.b32.xlu0 %v3322, 126
        %v3359 = vpop.permute.xlu0 %3358
        %3360 = vrot.lane.b32.xlu0 %v3323, 126
        %v3361 = vpop.permute.xlu0 %3360
        %3362 = vrot.lane.b32.xlu0 %v3324, 126
        %v3363 = vpop.permute.xlu0 %3362
        %3364 = vrot.lane.b32.xlu0 %v3325, 126
        %v3365 = vpop.permute.xlu0 %3364
        %3366 = vrot.lane.b32.xlu0 %v3326, 126
        %v3367 = vpop.permute.xlu0 %3366
        %3368 = vrot.lane.b32.xlu0 %v3327, 126
        %v3369 = vpop.permute.xlu0 %3368
        %3370 = vrot.lane.b32.xlu0 %v3328, 126
        %v3371 = vpop.permute.xlu0 %3370
        %3372 = vrot.lane.b32.xlu0 %v3329, 126
        %v3373 = vpop.permute.xlu0 %3372
        %3374 = vrot.lane.b32.xlu0 %v3330, 126
        %v3375 = vpop.permute.xlu0 %3374
        %3376 = vrot.lane.b32.xlu0 %v3331, 126
        %v3377 = vpop.permute.xlu0 %3376
        %3378 = vrot.lane.b32.xlu0 %v3332, 126
        %v3379 = vpop.permute.xlu0 %3378
        %3380 = vrot.lane.b32.xlu0 %v3333, 126
        %v3381 = vpop.permute.xlu0 %3380
        %v3398 = vadd.f32 %v3295, %v3351
        %v3399 = vadd.f32 %v3296, %v3353
        %v3400 = vadd.f32 %v3297, %v3355
        %v3401 = vadd.f32 %v3298, %v3357
        %v3402 = vadd.f32 %v3299, %v3359
        %v3403 = vadd.f32 %v3300, %v3361
        %v3404 = vadd.f32 %v3301, %v3363
        %v3405 = vadd.f32 %v3302, %v3365
        %v3406 = vadd.f32 %v3303, %v3367
        %v3407 = vadd.f32 %v3304, %v3369
        %v3408 = vadd.f32 %v3305, %v3371
        %v3409 = vadd.f32 %v3306, %v3373
        %v3410 = vadd.f32 %v3307, %v3375
        %v3411 = vadd.f32 %v3308, %v3377
        %v3412 = vadd.f32 %v3309, %v3379
        %v3413 = vadd.f32 %v3310, %v3381
        %v3414 = vmul.f32 %v3317, %v745
        %v3416 = vrot.slane %v3414, 2
        %v3418 = vadd.f32 %v3315, %v3416
        %s3419 = sld [smem:[#allocation3 + $0x83]]
        %v3420 = vstv %s3419
        %v3421 = vmul.f32 %v3420, %v827
        %v3422 = vmul.f32 %v3420, %v832
        %v3423 = vmul.f32 %v3420, %v837
        %v3424 = vmul.f32 %v3420, %v842
        %v3425 = vmul.f32 %v3420, %v847
        %v3426 = vmul.f32 %v3420, %v852
        %v3427 = vmul.f32 %v3420, %v857
        %v3428 = vmul.f32 %v3420, %v862
        %v3429 = vmul.f32 %v3420, %v867
        %v3430 = vmul.f32 %v3420, %v872
        %v3431 = vmul.f32 %v3420, %v877
        %v3432 = vmul.f32 %v3420, %v882
        %v3433 = vmul.f32 %v3420, %v887
        %v3434 = vmul.f32 %v3420, %v892
        %v3435 = vmul.f32 %v3420, %v897
        %v3436 = vmul.f32 %v3420, %v902
        %3453 = vrot.lane.b32.xlu0 %v3421, 125
        %v3454 = vpop.permute.xlu0 %3453
        %3455 = vrot.lane.b32.xlu0 %v3422, 125
        %v3456 = vpop.permute.xlu0 %3455
        %3457 = vrot.lane.b32.xlu0 %v3423, 125
        %v3458 = vpop.permute.xlu0 %3457
        %3459 = vrot.lane.b32.xlu0 %v3424, 125
        %v3460 = vpop.permute.xlu0 %3459
        %3461 = vrot.lane.b32.xlu0 %v3425, 125
        %v3462 = vpop.permute.xlu0 %3461
        %3463 = vrot.lane.b32.xlu0 %v3426, 125
        %v3464 = vpop.permute.xlu0 %3463
        %3465 = vrot.lane.b32.xlu0 %v3427, 125
        %v3466 = vpop.permute.xlu0 %3465
        %3467 = vrot.lane.b32.xlu0 %v3428, 125
        %v3468 = vpop.permute.xlu0 %3467
        %3469 = vrot.lane.b32.xlu0 %v3429, 125
        %v3470 = vpop.permute.xlu0 %3469
        %3471 = vrot.lane.b32.xlu0 %v3430, 125
        %v3472 = vpop.permute.xlu0 %3471
        %3473 = vrot.lane.b32.xlu0 %v3431, 125
        %v3474 = vpop.permute.xlu0 %3473
        %3475 = vrot.lane.b32.xlu0 %v3432, 125
        %v3476 = vpop.permute.xlu0 %3475
        %3477 = vrot.lane.b32.xlu0 %v3433, 125
        %v3478 = vpop.permute.xlu0 %3477
        %3479 = vrot.lane.b32.xlu0 %v3434, 125
        %v3480 = vpop.permute.xlu0 %3479
        %3481 = vrot.lane.b32.xlu0 %v3435, 125
        %v3482 = vpop.permute.xlu0 %3481
        %3483 = vrot.lane.b32.xlu0 %v3436, 125
        %v3484 = vpop.permute.xlu0 %3483
        %v3501 = vadd.f32 %v3398, %v3454
        %v3502 = vadd.f32 %v3399, %v3456
        %v3503 = vadd.f32 %v3400, %v3458
        %v3504 = vadd.f32 %v3401, %v3460
        %v3505 = vadd.f32 %v3402, %v3462
        %v3506 = vadd.f32 %v3403, %v3464
        %v3507 = vadd.f32 %v3404, %v3466
        %v3508 = vadd.f32 %v3405, %v3468
        %v3509 = vadd.f32 %v3406, %v3470
        %v3510 = vadd.f32 %v3407, %v3472
        %v3511 = vadd.f32 %v3408, %v3474
        %v3512 = vadd.f32 %v3409, %v3476
        %v3513 = vadd.f32 %v3410, %v3478
        %v3514 = vadd.f32 %v3411, %v3480
        %v3515 = vadd.f32 %v3412, %v3482
        %v3516 = vadd.f32 %v3413, %v3484
        %v3517 = vmul.f32 %v3420, %v745
        %v3519 = vrot.slane %v3517, 3
        %v3521 = vadd.f32 %v3418, %v3519
        %s3522 = sld [smem:[#allocation3 + $0x84]]
        %v3523 = vstv %s3522
        %v3524 = vmul.f32 %v3523, %v827
        %v3525 = vmul.f32 %v3523, %v832
        %v3526 = vmul.f32 %v3523, %v837
        %v3527 = vmul.f32 %v3523, %v842
        %v3528 = vmul.f32 %v3523, %v847
        %v3529 = vmul.f32 %v3523, %v852
        %v3530 = vmul.f32 %v3523, %v857
        %v3531 = vmul.f32 %v3523, %v862
        %v3532 = vmul.f32 %v3523, %v867
        %v3533 = vmul.f32 %v3523, %v872
        %v3534 = vmul.f32 %v3523, %v877
        %v3535 = vmul.f32 %v3523, %v882
        %v3536 = vmul.f32 %v3523, %v887
        %v3537 = vmul.f32 %v3523, %v892
        %v3538 = vmul.f32 %v3523, %v897
        %v3539 = vmul.f32 %v3523, %v902
        %3556 = vrot.lane.b32.xlu0 %v3524, 124
        %v3557 = vpop.permute.xlu0 %3556
        %3558 = vrot.lane.b32.xlu0 %v3525, 124
        %v3559 = vpop.permute.xlu0 %3558
        %3560 = vrot.lane.b32.xlu0 %v3526, 124
        %v3561 = vpop.permute.xlu0 %3560
        %3562 = vrot.lane.b32.xlu0 %v3527, 124
        %v3563 = vpop.permute.xlu0 %3562
        %3564 = vrot.lane.b32.xlu0 %v3528, 124
        %v3565 = vpop.permute.xlu0 %3564
        %3566 = vrot.lane.b32.xlu0 %v3529, 124
        %v3567 = vpop.permute.xlu0 %3566
        %3568 = vrot.lane.b32.xlu0 %v3530, 124
        %v3569 = vpop.permute.xlu0 %3568
        %3570 = vrot.lane.b32.xlu0 %v3531, 124
        %v3571 = vpop.permute.xlu0 %3570
        %3572 = vrot.lane.b32.xlu0 %v3532, 124
        %v3573 = vpop.permute.xlu0 %3572
        %3574 = vrot.lane.b32.xlu0 %v3533, 124
        %v3575 = vpop.permute.xlu0 %3574
        %3576 = vrot.lane.b32.xlu0 %v3534, 124
        %v3577 = vpop.permute.xlu0 %3576
        %3578 = vrot.lane.b32.xlu0 %v3535, 124
        %v3579 = vpop.permute.xlu0 %3578
        %3580 = vrot.lane.b32.xlu0 %v3536, 124
        %v3581 = vpop.permute.xlu0 %3580
        %3582 = vrot.lane.b32.xlu0 %v3537, 124
        %v3583 = vpop.permute.xlu0 %3582
        %3584 = vrot.lane.b32.xlu0 %v3538, 124
        %v3585 = vpop.permute.xlu0 %3584
        %3586 = vrot.lane.b32.xlu0 %v3539, 124
        %v3587 = vpop.permute.xlu0 %3586
        %v3604 = vadd.f32 %v3501, %v3557
        %v3605 = vadd.f32 %v3502, %v3559
        %v3606 = vadd.f32 %v3503, %v3561
        %v3607 = vadd.f32 %v3504, %v3563
        %v3608 = vadd.f32 %v3505, %v3565
        %v3609 = vadd.f32 %v3506, %v3567
        %v3610 = vadd.f32 %v3507, %v3569
        %v3611 = vadd.f32 %v3508, %v3571
        %v3612 = vadd.f32 %v3509, %v3573
        %v3613 = vadd.f32 %v3510, %v3575
        %v3614 = vadd.f32 %v3511, %v3577
        %v3615 = vadd.f32 %v3512, %v3579
        %v3616 = vadd.f32 %v3513, %v3581
        %v3617 = vadd.f32 %v3514, %v3583
        %v3618 = vadd.f32 %v3515, %v3585
        %v3619 = vadd.f32 %v3516, %v3587
        %v3620 = vmul.f32 %v3523, %v745
        %v3622 = vrot.slane %v3620, 4
        %v3624 = vadd.f32 %v3521, %v3622
        %s3625 = sld [smem:[#allocation3 + $0x85]]
        %v3626 = vstv %s3625
        %v3627 = vmul.f32 %v3626, %v827
        %v3628 = vmul.f32 %v3626, %v832
        %v3629 = vmul.f32 %v3626, %v837
        %v3630 = vmul.f32 %v3626, %v842
        %v3631 = vmul.f32 %v3626, %v847
        %v3632 = vmul.f32 %v3626, %v852
        %v3633 = vmul.f32 %v3626, %v857
        %v3634 = vmul.f32 %v3626, %v862
        %v3635 = vmul.f32 %v3626, %v867
        %v3636 = vmul.f32 %v3626, %v872
        %v3637 = vmul.f32 %v3626, %v877
        %v3638 = vmul.f32 %v3626, %v882
        %v3639 = vmul.f32 %v3626, %v887
        %v3640 = vmul.f32 %v3626, %v892
        %v3641 = vmul.f32 %v3626, %v897
        %v3642 = vmul.f32 %v3626, %v902
        %3659 = vrot.lane.b32.xlu0 %v3627, 123
        %v3660 = vpop.permute.xlu0 %3659
        %3661 = vrot.lane.b32.xlu0 %v3628, 123
        %v3662 = vpop.permute.xlu0 %3661
        %3663 = vrot.lane.b32.xlu0 %v3629, 123
        %v3664 = vpop.permute.xlu0 %3663
        %3665 = vrot.lane.b32.xlu0 %v3630, 123
        %v3666 = vpop.permute.xlu0 %3665
        %3667 = vrot.lane.b32.xlu0 %v3631, 123
        %v3668 = vpop.permute.xlu0 %3667
        %3669 = vrot.lane.b32.xlu0 %v3632, 123
        %v3670 = vpop.permute.xlu0 %3669
        %3671 = vrot.lane.b32.xlu0 %v3633, 123
        %v3672 = vpop.permute.xlu0 %3671
        %3673 = vrot.lane.b32.xlu0 %v3634, 123
        %v3674 = vpop.permute.xlu0 %3673
        %3675 = vrot.lane.b32.xlu0 %v3635, 123
        %v3676 = vpop.permute.xlu0 %3675
        %3677 = vrot.lane.b32.xlu0 %v3636, 123
        %v3678 = vpop.permute.xlu0 %3677
        %3679 = vrot.lane.b32.xlu0 %v3637, 123
        %v3680 = vpop.permute.xlu0 %3679
        %3681 = vrot.lane.b32.xlu0 %v3638, 123
        %v3682 = vpop.permute.xlu0 %3681
        %3683 = vrot.lane.b32.xlu0 %v3639, 123
        %v3684 = vpop.permute.xlu0 %3683
        %3685 = vrot.lane.b32.xlu0 %v3640, 123
        %v3686 = vpop.permute.xlu0 %3685
        %3687 = vrot.lane.b32.xlu0 %v3641, 123
        %v3688 = vpop.permute.xlu0 %3687
        %3689 = vrot.lane.b32.xlu0 %v3642, 123
        %v3690 = vpop.permute.xlu0 %3689
        %v3707 = vadd.f32 %v3604, %v3660
        %v3708 = vadd.f32 %v3605, %v3662
        %v3709 = vadd.f32 %v3606, %v3664
        %v3710 = vadd.f32 %v3607, %v3666
        %v3711 = vadd.f32 %v3608, %v3668
        %v3712 = vadd.f32 %v3609, %v3670
        %v3713 = vadd.f32 %v3610, %v3672
        %v3714 = vadd.f32 %v3611, %v3674
        %v3715 = vadd.f32 %v3612, %v3676
        %v3716 = vadd.f32 %v3613, %v3678
        %v3717 = vadd.f32 %v3614, %v3680
        %v3718 = vadd.f32 %v3615, %v3682
        %v3719 = vadd.f32 %v3616, %v3684
        %v3720 = vadd.f32 %v3617, %v3686
        %v3721 = vadd.f32 %v3618, %v3688
        %v3722 = vadd.f32 %v3619, %v3690
        %v3723 = vmul.f32 %v3626, %v745
        %v3725 = vrot.slane %v3723, 5
        %v3727 = vadd.f32 %v3624, %v3725
        %s3728 = sld [smem:[#allocation3 + $0x86]]
        %v3729 = vstv %s3728
        %v3730 = vmul.f32 %v3729, %v827
        %v3731 = vmul.f32 %v3729, %v832
        %v3732 = vmul.f32 %v3729, %v837
        %v3733 = vmul.f32 %v3729, %v842
        %v3734 = vmul.f32 %v3729, %v847
        %v3735 = vmul.f32 %v3729, %v852
        %v3736 = vmul.f32 %v3729, %v857
        %v3737 = vmul.f32 %v3729, %v862
        %v3738 = vmul.f32 %v3729, %v867
        %v3739 = vmul.f32 %v3729, %v872
        %v3740 = vmul.f32 %v3729, %v877
        %v3741 = vmul.f32 %v3729, %v882
        %v3742 = vmul.f32 %v3729, %v887
        %v3743 = vmul.f32 %v3729, %v892
        %v3744 = vmul.f32 %v3729, %v897
        %v3745 = vmul.f32 %v3729, %v902
        %3762 = vrot.lane.b32.xlu0 %v3730, 122
        %v3763 = vpop.permute.xlu0 %3762
        %3764 = vrot.lane.b32.xlu0 %v3731, 122
        %v3765 = vpop.permute.xlu0 %3764
        %3766 = vrot.lane.b32.xlu0 %v3732, 122
        %v3767 = vpop.permute.xlu0 %3766
        %3768 = vrot.lane.b32.xlu0 %v3733, 122
        %v3769 = vpop.permute.xlu0 %3768
        %3770 = vrot.lane.b32.xlu0 %v3734, 122
        %v3771 = vpop.permute.xlu0 %3770
        %3772 = vrot.lane.b32.xlu0 %v3735, 122
        %v3773 = vpop.permute.xlu0 %3772
        %3774 = vrot.lane.b32.xlu0 %v3736, 122
        %v3775 = vpop.permute.xlu0 %3774
        %3776 = vrot.lane.b32.xlu0 %v3737, 122
        %v3777 = vpop.permute.xlu0 %3776
        %3778 = vrot.lane.b32.xlu0 %v3738, 122
        %v3779 = vpop.permute.xlu0 %3778
        %3780 = vrot.lane.b32.xlu0 %v3739, 122
        %v3781 = vpop.permute.xlu0 %3780
        %3782 = vrot.lane.b32.xlu0 %v3740, 122
        %v3783 = vpop.permute.xlu0 %3782
        %3784 = vrot.lane.b32.xlu0 %v3741, 122
        %v3785 = vpop.permute.xlu0 %3784
        %3786 = vrot.lane.b32.xlu0 %v3742, 122
        %v3787 = vpop.permute.xlu0 %3786
        %3788 = vrot.lane.b32.xlu0 %v3743, 122
        %v3789 = vpop.permute.xlu0 %3788
        %3790 = vrot.lane.b32.xlu0 %v3744, 122
        %v3791 = vpop.permute.xlu0 %3790
        %3792 = vrot.lane.b32.xlu0 %v3745, 122
        %v3793 = vpop.permute.xlu0 %3792
        %v3810 = vadd.f32 %v3707, %v3763
        %v3811 = vadd.f32 %v3708, %v3765
        %v3812 = vadd.f32 %v3709, %v3767
        %v3813 = vadd.f32 %v3710, %v3769
        %v3814 = vadd.f32 %v3711, %v3771
        %v3815 = vadd.f32 %v3712, %v3773
        %v3816 = vadd.f32 %v3713, %v3775
        %v3817 = vadd.f32 %v3714, %v3777
        %v3818 = vadd.f32 %v3715, %v3779
        %v3819 = vadd.f32 %v3716, %v3781
        %v3820 = vadd.f32 %v3717, %v3783
        %v3821 = vadd.f32 %v3718, %v3785
        %v3822 = vadd.f32 %v3719, %v3787
        %v3823 = vadd.f32 %v3720, %v3789
        %v3824 = vadd.f32 %v3721, %v3791
        %v3825 = vadd.f32 %v3722, %v3793
        %v3826 = vmul.f32 %v3729, %v745
        %v3828 = vrot.slane %v3826, 6
        %v3830 = vadd.f32 %v3727, %v3828
        %s3831 = sld [smem:[#allocation3 + $0x87]]
        %v3832 = vstv %s3831
        %v3833 = vmul.f32 %v3832, %v827
        %v3834 = vmul.f32 %v3832, %v832
        %v3835 = vmul.f32 %v3832, %v837
        %v3836 = vmul.f32 %v3832, %v842
        %v3837 = vmul.f32 %v3832, %v847
        %v3838 = vmul.f32 %v3832, %v852
        %v3839 = vmul.f32 %v3832, %v857
        %v3840 = vmul.f32 %v3832, %v862
        %v3841 = vmul.f32 %v3832, %v867
        %v3842 = vmul.f32 %v3832, %v872
        %v3843 = vmul.f32 %v3832, %v877
        %v3844 = vmul.f32 %v3832, %v882
        %v3845 = vmul.f32 %v3832, %v887
        %v3846 = vmul.f32 %v3832, %v892
        %v3847 = vmul.f32 %v3832, %v897
        %v3848 = vmul.f32 %v3832, %v902
        %3865 = vrot.lane.b32.xlu0 %v3833, 121
        %v3866 = vpop.permute.xlu0 %3865
        %3867 = vrot.lane.b32.xlu0 %v3834, 121
        %v3868 = vpop.permute.xlu0 %3867
        %3869 = vrot.lane.b32.xlu0 %v3835, 121
        %v3870 = vpop.permute.xlu0 %3869
        %3871 = vrot.lane.b32.xlu0 %v3836, 121
        %v3872 = vpop.permute.xlu0 %3871
        %3873 = vrot.lane.b32.xlu0 %v3837, 121
        %v3874 = vpop.permute.xlu0 %3873
        %3875 = vrot.lane.b32.xlu0 %v3838, 121
        %v3876 = vpop.permute.xlu0 %3875
        %3877 = vrot.lane.b32.xlu0 %v3839, 121
        %v3878 = vpop.permute.xlu0 %3877
        %3879 = vrot.lane.b32.xlu0 %v3840, 121
        %v3880 = vpop.permute.xlu0 %3879
        %3881 = vrot.lane.b32.xlu0 %v3841, 121
        %v3882 = vpop.permute.xlu0 %3881
        %3883 = vrot.lane.b32.xlu0 %v3842, 121
        %v3884 = vpop.permute.xlu0 %3883
        %3885 = vrot.lane.b32.xlu0 %v3843, 121
        %v3886 = vpop.permute.xlu0 %3885
        %3887 = vrot.lane.b32.xlu0 %v3844, 121
        %v3888 = vpop.permute.xlu0 %3887
        %3889 = vrot.lane.b32.xlu0 %v3845, 121
        %v3890 = vpop.permute.xlu0 %3889
        %3891 = vrot.lane.b32.xlu0 %v3846, 121
        %v3892 = vpop.permute.xlu0 %3891
        %3893 = vrot.lane.b32.xlu0 %v3847, 121
        %v3894 = vpop.permute.xlu0 %3893
        %3895 = vrot.lane.b32.xlu0 %v3848, 121
        %v3896 = vpop.permute.xlu0 %3895
        %v3913 = vadd.f32 %v3810, %v3866
        %v3914 = vadd.f32 %v3811, %v3868
        %v3915 = vadd.f32 %v3812, %v3870
        %v3916 = vadd.f32 %v3813, %v3872
        %v3917 = vadd.f32 %v3814, %v3874
        %v3918 = vadd.f32 %v3815, %v3876
        %v3919 = vadd.f32 %v3816, %v3878
        %v3920 = vadd.f32 %v3817, %v3880
        %v3921 = vadd.f32 %v3818, %v3882
        %v3922 = vadd.f32 %v3819, %v3884
        %v3923 = vadd.f32 %v3820, %v3886
        %v3924 = vadd.f32 %v3821, %v3888
        %v3925 = vadd.f32 %v3822, %v3890
        %v3926 = vadd.f32 %v3823, %v3892
        %v3927 = vadd.f32 %v3824, %v3894
        %v3928 = vadd.f32 %v3825, %v3896
        %v3929 = vmul.f32 %v3832, %v745
        %v3931 = vrot.slane %v3929, 7
        %v3933 = vadd.f32 %v3830, %v3931
        %3935 = vset.pattern.permute.xlu0 8
        %3936 = vperm.xlu0 %3935, %v3913
        %v3937 = vpop.permute.xlu0 %3936
        %3940 = vset.pattern.permute.xlu0 8
        %3941 = vperm.xlu0 %3940, %v3914
        %v3942 = vpop.permute.xlu0 %3941
        %3945 = vset.pattern.permute.xlu0 8
        %3946 = vperm.xlu0 %3945, %v3915
        %v3947 = vpop.permute.xlu0 %3946
        %3950 = vset.pattern.permute.xlu0 8
        %3951 = vperm.xlu0 %3950, %v3916
        %v3952 = vpop.permute.xlu0 %3951
        %3955 = vset.pattern.permute.xlu0 8
        %3956 = vperm.xlu0 %3955, %v3917
        %v3957 = vpop.permute.xlu0 %3956
        %3960 = vset.pattern.permute.xlu0 8
        %3961 = vperm.xlu0 %3960, %v3918
        %v3962 = vpop.permute.xlu0 %3961
        %3965 = vset.pattern.permute.xlu0 8
        %3966 = vperm.xlu0 %3965, %v3919
        %v3967 = vpop.permute.xlu0 %3966
        %3970 = vset.pattern.permute.xlu0 8
        %3971 = vperm.xlu0 %3970, %v3920
        %v3972 = vpop.permute.xlu0 %3971
        %3975 = vset.pattern.permute.xlu0 8
        %3976 = vperm.xlu0 %3975, %v3921
        %v3977 = vpop.permute.xlu0 %3976
        %3980 = vset.pattern.permute.xlu0 8
        %3981 = vperm.xlu0 %3980, %v3922
        %v3982 = vpop.permute.xlu0 %3981
        %3985 = vset.pattern.permute.xlu0 8
        %3986 = vperm.xlu0 %3985, %v3923
        %v3987 = vpop.permute.xlu0 %3986
        %3990 = vset.pattern.permute.xlu0 8
        %3991 = vperm.xlu0 %3990, %v3924
        %v3992 = vpop.permute.xlu0 %3991
        %3995 = vset.pattern.permute.xlu0 8
        %3996 = vperm.xlu0 %3995, %v3925
        %v3997 = vpop.permute.xlu0 %3996
        %4000 = vset.pattern.permute.xlu0 8
        %4001 = vperm.xlu0 %4000, %v3926
        %v4002 = vpop.permute.xlu0 %4001
        %4005 = vset.pattern.permute.xlu0 8
        %4006 = vperm.xlu0 %4005, %v3927
        %v4007 = vpop.permute.xlu0 %4006
        %4010 = vset.pattern.permute.xlu0 8
        %4011 = vperm.xlu0 %4010, %v3928
        %v4012 = vpop.permute.xlu0 %4011
        %v4014 = vadd.f32 %v588, %v3937
        %v4015 = vadd.f32 %v589, %v3942
        %v4016 = vadd.f32 %v590, %v3947
        %v4017 = vadd.f32 %v591, %v3952
        %v4018 = vadd.f32 %v592, %v3957
        %v4019 = vadd.f32 %v593, %v3962
        %v4020 = vadd.f32 %v594, %v3967
        %v4021 = vadd.f32 %v595, %v3972
        %v4022 = vadd.f32 %v596, %v3977
        %v4023 = vadd.f32 %v597, %v3982
        %v4024 = vadd.f32 %v598, %v3987
        %v4025 = vadd.f32 %v599, %v3992
        %v4026 = vadd.f32 %v600, %v3997
        %v4027 = vadd.f32 %v601, %v4002
        %v4028 = vadd.f32 %v602, %v4007
        %v4029 = vadd.f32 %v603, %v4012
        %v4030 = vlaneseq
        %v4031 = vshrl.u32 %v4030, 7
        %v4032 = vsub.s32 0, %v4031
        %v4033 = vrot.slane %v3933, %v4032
        %v4034 = vadd.f32 %v4014, %v4033
        %v4035 = vadd.f32 %v4015, %v4033
        %v4036 = vadd.f32 %v4016, %v4033
        %v4037 = vadd.f32 %v4017, %v4033
        %v4038 = vadd.f32 %v4018, %v4033
        %v4039 = vadd.f32 %v4019, %v4033
        %v4040 = vadd.f32 %v4020, %v4033
        %v4041 = vadd.f32 %v4021, %v4033
        %v4042 = vadd.f32 %v4022, %v4033
        %v4043 = vadd.f32 %v4023, %v4033
        %v4044 = vadd.f32 %v4024, %v4033
        %v4045 = vadd.f32 %v4025, %v4033
        %v4046 = vadd.f32 %v4026, %v4033
        %v4047 = vadd.f32 %v4027, %v4033
        %v4048 = vadd.f32 %v4028, %v4033
        %v4049 = vadd.f32 %v4029, %v4033
        %4050 = vset.pattern.permute.xlu0 8
        %4051 = vperm.xlu0 %4050, %v827
        %v4052 = vpop.permute.xlu0 %4051
        %4054 = vset.pattern.permute.xlu0 8
        %4055 = vperm.xlu0 %4054, %v832
        %v4056 = vpop.permute.xlu0 %4055
        %4058 = vset.pattern.permute.xlu0 8
        %4059 = vperm.xlu0 %4058, %v837
        %v4060 = vpop.permute.xlu0 %4059
        %4062 = vset.pattern.permute.xlu0 8
        %4063 = vperm.xlu0 %4062, %v842
        %v4064 = vpop.permute.xlu0 %4063
        %4066 = vset.pattern.permute.xlu0 8
        %4067 = vperm.xlu0 %4066, %v847
        %v4068 = vpop.permute.xlu0 %4067
        %4070 = vset.pattern.permute.xlu0 8
        %4071 = vperm.xlu0 %4070, %v852
        %v4072 = vpop.permute.xlu0 %4071
        %4074 = vset.pattern.permute.xlu0 8
        %4075 = vperm.xlu0 %4074, %v857
        %v4076 = vpop.permute.xlu0 %4075
        %4078 = vset.pattern.permute.xlu0 8
        %4079 = vperm.xlu0 %4078, %v862
        %v4080 = vpop.permute.xlu0 %4079
        %4082 = vset.pattern.permute.xlu0 8
        %4083 = vperm.xlu0 %4082, %v867
        %v4084 = vpop.permute.xlu0 %4083
        %4086 = vset.pattern.permute.xlu0 8
        %4087 = vperm.xlu0 %4086, %v872
        %v4088 = vpop.permute.xlu0 %4087
        %4090 = vset.pattern.permute.xlu0 8
        %4091 = vperm.xlu0 %4090, %v877
        %v4092 = vpop.permute.xlu0 %4091
        %4094 = vset.pattern.permute.xlu0 8
        %4095 = vperm.xlu0 %4094, %v882
        %v4096 = vpop.permute.xlu0 %4095
        %4098 = vset.pattern.permute.xlu0 8
        %4099 = vperm.xlu0 %4098, %v887
        %v4100 = vpop.permute.xlu0 %4099
        %4102 = vset.pattern.permute.xlu0 8
        %4103 = vperm.xlu0 %4102, %v892
        %v4104 = vpop.permute.xlu0 %4103
        %4106 = vset.pattern.permute.xlu0 8
        %4107 = vperm.xlu0 %4106, %v897
        %v4108 = vpop.permute.xlu0 %4107
        %4110 = vset.pattern.permute.xlu0 8
        %4111 = vperm.xlu0 %4110, %v902
        %v4112 = vpop.permute.xlu0 %4111
        %v4114 = vlaneseq
        %v4115 = vshrl.u32 %v4114, 7
        %v4116 = vsub.s32 0, %v4115
        %v4117 = vrot.slane %v745, %v4116
        %v4118 = vadd.f32 %v4052, %v4117
        %v4119 = vadd.f32 %v4056, %v4117
        %v4120 = vadd.f32 %v4060, %v4117
        %v4121 = vadd.f32 %v4064, %v4117
        %v4122 = vadd.f32 %v4068, %v4117
        %v4123 = vadd.f32 %v4072, %v4117
        %v4124 = vadd.f32 %v4076, %v4117
        %v4125 = vadd.f32 %v4080, %v4117
        %v4126 = vadd.f32 %v4084, %v4117
        %v4127 = vadd.f32 %v4088, %v4117
        %v4128 = vadd.f32 %v4092, %v4117
        %v4129 = vadd.f32 %v4096, %v4117
        %v4130 = vadd.f32 %v4100, %v4117
        %v4131 = vadd.f32 %v4104, %v4117
        %v4132 = vadd.f32 %v4108, %v4117
        %v4133 = vadd.f32 %v4112, %v4117
        %s4134 = sld [smem:[#allocation6 + $0x80]]
        %v4135 = vand.u32 2147483647, %v4118
        %v4136 = vand.u32 2147483647, %v4119
        %v4137 = vand.u32 2147483647, %v4120
        %v4138 = vand.u32 2147483647, %v4121
        %v4139 = vand.u32 2147483647, %v4122
        %v4140 = vand.u32 2147483647, %v4123
        %v4141 = vand.u32 2147483647, %v4124
        %v4142 = vand.u32 2147483647, %v4125
        %v4143 = vand.u32 2147483647, %v4126
        %v4144 = vand.u32 2147483647, %v4127
        %v4145 = vand.u32 2147483647, %v4128
        %v4146 = vand.u32 2147483647, %v4129
        %v4147 = vand.u32 2147483647, %v4130
        %v4148 = vand.u32 2147483647, %v4131
        %v4149 = vand.u32 2147483647, %v4132
        %v4150 = vand.u32 2147483647, %v4133
        %v4151 = vstv %s4134
        %v4152 = vmul.f32 %v4151, %v4135
        %v4153 = vmul.f32 %v4151, %v4136
        %v4154 = vmul.f32 %v4151, %v4137
        %v4155 = vmul.f32 %v4151, %v4138
        %v4156 = vmul.f32 %v4151, %v4139
        %v4157 = vmul.f32 %v4151, %v4140
        %v4158 = vmul.f32 %v4151, %v4141
        %v4159 = vmul.f32 %v4151, %v4142
        %v4160 = vmul.f32 %v4151, %v4143
        %v4161 = vmul.f32 %v4151, %v4144
        %v4162 = vmul.f32 %v4151, %v4145
        %v4163 = vmul.f32 %v4151, %v4146
        %v4164 = vmul.f32 %v4151, %v4147
        %v4165 = vmul.f32 %v4151, %v4148
        %v4166 = vmul.f32 %v4151, %v4149
        %v4167 = vmul.f32 %v4151, %v4150
        %v4168 = vadd.f32 %v4034, %v4152
        %v4169 = vadd.f32 %v4035, %v4153
        %v4170 = vadd.f32 %v4036, %v4154
        %v4171 = vadd.f32 %v4037, %v4155
        %v4172 = vadd.f32 %v4038, %v4156
        %v4173 = vadd.f32 %v4039, %v4157
        %v4174 = vadd.f32 %v4040, %v4158
        %v4175 = vadd.f32 %v4041, %v4159
        %v4176 = vadd.f32 %v4042, %v4160
        %v4177 = vadd.f32 %v4043, %v4161
        %v4178 = vadd.f32 %v4044, %v4162
        %v4179 = vadd.f32 %v4045, %v4163
        %v4180 = vadd.f32 %v4046, %v4164
        %v4181 = vadd.f32 %v4047, %v4165
        %v4182 = vadd.f32 %v4048, %v4166
        %v4183 = vadd.f32 %v4049, %v4167
        %4184 = vset.pattern.permute.xlu0 9
        %4185 = vperm.xlu0 %4184, %v827
        %v4186 = vpop.permute.xlu0 %4185
        %4188 = vset.pattern.permute.xlu0 9
        %4189 = vperm.xlu0 %4188, %v832
        %v4190 = vpop.permute.xlu0 %4189
        %4192 = vset.pattern.permute.xlu0 9
        %4193 = vperm.xlu0 %4192, %v837
        %v4194 = vpop.permute.xlu0 %4193
        %4196 = vset.pattern.permute.xlu0 9
        %4197 = vperm.xlu0 %4196, %v842
        %v4198 = vpop.permute.xlu0 %4197
        %4200 = vset.pattern.permute.xlu0 9
        %4201 = vperm.xlu0 %4200, %v847
        %v4202 = vpop.permute.xlu0 %4201
        %4204 = vset.pattern.permute.xlu0 9
        %4205 = vperm.xlu0 %4204, %v852
        %v4206 = vpop.permute.xlu0 %4205
        %4208 = vset.pattern.permute.xlu0 9
        %4209 = vperm.xlu0 %4208, %v857
        %v4210 = vpop.permute.xlu0 %4209
        %4212 = vset.pattern.permute.xlu0 9
        %4213 = vperm.xlu0 %4212, %v862
        %v4214 = vpop.permute.xlu0 %4213
        %4216 = vset.pattern.permute.xlu0 9
        %4217 = vperm.xlu0 %4216, %v867
        %v4218 = vpop.permute.xlu0 %4217
        %4220 = vset.pattern.permute.xlu0 9
        %4221 = vperm.xlu0 %4220, %v872
        %v4222 = vpop.permute.xlu0 %4221
        %4224 = vset.pattern.permute.xlu0 9
        %4225 = vperm.xlu0 %4224, %v877
        %v4226 = vpop.permute.xlu0 %4225
        %4228 = vset.pattern.permute.xlu0 9
        %4229 = vperm.xlu0 %4228, %v882
        %v4230 = vpop.permute.xlu0 %4229
        %4232 = vset.pattern.permute.xlu0 9
        %4233 = vperm.xlu0 %4232, %v887
        %v4234 = vpop.permute.xlu0 %4233
        %4236 = vset.pattern.permute.xlu0 9
        %4237 = vperm.xlu0 %4236, %v892
        %v4238 = vpop.permute.xlu0 %4237
        %4240 = vset.pattern.permute.xlu0 9
        %4241 = vperm.xlu0 %4240, %v897
        %v4242 = vpop.permute.xlu0 %4241
        %4244 = vset.pattern.permute.xlu0 9
        %4245 = vperm.xlu0 %4244, %v902
        %v4246 = vpop.permute.xlu0 %4245
        %v4248 = vlaneseq
        %v4249 = vshrl.u32 %v4248, 7
        %v4250 = vsub.s32 1, %v4249
        %v4251 = vrot.slane %v745, %v4250
        %v4252 = vadd.f32 %v4186, %v4251
        %v4253 = vadd.f32 %v4190, %v4251
        %v4254 = vadd.f32 %v4194, %v4251
        %v4255 = vadd.f32 %v4198, %v4251
        %v4256 = vadd.f32 %v4202, %v4251
        %v4257 = vadd.f32 %v4206, %v4251
        %v4258 = vadd.f32 %v4210, %v4251
        %v4259 = vadd.f32 %v4214, %v4251
        %v4260 = vadd.f32 %v4218, %v4251
        %v4261 = vadd.f32 %v4222, %v4251
        %v4262 = vadd.f32 %v4226, %v4251
        %v4263 = vadd.f32 %v4230, %v4251
        %v4264 = vadd.f32 %v4234, %v4251
        %v4265 = vadd.f32 %v4238, %v4251
        %v4266 = vadd.f32 %v4242, %v4251
        %v4267 = vadd.f32 %v4246, %v4251
        %s4268 = sld [smem:[#allocation6 + $0x81]]
        %v4269 = vand.u32 2147483647, %v4252
        %v4270 = vand.u32 2147483647, %v4253
        %v4271 = vand.u32 2147483647, %v4254
        %v4272 = vand.u32 2147483647, %v4255
        %v4273 = vand.u32 2147483647, %v4256
        %v4274 = vand.u32 2147483647, %v4257
        %v4275 = vand.u32 2147483647, %v4258
        %v4276 = vand.u32 2147483647, %v4259
        %v4277 = vand.u32 2147483647, %v4260
        %v4278 = vand.u32 2147483647, %v4261
        %v4279 = vand.u32 2147483647, %v4262
        %v4280 = vand.u32 2147483647, %v4263
        %v4281 = vand.u32 2147483647, %v4264
        %v4282 = vand.u32 2147483647, %v4265
        %v4283 = vand.u32 2147483647, %v4266
        %v4284 = vand.u32 2147483647, %v4267
        %v4285 = vstv %s4268
        %v4286 = vmul.f32 %v4285, %v4269
        %v4287 = vmul.f32 %v4285, %v4270
        %v4288 = vmul.f32 %v4285, %v4271
        %v4289 = vmul.f32 %v4285, %v4272
        %v4290 = vmul.f32 %v4285, %v4273
        %v4291 = vmul.f32 %v4285, %v4274
        %v4292 = vmul.f32 %v4285, %v4275
        %v4293 = vmul.f32 %v4285, %v4276
        %v4294 = vmul.f32 %v4285, %v4277
        %v4295 = vmul.f32 %v4285, %v4278
        %v4296 = vmul.f32 %v4285, %v4279
        %v4297 = vmul.f32 %v4285, %v4280
        %v4298 = vmul.f32 %v4285, %v4281
        %v4299 = vmul.f32 %v4285, %v4282
        %v4300 = vmul.f32 %v4285, %v4283
        %v4301 = vmul.f32 %v4285, %v4284
        %v4302 = vadd.f32 %v4168, %v4286
        %v4303 = vadd.f32 %v4169, %v4287
        %v4304 = vadd.f32 %v4170, %v4288
        %v4305 = vadd.f32 %v4171, %v4289
        %v4306 = vadd.f32 %v4172, %v4290
        %v4307 = vadd.f32 %v4173, %v4291
        %v4308 = vadd.f32 %v4174, %v4292
        %v4309 = vadd.f32 %v4175, %v4293
        %v4310 = vadd.f32 %v4176, %v4294
        %v4311 = vadd.f32 %v4177, %v4295
        %v4312 = vadd.f32 %v4178, %v4296
        %v4313 = vadd.f32 %v4179, %v4297
        %v4314 = vadd.f32 %v4180, %v4298
        %v4315 = vadd.f32 %v4181, %v4299
        %v4316 = vadd.f32 %v4182, %v4300
        %v4317 = vadd.f32 %v4183, %v4301
        %4318 = vset.pattern.permute.xlu0 10
        %4319 = vperm.xlu0 %4318, %v827
        %v4320 = vpop.permute.xlu0 %4319
        %4322 = vset.pattern.permute.xlu0 10
        %4323 = vperm.xlu0 %4322, %v832
        %v4324 = vpop.permute.xlu0 %4323
        %4326 = vset.pattern.permute.xlu0 10
        %4327 = vperm.xlu0 %4326, %v837
        %v4328 = vpop.permute.xlu0 %4327
        %4330 = vset.pattern.permute.xlu0 10
        %4331 = vperm.xlu0 %4330, %v842
        %v4332 = vpop.permute.xlu0 %4331
        %4334 = vset.pattern.permute.xlu0 10
        %4335 = vperm.xlu0 %4334, %v847
        %v4336 = vpop.permute.xlu0 %4335
        %4338 = vset.pattern.permute.xlu0 10
        %4339 = vperm.xlu0 %4338, %v852
        %v4340 = vpop.permute.xlu0 %4339
        %4342 = vset.pattern.permute.xlu0 10
        %4343 = vperm.xlu0 %4342, %v857
        %v4344 = vpop.permute.xlu0 %4343
        %4346 = vset.pattern.permute.xlu0 10
        %4347 = vperm.xlu0 %4346, %v862
        %v4348 = vpop.permute.xlu0 %4347
        %4350 = vset.pattern.permute.xlu0 10
        %4351 = vperm.xlu0 %4350, %v867
        %v4352 = vpop.permute.xlu0 %4351
        %4354 = vset.pattern.permute.xlu0 10
        %4355 = vperm.xlu0 %4354, %v872
        %v4356 = vpop.permute.xlu0 %4355
        %4358 = vset.pattern.permute.xlu0 10
        %4359 = vperm.xlu0 %4358, %v877
        %v4360 = vpop.permute.xlu0 %4359
        %4362 = vset.pattern.permute.xlu0 10
        %4363 = vperm.xlu0 %4362, %v882
        %v4364 = vpop.permute.xlu0 %4363
        %4366 = vset.pattern.permute.xlu0 10
        %4367 = vperm.xlu0 %4366, %v887
        %v4368 = vpop.permute.xlu0 %4367
        %4370 = vset.pattern.permute.xlu0 10
        %4371 = vperm.xlu0 %4370, %v892
        %v4372 = vpop.permute.xlu0 %4371
        %4374 = vset.pattern.permute.xlu0 10
        %4375 = vperm.xlu0 %4374, %v897
        %v4376 = vpop.permute.xlu0 %4375
        %4378 = vset.pattern.permute.xlu0 10
        %4379 = vperm.xlu0 %4378, %v902
        %v4380 = vpop.permute.xlu0 %4379
        %v4382 = vlaneseq
        %v4383 = vshrl.u32 %v4382, 7
        %v4384 = vsub.s32 2, %v4383
        %v4385 = vrot.slane %v745, %v4384
        %v4386 = vadd.f32 %v4320, %v4385
        %v4387 = vadd.f32 %v4324, %v4385
        %v4388 = vadd.f32 %v4328, %v4385
        %v4389 = vadd.f32 %v4332, %v4385
        %v4390 = vadd.f32 %v4336, %v4385
        %v4391 = vadd.f32 %v4340, %v4385
        %v4392 = vadd.f32 %v4344, %v4385
        %v4393 = vadd.f32 %v4348, %v4385
        %v4394 = vadd.f32 %v4352, %v4385
        %v4395 = vadd.f32 %v4356, %v4385
        %v4396 = vadd.f32 %v4360, %v4385
        %v4397 = vadd.f32 %v4364, %v4385
        %v4398 = vadd.f32 %v4368, %v4385
        %v4399 = vadd.f32 %v4372, %v4385
        %v4400 = vadd.f32 %v4376, %v4385
        %v4401 = vadd.f32 %v4380, %v4385
        %s4402 = sld [smem:[#allocation6 + $0x82]]
        %v4403 = vand.u32 2147483647, %v4386
        %v4404 = vand.u32 2147483647, %v4387
        %v4405 = vand.u32 2147483647, %v4388
        %v4406 = vand.u32 2147483647, %v4389
        %v4407 = vand.u32 2147483647, %v4390
        %v4408 = vand.u32 2147483647, %v4391
        %v4409 = vand.u32 2147483647, %v4392
        %v4410 = vand.u32 2147483647, %v4393
        %v4411 = vand.u32 2147483647, %v4394
        %v4412 = vand.u32 2147483647, %v4395
        %v4413 = vand.u32 2147483647, %v4396
        %v4414 = vand.u32 2147483647, %v4397
        %v4415 = vand.u32 2147483647, %v4398
        %v4416 = vand.u32 2147483647, %v4399
        %v4417 = vand.u32 2147483647, %v4400
        %v4418 = vand.u32 2147483647, %v4401
        %v4419 = vstv %s4402
        %v4420 = vmul.f32 %v4419, %v4403
        %v4421 = vmul.f32 %v4419, %v4404
        %v4422 = vmul.f32 %v4419, %v4405
        %v4423 = vmul.f32 %v4419, %v4406
        %v4424 = vmul.f32 %v4419, %v4407
        %v4425 = vmul.f32 %v4419, %v4408
        %v4426 = vmul.f32 %v4419, %v4409
        %v4427 = vmul.f32 %v4419, %v4410
        %v4428 = vmul.f32 %v4419, %v4411
        %v4429 = vmul.f32 %v4419, %v4412
        %v4430 = vmul.f32 %v4419, %v4413
        %v4431 = vmul.f32 %v4419, %v4414
        %v4432 = vmul.f32 %v4419, %v4415
        %v4433 = vmul.f32 %v4419, %v4416
        %v4434 = vmul.f32 %v4419, %v4417
        %v4435 = vmul.f32 %v4419, %v4418
        %v4436 = vadd.f32 %v4302, %v4420
        %v4437 = vadd.f32 %v4303, %v4421
        %v4438 = vadd.f32 %v4304, %v4422
        %v4439 = vadd.f32 %v4305, %v4423
        %v4440 = vadd.f32 %v4306, %v4424
        %v4441 = vadd.f32 %v4307, %v4425
        %v4442 = vadd.f32 %v4308, %v4426
        %v4443 = vadd.f32 %v4309, %v4427
        %v4444 = vadd.f32 %v4310, %v4428
        %v4445 = vadd.f32 %v4311, %v4429
        %v4446 = vadd.f32 %v4312, %v4430
        %v4447 = vadd.f32 %v4313, %v4431
        %v4448 = vadd.f32 %v4314, %v4432
        %v4449 = vadd.f32 %v4315, %v4433
        %v4450 = vadd.f32 %v4316, %v4434
        %v4451 = vadd.f32 %v4317, %v4435
        %4452 = vset.pattern.permute.xlu0 11
        %4453 = vperm.xlu0 %4452, %v827
        %v4454 = vpop.permute.xlu0 %4453
        %4456 = vset.pattern.permute.xlu0 11
        %4457 = vperm.xlu0 %4456, %v832
        %v4458 = vpop.permute.xlu0 %4457
        %4460 = vset.pattern.permute.xlu0 11
        %4461 = vperm.xlu0 %4460, %v837
        %v4462 = vpop.permute.xlu0 %4461
        %4464 = vset.pattern.permute.xlu0 11
        %4465 = vperm.xlu0 %4464, %v842
        %v4466 = vpop.permute.xlu0 %4465
        %4468 = vset.pattern.permute.xlu0 11
        %4469 = vperm.xlu0 %4468, %v847
        %v4470 = vpop.permute.xlu0 %4469
        %4472 = vset.pattern.permute.xlu0 11
        %4473 = vperm.xlu0 %4472, %v852
        %v4474 = vpop.permute.xlu0 %4473
        %4476 = vset.pattern.permute.xlu0 11
        %4477 = vperm.xlu0 %4476, %v857
        %v4478 = vpop.permute.xlu0 %4477
        %4480 = vset.pattern.permute.xlu0 11
        %4481 = vperm.xlu0 %4480, %v862
        %v4482 = vpop.permute.xlu0 %4481
        %4484 = vset.pattern.permute.xlu0 11
        %4485 = vperm.xlu0 %4484, %v867
        %v4486 = vpop.permute.xlu0 %4485
        %4488 = vset.pattern.permute.xlu0 11
        %4489 = vperm.xlu0 %4488, %v872
        %v4490 = vpop.permute.xlu0 %4489
        %4492 = vset.pattern.permute.xlu0 11
        %4493 = vperm.xlu0 %4492, %v877
        %v4494 = vpop.permute.xlu0 %4493
        %4496 = vset.pattern.permute.xlu0 11
        %4497 = vperm.xlu0 %4496, %v882
        %v4498 = vpop.permute.xlu0 %4497
        %4500 = vset.pattern.permute.xlu0 11
        %4501 = vperm.xlu0 %4500, %v887
        %v4502 = vpop.permute.xlu0 %4501
        %4504 = vset.pattern.permute.xlu0 11
        %4505 = vperm.xlu0 %4504, %v892
        %v4506 = vpop.permute.xlu0 %4505
        %4508 = vset.pattern.permute.xlu0 11
        %4509 = vperm.xlu0 %4508, %v897
        %v4510 = vpop.permute.xlu0 %4509
        %4512 = vset.pattern.permute.xlu0 11
        %4513 = vperm.xlu0 %4512, %v902
        %v4514 = vpop.permute.xlu0 %4513
        %v4516 = vlaneseq
        %v4517 = vshrl.u32 %v4516, 7
        %v4518 = vsub.s32 3, %v4517
        %v4519 = vrot.slane %v745, %v4518
        %v4520 = vadd.f32 %v4454, %v4519
        %v4521 = vadd.f32 %v4458, %v4519
        %v4522 = vadd.f32 %v4462, %v4519
        %v4523 = vadd.f32 %v4466, %v4519
        %v4524 = vadd.f32 %v4470, %v4519
        %v4525 = vadd.f32 %v4474, %v4519
        %v4526 = vadd.f32 %v4478, %v4519
        %v4527 = vadd.f32 %v4482, %v4519
        %v4528 = vadd.f32 %v4486, %v4519
        %v4529 = vadd.f32 %v4490, %v4519
        %v4530 = vadd.f32 %v4494, %v4519
        %v4531 = vadd.f32 %v4498, %v4519
        %v4532 = vadd.f32 %v4502, %v4519
        %v4533 = vadd.f32 %v4506, %v4519
        %v4534 = vadd.f32 %v4510, %v4519
        %v4535 = vadd.f32 %v4514, %v4519
        %s4536 = sld [smem:[#allocation6 + $0x83]]
        %v4537 = vand.u32 2147483647, %v4520
        %v4538 = vand.u32 2147483647, %v4521
        %v4539 = vand.u32 2147483647, %v4522
        %v4540 = vand.u32 2147483647, %v4523
        %v4541 = vand.u32 2147483647, %v4524
        %v4542 = vand.u32 2147483647, %v4525
        %v4543 = vand.u32 2147483647, %v4526
        %v4544 = vand.u32 2147483647, %v4527
        %v4545 = vand.u32 2147483647, %v4528
        %v4546 = vand.u32 2147483647, %v4529
        %v4547 = vand.u32 2147483647, %v4530
        %v4548 = vand.u32 2147483647, %v4531
        %v4549 = vand.u32 2147483647, %v4532
        %v4550 = vand.u32 2147483647, %v4533
        %v4551 = vand.u32 2147483647, %v4534
        %v4552 = vand.u32 2147483647, %v4535
        %v4553 = vstv %s4536
        %v4554 = vmul.f32 %v4553, %v4537
        %v4555 = vmul.f32 %v4553, %v4538
        %v4556 = vmul.f32 %v4553, %v4539
        %v4557 = vmul.f32 %v4553, %v4540
        %v4558 = vmul.f32 %v4553, %v4541
        %v4559 = vmul.f32 %v4553, %v4542
        %v4560 = vmul.f32 %v4553, %v4543
        %v4561 = vmul.f32 %v4553, %v4544
        %v4562 = vmul.f32 %v4553, %v4545
        %v4563 = vmul.f32 %v4553, %v4546
        %v4564 = vmul.f32 %v4553, %v4547
        %v4565 = vmul.f32 %v4553, %v4548
        %v4566 = vmul.f32 %v4553, %v4549
        %v4567 = vmul.f32 %v4553, %v4550
        %v4568 = vmul.f32 %v4553, %v4551
        %v4569 = vmul.f32 %v4553, %v4552
        %v4570 = vadd.f32 %v4436, %v4554
        %v4571 = vadd.f32 %v4437, %v4555
        %v4572 = vadd.f32 %v4438, %v4556
        %v4573 = vadd.f32 %v4439, %v4557
        %v4574 = vadd.f32 %v4440, %v4558
        %v4575 = vadd.f32 %v4441, %v4559
        %v4576 = vadd.f32 %v4442, %v4560
        %v4577 = vadd.f32 %v4443, %v4561
        %v4578 = vadd.f32 %v4444, %v4562
        %v4579 = vadd.f32 %v4445, %v4563
        %v4580 = vadd.f32 %v4446, %v4564
        %v4581 = vadd.f32 %v4447, %v4565
        %v4582 = vadd.f32 %v4448, %v4566
        %v4583 = vadd.f32 %v4449, %v4567
        %v4584 = vadd.f32 %v4450, %v4568
        %v4585 = vadd.f32 %v4451, %v4569
        %4586 = vset.pattern.permute.xlu0 12
        %4587 = vperm.xlu0 %4586, %v827
        %v4588 = vpop.permute.xlu0 %4587
        %4590 = vset.pattern.permute.xlu0 12
        %4591 = vperm.xlu0 %4590, %v832
        %v4592 = vpop.permute.xlu0 %4591
        %4594 = vset.pattern.permute.xlu0 12
        %4595 = vperm.xlu0 %4594, %v837
        %v4596 = vpop.permute.xlu0 %4595
        %4598 = vset.pattern.permute.xlu0 12
        %4599 = vperm.xlu0 %4598, %v842
        %v4600 = vpop.permute.xlu0 %4599
        %4602 = vset.pattern.permute.xlu0 12
        %4603 = vperm.xlu0 %4602, %v847
        %v4604 = vpop.permute.xlu0 %4603
        %4606 = vset.pattern.permute.xlu0 12
        %4607 = vperm.xlu0 %4606, %v852
        %v4608 = vpop.permute.xlu0 %4607
        %4610 = vset.pattern.permute.xlu0 12
        %4611 = vperm.xlu0 %4610, %v857
        %v4612 = vpop.permute.xlu0 %4611
        %4614 = vset.pattern.permute.xlu0 12
        %4615 = vperm.xlu0 %4614, %v862
        %v4616 = vpop.permute.xlu0 %4615
        %4618 = vset.pattern.permute.xlu0 12
        %4619 = vperm.xlu0 %4618, %v867
        %v4620 = vpop.permute.xlu0 %4619
        %4622 = vset.pattern.permute.xlu0 12
        %4623 = vperm.xlu0 %4622, %v872
        %v4624 = vpop.permute.xlu0 %4623
        %4626 = vset.pattern.permute.xlu0 12
        %4627 = vperm.xlu0 %4626, %v877
        %v4628 = vpop.permute.xlu0 %4627
        %4630 = vset.pattern.permute.xlu0 12
        %4631 = vperm.xlu0 %4630, %v882
        %v4632 = vpop.permute.xlu0 %4631
        %4634 = vset.pattern.permute.xlu0 12
        %4635 = vperm.xlu0 %4634, %v887
        %v4636 = vpop.permute.xlu0 %4635
        %4638 = vset.pattern.permute.xlu0 12
        %4639 = vperm.xlu0 %4638, %v892
        %v4640 = vpop.permute.xlu0 %4639
        %4642 = vset.pattern.permute.xlu0 12
        %4643 = vperm.xlu0 %4642, %v897
        %v4644 = vpop.permute.xlu0 %4643
        %4646 = vset.pattern.permute.xlu0 12
        %4647 = vperm.xlu0 %4646, %v902
        %v4648 = vpop.permute.xlu0 %4647
        %v4650 = vlaneseq
        %v4651 = vshrl.u32 %v4650, 7
        %v4652 = vsub.s32 4, %v4651
        %v4653 = vrot.slane %v745, %v4652
        %v4654 = vadd.f32 %v4588, %v4653
        %v4655 = vadd.f32 %v4592, %v4653
        %v4656 = vadd.f32 %v4596, %v4653
        %v4657 = vadd.f32 %v4600, %v4653
        %v4658 = vadd.f32 %v4604, %v4653
        %v4659 = vadd.f32 %v4608, %v4653
        %v4660 = vadd.f32 %v4612, %v4653
        %v4661 = vadd.f32 %v4616, %v4653
        %v4662 = vadd.f32 %v4620, %v4653
        %v4663 = vadd.f32 %v4624, %v4653
        %v4664 = vadd.f32 %v4628, %v4653
        %v4665 = vadd.f32 %v4632, %v4653
        %v4666 = vadd.f32 %v4636, %v4653
        %v4667 = vadd.f32 %v4640, %v4653
        %v4668 = vadd.f32 %v4644, %v4653
        %v4669 = vadd.f32 %v4648, %v4653
        %s4670 = sld [smem:[#allocation6 + $0x84]]
        %v4671 = vand.u32 2147483647, %v4654
        %v4672 = vand.u32 2147483647, %v4655
        %v4673 = vand.u32 2147483647, %v4656
        %v4674 = vand.u32 2147483647, %v4657
        %v4675 = vand.u32 2147483647, %v4658
        %v4676 = vand.u32 2147483647, %v4659
        %v4677 = vand.u32 2147483647, %v4660
        %v4678 = vand.u32 2147483647, %v4661
        %v4679 = vand.u32 2147483647, %v4662
        %v4680 = vand.u32 2147483647, %v4663
        %v4681 = vand.u32 2147483647, %v4664
        %v4682 = vand.u32 2147483647, %v4665
        %v4683 = vand.u32 2147483647, %v4666
        %v4684 = vand.u32 2147483647, %v4667
        %v4685 = vand.u32 2147483647, %v4668
        %v4686 = vand.u32 2147483647, %v4669
        %v4687 = vstv %s4670
        %v4688 = vmul.f32 %v4687, %v4671
        %v4689 = vmul.f32 %v4687, %v4672
        %v4690 = vmul.f32 %v4687, %v4673
        %v4691 = vmul.f32 %v4687, %v4674
        %v4692 = vmul.f32 %v4687, %v4675
        %v4693 = vmul.f32 %v4687, %v4676
        %v4694 = vmul.f32 %v4687, %v4677
        %v4695 = vmul.f32 %v4687, %v4678
        %v4696 = vmul.f32 %v4687, %v4679
        %v4697 = vmul.f32 %v4687, %v4680
        %v4698 = vmul.f32 %v4687, %v4681
        %v4699 = vmul.f32 %v4687, %v4682
        %v4700 = vmul.f32 %v4687, %v4683
        %v4701 = vmul.f32 %v4687, %v4684
        %v4702 = vmul.f32 %v4687, %v4685
        %v4703 = vmul.f32 %v4687, %v4686
        %v4704 = vadd.f32 %v4570, %v4688
        %v4705 = vadd.f32 %v4571, %v4689
        %v4706 = vadd.f32 %v4572, %v4690
        %v4707 = vadd.f32 %v4573, %v4691
        %v4708 = vadd.f32 %v4574, %v4692
        %v4709 = vadd.f32 %v4575, %v4693
        %v4710 = vadd.f32 %v4576, %v4694
        %v4711 = vadd.f32 %v4577, %v4695
        %v4712 = vadd.f32 %v4578, %v4696
        %v4713 = vadd.f32 %v4579, %v4697
        %v4714 = vadd.f32 %v4580, %v4698
        %v4715 = vadd.f32 %v4581, %v4699
        %v4716 = vadd.f32 %v4582, %v4700
        %v4717 = vadd.f32 %v4583, %v4701
        %v4718 = vadd.f32 %v4584, %v4702
        %v4719 = vadd.f32 %v4585, %v4703
        %4720 = vset.pattern.permute.xlu0 13
        %4721 = vperm.xlu0 %4720, %v827
        %v4722 = vpop.permute.xlu0 %4721
        %4724 = vset.pattern.permute.xlu0 13
        %4725 = vperm.xlu0 %4724, %v832
        %v4726 = vpop.permute.xlu0 %4725
        %4728 = vset.pattern.permute.xlu0 13
        %4729 = vperm.xlu0 %4728, %v837
        %v4730 = vpop.permute.xlu0 %4729
        %4732 = vset.pattern.permute.xlu0 13
        %4733 = vperm.xlu0 %4732, %v842
        %v4734 = vpop.permute.xlu0 %4733
        %4736 = vset.pattern.permute.xlu0 13
        %4737 = vperm.xlu0 %4736, %v847
        %v4738 = vpop.permute.xlu0 %4737
        %4740 = vset.pattern.permute.xlu0 13
        %4741 = vperm.xlu0 %4740, %v852
        %v4742 = vpop.permute.xlu0 %4741
        %4744 = vset.pattern.permute.xlu0 13
        %4745 = vperm.xlu0 %4744, %v857
        %v4746 = vpop.permute.xlu0 %4745
        %4748 = vset.pattern.permute.xlu0 13
        %4749 = vperm.xlu0 %4748, %v862
        %v4750 = vpop.permute.xlu0 %4749
        %4752 = vset.pattern.permute.xlu0 13
        %4753 = vperm.xlu0 %4752, %v867
        %v4754 = vpop.permute.xlu0 %4753
        %4756 = vset.pattern.permute.xlu0 13
        %4757 = vperm.xlu0 %4756, %v872
        %v4758 = vpop.permute.xlu0 %4757
        %4760 = vset.pattern.permute.xlu0 13
        %4761 = vperm.xlu0 %4760, %v877
        %v4762 = vpop.permute.xlu0 %4761
        %4764 = vset.pattern.permute.xlu0 13
        %4765 = vperm.xlu0 %4764, %v882
        %v4766 = vpop.permute.xlu0 %4765
        %4768 = vset.pattern.permute.xlu0 13
        %4769 = vperm.xlu0 %4768, %v887
        %v4770 = vpop.permute.xlu0 %4769
        %4772 = vset.pattern.permute.xlu0 13
        %4773 = vperm.xlu0 %4772, %v892
        %v4774 = vpop.permute.xlu0 %4773
        %4776 = vset.pattern.permute.xlu0 13
        %4777 = vperm.xlu0 %4776, %v897
        %v4778 = vpop.permute.xlu0 %4777
        %4780 = vset.pattern.permute.xlu0 13
        %4781 = vperm.xlu0 %4780, %v902
        %v4782 = vpop.permute.xlu0 %4781
        %v4784 = vlaneseq
        %v4785 = vshrl.u32 %v4784, 7
        %v4786 = vsub.s32 5, %v4785
        %v4787 = vrot.slane %v745, %v4786
        %v4788 = vadd.f32 %v4722, %v4787
        %v4789 = vadd.f32 %v4726, %v4787
        %v4790 = vadd.f32 %v4730, %v4787
        %v4791 = vadd.f32 %v4734, %v4787
        %v4792 = vadd.f32 %v4738, %v4787
        %v4793 = vadd.f32 %v4742, %v4787
        %v4794 = vadd.f32 %v4746, %v4787
        %v4795 = vadd.f32 %v4750, %v4787
        %v4796 = vadd.f32 %v4754, %v4787
        %v4797 = vadd.f32 %v4758, %v4787
        %v4798 = vadd.f32 %v4762, %v4787
        %v4799 = vadd.f32 %v4766, %v4787
        %v4800 = vadd.f32 %v4770, %v4787
        %v4801 = vadd.f32 %v4774, %v4787
        %v4802 = vadd.f32 %v4778, %v4787
        %v4803 = vadd.f32 %v4782, %v4787
        %s4804 = sld [smem:[#allocation6 + $0x85]]
        %v4805 = vand.u32 2147483647, %v4788
        %v4806 = vand.u32 2147483647, %v4789
        %v4807 = vand.u32 2147483647, %v4790
        %v4808 = vand.u32 2147483647, %v4791
        %v4809 = vand.u32 2147483647, %v4792
        %v4810 = vand.u32 2147483647, %v4793
        %v4811 = vand.u32 2147483647, %v4794
        %v4812 = vand.u32 2147483647, %v4795
        %v4813 = vand.u32 2147483647, %v4796
        %v4814 = vand.u32 2147483647, %v4797
        %v4815 = vand.u32 2147483647, %v4798
        %v4816 = vand.u32 2147483647, %v4799
        %v4817 = vand.u32 2147483647, %v4800
        %v4818 = vand.u32 2147483647, %v4801
        %v4819 = vand.u32 2147483647, %v4802
        %v4820 = vand.u32 2147483647, %v4803
        %v4821 = vstv %s4804
        %v4822 = vmul.f32 %v4821, %v4805
        %v4823 = vmul.f32 %v4821, %v4806
        %v4824 = vmul.f32 %v4821, %v4807
        %v4825 = vmul.f32 %v4821, %v4808
        %v4826 = vmul.f32 %v4821, %v4809
        %v4827 = vmul.f32 %v4821, %v4810
        %v4828 = vmul.f32 %v4821, %v4811
        %v4829 = vmul.f32 %v4821, %v4812
        %v4830 = vmul.f32 %v4821, %v4813
        %v4831 = vmul.f32 %v4821, %v4814
        %v4832 = vmul.f32 %v4821, %v4815
        %v4833 = vmul.f32 %v4821, %v4816
        %v4834 = vmul.f32 %v4821, %v4817
        %v4835 = vmul.f32 %v4821, %v4818
        %v4836 = vmul.f32 %v4821, %v4819
        %v4837 = vmul.f32 %v4821, %v4820
        %v4838 = vadd.f32 %v4704, %v4822
        %v4839 = vadd.f32 %v4705, %v4823
        %v4840 = vadd.f32 %v4706, %v4824
        %v4841 = vadd.f32 %v4707, %v4825
        %v4842 = vadd.f32 %v4708, %v4826
        %v4843 = vadd.f32 %v4709, %v4827
        %v4844 = vadd.f32 %v4710, %v4828
        %v4845 = vadd.f32 %v4711, %v4829
        %v4846 = vadd.f32 %v4712, %v4830
        %v4847 = vadd.f32 %v4713, %v4831
        %v4848 = vadd.f32 %v4714, %v4832
        %v4849 = vadd.f32 %v4715, %v4833
        %v4850 = vadd.f32 %v4716, %v4834
        %v4851 = vadd.f32 %v4717, %v4835
        %v4852 = vadd.f32 %v4718, %v4836
        %v4853 = vadd.f32 %v4719, %v4837
        %4854 = vset.pattern.permute.xlu0 14
        %4855 = vperm.xlu0 %4854, %v827
        %v4856 = vpop.permute.xlu0 %4855
        %4858 = vset.pattern.permute.xlu0 14
        %4859 = vperm.xlu0 %4858, %v832
        %v4860 = vpop.permute.xlu0 %4859
        %4862 = vset.pattern.permute.xlu0 14
        %4863 = vperm.xlu0 %4862, %v837
        %v4864 = vpop.permute.xlu0 %4863
        %4866 = vset.pattern.permute.xlu0 14
        %4867 = vperm.xlu0 %4866, %v842
        %v4868 = vpop.permute.xlu0 %4867
        %4870 = vset.pattern.permute.xlu0 14
        %4871 = vperm.xlu0 %4870, %v847
        %v4872 = vpop.permute.xlu0 %4871
        %4874 = vset.pattern.permute.xlu0 14
        %4875 = vperm.xlu0 %4874, %v852
        %v4876 = vpop.permute.xlu0 %4875
        %4878 = vset.pattern.permute.xlu0 14
        %4879 = vperm.xlu0 %4878, %v857
        %v4880 = vpop.permute.xlu0 %4879
        %4882 = vset.pattern.permute.xlu0 14
        %4883 = vperm.xlu0 %4882, %v862
        %v4884 = vpop.permute.xlu0 %4883
        %4886 = vset.pattern.permute.xlu0 14
        %4887 = vperm.xlu0 %4886, %v867
        %v4888 = vpop.permute.xlu0 %4887
        %4890 = vset.pattern.permute.xlu0 14
        %4891 = vperm.xlu0 %4890, %v872
        %v4892 = vpop.permute.xlu0 %4891
        %4894 = vset.pattern.permute.xlu0 14
        %4895 = vperm.xlu0 %4894, %v877
        %v4896 = vpop.permute.xlu0 %4895
        %4898 = vset.pattern.permute.xlu0 14
        %4899 = vperm.xlu0 %4898, %v882
        %v4900 = vpop.permute.xlu0 %4899
        %4902 = vset.pattern.permute.xlu0 14
        %4903 = vperm.xlu0 %4902, %v887
        %v4904 = vpop.permute.xlu0 %4903
        %4906 = vset.pattern.permute.xlu0 14
        %4907 = vperm.xlu0 %4906, %v892
        %v4908 = vpop.permute.xlu0 %4907
        %4910 = vset.pattern.permute.xlu0 14
        %4911 = vperm.xlu0 %4910, %v897
        %v4912 = vpop.permute.xlu0 %4911
        %4914 = vset.pattern.permute.xlu0 14
        %4915 = vperm.xlu0 %4914, %v902
        %v4916 = vpop.permute.xlu0 %4915
        %v4918 = vlaneseq
        %v4919 = vshrl.u32 %v4918, 7
        %v4920 = vsub.s32 6, %v4919
        %v4921 = vrot.slane %v745, %v4920
        %v4922 = vadd.f32 %v4856, %v4921
        %v4923 = vadd.f32 %v4860, %v4921
        %v4924 = vadd.f32 %v4864, %v4921
        %v4925 = vadd.f32 %v4868, %v4921
        %v4926 = vadd.f32 %v4872, %v4921
        %v4927 = vadd.f32 %v4876, %v4921
        %v4928 = vadd.f32 %v4880, %v4921
        %v4929 = vadd.f32 %v4884, %v4921
        %v4930 = vadd.f32 %v4888, %v4921
        %v4931 = vadd.f32 %v4892, %v4921
        %v4932 = vadd.f32 %v4896, %v4921
        %v4933 = vadd.f32 %v4900, %v4921
        %v4934 = vadd.f32 %v4904, %v4921
        %v4935 = vadd.f32 %v4908, %v4921
        %v4936 = vadd.f32 %v4912, %v4921
        %v4937 = vadd.f32 %v4916, %v4921
        %s4938 = sld [smem:[#allocation6 + $0x86]]
        %v4939 = vand.u32 2147483647, %v4922
        %v4940 = vand.u32 2147483647, %v4923
        %v4941 = vand.u32 2147483647, %v4924
        %v4942 = vand.u32 2147483647, %v4925
        %v4943 = vand.u32 2147483647, %v4926
        %v4944 = vand.u32 2147483647, %v4927
        %v4945 = vand.u32 2147483647, %v4928
        %v4946 = vand.u32 2147483647, %v4929
        %v4947 = vand.u32 2147483647, %v4930
        %v4948 = vand.u32 2147483647, %v4931
        %v4949 = vand.u32 2147483647, %v4932
        %v4950 = vand.u32 2147483647, %v4933
        %v4951 = vand.u32 2147483647, %v4934
        %v4952 = vand.u32 2147483647, %v4935
        %v4953 = vand.u32 2147483647, %v4936
        %v4954 = vand.u32 2147483647, %v4937
        %v4955 = vstv %s4938
        %v4956 = vmul.f32 %v4955, %v4939
        %v4957 = vmul.f32 %v4955, %v4940
        %v4958 = vmul.f32 %v4955, %v4941
        %v4959 = vmul.f32 %v4955, %v4942
        %v4960 = vmul.f32 %v4955, %v4943
        %v4961 = vmul.f32 %v4955, %v4944
        %v4962 = vmul.f32 %v4955, %v4945
        %v4963 = vmul.f32 %v4955, %v4946
        %v4964 = vmul.f32 %v4955, %v4947
        %v4965 = vmul.f32 %v4955, %v4948
        %v4966 = vmul.f32 %v4955, %v4949
        %v4967 = vmul.f32 %v4955, %v4950
        %v4968 = vmul.f32 %v4955, %v4951
        %v4969 = vmul.f32 %v4955, %v4952
        %v4970 = vmul.f32 %v4955, %v4953
        %v4971 = vmul.f32 %v4955, %v4954
        %v4972 = vadd.f32 %v4838, %v4956
        %v4973 = vadd.f32 %v4839, %v4957
        %v4974 = vadd.f32 %v4840, %v4958
        %v4975 = vadd.f32 %v4841, %v4959
        %v4976 = vadd.f32 %v4842, %v4960
        %v4977 = vadd.f32 %v4843, %v4961
        %v4978 = vadd.f32 %v4844, %v4962
        %v4979 = vadd.f32 %v4845, %v4963
        %v4980 = vadd.f32 %v4846, %v4964
        %v4981 = vadd.f32 %v4847, %v4965
        %v4982 = vadd.f32 %v4848, %v4966
        %v4983 = vadd.f32 %v4849, %v4967
        %v4984 = vadd.f32 %v4850, %v4968
        %v4985 = vadd.f32 %v4851, %v4969
        %v4986 = vadd.f32 %v4852, %v4970
        %v4987 = vadd.f32 %v4853, %v4971
        %4988 = vset.pattern.permute.xlu0 15
        %4989 = vperm.xlu0 %4988, %v827
        %v4990 = vpop.permute.xlu0 %4989
        %4992 = vset.pattern.permute.xlu0 15
        %4993 = vperm.xlu0 %4992, %v832
        %v4994 = vpop.permute.xlu0 %4993
        %4996 = vset.pattern.permute.xlu0 15
        %4997 = vperm.xlu0 %4996, %v837
        %v4998 = vpop.permute.xlu0 %4997
        %5000 = vset.pattern.permute.xlu0 15
        %5001 = vperm.xlu0 %5000, %v842
        %v5002 = vpop.permute.xlu0 %5001
        %5004 = vset.pattern.permute.xlu0 15
        %5005 = vperm.xlu0 %5004, %v847
        %v5006 = vpop.permute.xlu0 %5005
        %5008 = vset.pattern.permute.xlu0 15
        %5009 = vperm.xlu0 %5008, %v852
        %v5010 = vpop.permute.xlu0 %5009
        %5012 = vset.pattern.permute.xlu0 15
        %5013 = vperm.xlu0 %5012, %v857
        %v5014 = vpop.permute.xlu0 %5013
        %5016 = vset.pattern.permute.xlu0 15
        %5017 = vperm.xlu0 %5016, %v862
        %v5018 = vpop.permute.xlu0 %5017
        %5020 = vset.pattern.permute.xlu0 15
        %5021 = vperm.xlu0 %5020, %v867
        %v5022 = vpop.permute.xlu0 %5021
        %5024 = vset.pattern.permute.xlu0 15
        %5025 = vperm.xlu0 %5024, %v872
        %v5026 = vpop.permute.xlu0 %5025
        %5028 = vset.pattern.permute.xlu0 15
        %5029 = vperm.xlu0 %5028, %v877
        %v5030 = vpop.permute.xlu0 %5029
        %5032 = vset.pattern.permute.xlu0 15
        %5033 = vperm.xlu0 %5032, %v882
        %v5034 = vpop.permute.xlu0 %5033
        %5036 = vset.pattern.permute.xlu0 15
        %5037 = vperm.xlu0 %5036, %v887
        %v5038 = vpop.permute.xlu0 %5037
        %5040 = vset.pattern.permute.xlu0 15
        %5041 = vperm.xlu0 %5040, %v892
        %v5042 = vpop.permute.xlu0 %5041
        %5044 = vset.pattern.permute.xlu0 15
        %5045 = vperm.xlu0 %5044, %v897
        %v5046 = vpop.permute.xlu0 %5045
        %5048 = vset.pattern.permute.xlu0 15
        %5049 = vperm.xlu0 %5048, %v902
        %v5050 = vpop.permute.xlu0 %5049
        %v5052 = vlaneseq
        %v5053 = vshrl.u32 %v5052, 7
        %v5054 = vsub.s32 7, %v5053
        %v5055 = vrot.slane %v745, %v5054
        %v5056 = vadd.f32 %v4990, %v5055
        %v5057 = vadd.f32 %v4994, %v5055
        %v5058 = vadd.f32 %v4998, %v5055
        %v5059 = vadd.f32 %v5002, %v5055
        %v5060 = vadd.f32 %v5006, %v5055
        %v5061 = vadd.f32 %v5010, %v5055
        %v5062 = vadd.f32 %v5014, %v5055
        %v5063 = vadd.f32 %v5018, %v5055
        %v5064 = vadd.f32 %v5022, %v5055
        %v5065 = vadd.f32 %v5026, %v5055
        %v5066 = vadd.f32 %v5030, %v5055
        %v5067 = vadd.f32 %v5034, %v5055
        %v5068 = vadd.f32 %v5038, %v5055
        %v5069 = vadd.f32 %v5042, %v5055
        %v5070 = vadd.f32 %v5046, %v5055
        %v5071 = vadd.f32 %v5050, %v5055
        %s5072 = sld [smem:[#allocation6 + $0x87]]
        %v5073 = vand.u32 2147483647, %v5056
        %v5074 = vand.u32 2147483647, %v5057
        %v5075 = vand.u32 2147483647, %v5058
        %v5076 = vand.u32 2147483647, %v5059
        %v5077 = vand.u32 2147483647, %v5060
        %v5078 = vand.u32 2147483647, %v5061
        %v5079 = vand.u32 2147483647, %v5062
        %v5080 = vand.u32 2147483647, %v5063
        %v5081 = vand.u32 2147483647, %v5064
        %v5082 = vand.u32 2147483647, %v5065
        %v5083 = vand.u32 2147483647, %v5066
        %v5084 = vand.u32 2147483647, %v5067
        %v5085 = vand.u32 2147483647, %v5068
        %v5086 = vand.u32 2147483647, %v5069
        %v5087 = vand.u32 2147483647, %v5070
        %v5088 = vand.u32 2147483647, %v5071
        %v5089 = vstv %s5072
        %v5090 = vmul.f32 %v5089, %v5073
        %v5091 = vmul.f32 %v5089, %v5074
        %v5092 = vmul.f32 %v5089, %v5075
        %v5093 = vmul.f32 %v5089, %v5076
        %v5094 = vmul.f32 %v5089, %v5077
        %v5095 = vmul.f32 %v5089, %v5078
        %v5096 = vmul.f32 %v5089, %v5079
        %v5097 = vmul.f32 %v5089, %v5080
        %v5098 = vmul.f32 %v5089, %v5081
        %v5099 = vmul.f32 %v5089, %v5082
        %v5100 = vmul.f32 %v5089, %v5083
        %v5101 = vmul.f32 %v5089, %v5084
        %v5102 = vmul.f32 %v5089, %v5085
        %v5103 = vmul.f32 %v5089, %v5086
        %v5104 = vmul.f32 %v5089, %v5087
        %v5105 = vmul.f32 %v5089, %v5088
        %v5106 = vadd.f32 %v4972, %v5090
        %v5107 = vadd.f32 %v4973, %v5091
        %v5108 = vadd.f32 %v4974, %v5092
        %v5109 = vadd.f32 %v4975, %v5093
        %v5110 = vadd.f32 %v4976, %v5094
        %v5111 = vadd.f32 %v4977, %v5095
        %v5112 = vadd.f32 %v4978, %v5096
        %v5113 = vadd.f32 %v4979, %v5097
        %v5114 = vadd.f32 %v4980, %v5098
        %v5115 = vadd.f32 %v4981, %v5099
        %v5116 = vadd.f32 %v4982, %v5100
        %v5117 = vadd.f32 %v4983, %v5101
        %v5118 = vadd.f32 %v4984, %v5102
        %v5119 = vadd.f32 %v4985, %v5103
        %v5120 = vadd.f32 %v4986, %v5104
        %v5121 = vadd.f32 %v4987, %v5105
        %5122 = vmax.xlane.f32.xlu0 %v5106
        %v5123 = vpop.xlane.xlu0 %5122
        %5124 = vmax.xlane.f32.xlu0 %v5107
        %v5125 = vpop.xlane.xlu0 %5124
        %5126 = vmax.xlane.f32.xlu0 %v5108
        %v5127 = vpop.xlane.xlu0 %5126
        %5128 = vmax.xlane.f32.xlu0 %v5109
        %v5129 = vpop.xlane.xlu0 %5128
        %5130 = vmax.xlane.f32.xlu0 %v5110
        %v5131 = vpop.xlane.xlu0 %5130
        %5132 = vmax.xlane.f32.xlu0 %v5111
        %v5133 = vpop.xlane.xlu0 %5132
        %5134 = vmax.xlane.f32.xlu0 %v5112
        %v5135 = vpop.xlane.xlu0 %5134
        %5136 = vmax.xlane.f32.xlu0 %v5113
        %v5137 = vpop.xlane.xlu0 %5136
        %5138 = vmax.xlane.f32.xlu0 %v5114
        %v5139 = vpop.xlane.xlu0 %5138
        %5140 = vmax.xlane.f32.xlu0 %v5115
        %v5141 = vpop.xlane.xlu0 %5140
        %5142 = vmax.xlane.f32.xlu0 %v5116
        %v5143 = vpop.xlane.xlu0 %5142
        %5144 = vmax.xlane.f32.xlu0 %v5117
        %v5145 = vpop.xlane.xlu0 %5144
        %5146 = vmax.xlane.f32.xlu0 %v5118
        %v5147 = vpop.xlane.xlu0 %5146
        %5148 = vmax.xlane.f32.xlu0 %v5119
        %v5149 = vpop.xlane.xlu0 %5148
        %5150 = vmax.xlane.f32.xlu0 %v5120
        %v5151 = vpop.xlane.xlu0 %5150
        %5152 = vmax.xlane.f32.xlu0 %v5121
        %v5153 = vpop.xlane.xlu0 %5152
        %v5154 = vsub.f32 %v5106, %v5123
        %v5155 = vsub.f32 %v5107, %v5125
        %v5156 = vsub.f32 %v5108, %v5127
        %v5157 = vsub.f32 %v5109, %v5129
        %v5158 = vsub.f32 %v5110, %v5131
        %v5159 = vsub.f32 %v5111, %v5133
        %v5160 = vsub.f32 %v5112, %v5135
        %v5161 = vsub.f32 %v5113, %v5137
        %v5162 = vsub.f32 %v5114, %v5139
        %v5163 = vsub.f32 %v5115, %v5141
        %v5164 = vsub.f32 %v5116, %v5143
        %v5165 = vsub.f32 %v5117, %v5145
        %v5166 = vsub.f32 %v5118, %v5147
        %v5167 = vsub.f32 %v5119, %v5149
        %v5168 = vsub.f32 %v5120, %v5151
        %v5169 = vsub.f32 %v5121, %v5153
        %v5170 = vmul.f32 %v5154, 1.442695
        %v5171 = vpow.pop %v5170
        %v5172 = vmul.f32 %v5155, 1.442695
        %v5173 = vpow.pop %v5172
        %v5174 = vmul.f32 %v5156, 1.442695
        %v5175 = vpow.pop %v5174
        %v5176 = vmul.f32 %v5157, 1.442695
        %v5177 = vpow.pop %v5176
        %v5178 = vmul.f32 %v5158, 1.442695
        %v5179 = vpow.pop %v5178
        %v5180 = vmul.f32 %v5159, 1.442695
        %v5181 = vpow.pop %v5180
        %v5182 = vmul.f32 %v5160, 1.442695
        %v5183 = vpow.pop %v5182
        %v5184 = vmul.f32 %v5161, 1.442695
        %v5185 = vpow.pop %v5184
        %v5186 = vmul.f32 %v5162, 1.442695
        %v5187 = vpow.pop %v5186
        %v5188 = vmul.f32 %v5163, 1.442695
        %v5189 = vpow.pop %v5188
        %v5190 = vmul.f32 %v5164, 1.442695
        %v5191 = vpow.pop %v5190
        %v5192 = vmul.f32 %v5165, 1.442695
        %v5193 = vpow.pop %v5192
        %v5194 = vmul.f32 %v5166, 1.442695
        %v5195 = vpow.pop %v5194
        %v5196 = vmul.f32 %v5167, 1.442695
        %v5197 = vpow.pop %v5196
        %v5198 = vmul.f32 %v5168, 1.442695
        %v5199 = vpow.pop %v5198
        %v5200 = vmul.f32 %v5169, 1.442695
        %v5201 = vpow.pop %v5200
        %5202 = vadd.xlane.f32.xlu0 %v5171
        %v5203 = vpop.xlane.xlu0 %5202
        %5204 = vadd.xlane.f32.xlu0 %v5173
        %v5205 = vpop.xlane.xlu0 %5204
        %5206 = vadd.xlane.f32.xlu0 %v5175
        %v5207 = vpop.xlane.xlu0 %5206
        %5208 = vadd.xlane.f32.xlu0 %v5177
        %v5209 = vpop.xlane.xlu0 %5208
        %5210 = vadd.xlane.f32.xlu0 %v5179
        %v5211 = vpop.xlane.xlu0 %5210
        %5212 = vadd.xlane.f32.xlu0 %v5181
        %v5213 = vpop.xlane.xlu0 %5212
        %5214 = vadd.xlane.f32.xlu0 %v5183
        %v5215 = vpop.xlane.xlu0 %5214
        %5216 = vadd.xlane.f32.xlu0 %v5185
        %v5217 = vpop.xlane.xlu0 %5216
        %5218 = vadd.xlane.f32.xlu0 %v5187
        %v5219 = vpop.xlane.xlu0 %5218
        %5220 = vadd.xlane.f32.xlu0 %v5189
        %v5221 = vpop.xlane.xlu0 %5220
        %5222 = vadd.xlane.f32.xlu0 %v5191
        %v5223 = vpop.xlane.xlu0 %5222
        %5224 = vadd.xlane.f32.xlu0 %v5193
        %v5225 = vpop.xlane.xlu0 %5224
        %5226 = vadd.xlane.f32.xlu0 %v5195
        %v5227 = vpop.xlane.xlu0 %5226
        %5228 = vadd.xlane.f32.xlu0 %v5197
        %v5229 = vpop.xlane.xlu0 %5228
        %5230 = vadd.xlane.f32.xlu0 %v5199
        %v5231 = vpop.xlane.xlu0 %5230
        %5232 = vadd.xlane.f32.xlu0 %v5201
        %v5233 = vpop.xlane.xlu0 %5232
        %v5234 = vrcp.pop %v5203
        %v5235 = vmul.f32 1.0, %v5234
        %v5236 = vrcp.pop %v5205
        %v5237 = vmul.f32 1.0, %v5236
        %v5238 = vrcp.pop %v5207
        %v5239 = vmul.f32 1.0, %v5238
        %v5240 = vrcp.pop %v5209
        %v5241 = vmul.f32 1.0, %v5240
        %v5242 = vrcp.pop %v5211
        %v5243 = vmul.f32 1.0, %v5242
        %v5244 = vrcp.pop %v5213
        %v5245 = vmul.f32 1.0, %v5244
        %v5246 = vrcp.pop %v5215
        %v5247 = vmul.f32 1.0, %v5246
        %v5248 = vrcp.pop %v5217
        %v5249 = vmul.f32 1.0, %v5248
        %v5250 = vrcp.pop %v5219
        %v5251 = vmul.f32 1.0, %v5250
        %v5252 = vrcp.pop %v5221
        %v5253 = vmul.f32 1.0, %v5252
        %v5254 = vrcp.pop %v5223
        %v5255 = vmul.f32 1.0, %v5254
        %v5256 = vrcp.pop %v5225
        %v5257 = vmul.f32 1.0, %v5256
        %v5258 = vrcp.pop %v5227
        %v5259 = vmul.f32 1.0, %v5258
        %v5260 = vrcp.pop %v5229
        %v5261 = vmul.f32 1.0, %v5260
        %v5262 = vrcp.pop %v5231
        %v5263 = vmul.f32 1.0, %v5262
        %v5264 = vrcp.pop %v5233
        %v5265 = vmul.f32 1.0, %v5264
        %5266 = vmatprep.subr.mxu0 0.0
        %5267 = vmatpush1.xpose.msra.mxu0 0.0
        %5268 = vmatprep.subr.mxu0 0.0
        %5269 = vmatpush1.xpose.msra.mxu0 0.0
        %5270 = vmatprep.subr.mxu0 0.0
        %5271 = vmatpush1.xpose.msra.mxu0 0.0
        %5272 = vmatprep.subr.mxu0 0.0
        %5273 = vmatpush1.xpose.msra.mxu0 0.0
        %5274 = vmatprep.subr.mxu0 0.0
        %5275 = vmatpush1.xpose.msra.mxu0 0.0
        %5276 = vmatprep.subr.mxu0 0.0
        %5277 = vmatpush1.xpose.msra.mxu0 0.0
        %5278 = vmatprep.subr.mxu0 0.0
        %5279 = vmatpush1.xpose.msra.mxu0 0.0
        %5280 = vmatprep.subr.mxu0 0.0
        %5281 = vmatpush1.xpose.msra.mxu0 0.0
        %5282 = vmatprep.subr.mxu0 0.0
        %5283 = vmatpush1.xpose.msra.mxu0 0.0
        %5284 = vmatprep.subr.mxu0 0.0
        %5285 = vmatpush1.xpose.msra.mxu0 0.0
        %5286 = vmatprep.subr.mxu0 0.0
        %5287 = vmatpush1.xpose.msra.mxu0 0.0
        %5288 = vmatprep.subr.mxu0 0.0
        %5289 = vmatpush1.xpose.msra.mxu0 0.0
        %5290 = vmatprep.subr.mxu0 0.0
        %5291 = vmatpush1.xpose.msra.mxu0 0.0
        %5292 = vmatprep.subr.mxu0 0.0
        %5293 = vmatpush1.xpose.msra.mxu0 0.0
        %5294 = vmatprep.subr.mxu0 0.0
        %5295 = vmatpush1.xpose.msra.mxu0 0.0
        %5296 = vmatprep.subr.mxu0 0.0
        %5297 = vmatpush1.xpose.msra.mxu0 %v745
        %5298 = vmatprep.subr.mxu0 0.0
        %5299 = vmatpush2.xpose.msra.mxu0 0.0
        %5300 = vmatprep.subr.mxu0 0.0
        %5301 = vmatpush2.xpose.msra.mxu0 0.0
        %5302 = vmatprep.subr.mxu0 0.0
        %5303 = vmatpush2.xpose.msra.mxu0 0.0
        %5304 = vmatprep.subr.mxu0 0.0
        %5305 = vmatpush2.xpose.msra.mxu0 0.0
        %5306 = vmatprep.subr.mxu0 0.0
        %5307 = vmatpush2.xpose.msra.mxu0 0.0
        %5308 = vmatprep.subr.mxu0 0.0
        %5309 = vmatpush2.xpose.msra.mxu0 0.0
        %5310 = vmatprep.subr.mxu0 0.0
        %5311 = vmatpush2.xpose.msra.mxu0 0.0
        %5312 = vmatprep.subr.mxu0 0.0
        %5313 = vmatpush2.xpose.msra.mxu0 0.0
        %5314 = vmatprep.subr.mxu0 0.0
        %5315 = vmatpush2.xpose.msra.mxu0 0.0
        %5316 = vmatprep.subr.mxu0 0.0
        %5317 = vmatpush2.xpose.msra.mxu0 0.0
        %5318 = vmatprep.subr.mxu0 0.0
        %5319 = vmatpush2.xpose.msra.mxu0 0.0
        %5320 = vmatprep.subr.mxu0 0.0
        %5321 = vmatpush2.xpose.msra.mxu0 0.0
        %5322 = vmatprep.subr.mxu0 0.0
        %5323 = vmatpush2.xpose.msra.mxu0 0.0
        %5324 = vmatprep.subr.mxu0 0.0
        %5325 = vmatpush2.xpose.msra.mxu0 0.0
        %5326 = vmatprep.subr.mxu0 0.0
        %5327 = vmatpush2.xpose.msra.mxu0 0.0
        %5328 = vmatprep.subr.mxu0 0.0
        %5329 = vmatpush2.xpose.msra.mxu0 0.0
        %5330 = vmatprep.mubr.f32.mxu0 0.0
        %5331 = vmatmul.mubr.f32.gmra.mxu0 %v5171
        %v5332 = vpop.f32.mrf.mxu0
        %v5333 = vadd.f32 0.0, %v5332
        %v5334 = vpop.f32.mrf.mxu0
        %5335 = vmatprep.mubr.f32.mxu0 0.0
        %5336 = vmatmul.mubr.f32.gmra.mxu0 %v5173
        %v5337 = vpop.f32.mrf.mxu0
        %v5338 = vadd.f32 0.0, %v5337
        %v5339 = vpop.f32.mrf.mxu0
        %5340 = vmatprep.mubr.f32.mxu0 0.0
        %5341 = vmatmul.mubr.f32.gmra.mxu0 %v5175
        %v5342 = vpop.f32.mrf.mxu0
        %v5343 = vadd.f32 0.0, %v5342
        %v5344 = vpop.f32.mrf.mxu0
        %5345 = vmatprep.mubr.f32.mxu0 0.0
        %5346 = vmatmul.mubr.f32.gmra.mxu0 %v5177
        %v5347 = vpop.f32.mrf.mxu0
        %v5348 = vadd.f32 0.0, %v5347
        %v5349 = vpop.f32.mrf.mxu0
        %5350 = vmatprep.mubr.f32.mxu0 0.0
        %5351 = vmatmul.mubr.f32.gmra.mxu0 %v5179
        %v5352 = vpop.f32.mrf.mxu0
        %v5353 = vadd.f32 0.0, %v5352
        %v5354 = vpop.f32.mrf.mxu0
        %5355 = vmatprep.mubr.f32.mxu0 0.0
        %5356 = vmatmul.mubr.f32.gmra.mxu0 %v5181
        %v5357 = vpop.f32.mrf.mxu0
        %v5358 = vadd.f32 0.0, %v5357
        %v5359 = vpop.f32.mrf.mxu0
        %5360 = vmatprep.mubr.f32.mxu0 0.0
        %5361 = vmatmul.mubr.f32.gmra.mxu0 %v5183
        %v5362 = vpop.f32.mrf.mxu0
        %v5363 = vadd.f32 0.0, %v5362
        %v5364 = vpop.f32.mrf.mxu0
        %5365 = vmatprep.mubr.f32.mxu0 0.0
        %5366 = vmatmul.mubr.f32.gmra.mxu0 %v5185
        %v5367 = vpop.f32.mrf.mxu0
        %v5368 = vadd.f32 0.0, %v5367
        %v5369 = vpop.f32.mrf.mxu0
        %5370 = vmatprep.mubr.f32.mxu0 0.0
        %5371 = vmatmul.mubr.f32.gmra.mxu0 %v5187
        %v5372 = vpop.f32.mrf.mxu0
        %v5373 = vadd.f32 0.0, %v5372
        %v5374 = vpop.f32.mrf.mxu0
        %5375 = vmatprep.mubr.f32.mxu0 0.0
        %5376 = vmatmul.mubr.f32.gmra.mxu0 %v5189
        %v5377 = vpop.f32.mrf.mxu0
        %v5378 = vadd.f32 0.0, %v5377
        %v5379 = vpop.f32.mrf.mxu0
        %5380 = vmatprep.mubr.f32.mxu0 0.0
        %5381 = vmatmul.mubr.f32.gmra.mxu0 %v5191
        %v5382 = vpop.f32.mrf.mxu0
        %v5383 = vadd.f32 0.0, %v5382
        %v5384 = vpop.f32.mrf.mxu0
        %5385 = vmatprep.mubr.f32.mxu0 0.0
        %5386 = vmatmul.mubr.f32.gmra.mxu0 %v5193
        %v5387 = vpop.f32.mrf.mxu0
        %v5388 = vadd.f32 0.0, %v5387
        %v5389 = vpop.f32.mrf.mxu0
        %5390 = vmatprep.mubr.f32.mxu0 0.0
        %5391 = vmatmul.mubr.f32.gmra.mxu0 %v5195
        %v5392 = vpop.f32.mrf.mxu0
        %v5393 = vadd.f32 0.0, %v5392
        %v5394 = vpop.f32.mrf.mxu0
        %5395 = vmatprep.mubr.f32.mxu0 0.0
        %5396 = vmatmul.mubr.f32.gmra.mxu0 %v5197
        %v5397 = vpop.f32.mrf.mxu0
        %v5398 = vadd.f32 0.0, %v5397
        %v5399 = vpop.f32.mrf.mxu0
        %5400 = vmatprep.mubr.f32.mxu0 0.0
        %5401 = vmatmul.mubr.f32.gmra.mxu0 %v5199
        %v5402 = vpop.f32.mrf.mxu0
        %v5403 = vadd.f32 0.0, %v5402
        %v5404 = vpop.f32.mrf.mxu0
        %5405 = vmatprep.mubr.f32.mxu0 0.0
        %5406 = vmatmul.mubr.f32.gmra.mxu0 %v5201
        %v5407 = vpop.f32.mrf.mxu0
        %v5408 = vadd.f32 0.0, %v5407
        %v5409 = vpop.f32.mrf.mxu0
        %5410 = vdwg.mxu0
        %v5411 = vmul.f32 %v5333, %v5235
        %v5412 = vmul.f32 %v5338, %v5237
        %v5413 = vmul.f32 %v5343, %v5239
        %v5414 = vmul.f32 %v5348, %v5241
        %v5415 = vmul.f32 %v5353, %v5243
        %v5416 = vmul.f32 %v5358, %v5245
        %v5417 = vmul.f32 %v5363, %v5247
        %v5418 = vmul.f32 %v5368, %v5249
        %v5419 = vmul.f32 %v5373, %v5251
        %v5420 = vmul.f32 %v5378, %v5253
        %v5421 = vmul.f32 %v5383, %v5255
        %v5422 = vmul.f32 %v5388, %v5257
        %v5423 = vmul.f32 %v5393, %v5259
        %v5424 = vmul.f32 %v5398, %v5261
        %v5425 = vmul.f32 %v5403, %v5263
        %v5426 = vmul.f32 %v5408, %v5265
        %v5427 = vld [vmem:[%s8] sm:$0x1]
        %v5429 = vlaneseq
        %v5430 = vshrl.u32 %v5429, 7
        %v5431 = vsub.s32 0, %v5430
        %v5432 = vrot.slane %v5427, %v5431
        %5433 = vrot.lane.b32.xlu0 %v5432, 120
        %v5434 = vpop.permute.xlu0 %5433
        %v5436 = vadd.f32 %v5411, %v5434
        %v5437 = vadd.f32 %v5412, %v5434
        %v5438 = vadd.f32 %v5413, %v5434
        %v5439 = vadd.f32 %v5414, %v5434
        %v5440 = vadd.f32 %v5415, %v5434
        %v5441 = vadd.f32 %v5416, %v5434
        %v5442 = vadd.f32 %v5417, %v5434
        %v5443 = vadd.f32 %v5418, %v5434
        %v5444 = vadd.f32 %v5419, %v5434
        %v5445 = vadd.f32 %v5420, %v5434
        %v5446 = vadd.f32 %v5421, %v5434
        %v5447 = vadd.f32 %v5422, %v5434
        %v5448 = vadd.f32 %v5423, %v5434
        %v5449 = vadd.f32 %v5424, %v5434
        %v5450 = vadd.f32 %v5425, %v5434
        %v5451 = vadd.f32 %v5426, %v5434
        %5468 = vrot.lane.b32.xlu0 %v5436, 8
        %v5469 = vpop.permute.xlu0 %5468
        %5470 = vrot.lane.b32.xlu0 %v5437, 8
        %v5471 = vpop.permute.xlu0 %5470
        %5472 = vrot.lane.b32.xlu0 %v5438, 8
        %v5473 = vpop.permute.xlu0 %5472
        %5474 = vrot.lane.b32.xlu0 %v5439, 8
        %v5475 = vpop.permute.xlu0 %5474
        %5476 = vrot.lane.b32.xlu0 %v5440, 8
        %v5477 = vpop.permute.xlu0 %5476
        %5478 = vrot.lane.b32.xlu0 %v5441, 8
        %v5479 = vpop.permute.xlu0 %5478
        %5480 = vrot.lane.b32.xlu0 %v5442, 8
        %v5481 = vpop.permute.xlu0 %5480
        %5482 = vrot.lane.b32.xlu0 %v5443, 8
        %v5483 = vpop.permute.xlu0 %5482
        %5484 = vrot.lane.b32.xlu0 %v5444, 8
        %v5485 = vpop.permute.xlu0 %5484
        %5486 = vrot.lane.b32.xlu0 %v5445, 8
        %v5487 = vpop.permute.xlu0 %5486
        %5488 = vrot.lane.b32.xlu0 %v5446, 8
        %v5489 = vpop.permute.xlu0 %5488
        %5490 = vrot.lane.b32.xlu0 %v5447, 8
        %v5491 = vpop.permute.xlu0 %5490
        %5492 = vrot.lane.b32.xlu0 %v5448, 8
        %v5493 = vpop.permute.xlu0 %5492
        %5494 = vrot.lane.b32.xlu0 %v5449, 8
        %v5495 = vpop.permute.xlu0 %5494
        %5496 = vrot.lane.b32.xlu0 %v5450, 8
        %v5497 = vpop.permute.xlu0 %5496
        %5498 = vrot.lane.b32.xlu0 %v5451, 8
        %v5499 = vpop.permute.xlu0 %5498
        %vm5516 = vcmask 130112
        %5517 = vst.msk [vmem:[#allocation2] sm:$0xff] %vm5516, %v5469
        %5518 = vst.msk [vmem:[#allocation2 + $0x8] sm:$0xff] %vm5516, %v5471
        %5519 = vst.msk [vmem:[#allocation2 + $0x10] sm:$0xff] %vm5516, %v5473
        %5520 = vst.msk [vmem:[#allocation2 + $0x18] sm:$0xff] %vm5516, %v5475
        %5521 = vst.msk [vmem:[#allocation2 + $0x20] sm:$0xff] %vm5516, %v5477
        %5522 = vst.msk [vmem:[#allocation2 + $0x28] sm:$0xff] %vm5516, %v5479
        %5523 = vst.msk [vmem:[#allocation2 + $0x30] sm:$0xff] %vm5516, %v5481
        %5524 = vst.msk [vmem:[#allocation2 + $0x38] sm:$0xff] %vm5516, %v5483
        %5525 = vst.msk [vmem:[#allocation2 + $0x40] sm:$0xff] %vm5516, %v5485
        %5526 = vst.msk [vmem:[#allocation2 + $0x48] sm:$0xff] %vm5516, %v5487
        %5527 = vst.msk [vmem:[#allocation2 + $0x50] sm:$0xff] %vm5516, %v5489
        %5528 = vst.msk [vmem:[#allocation2 + $0x58] sm:$0xff] %vm5516, %v5491
        %5529 = vst.msk [vmem:[#allocation2 + $0x60] sm:$0xff] %vm5516, %v5493
        %5530 = vst.msk [vmem:[#allocation2 + $0x68] sm:$0xff] %vm5516, %v5495
        %5531 = vst.msk [vmem:[#allocation2 + $0x70] sm:$0xff] %vm5516, %v5497
        %5532 = vst.msk [vmem:[#allocation2 + $0x78] sm:$0xff] %vm5516, %v5499
        %v5533 = vld [vmem:[#allocation2] sm:$0xff]
        %v5534 = vld [vmem:[#allocation2 + $0x8] sm:$0xff]
        %v5535 = vld [vmem:[#allocation2 + $0x10] sm:$0xff]
        %v5536 = vld [vmem:[#allocation2 + $0x18] sm:$0xff]
        %v5537 = vld [vmem:[#allocation2 + $0x20] sm:$0xff]
        %v5538 = vld [vmem:[#allocation2 + $0x28] sm:$0xff]
        %v5539 = vld [vmem:[#allocation2 + $0x30] sm:$0xff]
        %v5540 = vld [vmem:[#allocation2 + $0x38] sm:$0xff]
        %v5541 = vld [vmem:[#allocation2 + $0x40] sm:$0xff]
        %v5542 = vld [vmem:[#allocation2 + $0x48] sm:$0xff]
        %v5543 = vld [vmem:[#allocation2 + $0x50] sm:$0xff]
        %v5544 = vld [vmem:[#allocation2 + $0x58] sm:$0xff]
        %v5545 = vld [vmem:[#allocation2 + $0x60] sm:$0xff]
        %v5546 = vld [vmem:[#allocation2 + $0x68] sm:$0xff]
        %v5547 = vld [vmem:[#allocation2 + $0x70] sm:$0xff]
        %v5548 = vld [vmem:[#allocation2 + $0x78] sm:$0xff]
        %v5549 = vld [vmem:[%s9] sm:$0xff]
        %v5550 = vld [vmem:[%s9 + $0x8] sm:$0xff]
        %v5551 = vld [vmem:[%s11] sm:$0xff]
        %v5552 = vld [vmem:[%s11 + $0x8] sm:$0xff]
        %5554 = vset.pattern.permute.xlu0 0
        %5555 = vperm.xlu0 %5554, %v5551
        %v5556 = vpop.permute.xlu0 %5555
        %5559 = vset.pattern.permute.xlu0 0
        %5560 = vperm.xlu0 %5559, %v5552
        %v5561 = vpop.permute.xlu0 %5560
        %vm5563 = vcmask 130048
        %v5565 = vsel %vm5563, %v5549, 0
        %v5568 = vsel %vm5563, %v5550, 0
        %v5571 = vsel %vm5563, %v5533, 0
        %v5574 = vsel %vm5563, %v5534, 0
        %v5577 = vsel %vm5563, %v5535, 0
        %v5580 = vsel %vm5563, %v5536, 0
        %v5583 = vsel %vm5563, %v5537, 0
        %v5586 = vsel %vm5563, %v5538, 0
        %v5589 = vsel %vm5563, %v5539, 0
        %v5592 = vsel %vm5563, %v5540, 0
        %v5595 = vsel %vm5563, %v5541, 0
        %v5598 = vsel %vm5563, %v5542, 0
        %v5601 = vsel %vm5563, %v5543, 0
        %v5604 = vsel %vm5563, %v5544, 0
        %v5607 = vsel %vm5563, %v5545, 0
        %v5610 = vsel %vm5563, %v5546, 0
        %v5613 = vsel %vm5563, %v5547, 0
        %v5616 = vsel %vm5563, %v5548, 0
        %5618 = vmatprep.subr.mxu0 0.0
        %5619 = vmatpush1.xpose.msra.mxu0 %v5616
        %5620 = vmatprep.subr.mxu0 0.0
        %5621 = vmatpush1.xpose.msra.mxu0 %v5613
        %5622 = vmatprep.subr.mxu0 0.0
        %5623 = vmatpush1.xpose.msra.mxu0 %v5610
        %5624 = vmatprep.subr.mxu0 0.0
        %5625 = vmatpush1.xpose.msra.mxu0 %v5607
        %5626 = vmatprep.subr.mxu0 0.0
        %5627 = vmatpush1.xpose.msra.mxu0 %v5604
        %5628 = vmatprep.subr.mxu0 0.0
        %5629 = vmatpush1.xpose.msra.mxu0 %v5601
        %5630 = vmatprep.subr.mxu0 0.0
        %5631 = vmatpush1.xpose.msra.mxu0 %v5598
        %5632 = vmatprep.subr.mxu0 0.0
        %5633 = vmatpush1.xpose.msra.mxu0 %v5595
        %5634 = vmatprep.subr.mxu0 0.0
        %5635 = vmatpush1.xpose.msra.mxu0 %v5592
        %5636 = vmatprep.subr.mxu0 0.0
        %5637 = vmatpush1.xpose.msra.mxu0 %v5589
        %5638 = vmatprep.subr.mxu0 0.0
        %5639 = vmatpush1.xpose.msra.mxu0 %v5586
        %5640 = vmatprep.subr.mxu0 0.0
        %5641 = vmatpush1.xpose.msra.mxu0 %v5583
        %5642 = vmatprep.subr.mxu0 0.0
        %5643 = vmatpush1.xpose.msra.mxu0 %v5580
        %5644 = vmatprep.subr.mxu0 0.0
        %5645 = vmatpush1.xpose.msra.mxu0 %v5577
        %5646 = vmatprep.subr.mxu0 0.0
        %5647 = vmatpush1.xpose.msra.mxu0 %v5574
        %5648 = vmatprep.subr.mxu0 0.0
        %5649 = vmatpush1.xpose.msra.mxu0 %v5571
        %5650 = vmatprep.subr.mxu0 0.0
        %5651 = vmatpush2.xpose.msra.mxu0 0.0
        %5652 = vmatprep.subr.mxu0 0.0
        %5653 = vmatpush2.xpose.msra.mxu0 0.0
        %5654 = vmatprep.subr.mxu0 0.0
        %5655 = vmatpush2.xpose.msra.mxu0 0.0
        %5656 = vmatprep.subr.mxu0 0.0
        %5657 = vmatpush2.xpose.msra.mxu0 0.0
        %5658 = vmatprep.subr.mxu0 0.0
        %5659 = vmatpush2.xpose.msra.mxu0 0.0
        %5660 = vmatprep.subr.mxu0 0.0
        %5661 = vmatpush2.xpose.msra.mxu0 0.0
        %5662 = vmatprep.subr.mxu0 0.0
        %5663 = vmatpush2.xpose.msra.mxu0 0.0
        %5664 = vmatprep.subr.mxu0 0.0
        %5665 = vmatpush2.xpose.msra.mxu0 0.0
        %5666 = vmatprep.subr.mxu0 0.0
        %5667 = vmatpush2.xpose.msra.mxu0 0.0
        %5668 = vmatprep.subr.mxu0 0.0
        %5669 = vmatpush2.xpose.msra.mxu0 0.0
        %5670 = vmatprep.subr.mxu0 0.0
        %5671 = vmatpush2.xpose.msra.mxu0 0.0
        %5672 = vmatprep.subr.mxu0 0.0
        %5673 = vmatpush2.xpose.msra.mxu0 0.0
        %5674 = vmatprep.subr.mxu0 0.0
        %5675 = vmatpush2.xpose.msra.mxu0 0.0
        %5676 = vmatprep.subr.mxu0 0.0
        %5677 = vmatpush2.xpose.msra.mxu0 0.0
        %5678 = vmatprep.subr.mxu0 0.0
        %5679 = vmatpush2.xpose.msra.mxu0 0.0
        %5680 = vmatprep.subr.mxu0 0.0
        %5681 = vmatpush2.xpose.msra.mxu0 0.0
        %5682 = vmatprep.mubr.f32.mxu0 0.0
        %5683 = vmatmul.mubr.f32.gmra.mxu0 %v5565
        %v5684 = vpop.f32.mrf.mxu0
        %v5685 = vadd.f32 %v5556, %v5684
        %v5686 = vpop.f32.mrf.mxu0
        %5687 = vmatprep.mubr.f32.mxu0 0.0
        %5688 = vmatmul.mubr.f32.gmra.mxu0 %v5568
        %v5689 = vpop.f32.mrf.mxu0
        %v5690 = vadd.f32 %v5561, %v5689
        %v5691 = vpop.f32.mrf.mxu0
        %5692 = vdwg.mxu0
        %v5693 = vld [vmem:[%s10] sm:$0xff]
        %v5694 = vld [vmem:[%s10 + $0x8] sm:$0xff]
        %v5695 = vld [vmem:[%s12] sm:$0x1]
        %v5697 = vlaneseq
        %v5698 = vshrl.u32 %v5697, 7
        %v5699 = vsub.s32 0, %v5698
        %v5700 = vrot.slane %v5695, %v5699
        %5702 = vmatprep.subr.mxu0 0.0
        %5703 = vmatpush1.msra.mxu0 0.0
        %5704 = vmatprep.subr.mxu0 0.0
        %5705 = vmatpush1.msra.mxu0 0.0
        %5706 = vmatprep.subr.mxu0 0.0
        %5707 = vmatpush1.msra.mxu0 0.0
        %5708 = vmatprep.subr.mxu0 0.0
        %5709 = vmatpush1.msra.mxu0 0.0
        %5710 = vmatprep.subr.mxu0 0.0
        %5711 = vmatpush1.msra.mxu0 0.0
        %5712 = vmatprep.subr.mxu0 0.0
        %5713 = vmatpush1.msra.mxu0 0.0
        %5714 = vmatprep.subr.mxu0 0.0
        %5715 = vmatpush1.msra.mxu0 0.0
        %5716 = vmatprep.subr.mxu0 0.0
        %5717 = vmatpush1.msra.mxu0 0.0
        %5718 = vmatprep.subr.mxu0 0.0
        %5719 = vmatpush1.msra.mxu0 0.0
        %5720 = vmatprep.subr.mxu0 0.0
        %5721 = vmatpush1.msra.mxu0 0.0
        %5722 = vmatprep.subr.mxu0 0.0
        %5723 = vmatpush1.msra.mxu0 0.0
        %5724 = vmatprep.subr.mxu0 0.0
        %5725 = vmatpush1.msra.mxu0 0.0
        %5726 = vmatprep.subr.mxu0 0.0
        %5727 = vmatpush1.msra.mxu0 0.0
        %5728 = vmatprep.subr.mxu0 0.0
        %5729 = vmatpush1.msra.mxu0 0.0
        %5730 = vmatprep.subr.mxu0 0.0
        %5731 = vmatpush1.msra.mxu0 %v5694
        %5732 = vmatprep.subr.mxu0 0.0
        %5733 = vmatpush1.msra.mxu0 %v5693
        %5734 = vmatprep.subr.mxu0 0.0
        %5735 = vmatpush2.msra.mxu0 0.0
        %5736 = vmatprep.subr.mxu0 0.0
        %5737 = vmatpush2.msra.mxu0 0.0
        %5738 = vmatprep.subr.mxu0 0.0
        %5739 = vmatpush2.msra.mxu0 0.0
        %5740 = vmatprep.subr.mxu0 0.0
        %5741 = vmatpush2.msra.mxu0 0.0
        %5742 = vmatprep.subr.mxu0 0.0
        %5743 = vmatpush2.msra.mxu0 0.0
        %5744 = vmatprep.subr.mxu0 0.0
        %5745 = vmatpush2.msra.mxu0 0.0
        %5746 = vmatprep.subr.mxu0 0.0
        %5747 = vmatpush2.msra.mxu0 0.0
        %5748 = vmatprep.subr.mxu0 0.0
        %5749 = vmatpush2.msra.mxu0 0.0
        %5750 = vmatprep.subr.mxu0 0.0
        %5751 = vmatpush2.msra.mxu0 0.0
        %5752 = vmatprep.subr.mxu0 0.0
        %5753 = vmatpush2.msra.mxu0 0.0
        %5754 = vmatprep.subr.mxu0 0.0
        %5755 = vmatpush2.msra.mxu0 0.0
        %5756 = vmatprep.subr.mxu0 0.0
        %5757 = vmatpush2.msra.mxu0 0.0
        %5758 = vmatprep.subr.mxu0 0.0
        %5759 = vmatpush2.msra.mxu0 0.0
        %5760 = vmatprep.subr.mxu0 0.0
        %5761 = vmatpush2.msra.mxu0 0.0
        %5762 = vmatprep.subr.mxu0 0.0
        %5763 = vmatpush2.msra.mxu0 0.0
        %5764 = vmatprep.subr.mxu0 0.0
        %5765 = vmatpush2.msra.mxu0 0.0
        %5766 = vmatprep.mubr.f32.mxu0 0.0
        %5767 = vmatmul.mubr.f32.gmra.mxu0 %v5571
        %v5768 = vpop.f32.mrf.mxu0
        %v5769 = vadd.f32 %v5700, %v5768
        %v5770 = vpop.f32.mrf.mxu0
        %5771 = vmatprep.mubr.f32.mxu0 0.0
        %5772 = vmatmul.mubr.f32.gmra.mxu0 %v5574
        %v5773 = vpop.f32.mrf.mxu0
        %v5774 = vadd.f32 %v5700, %v5773
        %v5775 = vpop.f32.mrf.mxu0
        %5776 = vmatprep.mubr.f32.mxu0 0.0
        %5777 = vmatmul.mubr.f32.gmra.mxu0 %v5577
        %v5778 = vpop.f32.mrf.mxu0
        %v5779 = vadd.f32 %v5700, %v5778
        %v5780 = vpop.f32.mrf.mxu0
        %5781 = vmatprep.mubr.f32.mxu0 0.0
        %5782 = vmatmul.mubr.f32.gmra.mxu0 %v5580
        %v5783 = vpop.f32.mrf.mxu0
        %v5784 = vadd.f32 %v5700, %v5783
        %v5785 = vpop.f32.mrf.mxu0
        %5786 = vmatprep.mubr.f32.mxu0 0.0
        %5787 = vmatmul.mubr.f32.gmra.mxu0 %v5583
        %v5788 = vpop.f32.mrf.mxu0
        %v5789 = vadd.f32 %v5700, %v5788
        %v5790 = vpop.f32.mrf.mxu0
        %5791 = vmatprep.mubr.f32.mxu0 0.0
        %5792 = vmatmul.mubr.f32.gmra.mxu0 %v5586
        %v5793 = vpop.f32.mrf.mxu0
        %v5794 = vadd.f32 %v5700, %v5793
        %v5795 = vpop.f32.mrf.mxu0
        %5796 = vmatprep.mubr.f32.mxu0 0.0
        %5797 = vmatmul.mubr.f32.gmra.mxu0 %v5589
        %v5798 = vpop.f32.mrf.mxu0
        %v5799 = vadd.f32 %v5700, %v5798
        %v5800 = vpop.f32.mrf.mxu0
        %5801 = vmatprep.mubr.f32.mxu0 0.0
        %5802 = vmatmul.mubr.f32.gmra.mxu0 %v5592
        %v5803 = vpop.f32.mrf.mxu0
        %v5804 = vadd.f32 %v5700, %v5803
        %v5805 = vpop.f32.mrf.mxu0
        %5806 = vmatprep.mubr.f32.mxu0 0.0
        %5807 = vmatmul.mubr.f32.gmra.mxu0 %v5595
        %v5808 = vpop.f32.mrf.mxu0
        %v5809 = vadd.f32 %v5700, %v5808
        %v5810 = vpop.f32.mrf.mxu0
        %5811 = vmatprep.mubr.f32.mxu0 0.0
        %5812 = vmatmul.mubr.f32.gmra.mxu0 %v5598
        %v5813 = vpop.f32.mrf.mxu0
        %v5814 = vadd.f32 %v5700, %v5813
        %v5815 = vpop.f32.mrf.mxu0
        %5816 = vmatprep.mubr.f32.mxu0 0.0
        %5817 = vmatmul.mubr.f32.gmra.mxu0 %v5601
        %v5818 = vpop.f32.mrf.mxu0
        %v5819 = vadd.f32 %v5700, %v5818
        %v5820 = vpop.f32.mrf.mxu0
        %5821 = vmatprep.mubr.f32.mxu0 0.0
        %5822 = vmatmul.mubr.f32.gmra.mxu0 %v5604
        %v5823 = vpop.f32.mrf.mxu0
        %v5824 = vadd.f32 %v5700, %v5823
        %v5825 = vpop.f32.mrf.mxu0
        %5826 = vmatprep.mubr.f32.mxu0 0.0
        %5827 = vmatmul.mubr.f32.gmra.mxu0 %v5607
        %v5828 = vpop.f32.mrf.mxu0
        %v5829 = vadd.f32 %v5700, %v5828
        %v5830 = vpop.f32.mrf.mxu0
        %5831 = vmatprep.mubr.f32.mxu0 0.0
        %5832 = vmatmul.mubr.f32.gmra.mxu0 %v5610
        %v5833 = vpop.f32.mrf.mxu0
        %v5834 = vadd.f32 %v5700, %v5833
        %v5835 = vpop.f32.mrf.mxu0
        %5836 = vmatprep.mubr.f32.mxu0 0.0
        %5837 = vmatmul.mubr.f32.gmra.mxu0 %v5613
        %v5838 = vpop.f32.mrf.mxu0
        %v5839 = vadd.f32 %v5700, %v5838
        %v5840 = vpop.f32.mrf.mxu0
        %5841 = vmatprep.mubr.f32.mxu0 0.0
        %5842 = vmatmul.mubr.f32.gmra.mxu0 %v5616
        %v5843 = vpop.f32.mrf.mxu0
        %v5844 = vadd.f32 %v5700, %v5843
        %v5845 = vpop.f32.mrf.mxu0
        %5846 = vdwg.mxu0
        %s5847 = sld [smem:[#allocation8]]
        %v5848 = vstv %s5847
        %v5849 = vmul.f32 %v5848, %v5769
        %v5850 = vmul.f32 %v5848, %v5774
        %v5851 = vmul.f32 %v5848, %v5779
        %v5852 = vmul.f32 %v5848, %v5784
        %v5853 = vmul.f32 %v5848, %v5789
        %v5854 = vmul.f32 %v5848, %v5794
        %v5855 = vmul.f32 %v5848, %v5799
        %v5856 = vmul.f32 %v5848, %v5804
        %v5857 = vmul.f32 %v5848, %v5809
        %v5858 = vmul.f32 %v5848, %v5814
        %v5859 = vmul.f32 %v5848, %v5819
        %v5860 = vmul.f32 %v5848, %v5824
        %v5861 = vmul.f32 %v5848, %v5829
        %v5862 = vmul.f32 %v5848, %v5834
        %v5863 = vmul.f32 %v5848, %v5839
        %v5864 = vmul.f32 %v5848, %v5844
        %v5865 = vmul.f32 %v5848, %v5685
        %s5866 = sld [smem:[#allocation8 + $0x1]]
        %v5867 = vstv %s5866
        %v5868 = vmul.f32 %v5867, %v5769
        %v5869 = vmul.f32 %v5867, %v5774
        %v5870 = vmul.f32 %v5867, %v5779
        %v5871 = vmul.f32 %v5867, %v5784
        %v5872 = vmul.f32 %v5867, %v5789
        %v5873 = vmul.f32 %v5867, %v5794
        %v5874 = vmul.f32 %v5867, %v5799
        %v5875 = vmul.f32 %v5867, %v5804
        %v5876 = vmul.f32 %v5867, %v5809
        %v5877 = vmul.f32 %v5867, %v5814
        %v5878 = vmul.f32 %v5867, %v5819
        %v5879 = vmul.f32 %v5867, %v5824
        %v5880 = vmul.f32 %v5867, %v5829
        %v5881 = vmul.f32 %v5867, %v5834
        %v5882 = vmul.f32 %v5867, %v5839
        %v5883 = vmul.f32 %v5867, %v5844
        %5900 = vrot.lane.b32.xlu0 %v5868, 127
        %v5901 = vpop.permute.xlu0 %5900
        %5902 = vrot.lane.b32.xlu0 %v5869, 127
        %v5903 = vpop.permute.xlu0 %5902
        %5904 = vrot.lane.b32.xlu0 %v5870, 127
        %v5905 = vpop.permute.xlu0 %5904
        %5906 = vrot.lane.b32.xlu0 %v5871, 127
        %v5907 = vpop.permute.xlu0 %5906
        %5908 = vrot.lane.b32.xlu0 %v5872, 127
        %v5909 = vpop.permute.xlu0 %5908
        %5910 = vrot.lane.b32.xlu0 %v5873, 127
        %v5911 = vpop.permute.xlu0 %5910
        %5912 = vrot.lane.b32.xlu0 %v5874, 127
        %v5913 = vpop.permute.xlu0 %5912
        %5914 = vrot.lane.b32.xlu0 %v5875, 127
        %v5915 = vpop.permute.xlu0 %5914
        %5916 = vrot.lane.b32.xlu0 %v5876, 127
        %v5917 = vpop.permute.xlu0 %5916
        %5918 = vrot.lane.b32.xlu0 %v5877, 127
        %v5919 = vpop.permute.xlu0 %5918
        %5920 = vrot.lane.b32.xlu0 %v5878, 127
        %v5921 = vpop.permute.xlu0 %5920
        %5922 = vrot.lane.b32.xlu0 %v5879, 127
        %v5923 = vpop.permute.xlu0 %5922
        %5924 = vrot.lane.b32.xlu0 %v5880, 127
        %v5925 = vpop.permute.xlu0 %5924
        %5926 = vrot.lane.b32.xlu0 %v5881, 127
        %v5927 = vpop.permute.xlu0 %5926
        %5928 = vrot.lane.b32.xlu0 %v5882, 127
        %v5929 = vpop.permute.xlu0 %5928
        %5930 = vrot.lane.b32.xlu0 %v5883, 127
        %v5931 = vpop.permute.xlu0 %5930
        %v5948 = vadd.f32 %v5849, %v5901
        %v5949 = vadd.f32 %v5850, %v5903
        %v5950 = vadd.f32 %v5851, %v5905
        %v5951 = vadd.f32 %v5852, %v5907
        %v5952 = vadd.f32 %v5853, %v5909
        %v5953 = vadd.f32 %v5854, %v5911
        %v5954 = vadd.f32 %v5855, %v5913
        %v5955 = vadd.f32 %v5856, %v5915
        %v5956 = vadd.f32 %v5857, %v5917
        %v5957 = vadd.f32 %v5858, %v5919
        %v5958 = vadd.f32 %v5859, %v5921
        %v5959 = vadd.f32 %v5860, %v5923
        %v5960 = vadd.f32 %v5861, %v5925
        %v5961 = vadd.f32 %v5862, %v5927
        %v5962 = vadd.f32 %v5863, %v5929
        %v5963 = vadd.f32 %v5864, %v5931
        %v5964 = vmul.f32 %v5867, %v5685
        %v5966 = vrot.slane %v5964, 1
        %v5968 = vadd.f32 %v5865, %v5966
        %s5969 = sld [smem:[#allocation8 + $0x2]]
        %v5970 = vstv %s5969
        %v5971 = vmul.f32 %v5970, %v5769
        %v5972 = vmul.f32 %v5970, %v5774
        %v5973 = vmul.f32 %v5970, %v5779
        %v5974 = vmul.f32 %v5970, %v5784
        %v5975 = vmul.f32 %v5970, %v5789
        %v5976 = vmul.f32 %v5970, %v5794
        %v5977 = vmul.f32 %v5970, %v5799
        %v5978 = vmul.f32 %v5970, %v5804
        %v5979 = vmul.f32 %v5970, %v5809
        %v5980 = vmul.f32 %v5970, %v5814
        %v5981 = vmul.f32 %v5970, %v5819
        %v5982 = vmul.f32 %v5970, %v5824
        %v5983 = vmul.f32 %v5970, %v5829
        %v5984 = vmul.f32 %v5970, %v5834
        %v5985 = vmul.f32 %v5970, %v5839
        %v5986 = vmul.f32 %v5970, %v5844
        %6003 = vrot.lane.b32.xlu0 %v5971, 126
        %v6004 = vpop.permute.xlu0 %6003
        %6005 = vrot.lane.b32.xlu0 %v5972, 126
        %v6006 = vpop.permute.xlu0 %6005
        %6007 = vrot.lane.b32.xlu0 %v5973, 126
        %v6008 = vpop.permute.xlu0 %6007
        %6009 = vrot.lane.b32.xlu0 %v5974, 126
        %v6010 = vpop.permute.xlu0 %6009
        %6011 = vrot.lane.b32.xlu0 %v5975, 126
        %v6012 = vpop.permute.xlu0 %6011
        %6013 = vrot.lane.b32.xlu0 %v5976, 126
        %v6014 = vpop.permute.xlu0 %6013
        %6015 = vrot.lane.b32.xlu0 %v5977, 126
        %v6016 = vpop.permute.xlu0 %6015
        %6017 = vrot.lane.b32.xlu0 %v5978, 126
        %v6018 = vpop.permute.xlu0 %6017
        %6019 = vrot.lane.b32.xlu0 %v5979, 126
        %v6020 = vpop.permute.xlu0 %6019
        %6021 = vrot.lane.b32.xlu0 %v5980, 126
        %v6022 = vpop.permute.xlu0 %6021
        %6023 = vrot.lane.b32.xlu0 %v5981, 126
        %v6024 = vpop.permute.xlu0 %6023
        %6025 = vrot.lane.b32.xlu0 %v5982, 126
        %v6026 = vpop.permute.xlu0 %6025
        %6027 = vrot.lane.b32.xlu0 %v5983, 126
        %v6028 = vpop.permute.xlu0 %6027
        %6029 = vrot.lane.b32.xlu0 %v5984, 126
        %v6030 = vpop.permute.xlu0 %6029
        %6031 = vrot.lane.b32.xlu0 %v5985, 126
        %v6032 = vpop.permute.xlu0 %6031
        %6033 = vrot.lane.b32.xlu0 %v5986, 126
        %v6034 = vpop.permute.xlu0 %6033
        %v6051 = vadd.f32 %v5948, %v6004
        %v6052 = vadd.f32 %v5949, %v6006
        %v6053 = vadd.f32 %v5950, %v6008
        %v6054 = vadd.f32 %v5951, %v6010
        %v6055 = vadd.f32 %v5952, %v6012
        %v6056 = vadd.f32 %v5953, %v6014
        %v6057 = vadd.f32 %v5954, %v6016
        %v6058 = vadd.f32 %v5955, %v6018
        %v6059 = vadd.f32 %v5956, %v6020
        %v6060 = vadd.f32 %v5957, %v6022
        %v6061 = vadd.f32 %v5958, %v6024
        %v6062 = vadd.f32 %v5959, %v6026
        %v6063 = vadd.f32 %v5960, %v6028
        %v6064 = vadd.f32 %v5961, %v6030
        %v6065 = vadd.f32 %v5962, %v6032
        %v6066 = vadd.f32 %v5963, %v6034
        %v6067 = vmul.f32 %v5970, %v5685
        %v6069 = vrot.slane %v6067, 2
        %v6071 = vadd.f32 %v5968, %v6069
        %s6072 = sld [smem:[#allocation8 + $0x3]]
        %v6073 = vstv %s6072
        %v6074 = vmul.f32 %v6073, %v5769
        %v6075 = vmul.f32 %v6073, %v5774
        %v6076 = vmul.f32 %v6073, %v5779
        %v6077 = vmul.f32 %v6073, %v5784
        %v6078 = vmul.f32 %v6073, %v5789
        %v6079 = vmul.f32 %v6073, %v5794
        %v6080 = vmul.f32 %v6073, %v5799
        %v6081 = vmul.f32 %v6073, %v5804
        %v6082 = vmul.f32 %v6073, %v5809
        %v6083 = vmul.f32 %v6073, %v5814
        %v6084 = vmul.f32 %v6073, %v5819
        %v6085 = vmul.f32 %v6073, %v5824
        %v6086 = vmul.f32 %v6073, %v5829
        %v6087 = vmul.f32 %v6073, %v5834
        %v6088 = vmul.f32 %v6073, %v5839
        %v6089 = vmul.f32 %v6073, %v5844
        %6106 = vrot.lane.b32.xlu0 %v6074, 125
        %v6107 = vpop.permute.xlu0 %6106
        %6108 = vrot.lane.b32.xlu0 %v6075, 125
        %v6109 = vpop.permute.xlu0 %6108
        %6110 = vrot.lane.b32.xlu0 %v6076, 125
        %v6111 = vpop.permute.xlu0 %6110
        %6112 = vrot.lane.b32.xlu0 %v6077, 125
        %v6113 = vpop.permute.xlu0 %6112
        %6114 = vrot.lane.b32.xlu0 %v6078, 125
        %v6115 = vpop.permute.xlu0 %6114
        %6116 = vrot.lane.b32.xlu0 %v6079, 125
        %v6117 = vpop.permute.xlu0 %6116
        %6118 = vrot.lane.b32.xlu0 %v6080, 125
        %v6119 = vpop.permute.xlu0 %6118
        %6120 = vrot.lane.b32.xlu0 %v6081, 125
        %v6121 = vpop.permute.xlu0 %6120
        %6122 = vrot.lane.b32.xlu0 %v6082, 125
        %v6123 = vpop.permute.xlu0 %6122
        %6124 = vrot.lane.b32.xlu0 %v6083, 125
        %v6125 = vpop.permute.xlu0 %6124
        %6126 = vrot.lane.b32.xlu0 %v6084, 125
        %v6127 = vpop.permute.xlu0 %6126
        %6128 = vrot.lane.b32.xlu0 %v6085, 125
        %v6129 = vpop.permute.xlu0 %6128
        %6130 = vrot.lane.b32.xlu0 %v6086, 125
        %v6131 = vpop.permute.xlu0 %6130
        %6132 = vrot.lane.b32.xlu0 %v6087, 125
        %v6133 = vpop.permute.xlu0 %6132
        %6134 = vrot.lane.b32.xlu0 %v6088, 125
        %v6135 = vpop.permute.xlu0 %6134
        %6136 = vrot.lane.b32.xlu0 %v6089, 125
        %v6137 = vpop.permute.xlu0 %6136
        %v6154 = vadd.f32 %v6051, %v6107
        %v6155 = vadd.f32 %v6052, %v6109
        %v6156 = vadd.f32 %v6053, %v6111
        %v6157 = vadd.f32 %v6054, %v6113
        %v6158 = vadd.f32 %v6055, %v6115
        %v6159 = vadd.f32 %v6056, %v6117
        %v6160 = vadd.f32 %v6057, %v6119
        %v6161 = vadd.f32 %v6058, %v6121
        %v6162 = vadd.f32 %v6059, %v6123
        %v6163 = vadd.f32 %v6060, %v6125
        %v6164 = vadd.f32 %v6061, %v6127
        %v6165 = vadd.f32 %v6062, %v6129
        %v6166 = vadd.f32 %v6063, %v6131
        %v6167 = vadd.f32 %v6064, %v6133
        %v6168 = vadd.f32 %v6065, %v6135
        %v6169 = vadd.f32 %v6066, %v6137
        %v6170 = vmul.f32 %v6073, %v5685
        %v6172 = vrot.slane %v6170, 3
        %v6174 = vadd.f32 %v6071, %v6172
        %s6175 = sld [smem:[#allocation8 + $0x4]]
        %v6176 = vstv %s6175
        %v6177 = vmul.f32 %v6176, %v5769
        %v6178 = vmul.f32 %v6176, %v5774
        %v6179 = vmul.f32 %v6176, %v5779
        %v6180 = vmul.f32 %v6176, %v5784
        %v6181 = vmul.f32 %v6176, %v5789
        %v6182 = vmul.f32 %v6176, %v5794
        %v6183 = vmul.f32 %v6176, %v5799
        %v6184 = vmul.f32 %v6176, %v5804
        %v6185 = vmul.f32 %v6176, %v5809
        %v6186 = vmul.f32 %v6176, %v5814
        %v6187 = vmul.f32 %v6176, %v5819
        %v6188 = vmul.f32 %v6176, %v5824
        %v6189 = vmul.f32 %v6176, %v5829
        %v6190 = vmul.f32 %v6176, %v5834
        %v6191 = vmul.f32 %v6176, %v5839
        %v6192 = vmul.f32 %v6176, %v5844
        %6209 = vrot.lane.b32.xlu0 %v6177, 124
        %v6210 = vpop.permute.xlu0 %6209
        %6211 = vrot.lane.b32.xlu0 %v6178, 124
        %v6212 = vpop.permute.xlu0 %6211
        %6213 = vrot.lane.b32.xlu0 %v6179, 124
        %v6214 = vpop.permute.xlu0 %6213
        %6215 = vrot.lane.b32.xlu0 %v6180, 124
        %v6216 = vpop.permute.xlu0 %6215
        %6217 = vrot.lane.b32.xlu0 %v6181, 124
        %v6218 = vpop.permute.xlu0 %6217
        %6219 = vrot.lane.b32.xlu0 %v6182, 124
        %v6220 = vpop.permute.xlu0 %6219
        %6221 = vrot.lane.b32.xlu0 %v6183, 124
        %v6222 = vpop.permute.xlu0 %6221
        %6223 = vrot.lane.b32.xlu0 %v6184, 124
        %v6224 = vpop.permute.xlu0 %6223
        %6225 = vrot.lane.b32.xlu0 %v6185, 124
        %v6226 = vpop.permute.xlu0 %6225
        %6227 = vrot.lane.b32.xlu0 %v6186, 124
        %v6228 = vpop.permute.xlu0 %6227
        %6229 = vrot.lane.b32.xlu0 %v6187, 124
        %v6230 = vpop.permute.xlu0 %6229
        %6231 = vrot.lane.b32.xlu0 %v6188, 124
        %v6232 = vpop.permute.xlu0 %6231
        %6233 = vrot.lane.b32.xlu0 %v6189, 124
        %v6234 = vpop.permute.xlu0 %6233
        %6235 = vrot.lane.b32.xlu0 %v6190, 124
        %v6236 = vpop.permute.xlu0 %6235
        %6237 = vrot.lane.b32.xlu0 %v6191, 124
        %v6238 = vpop.permute.xlu0 %6237
        %6239 = vrot.lane.b32.xlu0 %v6192, 124
        %v6240 = vpop.permute.xlu0 %6239
        %v6257 = vadd.f32 %v6154, %v6210
        %v6258 = vadd.f32 %v6155, %v6212
        %v6259 = vadd.f32 %v6156, %v6214
        %v6260 = vadd.f32 %v6157, %v6216
        %v6261 = vadd.f32 %v6158, %v6218
        %v6262 = vadd.f32 %v6159, %v6220
        %v6263 = vadd.f32 %v6160, %v6222
        %v6264 = vadd.f32 %v6161, %v6224
        %v6265 = vadd.f32 %v6162, %v6226
        %v6266 = vadd.f32 %v6163, %v6228
        %v6267 = vadd.f32 %v6164, %v6230
        %v6268 = vadd.f32 %v6165, %v6232
        %v6269 = vadd.f32 %v6166, %v6234
        %v6270 = vadd.f32 %v6167, %v6236
        %v6271 = vadd.f32 %v6168, %v6238
        %v6272 = vadd.f32 %v6169, %v6240
        %v6273 = vmul.f32 %v6176, %v5685
        %v6275 = vrot.slane %v6273, 4
        %v6277 = vadd.f32 %v6174, %v6275
        %s6278 = sld [smem:[#allocation8 + $0x5]]
        %v6279 = vstv %s6278
        %v6280 = vmul.f32 %v6279, %v5769
        %v6281 = vmul.f32 %v6279, %v5774
        %v6282 = vmul.f32 %v6279, %v5779
        %v6283 = vmul.f32 %v6279, %v5784
        %v6284 = vmul.f32 %v6279, %v5789
        %v6285 = vmul.f32 %v6279, %v5794
        %v6286 = vmul.f32 %v6279, %v5799
        %v6287 = vmul.f32 %v6279, %v5804
        %v6288 = vmul.f32 %v6279, %v5809
        %v6289 = vmul.f32 %v6279, %v5814
        %v6290 = vmul.f32 %v6279, %v5819
        %v6291 = vmul.f32 %v6279, %v5824
        %v6292 = vmul.f32 %v6279, %v5829
        %v6293 = vmul.f32 %v6279, %v5834
        %v6294 = vmul.f32 %v6279, %v5839
        %v6295 = vmul.f32 %v6279, %v5844
        %6312 = vrot.lane.b32.xlu0 %v6280, 123
        %v6313 = vpop.permute.xlu0 %6312
        %6314 = vrot.lane.b32.xlu0 %v6281, 123
        %v6315 = vpop.permute.xlu0 %6314
        %6316 = vrot.lane.b32.xlu0 %v6282, 123
        %v6317 = vpop.permute.xlu0 %6316
        %6318 = vrot.lane.b32.xlu0 %v6283, 123
        %v6319 = vpop.permute.xlu0 %6318
        %6320 = vrot.lane.b32.xlu0 %v6284, 123
        %v6321 = vpop.permute.xlu0 %6320
        %6322 = vrot.lane.b32.xlu0 %v6285, 123
        %v6323 = vpop.permute.xlu0 %6322
        %6324 = vrot.lane.b32.xlu0 %v6286, 123
        %v6325 = vpop.permute.xlu0 %6324
        %6326 = vrot.lane.b32.xlu0 %v6287, 123
        %v6327 = vpop.permute.xlu0 %6326
        %6328 = vrot.lane.b32.xlu0 %v6288, 123
        %v6329 = vpop.permute.xlu0 %6328
        %6330 = vrot.lane.b32.xlu0 %v6289, 123
        %v6331 = vpop.permute.xlu0 %6330
        %6332 = vrot.lane.b32.xlu0 %v6290, 123
        %v6333 = vpop.permute.xlu0 %6332
        %6334 = vrot.lane.b32.xlu0 %v6291, 123
        %v6335 = vpop.permute.xlu0 %6334
        %6336 = vrot.lane.b32.xlu0 %v6292, 123
        %v6337 = vpop.permute.xlu0 %6336
        %6338 = vrot.lane.b32.xlu0 %v6293, 123
        %v6339 = vpop.permute.xlu0 %6338
        %6340 = vrot.lane.b32.xlu0 %v6294, 123
        %v6341 = vpop.permute.xlu0 %6340
        %6342 = vrot.lane.b32.xlu0 %v6295, 123
        %v6343 = vpop.permute.xlu0 %6342
        %v6360 = vadd.f32 %v6257, %v6313
        %v6361 = vadd.f32 %v6258, %v6315
        %v6362 = vadd.f32 %v6259, %v6317
        %v6363 = vadd.f32 %v6260, %v6319
        %v6364 = vadd.f32 %v6261, %v6321
        %v6365 = vadd.f32 %v6262, %v6323
        %v6366 = vadd.f32 %v6263, %v6325
        %v6367 = vadd.f32 %v6264, %v6327
        %v6368 = vadd.f32 %v6265, %v6329
        %v6369 = vadd.f32 %v6266, %v6331
        %v6370 = vadd.f32 %v6267, %v6333
        %v6371 = vadd.f32 %v6268, %v6335
        %v6372 = vadd.f32 %v6269, %v6337
        %v6373 = vadd.f32 %v6270, %v6339
        %v6374 = vadd.f32 %v6271, %v6341
        %v6375 = vadd.f32 %v6272, %v6343
        %v6376 = vmul.f32 %v6279, %v5685
        %v6378 = vrot.slane %v6376, 5
        %v6380 = vadd.f32 %v6277, %v6378
        %s6381 = sld [smem:[#allocation8 + $0x6]]
        %v6382 = vstv %s6381
        %v6383 = vmul.f32 %v6382, %v5769
        %v6384 = vmul.f32 %v6382, %v5774
        %v6385 = vmul.f32 %v6382, %v5779
        %v6386 = vmul.f32 %v6382, %v5784
        %v6387 = vmul.f32 %v6382, %v5789
        %v6388 = vmul.f32 %v6382, %v5794
        %v6389 = vmul.f32 %v6382, %v5799
        %v6390 = vmul.f32 %v6382, %v5804
        %v6391 = vmul.f32 %v6382, %v5809
        %v6392 = vmul.f32 %v6382, %v5814
        %v6393 = vmul.f32 %v6382, %v5819
        %v6394 = vmul.f32 %v6382, %v5824
        %v6395 = vmul.f32 %v6382, %v5829
        %v6396 = vmul.f32 %v6382, %v5834
        %v6397 = vmul.f32 %v6382, %v5839
        %v6398 = vmul.f32 %v6382, %v5844
        %6415 = vrot.lane.b32.xlu0 %v6383, 122
        %v6416 = vpop.permute.xlu0 %6415
        %6417 = vrot.lane.b32.xlu0 %v6384, 122
        %v6418 = vpop.permute.xlu0 %6417
        %6419 = vrot.lane.b32.xlu0 %v6385, 122
        %v6420 = vpop.permute.xlu0 %6419
        %6421 = vrot.lane.b32.xlu0 %v6386, 122
        %v6422 = vpop.permute.xlu0 %6421
        %6423 = vrot.lane.b32.xlu0 %v6387, 122
        %v6424 = vpop.permute.xlu0 %6423
        %6425 = vrot.lane.b32.xlu0 %v6388, 122
        %v6426 = vpop.permute.xlu0 %6425
        %6427 = vrot.lane.b32.xlu0 %v6389, 122
        %v6428 = vpop.permute.xlu0 %6427
        %6429 = vrot.lane.b32.xlu0 %v6390, 122
        %v6430 = vpop.permute.xlu0 %6429
        %6431 = vrot.lane.b32.xlu0 %v6391, 122
        %v6432 = vpop.permute.xlu0 %6431
        %6433 = vrot.lane.b32.xlu0 %v6392, 122
        %v6434 = vpop.permute.xlu0 %6433
        %6435 = vrot.lane.b32.xlu0 %v6393, 122
        %v6436 = vpop.permute.xlu0 %6435
        %6437 = vrot.lane.b32.xlu0 %v6394, 122
        %v6438 = vpop.permute.xlu0 %6437
        %6439 = vrot.lane.b32.xlu0 %v6395, 122
        %v6440 = vpop.permute.xlu0 %6439
        %6441 = vrot.lane.b32.xlu0 %v6396, 122
        %v6442 = vpop.permute.xlu0 %6441
        %6443 = vrot.lane.b32.xlu0 %v6397, 122
        %v6444 = vpop.permute.xlu0 %6443
        %6445 = vrot.lane.b32.xlu0 %v6398, 122
        %v6446 = vpop.permute.xlu0 %6445
        %v6463 = vadd.f32 %v6360, %v6416
        %v6464 = vadd.f32 %v6361, %v6418
        %v6465 = vadd.f32 %v6362, %v6420
        %v6466 = vadd.f32 %v6363, %v6422
        %v6467 = vadd.f32 %v6364, %v6424
        %v6468 = vadd.f32 %v6365, %v6426
        %v6469 = vadd.f32 %v6366, %v6428
        %v6470 = vadd.f32 %v6367, %v6430
        %v6471 = vadd.f32 %v6368, %v6432
        %v6472 = vadd.f32 %v6369, %v6434
        %v6473 = vadd.f32 %v6370, %v6436
        %v6474 = vadd.f32 %v6371, %v6438
        %v6475 = vadd.f32 %v6372, %v6440
        %v6476 = vadd.f32 %v6373, %v6442
        %v6477 = vadd.f32 %v6374, %v6444
        %v6478 = vadd.f32 %v6375, %v6446
        %v6479 = vmul.f32 %v6382, %v5685
        %v6481 = vrot.slane %v6479, 6
        %v6483 = vadd.f32 %v6380, %v6481
        %s6484 = sld [smem:[#allocation8 + $0x7]]
        %v6485 = vstv %s6484
        %v6486 = vmul.f32 %v6485, %v5769
        %v6487 = vmul.f32 %v6485, %v5774
        %v6488 = vmul.f32 %v6485, %v5779
        %v6489 = vmul.f32 %v6485, %v5784
        %v6490 = vmul.f32 %v6485, %v5789
        %v6491 = vmul.f32 %v6485, %v5794
        %v6492 = vmul.f32 %v6485, %v5799
        %v6493 = vmul.f32 %v6485, %v5804
        %v6494 = vmul.f32 %v6485, %v5809
        %v6495 = vmul.f32 %v6485, %v5814
        %v6496 = vmul.f32 %v6485, %v5819
        %v6497 = vmul.f32 %v6485, %v5824
        %v6498 = vmul.f32 %v6485, %v5829
        %v6499 = vmul.f32 %v6485, %v5834
        %v6500 = vmul.f32 %v6485, %v5839
        %v6501 = vmul.f32 %v6485, %v5844
        %6518 = vrot.lane.b32.xlu0 %v6486, 121
        %v6519 = vpop.permute.xlu0 %6518
        %6520 = vrot.lane.b32.xlu0 %v6487, 121
        %v6521 = vpop.permute.xlu0 %6520
        %6522 = vrot.lane.b32.xlu0 %v6488, 121
        %v6523 = vpop.permute.xlu0 %6522
        %6524 = vrot.lane.b32.xlu0 %v6489, 121
        %v6525 = vpop.permute.xlu0 %6524
        %6526 = vrot.lane.b32.xlu0 %v6490, 121
        %v6527 = vpop.permute.xlu0 %6526
        %6528 = vrot.lane.b32.xlu0 %v6491, 121
        %v6529 = vpop.permute.xlu0 %6528
        %6530 = vrot.lane.b32.xlu0 %v6492, 121
        %v6531 = vpop.permute.xlu0 %6530
        %6532 = vrot.lane.b32.xlu0 %v6493, 121
        %v6533 = vpop.permute.xlu0 %6532
        %6534 = vrot.lane.b32.xlu0 %v6494, 121
        %v6535 = vpop.permute.xlu0 %6534
        %6536 = vrot.lane.b32.xlu0 %v6495, 121
        %v6537 = vpop.permute.xlu0 %6536
        %6538 = vrot.lane.b32.xlu0 %v6496, 121
        %v6539 = vpop.permute.xlu0 %6538
        %6540 = vrot.lane.b32.xlu0 %v6497, 121
        %v6541 = vpop.permute.xlu0 %6540
        %6542 = vrot.lane.b32.xlu0 %v6498, 121
        %v6543 = vpop.permute.xlu0 %6542
        %6544 = vrot.lane.b32.xlu0 %v6499, 121
        %v6545 = vpop.permute.xlu0 %6544
        %6546 = vrot.lane.b32.xlu0 %v6500, 121
        %v6547 = vpop.permute.xlu0 %6546
        %6548 = vrot.lane.b32.xlu0 %v6501, 121
        %v6549 = vpop.permute.xlu0 %6548
        %v6566 = vadd.f32 %v6463, %v6519
        %v6567 = vadd.f32 %v6464, %v6521
        %v6568 = vadd.f32 %v6465, %v6523
        %v6569 = vadd.f32 %v6466, %v6525
        %v6570 = vadd.f32 %v6467, %v6527
        %v6571 = vadd.f32 %v6468, %v6529
        %v6572 = vadd.f32 %v6469, %v6531
        %v6573 = vadd.f32 %v6470, %v6533
        %v6574 = vadd.f32 %v6471, %v6535
        %v6575 = vadd.f32 %v6472, %v6537
        %v6576 = vadd.f32 %v6473, %v6539
        %v6577 = vadd.f32 %v6474, %v6541
        %v6578 = vadd.f32 %v6475, %v6543
        %v6579 = vadd.f32 %v6476, %v6545
        %v6580 = vadd.f32 %v6477, %v6547
        %v6581 = vadd.f32 %v6478, %v6549
        %v6582 = vmul.f32 %v6485, %v5685
        %v6584 = vrot.slane %v6582, 7
        %v6586 = vadd.f32 %v6483, %v6584
        %6588 = vset.pattern.permute.xlu0 0
        %6589 = vperm.xlu0 %6588, %v6566
        %v6590 = vpop.permute.xlu0 %6589
        %6593 = vset.pattern.permute.xlu0 0
        %6594 = vperm.xlu0 %6593, %v6567
        %v6595 = vpop.permute.xlu0 %6594
        %6598 = vset.pattern.permute.xlu0 0
        %6599 = vperm.xlu0 %6598, %v6568
        %v6600 = vpop.permute.xlu0 %6599
        %6603 = vset.pattern.permute.xlu0 0
        %6604 = vperm.xlu0 %6603, %v6569
        %v6605 = vpop.permute.xlu0 %6604
        %6608 = vset.pattern.permute.xlu0 0
        %6609 = vperm.xlu0 %6608, %v6570
        %v6610 = vpop.permute.xlu0 %6609
        %6613 = vset.pattern.permute.xlu0 0
        %6614 = vperm.xlu0 %6613, %v6571
        %v6615 = vpop.permute.xlu0 %6614
        %6618 = vset.pattern.permute.xlu0 0
        %6619 = vperm.xlu0 %6618, %v6572
        %v6620 = vpop.permute.xlu0 %6619
        %6623 = vset.pattern.permute.xlu0 0
        %6624 = vperm.xlu0 %6623, %v6573
        %v6625 = vpop.permute.xlu0 %6624
        %6628 = vset.pattern.permute.xlu0 0
        %6629 = vperm.xlu0 %6628, %v6574
        %v6630 = vpop.permute.xlu0 %6629
        %6633 = vset.pattern.permute.xlu0 0
        %6634 = vperm.xlu0 %6633, %v6575
        %v6635 = vpop.permute.xlu0 %6634
        %6638 = vset.pattern.permute.xlu0 0
        %6639 = vperm.xlu0 %6638, %v6576
        %v6640 = vpop.permute.xlu0 %6639
        %6643 = vset.pattern.permute.xlu0 0
        %6644 = vperm.xlu0 %6643, %v6577
        %v6645 = vpop.permute.xlu0 %6644
        %6648 = vset.pattern.permute.xlu0 0
        %6649 = vperm.xlu0 %6648, %v6578
        %v6650 = vpop.permute.xlu0 %6649
        %6653 = vset.pattern.permute.xlu0 0
        %6654 = vperm.xlu0 %6653, %v6579
        %v6655 = vpop.permute.xlu0 %6654
        %6658 = vset.pattern.permute.xlu0 0
        %6659 = vperm.xlu0 %6658, %v6580
        %v6660 = vpop.permute.xlu0 %6659
        %6663 = vset.pattern.permute.xlu0 0
        %6664 = vperm.xlu0 %6663, %v6581
        %v6665 = vpop.permute.xlu0 %6664
        %v6667 = vadd.f32 %v588, %v6590
        %v6668 = vadd.f32 %v589, %v6595
        %v6669 = vadd.f32 %v590, %v6600
        %v6670 = vadd.f32 %v591, %v6605
        %v6671 = vadd.f32 %v592, %v6610
        %v6672 = vadd.f32 %v593, %v6615
        %v6673 = vadd.f32 %v594, %v6620
        %v6674 = vadd.f32 %v595, %v6625
        %v6675 = vadd.f32 %v596, %v6630
        %v6676 = vadd.f32 %v597, %v6635
        %v6677 = vadd.f32 %v598, %v6640
        %v6678 = vadd.f32 %v599, %v6645
        %v6679 = vadd.f32 %v600, %v6650
        %v6680 = vadd.f32 %v601, %v6655
        %v6681 = vadd.f32 %v602, %v6660
        %v6682 = vadd.f32 %v603, %v6665
        %v6683 = vlaneseq
        %v6684 = vshrl.u32 %v6683, 7
        %v6685 = vsub.s32 0, %v6684
        %v6686 = vrot.slane %v6586, %v6685
        %v6687 = vadd.f32 %v6667, %v6686
        %v6688 = vadd.f32 %v6668, %v6686
        %v6689 = vadd.f32 %v6669, %v6686
        %v6690 = vadd.f32 %v6670, %v6686
        %v6691 = vadd.f32 %v6671, %v6686
        %v6692 = vadd.f32 %v6672, %v6686
        %v6693 = vadd.f32 %v6673, %v6686
        %v6694 = vadd.f32 %v6674, %v6686
        %v6695 = vadd.f32 %v6675, %v6686
        %v6696 = vadd.f32 %v6676, %v6686
        %v6697 = vadd.f32 %v6677, %v6686
        %v6698 = vadd.f32 %v6678, %v6686
        %v6699 = vadd.f32 %v6679, %v6686
        %v6700 = vadd.f32 %v6680, %v6686
        %v6701 = vadd.f32 %v6681, %v6686
        %v6702 = vadd.f32 %v6682, %v6686
        %6704 = vset.pattern.permute.xlu0 0
        %6705 = vperm.xlu0 %6704, %v5769
        %v6706 = vpop.permute.xlu0 %6705
        %6709 = vset.pattern.permute.xlu0 0
        %6710 = vperm.xlu0 %6709, %v5774
        %v6711 = vpop.permute.xlu0 %6710
        %6714 = vset.pattern.permute.xlu0 0
        %6715 = vperm.xlu0 %6714, %v5779
        %v6716 = vpop.permute.xlu0 %6715
        %6719 = vset.pattern.permute.xlu0 0
        %6720 = vperm.xlu0 %6719, %v5784
        %v6721 = vpop.permute.xlu0 %6720
        %6724 = vset.pattern.permute.xlu0 0
        %6725 = vperm.xlu0 %6724, %v5789
        %v6726 = vpop.permute.xlu0 %6725
        %6729 = vset.pattern.permute.xlu0 0
        %6730 = vperm.xlu0 %6729, %v5794
        %v6731 = vpop.permute.xlu0 %6730
        %6734 = vset.pattern.permute.xlu0 0
        %6735 = vperm.xlu0 %6734, %v5799
        %v6736 = vpop.permute.xlu0 %6735
        %6739 = vset.pattern.permute.xlu0 0
        %6740 = vperm.xlu0 %6739, %v5804
        %v6741 = vpop.permute.xlu0 %6740
        %6744 = vset.pattern.permute.xlu0 0
        %6745 = vperm.xlu0 %6744, %v5809
        %v6746 = vpop.permute.xlu0 %6745
        %6749 = vset.pattern.permute.xlu0 0
        %6750 = vperm.xlu0 %6749, %v5814
        %v6751 = vpop.permute.xlu0 %6750
        %6754 = vset.pattern.permute.xlu0 0
        %6755 = vperm.xlu0 %6754, %v5819
        %v6756 = vpop.permute.xlu0 %6755
        %6759 = vset.pattern.permute.xlu0 0
        %6760 = vperm.xlu0 %6759, %v5824
        %v6761 = vpop.permute.xlu0 %6760
        %6764 = vset.pattern.permute.xlu0 0
        %6765 = vperm.xlu0 %6764, %v5829
        %v6766 = vpop.permute.xlu0 %6765
        %6769 = vset.pattern.permute.xlu0 0
        %6770 = vperm.xlu0 %6769, %v5834
        %v6771 = vpop.permute.xlu0 %6770
        %6774 = vset.pattern.permute.xlu0 0
        %6775 = vperm.xlu0 %6774, %v5839
        %v6776 = vpop.permute.xlu0 %6775
        %6779 = vset.pattern.permute.xlu0 0
        %6780 = vperm.xlu0 %6779, %v5844
        %v6781 = vpop.permute.xlu0 %6780
        %v6783 = vlaneseq
        %v6784 = vshrl.u32 %v6783, 7
        %v6785 = vsub.s32 0, %v6784
        %v6786 = vrot.slane %v5685, %v6785
        %v6787 = vadd.f32 %v6706, %v6786
        %v6788 = vadd.f32 %v6711, %v6786
        %v6789 = vadd.f32 %v6716, %v6786
        %v6790 = vadd.f32 %v6721, %v6786
        %v6791 = vadd.f32 %v6726, %v6786
        %v6792 = vadd.f32 %v6731, %v6786
        %v6793 = vadd.f32 %v6736, %v6786
        %v6794 = vadd.f32 %v6741, %v6786
        %v6795 = vadd.f32 %v6746, %v6786
        %v6796 = vadd.f32 %v6751, %v6786
        %v6797 = vadd.f32 %v6756, %v6786
        %v6798 = vadd.f32 %v6761, %v6786
        %v6799 = vadd.f32 %v6766, %v6786
        %v6800 = vadd.f32 %v6771, %v6786
        %v6801 = vadd.f32 %v6776, %v6786
        %v6802 = vadd.f32 %v6781, %v6786
        %s6803 = sld [smem:[#allocation9]]
        %v6804 = vand.u32 2147483647, %v6787
        %v6805 = vand.u32 2147483647, %v6788
        %v6806 = vand.u32 2147483647, %v6789
        %v6807 = vand.u32 2147483647, %v6790
        %v6808 = vand.u32 2147483647, %v6791
        %v6809 = vand.u32 2147483647, %v6792
        %v6810 = vand.u32 2147483647, %v6793
        %v6811 = vand.u32 2147483647, %v6794
        %v6812 = vand.u32 2147483647, %v6795
        %v6813 = vand.u32 2147483647, %v6796
        %v6814 = vand.u32 2147483647, %v6797
        %v6815 = vand.u32 2147483647, %v6798
        %v6816 = vand.u32 2147483647, %v6799
        %v6817 = vand.u32 2147483647, %v6800
        %v6818 = vand.u32 2147483647, %v6801
        %v6819 = vand.u32 2147483647, %v6802
        %v6820 = vstv %s6803
        %v6821 = vmul.f32 %v6820, %v6804
        %v6822 = vmul.f32 %v6820, %v6805
        %v6823 = vmul.f32 %v6820, %v6806
        %v6824 = vmul.f32 %v6820, %v6807
        %v6825 = vmul.f32 %v6820, %v6808
        %v6826 = vmul.f32 %v6820, %v6809
        %v6827 = vmul.f32 %v6820, %v6810
        %v6828 = vmul.f32 %v6820, %v6811
        %v6829 = vmul.f32 %v6820, %v6812
        %v6830 = vmul.f32 %v6820, %v6813
        %v6831 = vmul.f32 %v6820, %v6814
        %v6832 = vmul.f32 %v6820, %v6815
        %v6833 = vmul.f32 %v6820, %v6816
        %v6834 = vmul.f32 %v6820, %v6817
        %v6835 = vmul.f32 %v6820, %v6818
        %v6836 = vmul.f32 %v6820, %v6819
        %v6837 = vadd.f32 %v6687, %v6821
        %v6838 = vadd.f32 %v6688, %v6822
        %v6839 = vadd.f32 %v6689, %v6823
        %v6840 = vadd.f32 %v6690, %v6824
        %v6841 = vadd.f32 %v6691, %v6825
        %v6842 = vadd.f32 %v6692, %v6826
        %v6843 = vadd.f32 %v6693, %v6827
        %v6844 = vadd.f32 %v6694, %v6828
        %v6845 = vadd.f32 %v6695, %v6829
        %v6846 = vadd.f32 %v6696, %v6830
        %v6847 = vadd.f32 %v6697, %v6831
        %v6848 = vadd.f32 %v6698, %v6832
        %v6849 = vadd.f32 %v6699, %v6833
        %v6850 = vadd.f32 %v6700, %v6834
        %v6851 = vadd.f32 %v6701, %v6835
        %v6852 = vadd.f32 %v6702, %v6836
        %6853 = vset.pattern.permute.xlu0 1
        %6854 = vperm.xlu0 %6853, %v5769
        %v6855 = vpop.permute.xlu0 %6854
        %6857 = vset.pattern.permute.xlu0 1
        %6858 = vperm.xlu0 %6857, %v5774
        %v6859 = vpop.permute.xlu0 %6858
        %6861 = vset.pattern.permute.xlu0 1
        %6862 = vperm.xlu0 %6861, %v5779
        %v6863 = vpop.permute.xlu0 %6862
        %6865 = vset.pattern.permute.xlu0 1
        %6866 = vperm.xlu0 %6865, %v5784
        %v6867 = vpop.permute.xlu0 %6866
        %6869 = vset.pattern.permute.xlu0 1
        %6870 = vperm.xlu0 %6869, %v5789
        %v6871 = vpop.permute.xlu0 %6870
        %6873 = vset.pattern.permute.xlu0 1
        %6874 = vperm.xlu0 %6873, %v5794
        %v6875 = vpop.permute.xlu0 %6874
        %6877 = vset.pattern.permute.xlu0 1
        %6878 = vperm.xlu0 %6877, %v5799
        %v6879 = vpop.permute.xlu0 %6878
        %6881 = vset.pattern.permute.xlu0 1
        %6882 = vperm.xlu0 %6881, %v5804
        %v6883 = vpop.permute.xlu0 %6882
        %6885 = vset.pattern.permute.xlu0 1
        %6886 = vperm.xlu0 %6885, %v5809
        %v6887 = vpop.permute.xlu0 %6886
        %6889 = vset.pattern.permute.xlu0 1
        %6890 = vperm.xlu0 %6889, %v5814
        %v6891 = vpop.permute.xlu0 %6890
        %6893 = vset.pattern.permute.xlu0 1
        %6894 = vperm.xlu0 %6893, %v5819
        %v6895 = vpop.permute.xlu0 %6894
        %6897 = vset.pattern.permute.xlu0 1
        %6898 = vperm.xlu0 %6897, %v5824
        %v6899 = vpop.permute.xlu0 %6898
        %6901 = vset.pattern.permute.xlu0 1
        %6902 = vperm.xlu0 %6901, %v5829
        %v6903 = vpop.permute.xlu0 %6902
        %6905 = vset.pattern.permute.xlu0 1
        %6906 = vperm.xlu0 %6905, %v5834
        %v6907 = vpop.permute.xlu0 %6906
        %6909 = vset.pattern.permute.xlu0 1
        %6910 = vperm.xlu0 %6909, %v5839
        %v6911 = vpop.permute.xlu0 %6910
        %6913 = vset.pattern.permute.xlu0 1
        %6914 = vperm.xlu0 %6913, %v5844
        %v6915 = vpop.permute.xlu0 %6914
        %v6917 = vlaneseq
        %v6918 = vshrl.u32 %v6917, 7
        %v6919 = vsub.s32 1, %v6918
        %v6920 = vrot.slane %v5685, %v6919
        %v6921 = vadd.f32 %v6855, %v6920
        %v6922 = vadd.f32 %v6859, %v6920
        %v6923 = vadd.f32 %v6863, %v6920
        %v6924 = vadd.f32 %v6867, %v6920
        %v6925 = vadd.f32 %v6871, %v6920
        %v6926 = vadd.f32 %v6875, %v6920
        %v6927 = vadd.f32 %v6879, %v6920
        %v6928 = vadd.f32 %v6883, %v6920
        %v6929 = vadd.f32 %v6887, %v6920
        %v6930 = vadd.f32 %v6891, %v6920
        %v6931 = vadd.f32 %v6895, %v6920
        %v6932 = vadd.f32 %v6899, %v6920
        %v6933 = vadd.f32 %v6903, %v6920
        %v6934 = vadd.f32 %v6907, %v6920
        %v6935 = vadd.f32 %v6911, %v6920
        %v6936 = vadd.f32 %v6915, %v6920
        %s6937 = sld [smem:[#allocation9 + $0x1]]
        %v6938 = vand.u32 2147483647, %v6921
        %v6939 = vand.u32 2147483647, %v6922
        %v6940 = vand.u32 2147483647, %v6923
        %v6941 = vand.u32 2147483647, %v6924
        %v6942 = vand.u32 2147483647, %v6925
        %v6943 = vand.u32 2147483647, %v6926
        %v6944 = vand.u32 2147483647, %v6927
        %v6945 = vand.u32 2147483647, %v6928
        %v6946 = vand.u32 2147483647, %v6929
        %v6947 = vand.u32 2147483647, %v6930
        %v6948 = vand.u32 2147483647, %v6931
        %v6949 = vand.u32 2147483647, %v6932
        %v6950 = vand.u32 2147483647, %v6933
        %v6951 = vand.u32 2147483647, %v6934
        %v6952 = vand.u32 2147483647, %v6935
        %v6953 = vand.u32 2147483647, %v6936
        %v6954 = vstv %s6937
        %v6955 = vmul.f32 %v6954, %v6938
        %v6956 = vmul.f32 %v6954, %v6939
        %v6957 = vmul.f32 %v6954, %v6940
        %v6958 = vmul.f32 %v6954, %v6941
        %v6959 = vmul.f32 %v6954, %v6942
        %v6960 = vmul.f32 %v6954, %v6943
        %v6961 = vmul.f32 %v6954, %v6944
        %v6962 = vmul.f32 %v6954, %v6945
        %v6963 = vmul.f32 %v6954, %v6946
        %v6964 = vmul.f32 %v6954, %v6947
        %v6965 = vmul.f32 %v6954, %v6948
        %v6966 = vmul.f32 %v6954, %v6949
        %v6967 = vmul.f32 %v6954, %v6950
        %v6968 = vmul.f32 %v6954, %v6951
        %v6969 = vmul.f32 %v6954, %v6952
        %v6970 = vmul.f32 %v6954, %v6953
        %v6971 = vadd.f32 %v6837, %v6955
        %v6972 = vadd.f32 %v6838, %v6956
        %v6973 = vadd.f32 %v6839, %v6957
        %v6974 = vadd.f32 %v6840, %v6958
        %v6975 = vadd.f32 %v6841, %v6959
        %v6976 = vadd.f32 %v6842, %v6960
        %v6977 = vadd.f32 %v6843, %v6961
        %v6978 = vadd.f32 %v6844, %v6962
        %v6979 = vadd.f32 %v6845, %v6963
        %v6980 = vadd.f32 %v6846, %v6964
        %v6981 = vadd.f32 %v6847, %v6965
        %v6982 = vadd.f32 %v6848, %v6966
        %v6983 = vadd.f32 %v6849, %v6967
        %v6984 = vadd.f32 %v6850, %v6968
        %v6985 = vadd.f32 %v6851, %v6969
        %v6986 = vadd.f32 %v6852, %v6970
        %6987 = vset.pattern.permute.xlu0 2
        %6988 = vperm.xlu0 %6987, %v5769
        %v6989 = vpop.permute.xlu0 %6988
        %6991 = vset.pattern.permute.xlu0 2
        %6992 = vperm.xlu0 %6991, %v5774
        %v6993 = vpop.permute.xlu0 %6992
        %6995 = vset.pattern.permute.xlu0 2
        %6996 = vperm.xlu0 %6995, %v5779
        %v6997 = vpop.permute.xlu0 %6996
        %6999 = vset.pattern.permute.xlu0 2
        %7000 = vperm.xlu0 %6999, %v5784
        %v7001 = vpop.permute.xlu0 %7000
        %7003 = vset.pattern.permute.xlu0 2
        %7004 = vperm.xlu0 %7003, %v5789
        %v7005 = vpop.permute.xlu0 %7004
        %7007 = vset.pattern.permute.xlu0 2
        %7008 = vperm.xlu0 %7007, %v5794
        %v7009 = vpop.permute.xlu0 %7008
        %7011 = vset.pattern.permute.xlu0 2
        %7012 = vperm.xlu0 %7011, %v5799
        %v7013 = vpop.permute.xlu0 %7012
        %7015 = vset.pattern.permute.xlu0 2
        %7016 = vperm.xlu0 %7015, %v5804
        %v7017 = vpop.permute.xlu0 %7016
        %7019 = vset.pattern.permute.xlu0 2
        %7020 = vperm.xlu0 %7019, %v5809
        %v7021 = vpop.permute.xlu0 %7020
        %7023 = vset.pattern.permute.xlu0 2
        %7024 = vperm.xlu0 %7023, %v5814
        %v7025 = vpop.permute.xlu0 %7024
        %7027 = vset.pattern.permute.xlu0 2
        %7028 = vperm.xlu0 %7027, %v5819
        %v7029 = vpop.permute.xlu0 %7028
        %7031 = vset.pattern.permute.xlu0 2
        %7032 = vperm.xlu0 %7031, %v5824
        %v7033 = vpop.permute.xlu0 %7032
        %7035 = vset.pattern.permute.xlu0 2
        %7036 = vperm.xlu0 %7035, %v5829
        %v7037 = vpop.permute.xlu0 %7036
        %7039 = vset.pattern.permute.xlu0 2
        %7040 = vperm.xlu0 %7039, %v5834
        %v7041 = vpop.permute.xlu0 %7040
        %7043 = vset.pattern.permute.xlu0 2
        %7044 = vperm.xlu0 %7043, %v5839
        %v7045 = vpop.permute.xlu0 %7044
        %7047 = vset.pattern.permute.xlu0 2
        %7048 = vperm.xlu0 %7047, %v5844
        %v7049 = vpop.permute.xlu0 %7048
        %v7051 = vlaneseq
        %v7052 = vshrl.u32 %v7051, 7
        %v7053 = vsub.s32 2, %v7052
        %v7054 = vrot.slane %v5685, %v7053
        %v7055 = vadd.f32 %v6989, %v7054
        %v7056 = vadd.f32 %v6993, %v7054
        %v7057 = vadd.f32 %v6997, %v7054
        %v7058 = vadd.f32 %v7001, %v7054
        %v7059 = vadd.f32 %v7005, %v7054
        %v7060 = vadd.f32 %v7009, %v7054
        %v7061 = vadd.f32 %v7013, %v7054
        %v7062 = vadd.f32 %v7017, %v7054
        %v7063 = vadd.f32 %v7021, %v7054
        %v7064 = vadd.f32 %v7025, %v7054
        %v7065 = vadd.f32 %v7029, %v7054
        %v7066 = vadd.f32 %v7033, %v7054
        %v7067 = vadd.f32 %v7037, %v7054
        %v7068 = vadd.f32 %v7041, %v7054
        %v7069 = vadd.f32 %v7045, %v7054
        %v7070 = vadd.f32 %v7049, %v7054
        %s7071 = sld [smem:[#allocation9 + $0x2]]
        %v7072 = vand.u32 2147483647, %v7055
        %v7073 = vand.u32 2147483647, %v7056
        %v7074 = vand.u32 2147483647, %v7057
        %v7075 = vand.u32 2147483647, %v7058
        %v7076 = vand.u32 2147483647, %v7059
        %v7077 = vand.u32 2147483647, %v7060
        %v7078 = vand.u32 2147483647, %v7061
        %v7079 = vand.u32 2147483647, %v7062
        %v7080 = vand.u32 2147483647, %v7063
        %v7081 = vand.u32 2147483647, %v7064
        %v7082 = vand.u32 2147483647, %v7065
        %v7083 = vand.u32 2147483647, %v7066
        %v7084 = vand.u32 2147483647, %v7067
        %v7085 = vand.u32 2147483647, %v7068
        %v7086 = vand.u32 2147483647, %v7069
        %v7087 = vand.u32 2147483647, %v7070
        %v7088 = vstv %s7071
        %v7089 = vmul.f32 %v7088, %v7072
        %v7090 = vmul.f32 %v7088, %v7073
        %v7091 = vmul.f32 %v7088, %v7074
        %v7092 = vmul.f32 %v7088, %v7075
        %v7093 = vmul.f32 %v7088, %v7076
        %v7094 = vmul.f32 %v7088, %v7077
        %v7095 = vmul.f32 %v7088, %v7078
        %v7096 = vmul.f32 %v7088, %v7079
        %v7097 = vmul.f32 %v7088, %v7080
        %v7098 = vmul.f32 %v7088, %v7081
        %v7099 = vmul.f32 %v7088, %v7082
        %v7100 = vmul.f32 %v7088, %v7083
        %v7101 = vmul.f32 %v7088, %v7084
        %v7102 = vmul.f32 %v7088, %v7085
        %v7103 = vmul.f32 %v7088, %v7086
        %v7104 = vmul.f32 %v7088, %v7087
        %v7105 = vadd.f32 %v6971, %v7089
        %v7106 = vadd.f32 %v6972, %v7090
        %v7107 = vadd.f32 %v6973, %v7091
        %v7108 = vadd.f32 %v6974, %v7092
        %v7109 = vadd.f32 %v6975, %v7093
        %v7110 = vadd.f32 %v6976, %v7094
        %v7111 = vadd.f32 %v6977, %v7095
        %v7112 = vadd.f32 %v6978, %v7096
        %v7113 = vadd.f32 %v6979, %v7097
        %v7114 = vadd.f32 %v6980, %v7098
        %v7115 = vadd.f32 %v6981, %v7099
        %v7116 = vadd.f32 %v6982, %v7100
        %v7117 = vadd.f32 %v6983, %v7101
        %v7118 = vadd.f32 %v6984, %v7102
        %v7119 = vadd.f32 %v6985, %v7103
        %v7120 = vadd.f32 %v6986, %v7104
        %7121 = vset.pattern.permute.xlu0 3
        %7122 = vperm.xlu0 %7121, %v5769
        %v7123 = vpop.permute.xlu0 %7122
        %7125 = vset.pattern.permute.xlu0 3
        %7126 = vperm.xlu0 %7125, %v5774
        %v7127 = vpop.permute.xlu0 %7126
        %7129 = vset.pattern.permute.xlu0 3
        %7130 = vperm.xlu0 %7129, %v5779
        %v7131 = vpop.permute.xlu0 %7130
        %7133 = vset.pattern.permute.xlu0 3
        %7134 = vperm.xlu0 %7133, %v5784
        %v7135 = vpop.permute.xlu0 %7134
        %7137 = vset.pattern.permute.xlu0 3
        %7138 = vperm.xlu0 %7137, %v5789
        %v7139 = vpop.permute.xlu0 %7138
        %7141 = vset.pattern.permute.xlu0 3
        %7142 = vperm.xlu0 %7141, %v5794
        %v7143 = vpop.permute.xlu0 %7142
        %7145 = vset.pattern.permute.xlu0 3
        %7146 = vperm.xlu0 %7145, %v5799
        %v7147 = vpop.permute.xlu0 %7146
        %7149 = vset.pattern.permute.xlu0 3
        %7150 = vperm.xlu0 %7149, %v5804
        %v7151 = vpop.permute.xlu0 %7150
        %7153 = vset.pattern.permute.xlu0 3
        %7154 = vperm.xlu0 %7153, %v5809
        %v7155 = vpop.permute.xlu0 %7154
        %7157 = vset.pattern.permute.xlu0 3
        %7158 = vperm.xlu0 %7157, %v5814
        %v7159 = vpop.permute.xlu0 %7158
        %7161 = vset.pattern.permute.xlu0 3
        %7162 = vperm.xlu0 %7161, %v5819
        %v7163 = vpop.permute.xlu0 %7162
        %7165 = vset.pattern.permute.xlu0 3
        %7166 = vperm.xlu0 %7165, %v5824
        %v7167 = vpop.permute.xlu0 %7166
        %7169 = vset.pattern.permute.xlu0 3
        %7170 = vperm.xlu0 %7169, %v5829
        %v7171 = vpop.permute.xlu0 %7170
        %7173 = vset.pattern.permute.xlu0 3
        %7174 = vperm.xlu0 %7173, %v5834
        %v7175 = vpop.permute.xlu0 %7174
        %7177 = vset.pattern.permute.xlu0 3
        %7178 = vperm.xlu0 %7177, %v5839
        %v7179 = vpop.permute.xlu0 %7178
        %7181 = vset.pattern.permute.xlu0 3
        %7182 = vperm.xlu0 %7181, %v5844
        %v7183 = vpop.permute.xlu0 %7182
        %v7185 = vlaneseq
        %v7186 = vshrl.u32 %v7185, 7
        %v7187 = vsub.s32 3, %v7186
        %v7188 = vrot.slane %v5685, %v7187
        %v7189 = vadd.f32 %v7123, %v7188
        %v7190 = vadd.f32 %v7127, %v7188
        %v7191 = vadd.f32 %v7131, %v7188
        %v7192 = vadd.f32 %v7135, %v7188
        %v7193 = vadd.f32 %v7139, %v7188
        %v7194 = vadd.f32 %v7143, %v7188
        %v7195 = vadd.f32 %v7147, %v7188
        %v7196 = vadd.f32 %v7151, %v7188
        %v7197 = vadd.f32 %v7155, %v7188
        %v7198 = vadd.f32 %v7159, %v7188
        %v7199 = vadd.f32 %v7163, %v7188
        %v7200 = vadd.f32 %v7167, %v7188
        %v7201 = vadd.f32 %v7171, %v7188
        %v7202 = vadd.f32 %v7175, %v7188
        %v7203 = vadd.f32 %v7179, %v7188
        %v7204 = vadd.f32 %v7183, %v7188
        %s7205 = sld [smem:[#allocation9 + $0x3]]
        %v7206 = vand.u32 2147483647, %v7189
        %v7207 = vand.u32 2147483647, %v7190
        %v7208 = vand.u32 2147483647, %v7191
        %v7209 = vand.u32 2147483647, %v7192
        %v7210 = vand.u32 2147483647, %v7193
        %v7211 = vand.u32 2147483647, %v7194
        %v7212 = vand.u32 2147483647, %v7195
        %v7213 = vand.u32 2147483647, %v7196
        %v7214 = vand.u32 2147483647, %v7197
        %v7215 = vand.u32 2147483647, %v7198
        %v7216 = vand.u32 2147483647, %v7199
        %v7217 = vand.u32 2147483647, %v7200
        %v7218 = vand.u32 2147483647, %v7201
        %v7219 = vand.u32 2147483647, %v7202
        %v7220 = vand.u32 2147483647, %v7203
        %v7221 = vand.u32 2147483647, %v7204
        %v7222 = vstv %s7205
        %v7223 = vmul.f32 %v7222, %v7206
        %v7224 = vmul.f32 %v7222, %v7207
        %v7225 = vmul.f32 %v7222, %v7208
        %v7226 = vmul.f32 %v7222, %v7209
        %v7227 = vmul.f32 %v7222, %v7210
        %v7228 = vmul.f32 %v7222, %v7211
        %v7229 = vmul.f32 %v7222, %v7212
        %v7230 = vmul.f32 %v7222, %v7213
        %v7231 = vmul.f32 %v7222, %v7214
        %v7232 = vmul.f32 %v7222, %v7215
        %v7233 = vmul.f32 %v7222, %v7216
        %v7234 = vmul.f32 %v7222, %v7217
        %v7235 = vmul.f32 %v7222, %v7218
        %v7236 = vmul.f32 %v7222, %v7219
        %v7237 = vmul.f32 %v7222, %v7220
        %v7238 = vmul.f32 %v7222, %v7221
        %v7239 = vadd.f32 %v7105, %v7223
        %v7240 = vadd.f32 %v7106, %v7224
        %v7241 = vadd.f32 %v7107, %v7225
        %v7242 = vadd.f32 %v7108, %v7226
        %v7243 = vadd.f32 %v7109, %v7227
        %v7244 = vadd.f32 %v7110, %v7228
        %v7245 = vadd.f32 %v7111, %v7229
        %v7246 = vadd.f32 %v7112, %v7230
        %v7247 = vadd.f32 %v7113, %v7231
        %v7248 = vadd.f32 %v7114, %v7232
        %v7249 = vadd.f32 %v7115, %v7233
        %v7250 = vadd.f32 %v7116, %v7234
        %v7251 = vadd.f32 %v7117, %v7235
        %v7252 = vadd.f32 %v7118, %v7236
        %v7253 = vadd.f32 %v7119, %v7237
        %v7254 = vadd.f32 %v7120, %v7238
        %7255 = vset.pattern.permute.xlu0 4
        %7256 = vperm.xlu0 %7255, %v5769
        %v7257 = vpop.permute.xlu0 %7256
        %7259 = vset.pattern.permute.xlu0 4
        %7260 = vperm.xlu0 %7259, %v5774
        %v7261 = vpop.permute.xlu0 %7260
        %7263 = vset.pattern.permute.xlu0 4
        %7264 = vperm.xlu0 %7263, %v5779
        %v7265 = vpop.permute.xlu0 %7264
        %7267 = vset.pattern.permute.xlu0 4
        %7268 = vperm.xlu0 %7267, %v5784
        %v7269 = vpop.permute.xlu0 %7268
        %7271 = vset.pattern.permute.xlu0 4
        %7272 = vperm.xlu0 %7271, %v5789
        %v7273 = vpop.permute.xlu0 %7272
        %7275 = vset.pattern.permute.xlu0 4
        %7276 = vperm.xlu0 %7275, %v5794
        %v7277 = vpop.permute.xlu0 %7276
        %7279 = vset.pattern.permute.xlu0 4
        %7280 = vperm.xlu0 %7279, %v5799
        %v7281 = vpop.permute.xlu0 %7280
        %7283 = vset.pattern.permute.xlu0 4
        %7284 = vperm.xlu0 %7283, %v5804
        %v7285 = vpop.permute.xlu0 %7284
        %7287 = vset.pattern.permute.xlu0 4
        %7288 = vperm.xlu0 %7287, %v5809
        %v7289 = vpop.permute.xlu0 %7288
        %7291 = vset.pattern.permute.xlu0 4
        %7292 = vperm.xlu0 %7291, %v5814
        %v7293 = vpop.permute.xlu0 %7292
        %7295 = vset.pattern.permute.xlu0 4
        %7296 = vperm.xlu0 %7295, %v5819
        %v7297 = vpop.permute.xlu0 %7296
        %7299 = vset.pattern.permute.xlu0 4
        %7300 = vperm.xlu0 %7299, %v5824
        %v7301 = vpop.permute.xlu0 %7300
        %7303 = vset.pattern.permute.xlu0 4
        %7304 = vperm.xlu0 %7303, %v5829
        %v7305 = vpop.permute.xlu0 %7304
        %7307 = vset.pattern.permute.xlu0 4
        %7308 = vperm.xlu0 %7307, %v5834
        %v7309 = vpop.permute.xlu0 %7308
        %7311 = vset.pattern.permute.xlu0 4
        %7312 = vperm.xlu0 %7311, %v5839
        %v7313 = vpop.permute.xlu0 %7312
        %7315 = vset.pattern.permute.xlu0 4
        %7316 = vperm.xlu0 %7315, %v5844
        %v7317 = vpop.permute.xlu0 %7316
        %v7319 = vlaneseq
        %v7320 = vshrl.u32 %v7319, 7
        %v7321 = vsub.s32 4, %v7320
        %v7322 = vrot.slane %v5685, %v7321
        %v7323 = vadd.f32 %v7257, %v7322
        %v7324 = vadd.f32 %v7261, %v7322
        %v7325 = vadd.f32 %v7265, %v7322
        %v7326 = vadd.f32 %v7269, %v7322
        %v7327 = vadd.f32 %v7273, %v7322
        %v7328 = vadd.f32 %v7277, %v7322
        %v7329 = vadd.f32 %v7281, %v7322
        %v7330 = vadd.f32 %v7285, %v7322
        %v7331 = vadd.f32 %v7289, %v7322
        %v7332 = vadd.f32 %v7293, %v7322
        %v7333 = vadd.f32 %v7297, %v7322
        %v7334 = vadd.f32 %v7301, %v7322
        %v7335 = vadd.f32 %v7305, %v7322
        %v7336 = vadd.f32 %v7309, %v7322
        %v7337 = vadd.f32 %v7313, %v7322
        %v7338 = vadd.f32 %v7317, %v7322
        %s7339 = sld [smem:[#allocation9 + $0x4]]
        %v7340 = vand.u32 2147483647, %v7323
        %v7341 = vand.u32 2147483647, %v7324
        %v7342 = vand.u32 2147483647, %v7325
        %v7343 = vand.u32 2147483647, %v7326
        %v7344 = vand.u32 2147483647, %v7327
        %v7345 = vand.u32 2147483647, %v7328
        %v7346 = vand.u32 2147483647, %v7329
        %v7347 = vand.u32 2147483647, %v7330
        %v7348 = vand.u32 2147483647, %v7331
        %v7349 = vand.u32 2147483647, %v7332
        %v7350 = vand.u32 2147483647, %v7333
        %v7351 = vand.u32 2147483647, %v7334
        %v7352 = vand.u32 2147483647, %v7335
        %v7353 = vand.u32 2147483647, %v7336
        %v7354 = vand.u32 2147483647, %v7337
        %v7355 = vand.u32 2147483647, %v7338
        %v7356 = vstv %s7339
        %v7357 = vmul.f32 %v7356, %v7340
        %v7358 = vmul.f32 %v7356, %v7341
        %v7359 = vmul.f32 %v7356, %v7342
        %v7360 = vmul.f32 %v7356, %v7343
        %v7361 = vmul.f32 %v7356, %v7344
        %v7362 = vmul.f32 %v7356, %v7345
        %v7363 = vmul.f32 %v7356, %v7346
        %v7364 = vmul.f32 %v7356, %v7347
        %v7365 = vmul.f32 %v7356, %v7348
        %v7366 = vmul.f32 %v7356, %v7349
        %v7367 = vmul.f32 %v7356, %v7350
        %v7368 = vmul.f32 %v7356, %v7351
        %v7369 = vmul.f32 %v7356, %v7352
        %v7370 = vmul.f32 %v7356, %v7353
        %v7371 = vmul.f32 %v7356, %v7354
        %v7372 = vmul.f32 %v7356, %v7355
        %v7373 = vadd.f32 %v7239, %v7357
        %v7374 = vadd.f32 %v7240, %v7358
        %v7375 = vadd.f32 %v7241, %v7359
        %v7376 = vadd.f32 %v7242, %v7360
        %v7377 = vadd.f32 %v7243, %v7361
        %v7378 = vadd.f32 %v7244, %v7362
        %v7379 = vadd.f32 %v7245, %v7363
        %v7380 = vadd.f32 %v7246, %v7364
        %v7381 = vadd.f32 %v7247, %v7365
        %v7382 = vadd.f32 %v7248, %v7366
        %v7383 = vadd.f32 %v7249, %v7367
        %v7384 = vadd.f32 %v7250, %v7368
        %v7385 = vadd.f32 %v7251, %v7369
        %v7386 = vadd.f32 %v7252, %v7370
        %v7387 = vadd.f32 %v7253, %v7371
        %v7388 = vadd.f32 %v7254, %v7372
        %7389 = vset.pattern.permute.xlu0 5
        %7390 = vperm.xlu0 %7389, %v5769
        %v7391 = vpop.permute.xlu0 %7390
        %7393 = vset.pattern.permute.xlu0 5
        %7394 = vperm.xlu0 %7393, %v5774
        %v7395 = vpop.permute.xlu0 %7394
        %7397 = vset.pattern.permute.xlu0 5
        %7398 = vperm.xlu0 %7397, %v5779
        %v7399 = vpop.permute.xlu0 %7398
        %7401 = vset.pattern.permute.xlu0 5
        %7402 = vperm.xlu0 %7401, %v5784
        %v7403 = vpop.permute.xlu0 %7402
        %7405 = vset.pattern.permute.xlu0 5
        %7406 = vperm.xlu0 %7405, %v5789
        %v7407 = vpop.permute.xlu0 %7406
        %7409 = vset.pattern.permute.xlu0 5
        %7410 = vperm.xlu0 %7409, %v5794
        %v7411 = vpop.permute.xlu0 %7410
        %7413 = vset.pattern.permute.xlu0 5
        %7414 = vperm.xlu0 %7413, %v5799
        %v7415 = vpop.permute.xlu0 %7414
        %7417 = vset.pattern.permute.xlu0 5
        %7418 = vperm.xlu0 %7417, %v5804
        %v7419 = vpop.permute.xlu0 %7418
        %7421 = vset.pattern.permute.xlu0 5
        %7422 = vperm.xlu0 %7421, %v5809
        %v7423 = vpop.permute.xlu0 %7422
        %7425 = vset.pattern.permute.xlu0 5
        %7426 = vperm.xlu0 %7425, %v5814
        %v7427 = vpop.permute.xlu0 %7426
        %7429 = vset.pattern.permute.xlu0 5
        %7430 = vperm.xlu0 %7429, %v5819
        %v7431 = vpop.permute.xlu0 %7430
        %7433 = vset.pattern.permute.xlu0 5
        %7434 = vperm.xlu0 %7433, %v5824
        %v7435 = vpop.permute.xlu0 %7434
        %7437 = vset.pattern.permute.xlu0 5
        %7438 = vperm.xlu0 %7437, %v5829
        %v7439 = vpop.permute.xlu0 %7438
        %7441 = vset.pattern.permute.xlu0 5
        %7442 = vperm.xlu0 %7441, %v5834
        %v7443 = vpop.permute.xlu0 %7442
        %7445 = vset.pattern.permute.xlu0 5
        %7446 = vperm.xlu0 %7445, %v5839
        %v7447 = vpop.permute.xlu0 %7446
        %7449 = vset.pattern.permute.xlu0 5
        %7450 = vperm.xlu0 %7449, %v5844
        %v7451 = vpop.permute.xlu0 %7450
        %v7453 = vlaneseq
        %v7454 = vshrl.u32 %v7453, 7
        %v7455 = vsub.s32 5, %v7454
        %v7456 = vrot.slane %v5685, %v7455
        %v7457 = vadd.f32 %v7391, %v7456
        %v7458 = vadd.f32 %v7395, %v7456
        %v7459 = vadd.f32 %v7399, %v7456
        %v7460 = vadd.f32 %v7403, %v7456
        %v7461 = vadd.f32 %v7407, %v7456
        %v7462 = vadd.f32 %v7411, %v7456
        %v7463 = vadd.f32 %v7415, %v7456
        %v7464 = vadd.f32 %v7419, %v7456
        %v7465 = vadd.f32 %v7423, %v7456
        %v7466 = vadd.f32 %v7427, %v7456
        %v7467 = vadd.f32 %v7431, %v7456
        %v7468 = vadd.f32 %v7435, %v7456
        %v7469 = vadd.f32 %v7439, %v7456
        %v7470 = vadd.f32 %v7443, %v7456
        %v7471 = vadd.f32 %v7447, %v7456
        %v7472 = vadd.f32 %v7451, %v7456
        %s7473 = sld [smem:[#allocation9 + $0x5]]
        %v7474 = vand.u32 2147483647, %v7457
        %v7475 = vand.u32 2147483647, %v7458
        %v7476 = vand.u32 2147483647, %v7459
        %v7477 = vand.u32 2147483647, %v7460
        %v7478 = vand.u32 2147483647, %v7461
        %v7479 = vand.u32 2147483647, %v7462
        %v7480 = vand.u32 2147483647, %v7463
        %v7481 = vand.u32 2147483647, %v7464
        %v7482 = vand.u32 2147483647, %v7465
        %v7483 = vand.u32 2147483647, %v7466
        %v7484 = vand.u32 2147483647, %v7467
        %v7485 = vand.u32 2147483647, %v7468
        %v7486 = vand.u32 2147483647, %v7469
        %v7487 = vand.u32 2147483647, %v7470
        %v7488 = vand.u32 2147483647, %v7471
        %v7489 = vand.u32 2147483647, %v7472
        %v7490 = vstv %s7473
        %v7491 = vmul.f32 %v7490, %v7474
        %v7492 = vmul.f32 %v7490, %v7475
        %v7493 = vmul.f32 %v7490, %v7476
        %v7494 = vmul.f32 %v7490, %v7477
        %v7495 = vmul.f32 %v7490, %v7478
        %v7496 = vmul.f32 %v7490, %v7479
        %v7497 = vmul.f32 %v7490, %v7480
        %v7498 = vmul.f32 %v7490, %v7481
        %v7499 = vmul.f32 %v7490, %v7482
        %v7500 = vmul.f32 %v7490, %v7483
        %v7501 = vmul.f32 %v7490, %v7484
        %v7502 = vmul.f32 %v7490, %v7485
        %v7503 = vmul.f32 %v7490, %v7486
        %v7504 = vmul.f32 %v7490, %v7487
        %v7505 = vmul.f32 %v7490, %v7488
        %v7506 = vmul.f32 %v7490, %v7489
        %v7507 = vadd.f32 %v7373, %v7491
        %v7508 = vadd.f32 %v7374, %v7492
        %v7509 = vadd.f32 %v7375, %v7493
        %v7510 = vadd.f32 %v7376, %v7494
        %v7511 = vadd.f32 %v7377, %v7495
        %v7512 = vadd.f32 %v7378, %v7496
        %v7513 = vadd.f32 %v7379, %v7497
        %v7514 = vadd.f32 %v7380, %v7498
        %v7515 = vadd.f32 %v7381, %v7499
        %v7516 = vadd.f32 %v7382, %v7500
        %v7517 = vadd.f32 %v7383, %v7501
        %v7518 = vadd.f32 %v7384, %v7502
        %v7519 = vadd.f32 %v7385, %v7503
        %v7520 = vadd.f32 %v7386, %v7504
        %v7521 = vadd.f32 %v7387, %v7505
        %v7522 = vadd.f32 %v7388, %v7506
        %7523 = vset.pattern.permute.xlu0 6
        %7524 = vperm.xlu0 %7523, %v5769
        %v7525 = vpop.permute.xlu0 %7524
        %7527 = vset.pattern.permute.xlu0 6
        %7528 = vperm.xlu0 %7527, %v5774
        %v7529 = vpop.permute.xlu0 %7528
        %7531 = vset.pattern.permute.xlu0 6
        %7532 = vperm.xlu0 %7531, %v5779
        %v7533 = vpop.permute.xlu0 %7532
        %7535 = vset.pattern.permute.xlu0 6
        %7536 = vperm.xlu0 %7535, %v5784
        %v7537 = vpop.permute.xlu0 %7536
        %7539 = vset.pattern.permute.xlu0 6
        %7540 = vperm.xlu0 %7539, %v5789
        %v7541 = vpop.permute.xlu0 %7540
        %7543 = vset.pattern.permute.xlu0 6
        %7544 = vperm.xlu0 %7543, %v5794
        %v7545 = vpop.permute.xlu0 %7544
        %7547 = vset.pattern.permute.xlu0 6
        %7548 = vperm.xlu0 %7547, %v5799
        %v7549 = vpop.permute.xlu0 %7548
        %7551 = vset.pattern.permute.xlu0 6
        %7552 = vperm.xlu0 %7551, %v5804
        %v7553 = vpop.permute.xlu0 %7552
        %7555 = vset.pattern.permute.xlu0 6
        %7556 = vperm.xlu0 %7555, %v5809
        %v7557 = vpop.permute.xlu0 %7556
        %7559 = vset.pattern.permute.xlu0 6
        %7560 = vperm.xlu0 %7559, %v5814
        %v7561 = vpop.permute.xlu0 %7560
        %7563 = vset.pattern.permute.xlu0 6
        %7564 = vperm.xlu0 %7563, %v5819
        %v7565 = vpop.permute.xlu0 %7564
        %7567 = vset.pattern.permute.xlu0 6
        %7568 = vperm.xlu0 %7567, %v5824
        %v7569 = vpop.permute.xlu0 %7568
        %7571 = vset.pattern.permute.xlu0 6
        %7572 = vperm.xlu0 %7571, %v5829
        %v7573 = vpop.permute.xlu0 %7572
        %7575 = vset.pattern.permute.xlu0 6
        %7576 = vperm.xlu0 %7575, %v5834
        %v7577 = vpop.permute.xlu0 %7576
        %7579 = vset.pattern.permute.xlu0 6
        %7580 = vperm.xlu0 %7579, %v5839
        %v7581 = vpop.permute.xlu0 %7580
        %7583 = vset.pattern.permute.xlu0 6
        %7584 = vperm.xlu0 %7583, %v5844
        %v7585 = vpop.permute.xlu0 %7584
        %v7587 = vlaneseq
        %v7588 = vshrl.u32 %v7587, 7
        %v7589 = vsub.s32 6, %v7588
        %v7590 = vrot.slane %v5685, %v7589
        %v7591 = vadd.f32 %v7525, %v7590
        %v7592 = vadd.f32 %v7529, %v7590
        %v7593 = vadd.f32 %v7533, %v7590
        %v7594 = vadd.f32 %v7537, %v7590
        %v7595 = vadd.f32 %v7541, %v7590
        %v7596 = vadd.f32 %v7545, %v7590
        %v7597 = vadd.f32 %v7549, %v7590
        %v7598 = vadd.f32 %v7553, %v7590
        %v7599 = vadd.f32 %v7557, %v7590
        %v7600 = vadd.f32 %v7561, %v7590
        %v7601 = vadd.f32 %v7565, %v7590
        %v7602 = vadd.f32 %v7569, %v7590
        %v7603 = vadd.f32 %v7573, %v7590
        %v7604 = vadd.f32 %v7577, %v7590
        %v7605 = vadd.f32 %v7581, %v7590
        %v7606 = vadd.f32 %v7585, %v7590
        %s7607 = sld [smem:[#allocation9 + $0x6]]
        %v7608 = vand.u32 2147483647, %v7591
        %v7609 = vand.u32 2147483647, %v7592
        %v7610 = vand.u32 2147483647, %v7593
        %v7611 = vand.u32 2147483647, %v7594
        %v7612 = vand.u32 2147483647, %v7595
        %v7613 = vand.u32 2147483647, %v7596
        %v7614 = vand.u32 2147483647, %v7597
        %v7615 = vand.u32 2147483647, %v7598
        %v7616 = vand.u32 2147483647, %v7599
        %v7617 = vand.u32 2147483647, %v7600
        %v7618 = vand.u32 2147483647, %v7601
        %v7619 = vand.u32 2147483647, %v7602
        %v7620 = vand.u32 2147483647, %v7603
        %v7621 = vand.u32 2147483647, %v7604
        %v7622 = vand.u32 2147483647, %v7605
        %v7623 = vand.u32 2147483647, %v7606
        %v7624 = vstv %s7607
        %v7625 = vmul.f32 %v7624, %v7608
        %v7626 = vmul.f32 %v7624, %v7609
        %v7627 = vmul.f32 %v7624, %v7610
        %v7628 = vmul.f32 %v7624, %v7611
        %v7629 = vmul.f32 %v7624, %v7612
        %v7630 = vmul.f32 %v7624, %v7613
        %v7631 = vmul.f32 %v7624, %v7614
        %v7632 = vmul.f32 %v7624, %v7615
        %v7633 = vmul.f32 %v7624, %v7616
        %v7634 = vmul.f32 %v7624, %v7617
        %v7635 = vmul.f32 %v7624, %v7618
        %v7636 = vmul.f32 %v7624, %v7619
        %v7637 = vmul.f32 %v7624, %v7620
        %v7638 = vmul.f32 %v7624, %v7621
        %v7639 = vmul.f32 %v7624, %v7622
        %v7640 = vmul.f32 %v7624, %v7623
        %v7641 = vadd.f32 %v7507, %v7625
        %v7642 = vadd.f32 %v7508, %v7626
        %v7643 = vadd.f32 %v7509, %v7627
        %v7644 = vadd.f32 %v7510, %v7628
        %v7645 = vadd.f32 %v7511, %v7629
        %v7646 = vadd.f32 %v7512, %v7630
        %v7647 = vadd.f32 %v7513, %v7631
        %v7648 = vadd.f32 %v7514, %v7632
        %v7649 = vadd.f32 %v7515, %v7633
        %v7650 = vadd.f32 %v7516, %v7634
        %v7651 = vadd.f32 %v7517, %v7635
        %v7652 = vadd.f32 %v7518, %v7636
        %v7653 = vadd.f32 %v7519, %v7637
        %v7654 = vadd.f32 %v7520, %v7638
        %v7655 = vadd.f32 %v7521, %v7639
        %v7656 = vadd.f32 %v7522, %v7640
        %7657 = vset.pattern.permute.xlu0 7
        %7658 = vperm.xlu0 %7657, %v5769
        %v7659 = vpop.permute.xlu0 %7658
        %7661 = vset.pattern.permute.xlu0 7
        %7662 = vperm.xlu0 %7661, %v5774
        %v7663 = vpop.permute.xlu0 %7662
        %7665 = vset.pattern.permute.xlu0 7
        %7666 = vperm.xlu0 %7665, %v5779
        %v7667 = vpop.permute.xlu0 %7666
        %7669 = vset.pattern.permute.xlu0 7
        %7670 = vperm.xlu0 %7669, %v5784
        %v7671 = vpop.permute.xlu0 %7670
        %7673 = vset.pattern.permute.xlu0 7
        %7674 = vperm.xlu0 %7673, %v5789
        %v7675 = vpop.permute.xlu0 %7674
        %7677 = vset.pattern.permute.xlu0 7
        %7678 = vperm.xlu0 %7677, %v5794
        %v7679 = vpop.permute.xlu0 %7678
        %7681 = vset.pattern.permute.xlu0 7
        %7682 = vperm.xlu0 %7681, %v5799
        %v7683 = vpop.permute.xlu0 %7682
        %7685 = vset.pattern.permute.xlu0 7
        %7686 = vperm.xlu0 %7685, %v5804
        %v7687 = vpop.permute.xlu0 %7686
        %7689 = vset.pattern.permute.xlu0 7
        %7690 = vperm.xlu0 %7689, %v5809
        %v7691 = vpop.permute.xlu0 %7690
        %7693 = vset.pattern.permute.xlu0 7
        %7694 = vperm.xlu0 %7693, %v5814
        %v7695 = vpop.permute.xlu0 %7694
        %7697 = vset.pattern.permute.xlu0 7
        %7698 = vperm.xlu0 %7697, %v5819
        %v7699 = vpop.permute.xlu0 %7698
        %7701 = vset.pattern.permute.xlu0 7
        %7702 = vperm.xlu0 %7701, %v5824
        %v7703 = vpop.permute.xlu0 %7702
        %7705 = vset.pattern.permute.xlu0 7
        %7706 = vperm.xlu0 %7705, %v5829
        %v7707 = vpop.permute.xlu0 %7706
        %7709 = vset.pattern.permute.xlu0 7
        %7710 = vperm.xlu0 %7709, %v5834
        %v7711 = vpop.permute.xlu0 %7710
        %7713 = vset.pattern.permute.xlu0 7
        %7714 = vperm.xlu0 %7713, %v5839
        %v7715 = vpop.permute.xlu0 %7714
        %7717 = vset.pattern.permute.xlu0 7
        %7718 = vperm.xlu0 %7717, %v5844
        %v7719 = vpop.permute.xlu0 %7718
        %v7721 = vlaneseq
        %v7722 = vshrl.u32 %v7721, 7
        %v7723 = vsub.s32 7, %v7722
        %v7724 = vrot.slane %v5685, %v7723
        %v7725 = vadd.f32 %v7659, %v7724
        %v7726 = vadd.f32 %v7663, %v7724
        %v7727 = vadd.f32 %v7667, %v7724
        %v7728 = vadd.f32 %v7671, %v7724
        %v7729 = vadd.f32 %v7675, %v7724
        %v7730 = vadd.f32 %v7679, %v7724
        %v7731 = vadd.f32 %v7683, %v7724
        %v7732 = vadd.f32 %v7687, %v7724
        %v7733 = vadd.f32 %v7691, %v7724
        %v7734 = vadd.f32 %v7695, %v7724
        %v7735 = vadd.f32 %v7699, %v7724
        %v7736 = vadd.f32 %v7703, %v7724
        %v7737 = vadd.f32 %v7707, %v7724
        %v7738 = vadd.f32 %v7711, %v7724
        %v7739 = vadd.f32 %v7715, %v7724
        %v7740 = vadd.f32 %v7719, %v7724
        %s7741 = sld [smem:[#allocation9 + $0x7]]
        %v7742 = vand.u32 2147483647, %v7725
        %v7743 = vand.u32 2147483647, %v7726
        %v7744 = vand.u32 2147483647, %v7727
        %v7745 = vand.u32 2147483647, %v7728
        %v7746 = vand.u32 2147483647, %v7729
        %v7747 = vand.u32 2147483647, %v7730
        %v7748 = vand.u32 2147483647, %v7731
        %v7749 = vand.u32 2147483647, %v7732
        %v7750 = vand.u32 2147483647, %v7733
        %v7751 = vand.u32 2147483647, %v7734
        %v7752 = vand.u32 2147483647, %v7735
        %v7753 = vand.u32 2147483647, %v7736
        %v7754 = vand.u32 2147483647, %v7737
        %v7755 = vand.u32 2147483647, %v7738
        %v7756 = vand.u32 2147483647, %v7739
        %v7757 = vand.u32 2147483647, %v7740
        %v7758 = vstv %s7741
        %v7759 = vmul.f32 %v7758, %v7742
        %v7760 = vmul.f32 %v7758, %v7743
        %v7761 = vmul.f32 %v7758, %v7744
        %v7762 = vmul.f32 %v7758, %v7745
        %v7763 = vmul.f32 %v7758, %v7746
        %v7764 = vmul.f32 %v7758, %v7747
        %v7765 = vmul.f32 %v7758, %v7748
        %v7766 = vmul.f32 %v7758, %v7749
        %v7767 = vmul.f32 %v7758, %v7750
        %v7768 = vmul.f32 %v7758, %v7751
        %v7769 = vmul.f32 %v7758, %v7752
        %v7770 = vmul.f32 %v7758, %v7753
        %v7771 = vmul.f32 %v7758, %v7754
        %v7772 = vmul.f32 %v7758, %v7755
        %v7773 = vmul.f32 %v7758, %v7756
        %v7774 = vmul.f32 %v7758, %v7757
        %v7775 = vadd.f32 %v7641, %v7759
        %v7776 = vadd.f32 %v7642, %v7760
        %v7777 = vadd.f32 %v7643, %v7761
        %v7778 = vadd.f32 %v7644, %v7762
        %v7779 = vadd.f32 %v7645, %v7763
        %v7780 = vadd.f32 %v7646, %v7764
        %v7781 = vadd.f32 %v7647, %v7765
        %v7782 = vadd.f32 %v7648, %v7766
        %v7783 = vadd.f32 %v7649, %v7767
        %v7784 = vadd.f32 %v7650, %v7768
        %v7785 = vadd.f32 %v7651, %v7769
        %v7786 = vadd.f32 %v7652, %v7770
        %v7787 = vadd.f32 %v7653, %v7771
        %v7788 = vadd.f32 %v7654, %v7772
        %v7789 = vadd.f32 %v7655, %v7773
        %v7790 = vadd.f32 %v7656, %v7774
        %7791 = vmax.xlane.f32.xlu0 %v7775
        %v7792 = vpop.xlane.xlu0 %7791
        %7793 = vmax.xlane.f32.xlu0 %v7776
        %v7794 = vpop.xlane.xlu0 %7793
        %7795 = vmax.xlane.f32.xlu0 %v7777
        %v7796 = vpop.xlane.xlu0 %7795
        %7797 = vmax.xlane.f32.xlu0 %v7778
        %v7798 = vpop.xlane.xlu0 %7797
        %7799 = vmax.xlane.f32.xlu0 %v7779
        %v7800 = vpop.xlane.xlu0 %7799
        %7801 = vmax.xlane.f32.xlu0 %v7780
        %v7802 = vpop.xlane.xlu0 %7801
        %7803 = vmax.xlane.f32.xlu0 %v7781
        %v7804 = vpop.xlane.xlu0 %7803
        %7805 = vmax.xlane.f32.xlu0 %v7782
        %v7806 = vpop.xlane.xlu0 %7805
        %7807 = vmax.xlane.f32.xlu0 %v7783
        %v7808 = vpop.xlane.xlu0 %7807
        %7809 = vmax.xlane.f32.xlu0 %v7784
        %v7810 = vpop.xlane.xlu0 %7809
        %7811 = vmax.xlane.f32.xlu0 %v7785
        %v7812 = vpop.xlane.xlu0 %7811
        %7813 = vmax.xlane.f32.xlu0 %v7786
        %v7814 = vpop.xlane.xlu0 %7813
        %7815 = vmax.xlane.f32.xlu0 %v7787
        %v7816 = vpop.xlane.xlu0 %7815
        %7817 = vmax.xlane.f32.xlu0 %v7788
        %v7818 = vpop.xlane.xlu0 %7817
        %7819 = vmax.xlane.f32.xlu0 %v7789
        %v7820 = vpop.xlane.xlu0 %7819
        %7821 = vmax.xlane.f32.xlu0 %v7790
        %v7822 = vpop.xlane.xlu0 %7821
        %v7823 = vsub.f32 %v7775, %v7792
        %v7824 = vsub.f32 %v7776, %v7794
        %v7825 = vsub.f32 %v7777, %v7796
        %v7826 = vsub.f32 %v7778, %v7798
        %v7827 = vsub.f32 %v7779, %v7800
        %v7828 = vsub.f32 %v7780, %v7802
        %v7829 = vsub.f32 %v7781, %v7804
        %v7830 = vsub.f32 %v7782, %v7806
        %v7831 = vsub.f32 %v7783, %v7808
        %v7832 = vsub.f32 %v7784, %v7810
        %v7833 = vsub.f32 %v7785, %v7812
        %v7834 = vsub.f32 %v7786, %v7814
        %v7835 = vsub.f32 %v7787, %v7816
        %v7836 = vsub.f32 %v7788, %v7818
        %v7837 = vsub.f32 %v7789, %v7820
        %v7838 = vsub.f32 %v7790, %v7822
        %v7839 = vmul.f32 %v7823, 1.442695
        %v7840 = vpow.pop %v7839
        %v7841 = vmul.f32 %v7824, 1.442695
        %v7842 = vpow.pop %v7841
        %v7843 = vmul.f32 %v7825, 1.442695
        %v7844 = vpow.pop %v7843
        %v7845 = vmul.f32 %v7826, 1.442695
        %v7846 = vpow.pop %v7845
        %v7847 = vmul.f32 %v7827, 1.442695
        %v7848 = vpow.pop %v7847
        %v7849 = vmul.f32 %v7828, 1.442695
        %v7850 = vpow.pop %v7849
        %v7851 = vmul.f32 %v7829, 1.442695
        %v7852 = vpow.pop %v7851
        %v7853 = vmul.f32 %v7830, 1.442695
        %v7854 = vpow.pop %v7853
        %v7855 = vmul.f32 %v7831, 1.442695
        %v7856 = vpow.pop %v7855
        %v7857 = vmul.f32 %v7832, 1.442695
        %v7858 = vpow.pop %v7857
        %v7859 = vmul.f32 %v7833, 1.442695
        %v7860 = vpow.pop %v7859
        %v7861 = vmul.f32 %v7834, 1.442695
        %v7862 = vpow.pop %v7861
        %v7863 = vmul.f32 %v7835, 1.442695
        %v7864 = vpow.pop %v7863
        %v7865 = vmul.f32 %v7836, 1.442695
        %v7866 = vpow.pop %v7865
        %v7867 = vmul.f32 %v7837, 1.442695
        %v7868 = vpow.pop %v7867
        %v7869 = vmul.f32 %v7838, 1.442695
        %v7870 = vpow.pop %v7869
        %7871 = vadd.xlane.f32.xlu0 %v7840
        %v7872 = vpop.xlane.xlu0 %7871
        %7873 = vadd.xlane.f32.xlu0 %v7842
        %v7874 = vpop.xlane.xlu0 %7873
        %7875 = vadd.xlane.f32.xlu0 %v7844
        %v7876 = vpop.xlane.xlu0 %7875
        %7877 = vadd.xlane.f32.xlu0 %v7846
        %v7878 = vpop.xlane.xlu0 %7877
        %7879 = vadd.xlane.f32.xlu0 %v7848
        %v7880 = vpop.xlane.xlu0 %7879
        %7881 = vadd.xlane.f32.xlu0 %v7850
        %v7882 = vpop.xlane.xlu0 %7881
        %7883 = vadd.xlane.f32.xlu0 %v7852
        %v7884 = vpop.xlane.xlu0 %7883
        %7885 = vadd.xlane.f32.xlu0 %v7854
        %v7886 = vpop.xlane.xlu0 %7885
        %7887 = vadd.xlane.f32.xlu0 %v7856
        %v7888 = vpop.xlane.xlu0 %7887
        %7889 = vadd.xlane.f32.xlu0 %v7858
        %v7890 = vpop.xlane.xlu0 %7889
        %7891 = vadd.xlane.f32.xlu0 %v7860
        %v7892 = vpop.xlane.xlu0 %7891
        %7893 = vadd.xlane.f32.xlu0 %v7862
        %v7894 = vpop.xlane.xlu0 %7893
        %7895 = vadd.xlane.f32.xlu0 %v7864
        %v7896 = vpop.xlane.xlu0 %7895
        %7897 = vadd.xlane.f32.xlu0 %v7866
        %v7898 = vpop.xlane.xlu0 %7897
        %7899 = vadd.xlane.f32.xlu0 %v7868
        %v7900 = vpop.xlane.xlu0 %7899
        %7901 = vadd.xlane.f32.xlu0 %v7870
        %v7902 = vpop.xlane.xlu0 %7901
        %v7903 = vrcp.pop %v7872
        %v7904 = vmul.f32 1.0, %v7903
        %v7905 = vrcp.pop %v7874
        %v7906 = vmul.f32 1.0, %v7905
        %v7907 = vrcp.pop %v7876
        %v7908 = vmul.f32 1.0, %v7907
        %v7909 = vrcp.pop %v7878
        %v7910 = vmul.f32 1.0, %v7909
        %v7911 = vrcp.pop %v7880
        %v7912 = vmul.f32 1.0, %v7911
        %v7913 = vrcp.pop %v7882
        %v7914 = vmul.f32 1.0, %v7913
        %v7915 = vrcp.pop %v7884
        %v7916 = vmul.f32 1.0, %v7915
        %v7917 = vrcp.pop %v7886
        %v7918 = vmul.f32 1.0, %v7917
        %v7919 = vrcp.pop %v7888
        %v7920 = vmul.f32 1.0, %v7919
        %v7921 = vrcp.pop %v7890
        %v7922 = vmul.f32 1.0, %v7921
        %v7923 = vrcp.pop %v7892
        %v7924 = vmul.f32 1.0, %v7923
        %v7925 = vrcp.pop %v7894
        %v7926 = vmul.f32 1.0, %v7925
        %v7927 = vrcp.pop %v7896
        %v7928 = vmul.f32 1.0, %v7927
        %v7929 = vrcp.pop %v7898
        %v7930 = vmul.f32 1.0, %v7929
        %v7931 = vrcp.pop %v7900
        %v7932 = vmul.f32 1.0, %v7931
        %v7933 = vrcp.pop %v7902
        %v7934 = vmul.f32 1.0, %v7933
        %v7935 = vmul.f32 %v7840, %v7904
        %v7936 = vmul.f32 %v7842, %v7906
        %v7937 = vmul.f32 %v7844, %v7908
        %v7938 = vmul.f32 %v7846, %v7910
        %v7939 = vmul.f32 %v7848, %v7912
        %v7940 = vmul.f32 %v7850, %v7914
        %v7941 = vmul.f32 %v7852, %v7916
        %v7942 = vmul.f32 %v7854, %v7918
        %v7943 = vmul.f32 %v7856, %v7920
        %v7944 = vmul.f32 %v7858, %v7922
        %v7945 = vmul.f32 %v7860, %v7924
        %v7946 = vmul.f32 %v7862, %v7926
        %v7947 = vmul.f32 %v7864, %v7928
        %v7948 = vmul.f32 %v7866, %v7930
        %v7949 = vmul.f32 %v7868, %v7932
        %v7950 = vmul.f32 %v7870, %v7934
        %v7951 = vld [vmem:[%s15] sm:$0xff]
        %7953 = vset.pattern.permute.xlu0 0
        %7954 = vperm.xlu0 %7953, %v7951
        %v7955 = vpop.permute.xlu0 %7954
        %7957 = vmatprep.subr.mxu0 0.0
        %7958 = vmatpush1.xpose.msra.mxu0 %v7950
        %7959 = vmatprep.subr.mxu0 0.0
        %7960 = vmatpush1.xpose.msra.mxu0 %v7949
        %7961 = vmatprep.subr.mxu0 0.0
        %7962 = vmatpush1.xpose.msra.mxu0 %v7948
        %7963 = vmatprep.subr.mxu0 0.0
        %7964 = vmatpush1.xpose.msra.mxu0 %v7947
        %7965 = vmatprep.subr.mxu0 0.0
        %7966 = vmatpush1.xpose.msra.mxu0 %v7946
        %7967 = vmatprep.subr.mxu0 0.0
        %7968 = vmatpush1.xpose.msra.mxu0 %v7945
        %7969 = vmatprep.subr.mxu0 0.0
        %7970 = vmatpush1.xpose.msra.mxu0 %v7944
        %7971 = vmatprep.subr.mxu0 0.0
        %7972 = vmatpush1.xpose.msra.mxu0 %v7943
        %7973 = vmatprep.subr.mxu0 0.0
        %7974 = vmatpush1.xpose.msra.mxu0 %v7942
        %7975 = vmatprep.subr.mxu0 0.0
        %7976 = vmatpush1.xpose.msra.mxu0 %v7941
        %7977 = vmatprep.subr.mxu0 0.0
        %7978 = vmatpush1.xpose.msra.mxu0 %v7940
        %7979 = vmatprep.subr.mxu0 0.0
        %7980 = vmatpush1.xpose.msra.mxu0 %v7939
        %7981 = vmatprep.subr.mxu0 0.0
        %7982 = vmatpush1.xpose.msra.mxu0 %v7938
        %7983 = vmatprep.subr.mxu0 0.0
        %7984 = vmatpush1.xpose.msra.mxu0 %v7937
        %7985 = vmatprep.subr.mxu0 0.0
        %7986 = vmatpush1.xpose.msra.mxu0 %v7936
        %7987 = vmatprep.subr.mxu0 0.0
        %7988 = vmatpush1.xpose.msra.mxu0 %v7935
        %7989 = vmatprep.subr.mxu0 0.0
        %7990 = vmatpush2.xpose.msra.mxu0 0.0
        %7991 = vmatprep.subr.mxu0 0.0
        %7992 = vmatpush2.xpose.msra.mxu0 0.0
        %7993 = vmatprep.subr.mxu0 0.0
        %7994 = vmatpush2.xpose.msra.mxu0 0.0
        %7995 = vmatprep.subr.mxu0 0.0
        %7996 = vmatpush2.xpose.msra.mxu0 0.0
        %7997 = vmatprep.subr.mxu0 0.0
        %7998 = vmatpush2.xpose.msra.mxu0 0.0
        %7999 = vmatprep.subr.mxu0 0.0
        %8000 = vmatpush2.xpose.msra.mxu0 0.0
        %8001 = vmatprep.subr.mxu0 0.0
        %8002 = vmatpush2.xpose.msra.mxu0 0.0
        %8003 = vmatprep.subr.mxu0 0.0
        %8004 = vmatpush2.xpose.msra.mxu0 0.0
        %8005 = vmatprep.subr.mxu0 0.0
        %8006 = vmatpush2.xpose.msra.mxu0 0.0
        %8007 = vmatprep.subr.mxu0 0.0
        %8008 = vmatpush2.xpose.msra.mxu0 0.0
        %8009 = vmatprep.subr.mxu0 0.0
        %8010 = vmatpush2.xpose.msra.mxu0 0.0
        %8011 = vmatprep.subr.mxu0 0.0
        %8012 = vmatpush2.xpose.msra.mxu0 0.0
        %8013 = vmatprep.subr.mxu0 0.0
        %8014 = vmatpush2.xpose.msra.mxu0 0.0
        %8015 = vmatprep.subr.mxu0 0.0
        %8016 = vmatpush2.xpose.msra.mxu0 0.0
        %8017 = vmatprep.subr.mxu0 0.0
        %8018 = vmatpush2.xpose.msra.mxu0 0.0
        %8019 = vmatprep.subr.mxu0 0.0
        %8020 = vmatpush2.xpose.msra.mxu0 0.0
        %8021 = vmatprep.mubr.f32.mxu0 0.0
        %8022 = vmatmul.mubr.f32.gmra.mxu0 %v5685
        %v8023 = vpop.f32.mrf.mxu0
        %v8024 = vadd.f32 %v7955, %v8023
        %v8025 = vpop.f32.mrf.mxu0
        %8026 = vdwg.mxu0
        %8027 = vst [vmem:[%s566] sm:$0xff] %v8024
        %s8028 = sld [smem:[#allocation8 + $0x80]]
        %v8029 = vstv %s8028
        %v8030 = vmul.f32 %v8029, %v5769
        %v8031 = vmul.f32 %v8029, %v5774
        %v8032 = vmul.f32 %v8029, %v5779
        %v8033 = vmul.f32 %v8029, %v5784
        %v8034 = vmul.f32 %v8029, %v5789
        %v8035 = vmul.f32 %v8029, %v5794
        %v8036 = vmul.f32 %v8029, %v5799
        %v8037 = vmul.f32 %v8029, %v5804
        %v8038 = vmul.f32 %v8029, %v5809
        %v8039 = vmul.f32 %v8029, %v5814
        %v8040 = vmul.f32 %v8029, %v5819
        %v8041 = vmul.f32 %v8029, %v5824
        %v8042 = vmul.f32 %v8029, %v5829
        %v8043 = vmul.f32 %v8029, %v5834
        %v8044 = vmul.f32 %v8029, %v5839
        %v8045 = vmul.f32 %v8029, %v5844
        %v8046 = vmul.f32 %v8029, %v5690
        %s8047 = sld [smem:[#allocation8 + $0x81]]
        %v8048 = vstv %s8047
        %v8049 = vmul.f32 %v8048, %v5769
        %v8050 = vmul.f32 %v8048, %v5774
        %v8051 = vmul.f32 %v8048, %v5779
        %v8052 = vmul.f32 %v8048, %v5784
        %v8053 = vmul.f32 %v8048, %v5789
        %v8054 = vmul.f32 %v8048, %v5794
        %v8055 = vmul.f32 %v8048, %v5799
        %v8056 = vmul.f32 %v8048, %v5804
        %v8057 = vmul.f32 %v8048, %v5809
        %v8058 = vmul.f32 %v8048, %v5814
        %v8059 = vmul.f32 %v8048, %v5819
        %v8060 = vmul.f32 %v8048, %v5824
        %v8061 = vmul.f32 %v8048, %v5829
        %v8062 = vmul.f32 %v8048, %v5834
        %v8063 = vmul.f32 %v8048, %v5839
        %v8064 = vmul.f32 %v8048, %v5844
        %8081 = vrot.lane.b32.xlu0 %v8049, 127
        %v8082 = vpop.permute.xlu0 %8081
        %8083 = vrot.lane.b32.xlu0 %v8050, 127
        %v8084 = vpop.permute.xlu0 %8083
        %8085 = vrot.lane.b32.xlu0 %v8051, 127
        %v8086 = vpop.permute.xlu0 %8085
        %8087 = vrot.lane.b32.xlu0 %v8052, 127
        %v8088 = vpop.permute.xlu0 %8087
        %8089 = vrot.lane.b32.xlu0 %v8053, 127
        %v8090 = vpop.permute.xlu0 %8089
        %8091 = vrot.lane.b32.xlu0 %v8054, 127
        %v8092 = vpop.permute.xlu0 %8091
        %8093 = vrot.lane.b32.xlu0 %v8055, 127
        %v8094 = vpop.permute.xlu0 %8093
        %8095 = vrot.lane.b32.xlu0 %v8056, 127
        %v8096 = vpop.permute.xlu0 %8095
        %8097 = vrot.lane.b32.xlu0 %v8057, 127
        %v8098 = vpop.permute.xlu0 %8097
        %8099 = vrot.lane.b32.xlu0 %v8058, 127
        %v8100 = vpop.permute.xlu0 %8099
        %8101 = vrot.lane.b32.xlu0 %v8059, 127
        %v8102 = vpop.permute.xlu0 %8101
        %8103 = vrot.lane.b32.xlu0 %v8060, 127
        %v8104 = vpop.permute.xlu0 %8103
        %8105 = vrot.lane.b32.xlu0 %v8061, 127
        %v8106 = vpop.permute.xlu0 %8105
        %8107 = vrot.lane.b32.xlu0 %v8062, 127
        %v8108 = vpop.permute.xlu0 %8107
        %8109 = vrot.lane.b32.xlu0 %v8063, 127
        %v8110 = vpop.permute.xlu0 %8109
        %8111 = vrot.lane.b32.xlu0 %v8064, 127
        %v8112 = vpop.permute.xlu0 %8111
        %v8129 = vadd.f32 %v8030, %v8082
        %v8130 = vadd.f32 %v8031, %v8084
        %v8131 = vadd.f32 %v8032, %v8086
        %v8132 = vadd.f32 %v8033, %v8088
        %v8133 = vadd.f32 %v8034, %v8090
        %v8134 = vadd.f32 %v8035, %v8092
        %v8135 = vadd.f32 %v8036, %v8094
        %v8136 = vadd.f32 %v8037, %v8096
        %v8137 = vadd.f32 %v8038, %v8098
        %v8138 = vadd.f32 %v8039, %v8100
        %v8139 = vadd.f32 %v8040, %v8102
        %v8140 = vadd.f32 %v8041, %v8104
        %v8141 = vadd.f32 %v8042, %v8106
        %v8142 = vadd.f32 %v8043, %v8108
        %v8143 = vadd.f32 %v8044, %v8110
        %v8144 = vadd.f32 %v8045, %v8112
        %v8145 = vmul.f32 %v8048, %v5690
        %v8147 = vrot.slane %v8145, 1
        %v8149 = vadd.f32 %v8046, %v8147
        %s8150 = sld [smem:[#allocation8 + $0x82]]
        %v8151 = vstv %s8150
        %v8152 = vmul.f32 %v8151, %v5769
        %v8153 = vmul.f32 %v8151, %v5774
        %v8154 = vmul.f32 %v8151, %v5779
        %v8155 = vmul.f32 %v8151, %v5784
        %v8156 = vmul.f32 %v8151, %v5789
        %v8157 = vmul.f32 %v8151, %v5794
        %v8158 = vmul.f32 %v8151, %v5799
        %v8159 = vmul.f32 %v8151, %v5804
        %v8160 = vmul.f32 %v8151, %v5809
        %v8161 = vmul.f32 %v8151, %v5814
        %v8162 = vmul.f32 %v8151, %v5819
        %v8163 = vmul.f32 %v8151, %v5824
        %v8164 = vmul.f32 %v8151, %v5829
        %v8165 = vmul.f32 %v8151, %v5834
        %v8166 = vmul.f32 %v8151, %v5839
        %v8167 = vmul.f32 %v8151, %v5844
        %8184 = vrot.lane.b32.xlu0 %v8152, 126
        %v8185 = vpop.permute.xlu0 %8184
        %8186 = vrot.lane.b32.xlu0 %v8153, 126
        %v8187 = vpop.permute.xlu0 %8186
        %8188 = vrot.lane.b32.xlu0 %v8154, 126
        %v8189 = vpop.permute.xlu0 %8188
        %8190 = vrot.lane.b32.xlu0 %v8155, 126
        %v8191 = vpop.permute.xlu0 %8190
        %8192 = vrot.lane.b32.xlu0 %v8156, 126
        %v8193 = vpop.permute.xlu0 %8192
        %8194 = vrot.lane.b32.xlu0 %v8157, 126
        %v8195 = vpop.permute.xlu0 %8194
        %8196 = vrot.lane.b32.xlu0 %v8158, 126
        %v8197 = vpop.permute.xlu0 %8196
        %8198 = vrot.lane.b32.xlu0 %v8159, 126
        %v8199 = vpop.permute.xlu0 %8198
        %8200 = vrot.lane.b32.xlu0 %v8160, 126
        %v8201 = vpop.permute.xlu0 %8200
        %8202 = vrot.lane.b32.xlu0 %v8161, 126
        %v8203 = vpop.permute.xlu0 %8202
        %8204 = vrot.lane.b32.xlu0 %v8162, 126
        %v8205 = vpop.permute.xlu0 %8204
        %8206 = vrot.lane.b32.xlu0 %v8163, 126
        %v8207 = vpop.permute.xlu0 %8206
        %8208 = vrot.lane.b32.xlu0 %v8164, 126
        %v8209 = vpop.permute.xlu0 %8208
        %8210 = vrot.lane.b32.xlu0 %v8165, 126
        %v8211 = vpop.permute.xlu0 %8210
        %8212 = vrot.lane.b32.xlu0 %v8166, 126
        %v8213 = vpop.permute.xlu0 %8212
        %8214 = vrot.lane.b32.xlu0 %v8167, 126
        %v8215 = vpop.permute.xlu0 %8214
        %v8232 = vadd.f32 %v8129, %v8185
        %v8233 = vadd.f32 %v8130, %v8187
        %v8234 = vadd.f32 %v8131, %v8189
        %v8235 = vadd.f32 %v8132, %v8191
        %v8236 = vadd.f32 %v8133, %v8193
        %v8237 = vadd.f32 %v8134, %v8195
        %v8238 = vadd.f32 %v8135, %v8197
        %v8239 = vadd.f32 %v8136, %v8199
        %v8240 = vadd.f32 %v8137, %v8201
        %v8241 = vadd.f32 %v8138, %v8203
        %v8242 = vadd.f32 %v8139, %v8205
        %v8243 = vadd.f32 %v8140, %v8207
        %v8244 = vadd.f32 %v8141, %v8209
        %v8245 = vadd.f32 %v8142, %v8211
        %v8246 = vadd.f32 %v8143, %v8213
        %v8247 = vadd.f32 %v8144, %v8215
        %v8248 = vmul.f32 %v8151, %v5690
        %v8250 = vrot.slane %v8248, 2
        %v8252 = vadd.f32 %v8149, %v8250
        %s8253 = sld [smem:[#allocation8 + $0x83]]
        %v8254 = vstv %s8253
        %v8255 = vmul.f32 %v8254, %v5769
        %v8256 = vmul.f32 %v8254, %v5774
        %v8257 = vmul.f32 %v8254, %v5779
        %v8258 = vmul.f32 %v8254, %v5784
        %v8259 = vmul.f32 %v8254, %v5789
        %v8260 = vmul.f32 %v8254, %v5794
        %v8261 = vmul.f32 %v8254, %v5799
        %v8262 = vmul.f32 %v8254, %v5804
        %v8263 = vmul.f32 %v8254, %v5809
        %v8264 = vmul.f32 %v8254, %v5814
        %v8265 = vmul.f32 %v8254, %v5819
        %v8266 = vmul.f32 %v8254, %v5824
        %v8267 = vmul.f32 %v8254, %v5829
        %v8268 = vmul.f32 %v8254, %v5834
        %v8269 = vmul.f32 %v8254, %v5839
        %v8270 = vmul.f32 %v8254, %v5844
        %8287 = vrot.lane.b32.xlu0 %v8255, 125
        %v8288 = vpop.permute.xlu0 %8287
        %8289 = vrot.lane.b32.xlu0 %v8256, 125
        %v8290 = vpop.permute.xlu0 %8289
        %8291 = vrot.lane.b32.xlu0 %v8257, 125
        %v8292 = vpop.permute.xlu0 %8291
        %8293 = vrot.lane.b32.xlu0 %v8258, 125
        %v8294 = vpop.permute.xlu0 %8293
        %8295 = vrot.lane.b32.xlu0 %v8259, 125
        %v8296 = vpop.permute.xlu0 %8295
        %8297 = vrot.lane.b32.xlu0 %v8260, 125
        %v8298 = vpop.permute.xlu0 %8297
        %8299 = vrot.lane.b32.xlu0 %v8261, 125
        %v8300 = vpop.permute.xlu0 %8299
        %8301 = vrot.lane.b32.xlu0 %v8262, 125
        %v8302 = vpop.permute.xlu0 %8301
        %8303 = vrot.lane.b32.xlu0 %v8263, 125
        %v8304 = vpop.permute.xlu0 %8303
        %8305 = vrot.lane.b32.xlu0 %v8264, 125
        %v8306 = vpop.permute.xlu0 %8305
        %8307 = vrot.lane.b32.xlu0 %v8265, 125
        %v8308 = vpop.permute.xlu0 %8307
        %8309 = vrot.lane.b32.xlu0 %v8266, 125
        %v8310 = vpop.permute.xlu0 %8309
        %8311 = vrot.lane.b32.xlu0 %v8267, 125
        %v8312 = vpop.permute.xlu0 %8311
        %8313 = vrot.lane.b32.xlu0 %v8268, 125
        %v8314 = vpop.permute.xlu0 %8313
        %8315 = vrot.lane.b32.xlu0 %v8269, 125
        %v8316 = vpop.permute.xlu0 %8315
        %8317 = vrot.lane.b32.xlu0 %v8270, 125
        %v8318 = vpop.permute.xlu0 %8317
        %v8335 = vadd.f32 %v8232, %v8288
        %v8336 = vadd.f32 %v8233, %v8290
        %v8337 = vadd.f32 %v8234, %v8292
        %v8338 = vadd.f32 %v8235, %v8294
        %v8339 = vadd.f32 %v8236, %v8296
        %v8340 = vadd.f32 %v8237, %v8298
        %v8341 = vadd.f32 %v8238, %v8300
        %v8342 = vadd.f32 %v8239, %v8302
        %v8343 = vadd.f32 %v8240, %v8304
        %v8344 = vadd.f32 %v8241, %v8306
        %v8345 = vadd.f32 %v8242, %v8308
        %v8346 = vadd.f32 %v8243, %v8310
        %v8347 = vadd.f32 %v8244, %v8312
        %v8348 = vadd.f32 %v8245, %v8314
        %v8349 = vadd.f32 %v8246, %v8316
        %v8350 = vadd.f32 %v8247, %v8318
        %v8351 = vmul.f32 %v8254, %v5690
        %v8353 = vrot.slane %v8351, 3
        %v8355 = vadd.f32 %v8252, %v8353
        %s8356 = sld [smem:[#allocation8 + $0x84]]
        %v8357 = vstv %s8356
        %v8358 = vmul.f32 %v8357, %v5769
        %v8359 = vmul.f32 %v8357, %v5774
        %v8360 = vmul.f32 %v8357, %v5779
        %v8361 = vmul.f32 %v8357, %v5784
        %v8362 = vmul.f32 %v8357, %v5789
        %v8363 = vmul.f32 %v8357, %v5794
        %v8364 = vmul.f32 %v8357, %v5799
        %v8365 = vmul.f32 %v8357, %v5804
        %v8366 = vmul.f32 %v8357, %v5809
        %v8367 = vmul.f32 %v8357, %v5814
        %v8368 = vmul.f32 %v8357, %v5819
        %v8369 = vmul.f32 %v8357, %v5824
        %v8370 = vmul.f32 %v8357, %v5829
        %v8371 = vmul.f32 %v8357, %v5834
        %v8372 = vmul.f32 %v8357, %v5839
        %v8373 = vmul.f32 %v8357, %v5844
        %8390 = vrot.lane.b32.xlu0 %v8358, 124
        %v8391 = vpop.permute.xlu0 %8390
        %8392 = vrot.lane.b32.xlu0 %v8359, 124
        %v8393 = vpop.permute.xlu0 %8392
        %8394 = vrot.lane.b32.xlu0 %v8360, 124
        %v8395 = vpop.permute.xlu0 %8394
        %8396 = vrot.lane.b32.xlu0 %v8361, 124
        %v8397 = vpop.permute.xlu0 %8396
        %8398 = vrot.lane.b32.xlu0 %v8362, 124
        %v8399 = vpop.permute.xlu0 %8398
        %8400 = vrot.lane.b32.xlu0 %v8363, 124
        %v8401 = vpop.permute.xlu0 %8400
        %8402 = vrot.lane.b32.xlu0 %v8364, 124
        %v8403 = vpop.permute.xlu0 %8402
        %8404 = vrot.lane.b32.xlu0 %v8365, 124
        %v8405 = vpop.permute.xlu0 %8404
        %8406 = vrot.lane.b32.xlu0 %v8366, 124
        %v8407 = vpop.permute.xlu0 %8406
        %8408 = vrot.lane.b32.xlu0 %v8367, 124
        %v8409 = vpop.permute.xlu0 %8408
        %8410 = vrot.lane.b32.xlu0 %v8368, 124
        %v8411 = vpop.permute.xlu0 %8410
        %8412 = vrot.lane.b32.xlu0 %v8369, 124
        %v8413 = vpop.permute.xlu0 %8412
        %8414 = vrot.lane.b32.xlu0 %v8370, 124
        %v8415 = vpop.permute.xlu0 %8414
        %8416 = vrot.lane.b32.xlu0 %v8371, 124
        %v8417 = vpop.permute.xlu0 %8416
        %8418 = vrot.lane.b32.xlu0 %v8372, 124
        %v8419 = vpop.permute.xlu0 %8418
        %8420 = vrot.lane.b32.xlu0 %v8373, 124
        %v8421 = vpop.permute.xlu0 %8420
        %v8438 = vadd.f32 %v8335, %v8391
        %v8439 = vadd.f32 %v8336, %v8393
        %v8440 = vadd.f32 %v8337, %v8395
        %v8441 = vadd.f32 %v8338, %v8397
        %v8442 = vadd.f32 %v8339, %v8399
        %v8443 = vadd.f32 %v8340, %v8401
        %v8444 = vadd.f32 %v8341, %v8403
        %v8445 = vadd.f32 %v8342, %v8405
        %v8446 = vadd.f32 %v8343, %v8407
        %v8447 = vadd.f32 %v8344, %v8409
        %v8448 = vadd.f32 %v8345, %v8411
        %v8449 = vadd.f32 %v8346, %v8413
        %v8450 = vadd.f32 %v8347, %v8415
        %v8451 = vadd.f32 %v8348, %v8417
        %v8452 = vadd.f32 %v8349, %v8419
        %v8453 = vadd.f32 %v8350, %v8421
        %v8454 = vmul.f32 %v8357, %v5690
        %v8456 = vrot.slane %v8454, 4
        %v8458 = vadd.f32 %v8355, %v8456
        %s8459 = sld [smem:[#allocation8 + $0x85]]
        %v8460 = vstv %s8459
        %v8461 = vmul.f32 %v8460, %v5769
        %v8462 = vmul.f32 %v8460, %v5774
        %v8463 = vmul.f32 %v8460, %v5779
        %v8464 = vmul.f32 %v8460, %v5784
        %v8465 = vmul.f32 %v8460, %v5789
        %v8466 = vmul.f32 %v8460, %v5794
        %v8467 = vmul.f32 %v8460, %v5799
        %v8468 = vmul.f32 %v8460, %v5804
        %v8469 = vmul.f32 %v8460, %v5809
        %v8470 = vmul.f32 %v8460, %v5814
        %v8471 = vmul.f32 %v8460, %v5819
        %v8472 = vmul.f32 %v8460, %v5824
        %v8473 = vmul.f32 %v8460, %v5829
        %v8474 = vmul.f32 %v8460, %v5834
        %v8475 = vmul.f32 %v8460, %v5839
        %v8476 = vmul.f32 %v8460, %v5844
        %8493 = vrot.lane.b32.xlu0 %v8461, 123
        %v8494 = vpop.permute.xlu0 %8493
        %8495 = vrot.lane.b32.xlu0 %v8462, 123
        %v8496 = vpop.permute.xlu0 %8495
        %8497 = vrot.lane.b32.xlu0 %v8463, 123
        %v8498 = vpop.permute.xlu0 %8497
        %8499 = vrot.lane.b32.xlu0 %v8464, 123
        %v8500 = vpop.permute.xlu0 %8499
        %8501 = vrot.lane.b32.xlu0 %v8465, 123
        %v8502 = vpop.permute.xlu0 %8501
        %8503 = vrot.lane.b32.xlu0 %v8466, 123
        %v8504 = vpop.permute.xlu0 %8503
        %8505 = vrot.lane.b32.xlu0 %v8467, 123
        %v8506 = vpop.permute.xlu0 %8505
        %8507 = vrot.lane.b32.xlu0 %v8468, 123
        %v8508 = vpop.permute.xlu0 %8507
        %8509 = vrot.lane.b32.xlu0 %v8469, 123
        %v8510 = vpop.permute.xlu0 %8509
        %8511 = vrot.lane.b32.xlu0 %v8470, 123
        %v8512 = vpop.permute.xlu0 %8511
        %8513 = vrot.lane.b32.xlu0 %v8471, 123
        %v8514 = vpop.permute.xlu0 %8513
        %8515 = vrot.lane.b32.xlu0 %v8472, 123
        %v8516 = vpop.permute.xlu0 %8515
        %8517 = vrot.lane.b32.xlu0 %v8473, 123
        %v8518 = vpop.permute.xlu0 %8517
        %8519 = vrot.lane.b32.xlu0 %v8474, 123
        %v8520 = vpop.permute.xlu0 %8519
        %8521 = vrot.lane.b32.xlu0 %v8475, 123
        %v8522 = vpop.permute.xlu0 %8521
        %8523 = vrot.lane.b32.xlu0 %v8476, 123
        %v8524 = vpop.permute.xlu0 %8523
        %v8541 = vadd.f32 %v8438, %v8494
        %v8542 = vadd.f32 %v8439, %v8496
        %v8543 = vadd.f32 %v8440, %v8498
        %v8544 = vadd.f32 %v8441, %v8500
        %v8545 = vadd.f32 %v8442, %v8502
        %v8546 = vadd.f32 %v8443, %v8504
        %v8547 = vadd.f32 %v8444, %v8506
        %v8548 = vadd.f32 %v8445, %v8508
        %v8549 = vadd.f32 %v8446, %v8510
        %v8550 = vadd.f32 %v8447, %v8512
        %v8551 = vadd.f32 %v8448, %v8514
        %v8552 = vadd.f32 %v8449, %v8516
        %v8553 = vadd.f32 %v8450, %v8518
        %v8554 = vadd.f32 %v8451, %v8520
        %v8555 = vadd.f32 %v8452, %v8522
        %v8556 = vadd.f32 %v8453, %v8524
        %v8557 = vmul.f32 %v8460, %v5690
        %v8559 = vrot.slane %v8557, 5
        %v8561 = vadd.f32 %v8458, %v8559
        %s8562 = sld [smem:[#allocation8 + $0x86]]
        %v8563 = vstv %s8562
        %v8564 = vmul.f32 %v8563, %v5769
        %v8565 = vmul.f32 %v8563, %v5774
        %v8566 = vmul.f32 %v8563, %v5779
        %v8567 = vmul.f32 %v8563, %v5784
        %v8568 = vmul.f32 %v8563, %v5789
        %v8569 = vmul.f32 %v8563, %v5794
        %v8570 = vmul.f32 %v8563, %v5799
        %v8571 = vmul.f32 %v8563, %v5804
        %v8572 = vmul.f32 %v8563, %v5809
        %v8573 = vmul.f32 %v8563, %v5814
        %v8574 = vmul.f32 %v8563, %v5819
        %v8575 = vmul.f32 %v8563, %v5824
        %v8576 = vmul.f32 %v8563, %v5829
        %v8577 = vmul.f32 %v8563, %v5834
        %v8578 = vmul.f32 %v8563, %v5839
        %v8579 = vmul.f32 %v8563, %v5844
        %8596 = vrot.lane.b32.xlu0 %v8564, 122
        %v8597 = vpop.permute.xlu0 %8596
        %8598 = vrot.lane.b32.xlu0 %v8565, 122
        %v8599 = vpop.permute.xlu0 %8598
        %8600 = vrot.lane.b32.xlu0 %v8566, 122
        %v8601 = vpop.permute.xlu0 %8600
        %8602 = vrot.lane.b32.xlu0 %v8567, 122
        %v8603 = vpop.permute.xlu0 %8602
        %8604 = vrot.lane.b32.xlu0 %v8568, 122
        %v8605 = vpop.permute.xlu0 %8604
        %8606 = vrot.lane.b32.xlu0 %v8569, 122
        %v8607 = vpop.permute.xlu0 %8606
        %8608 = vrot.lane.b32.xlu0 %v8570, 122
        %v8609 = vpop.permute.xlu0 %8608
        %8610 = vrot.lane.b32.xlu0 %v8571, 122
        %v8611 = vpop.permute.xlu0 %8610
        %8612 = vrot.lane.b32.xlu0 %v8572, 122
        %v8613 = vpop.permute.xlu0 %8612
        %8614 = vrot.lane.b32.xlu0 %v8573, 122
        %v8615 = vpop.permute.xlu0 %8614
        %8616 = vrot.lane.b32.xlu0 %v8574, 122
        %v8617 = vpop.permute.xlu0 %8616
        %8618 = vrot.lane.b32.xlu0 %v8575, 122
        %v8619 = vpop.permute.xlu0 %8618
        %8620 = vrot.lane.b32.xlu0 %v8576, 122
        %v8621 = vpop.permute.xlu0 %8620
        %8622 = vrot.lane.b32.xlu0 %v8577, 122
        %v8623 = vpop.permute.xlu0 %8622
        %8624 = vrot.lane.b32.xlu0 %v8578, 122
        %v8625 = vpop.permute.xlu0 %8624
        %8626 = vrot.lane.b32.xlu0 %v8579, 122
        %v8627 = vpop.permute.xlu0 %8626
        %v8644 = vadd.f32 %v8541, %v8597
        %v8645 = vadd.f32 %v8542, %v8599
        %v8646 = vadd.f32 %v8543, %v8601
        %v8647 = vadd.f32 %v8544, %v8603
        %v8648 = vadd.f32 %v8545, %v8605
        %v8649 = vadd.f32 %v8546, %v8607
        %v8650 = vadd.f32 %v8547, %v8609
        %v8651 = vadd.f32 %v8548, %v8611
        %v8652 = vadd.f32 %v8549, %v8613
        %v8653 = vadd.f32 %v8550, %v8615
        %v8654 = vadd.f32 %v8551, %v8617
        %v8655 = vadd.f32 %v8552, %v8619
        %v8656 = vadd.f32 %v8553, %v8621
        %v8657 = vadd.f32 %v8554, %v8623
        %v8658 = vadd.f32 %v8555, %v8625
        %v8659 = vadd.f32 %v8556, %v8627
        %v8660 = vmul.f32 %v8563, %v5690
        %v8662 = vrot.slane %v8660, 6
        %v8664 = vadd.f32 %v8561, %v8662
        %s8665 = sld [smem:[#allocation8 + $0x87]]
        %v8666 = vstv %s8665
        %v8667 = vmul.f32 %v8666, %v5769
        %v8668 = vmul.f32 %v8666, %v5774
        %v8669 = vmul.f32 %v8666, %v5779
        %v8670 = vmul.f32 %v8666, %v5784
        %v8671 = vmul.f32 %v8666, %v5789
        %v8672 = vmul.f32 %v8666, %v5794
        %v8673 = vmul.f32 %v8666, %v5799
        %v8674 = vmul.f32 %v8666, %v5804
        %v8675 = vmul.f32 %v8666, %v5809
        %v8676 = vmul.f32 %v8666, %v5814
        %v8677 = vmul.f32 %v8666, %v5819
        %v8678 = vmul.f32 %v8666, %v5824
        %v8679 = vmul.f32 %v8666, %v5829
        %v8680 = vmul.f32 %v8666, %v5834
        %v8681 = vmul.f32 %v8666, %v5839
        %v8682 = vmul.f32 %v8666, %v5844
        %8699 = vrot.lane.b32.xlu0 %v8667, 121
        %v8700 = vpop.permute.xlu0 %8699
        %8701 = vrot.lane.b32.xlu0 %v8668, 121
        %v8702 = vpop.permute.xlu0 %8701
        %8703 = vrot.lane.b32.xlu0 %v8669, 121
        %v8704 = vpop.permute.xlu0 %8703
        %8705 = vrot.lane.b32.xlu0 %v8670, 121
        %v8706 = vpop.permute.xlu0 %8705
        %8707 = vrot.lane.b32.xlu0 %v8671, 121
        %v8708 = vpop.permute.xlu0 %8707
        %8709 = vrot.lane.b32.xlu0 %v8672, 121
        %v8710 = vpop.permute.xlu0 %8709
        %8711 = vrot.lane.b32.xlu0 %v8673, 121
        %v8712 = vpop.permute.xlu0 %8711
        %8713 = vrot.lane.b32.xlu0 %v8674, 121
        %v8714 = vpop.permute.xlu0 %8713
        %8715 = vrot.lane.b32.xlu0 %v8675, 121
        %v8716 = vpop.permute.xlu0 %8715
        %8717 = vrot.lane.b32.xlu0 %v8676, 121
        %v8718 = vpop.permute.xlu0 %8717
        %8719 = vrot.lane.b32.xlu0 %v8677, 121
        %v8720 = vpop.permute.xlu0 %8719
        %8721 = vrot.lane.b32.xlu0 %v8678, 121
        %v8722 = vpop.permute.xlu0 %8721
        %8723 = vrot.lane.b32.xlu0 %v8679, 121
        %v8724 = vpop.permute.xlu0 %8723
        %8725 = vrot.lane.b32.xlu0 %v8680, 121
        %v8726 = vpop.permute.xlu0 %8725
        %8727 = vrot.lane.b32.xlu0 %v8681, 121
        %v8728 = vpop.permute.xlu0 %8727
        %8729 = vrot.lane.b32.xlu0 %v8682, 121
        %v8730 = vpop.permute.xlu0 %8729
        %v8747 = vadd.f32 %v8644, %v8700
        %v8748 = vadd.f32 %v8645, %v8702
        %v8749 = vadd.f32 %v8646, %v8704
        %v8750 = vadd.f32 %v8647, %v8706
        %v8751 = vadd.f32 %v8648, %v8708
        %v8752 = vadd.f32 %v8649, %v8710
        %v8753 = vadd.f32 %v8650, %v8712
        %v8754 = vadd.f32 %v8651, %v8714
        %v8755 = vadd.f32 %v8652, %v8716
        %v8756 = vadd.f32 %v8653, %v8718
        %v8757 = vadd.f32 %v8654, %v8720
        %v8758 = vadd.f32 %v8655, %v8722
        %v8759 = vadd.f32 %v8656, %v8724
        %v8760 = vadd.f32 %v8657, %v8726
        %v8761 = vadd.f32 %v8658, %v8728
        %v8762 = vadd.f32 %v8659, %v8730
        %v8763 = vmul.f32 %v8666, %v5690
        %v8765 = vrot.slane %v8763, 7
        %v8767 = vadd.f32 %v8664, %v8765
        %8769 = vset.pattern.permute.xlu0 8
        %8770 = vperm.xlu0 %8769, %v8747
        %v8771 = vpop.permute.xlu0 %8770
        %8774 = vset.pattern.permute.xlu0 8
        %8775 = vperm.xlu0 %8774, %v8748
        %v8776 = vpop.permute.xlu0 %8775
        %8779 = vset.pattern.permute.xlu0 8
        %8780 = vperm.xlu0 %8779, %v8749
        %v8781 = vpop.permute.xlu0 %8780
        %8784 = vset.pattern.permute.xlu0 8
        %8785 = vperm.xlu0 %8784, %v8750
        %v8786 = vpop.permute.xlu0 %8785
        %8789 = vset.pattern.permute.xlu0 8
        %8790 = vperm.xlu0 %8789, %v8751
        %v8791 = vpop.permute.xlu0 %8790
        %8794 = vset.pattern.permute.xlu0 8
        %8795 = vperm.xlu0 %8794, %v8752
        %v8796 = vpop.permute.xlu0 %8795
        %8799 = vset.pattern.permute.xlu0 8
        %8800 = vperm.xlu0 %8799, %v8753
        %v8801 = vpop.permute.xlu0 %8800
        %8804 = vset.pattern.permute.xlu0 8
        %8805 = vperm.xlu0 %8804, %v8754
        %v8806 = vpop.permute.xlu0 %8805
        %8809 = vset.pattern.permute.xlu0 8
        %8810 = vperm.xlu0 %8809, %v8755
        %v8811 = vpop.permute.xlu0 %8810
        %8814 = vset.pattern.permute.xlu0 8
        %8815 = vperm.xlu0 %8814, %v8756
        %v8816 = vpop.permute.xlu0 %8815
        %8819 = vset.pattern.permute.xlu0 8
        %8820 = vperm.xlu0 %8819, %v8757
        %v8821 = vpop.permute.xlu0 %8820
        %8824 = vset.pattern.permute.xlu0 8
        %8825 = vperm.xlu0 %8824, %v8758
        %v8826 = vpop.permute.xlu0 %8825
        %8829 = vset.pattern.permute.xlu0 8
        %8830 = vperm.xlu0 %8829, %v8759
        %v8831 = vpop.permute.xlu0 %8830
        %8834 = vset.pattern.permute.xlu0 8
        %8835 = vperm.xlu0 %8834, %v8760
        %v8836 = vpop.permute.xlu0 %8835
        %8839 = vset.pattern.permute.xlu0 8
        %8840 = vperm.xlu0 %8839, %v8761
        %v8841 = vpop.permute.xlu0 %8840
        %8844 = vset.pattern.permute.xlu0 8
        %8845 = vperm.xlu0 %8844, %v8762
        %v8846 = vpop.permute.xlu0 %8845
        %v8848 = vadd.f32 %v588, %v8771
        %v8849 = vadd.f32 %v589, %v8776
        %v8850 = vadd.f32 %v590, %v8781
        %v8851 = vadd.f32 %v591, %v8786
        %v8852 = vadd.f32 %v592, %v8791
        %v8853 = vadd.f32 %v593, %v8796
        %v8854 = vadd.f32 %v594, %v8801
        %v8855 = vadd.f32 %v595, %v8806
        %v8856 = vadd.f32 %v596, %v8811
        %v8857 = vadd.f32 %v597, %v8816
        %v8858 = vadd.f32 %v598, %v8821
        %v8859 = vadd.f32 %v599, %v8826
        %v8860 = vadd.f32 %v600, %v8831
        %v8861 = vadd.f32 %v601, %v8836
        %v8862 = vadd.f32 %v602, %v8841
        %v8863 = vadd.f32 %v603, %v8846
        %v8864 = vlaneseq
        %v8865 = vshrl.u32 %v8864, 7
        %v8866 = vsub.s32 0, %v8865
        %v8867 = vrot.slane %v8767, %v8866
        %v8868 = vadd.f32 %v8848, %v8867
        %v8869 = vadd.f32 %v8849, %v8867
        %v8870 = vadd.f32 %v8850, %v8867
        %v8871 = vadd.f32 %v8851, %v8867
        %v8872 = vadd.f32 %v8852, %v8867
        %v8873 = vadd.f32 %v8853, %v8867
        %v8874 = vadd.f32 %v8854, %v8867
        %v8875 = vadd.f32 %v8855, %v8867
        %v8876 = vadd.f32 %v8856, %v8867
        %v8877 = vadd.f32 %v8857, %v8867
        %v8878 = vadd.f32 %v8858, %v8867
        %v8879 = vadd.f32 %v8859, %v8867
        %v8880 = vadd.f32 %v8860, %v8867
        %v8881 = vadd.f32 %v8861, %v8867
        %v8882 = vadd.f32 %v8862, %v8867
        %v8883 = vadd.f32 %v8863, %v8867
        %8884 = vset.pattern.permute.xlu0 8
        %8885 = vperm.xlu0 %8884, %v5769
        %v8886 = vpop.permute.xlu0 %8885
        %8888 = vset.pattern.permute.xlu0 8
        %8889 = vperm.xlu0 %8888, %v5774
        %v8890 = vpop.permute.xlu0 %8889
        %8892 = vset.pattern.permute.xlu0 8
        %8893 = vperm.xlu0 %8892, %v5779
        %v8894 = vpop.permute.xlu0 %8893
        %8896 = vset.pattern.permute.xlu0 8
        %8897 = vperm.xlu0 %8896, %v5784
        %v8898 = vpop.permute.xlu0 %8897
        %8900 = vset.pattern.permute.xlu0 8
        %8901 = vperm.xlu0 %8900, %v5789
        %v8902 = vpop.permute.xlu0 %8901
        %8904 = vset.pattern.permute.xlu0 8
        %8905 = vperm.xlu0 %8904, %v5794
        %v8906 = vpop.permute.xlu0 %8905
        %8908 = vset.pattern.permute.xlu0 8
        %8909 = vperm.xlu0 %8908, %v5799
        %v8910 = vpop.permute.xlu0 %8909
        %8912 = vset.pattern.permute.xlu0 8
        %8913 = vperm.xlu0 %8912, %v5804
        %v8914 = vpop.permute.xlu0 %8913
        %8916 = vset.pattern.permute.xlu0 8
        %8917 = vperm.xlu0 %8916, %v5809
        %v8918 = vpop.permute.xlu0 %8917
        %8920 = vset.pattern.permute.xlu0 8
        %8921 = vperm.xlu0 %8920, %v5814
        %v8922 = vpop.permute.xlu0 %8921
        %8924 = vset.pattern.permute.xlu0 8
        %8925 = vperm.xlu0 %8924, %v5819
        %v8926 = vpop.permute.xlu0 %8925
        %8928 = vset.pattern.permute.xlu0 8
        %8929 = vperm.xlu0 %8928, %v5824
        %v8930 = vpop.permute.xlu0 %8929
        %8932 = vset.pattern.permute.xlu0 8
        %8933 = vperm.xlu0 %8932, %v5829
        %v8934 = vpop.permute.xlu0 %8933
        %8936 = vset.pattern.permute.xlu0 8
        %8937 = vperm.xlu0 %8936, %v5834
        %v8938 = vpop.permute.xlu0 %8937
        %8940 = vset.pattern.permute.xlu0 8
        %8941 = vperm.xlu0 %8940, %v5839
        %v8942 = vpop.permute.xlu0 %8941
        %8944 = vset.pattern.permute.xlu0 8
        %8945 = vperm.xlu0 %8944, %v5844
        %v8946 = vpop.permute.xlu0 %8945
        %v8948 = vlaneseq
        %v8949 = vshrl.u32 %v8948, 7
        %v8950 = vsub.s32 0, %v8949
        %v8951 = vrot.slane %v5690, %v8950
        %v8952 = vadd.f32 %v8886, %v8951
        %v8953 = vadd.f32 %v8890, %v8951
        %v8954 = vadd.f32 %v8894, %v8951
        %v8955 = vadd.f32 %v8898, %v8951
        %v8956 = vadd.f32 %v8902, %v8951
        %v8957 = vadd.f32 %v8906, %v8951
        %v8958 = vadd.f32 %v8910, %v8951
        %v8959 = vadd.f32 %v8914, %v8951
        %v8960 = vadd.f32 %v8918, %v8951
        %v8961 = vadd.f32 %v8922, %v8951
        %v8962 = vadd.f32 %v8926, %v8951
        %v8963 = vadd.f32 %v8930, %v8951
        %v8964 = vadd.f32 %v8934, %v8951
        %v8965 = vadd.f32 %v8938, %v8951
        %v8966 = vadd.f32 %v8942, %v8951
        %v8967 = vadd.f32 %v8946, %v8951
        %s8968 = sld [smem:[#allocation9 + $0x80]]
        %v8969 = vand.u32 2147483647, %v8952
        %v8970 = vand.u32 2147483647, %v8953
        %v8971 = vand.u32 2147483647, %v8954
        %v8972 = vand.u32 2147483647, %v8955
        %v8973 = vand.u32 2147483647, %v8956
        %v8974 = vand.u32 2147483647, %v8957
        %v8975 = vand.u32 2147483647, %v8958
        %v8976 = vand.u32 2147483647, %v8959
        %v8977 = vand.u32 2147483647, %v8960
        %v8978 = vand.u32 2147483647, %v8961
        %v8979 = vand.u32 2147483647, %v8962
        %v8980 = vand.u32 2147483647, %v8963
        %v8981 = vand.u32 2147483647, %v8964
        %v8982 = vand.u32 2147483647, %v8965
        %v8983 = vand.u32 2147483647, %v8966
        %v8984 = vand.u32 2147483647, %v8967
        %v8985 = vstv %s8968
        %v8986 = vmul.f32 %v8985, %v8969
        %v8987 = vmul.f32 %v8985, %v8970
        %v8988 = vmul.f32 %v8985, %v8971
        %v8989 = vmul.f32 %v8985, %v8972
        %v8990 = vmul.f32 %v8985, %v8973
        %v8991 = vmul.f32 %v8985, %v8974
        %v8992 = vmul.f32 %v8985, %v8975
        %v8993 = vmul.f32 %v8985, %v8976
        %v8994 = vmul.f32 %v8985, %v8977
        %v8995 = vmul.f32 %v8985, %v8978
        %v8996 = vmul.f32 %v8985, %v8979
        %v8997 = vmul.f32 %v8985, %v8980
        %v8998 = vmul.f32 %v8985, %v8981
        %v8999 = vmul.f32 %v8985, %v8982
        %v9000 = vmul.f32 %v8985, %v8983
        %v9001 = vmul.f32 %v8985, %v8984
        %v9002 = vadd.f32 %v8868, %v8986
        %v9003 = vadd.f32 %v8869, %v8987
        %v9004 = vadd.f32 %v8870, %v8988
        %v9005 = vadd.f32 %v8871, %v8989
        %v9006 = vadd.f32 %v8872, %v8990
        %v9007 = vadd.f32 %v8873, %v8991
        %v9008 = vadd.f32 %v8874, %v8992
        %v9009 = vadd.f32 %v8875, %v8993
        %v9010 = vadd.f32 %v8876, %v8994
        %v9011 = vadd.f32 %v8877, %v8995
        %v9012 = vadd.f32 %v8878, %v8996
        %v9013 = vadd.f32 %v8879, %v8997
        %v9014 = vadd.f32 %v8880, %v8998
        %v9015 = vadd.f32 %v8881, %v8999
        %v9016 = vadd.f32 %v8882, %v9000
        %v9017 = vadd.f32 %v8883, %v9001
        %9018 = vset.pattern.permute.xlu0 9
        %9019 = vperm.xlu0 %9018, %v5769
        %v9020 = vpop.permute.xlu0 %9019
        %9022 = vset.pattern.permute.xlu0 9
        %9023 = vperm.xlu0 %9022, %v5774
        %v9024 = vpop.permute.xlu0 %9023
        %9026 = vset.pattern.permute.xlu0 9
        %9027 = vperm.xlu0 %9026, %v5779
        %v9028 = vpop.permute.xlu0 %9027
        %9030 = vset.pattern.permute.xlu0 9
        %9031 = vperm.xlu0 %9030, %v5784
        %v9032 = vpop.permute.xlu0 %9031
        %9034 = vset.pattern.permute.xlu0 9
        %9035 = vperm.xlu0 %9034, %v5789
        %v9036 = vpop.permute.xlu0 %9035
        %9038 = vset.pattern.permute.xlu0 9
        %9039 = vperm.xlu0 %9038, %v5794
        %v9040 = vpop.permute.xlu0 %9039
        %9042 = vset.pattern.permute.xlu0 9
        %9043 = vperm.xlu0 %9042, %v5799
        %v9044 = vpop.permute.xlu0 %9043
        %9046 = vset.pattern.permute.xlu0 9
        %9047 = vperm.xlu0 %9046, %v5804
        %v9048 = vpop.permute.xlu0 %9047
        %9050 = vset.pattern.permute.xlu0 9
        %9051 = vperm.xlu0 %9050, %v5809
        %v9052 = vpop.permute.xlu0 %9051
        %9054 = vset.pattern.permute.xlu0 9
        %9055 = vperm.xlu0 %9054, %v5814
        %v9056 = vpop.permute.xlu0 %9055
        %9058 = vset.pattern.permute.xlu0 9
        %9059 = vperm.xlu0 %9058, %v5819
        %v9060 = vpop.permute.xlu0 %9059
        %9062 = vset.pattern.permute.xlu0 9
        %9063 = vperm.xlu0 %9062, %v5824
        %v9064 = vpop.permute.xlu0 %9063
        %9066 = vset.pattern.permute.xlu0 9
        %9067 = vperm.xlu0 %9066, %v5829
        %v9068 = vpop.permute.xlu0 %9067
        %9070 = vset.pattern.permute.xlu0 9
        %9071 = vperm.xlu0 %9070, %v5834
        %v9072 = vpop.permute.xlu0 %9071
        %9074 = vset.pattern.permute.xlu0 9
        %9075 = vperm.xlu0 %9074, %v5839
        %v9076 = vpop.permute.xlu0 %9075
        %9078 = vset.pattern.permute.xlu0 9
        %9079 = vperm.xlu0 %9078, %v5844
        %v9080 = vpop.permute.xlu0 %9079
        %v9082 = vlaneseq
        %v9083 = vshrl.u32 %v9082, 7
        %v9084 = vsub.s32 1, %v9083
        %v9085 = vrot.slane %v5690, %v9084
        %v9086 = vadd.f32 %v9020, %v9085
        %v9087 = vadd.f32 %v9024, %v9085
        %v9088 = vadd.f32 %v9028, %v9085
        %v9089 = vadd.f32 %v9032, %v9085
        %v9090 = vadd.f32 %v9036, %v9085
        %v9091 = vadd.f32 %v9040, %v9085
        %v9092 = vadd.f32 %v9044, %v9085
        %v9093 = vadd.f32 %v9048, %v9085
        %v9094 = vadd.f32 %v9052, %v9085
        %v9095 = vadd.f32 %v9056, %v9085
        %v9096 = vadd.f32 %v9060, %v9085
        %v9097 = vadd.f32 %v9064, %v9085
        %v9098 = vadd.f32 %v9068, %v9085
        %v9099 = vadd.f32 %v9072, %v9085
        %v9100 = vadd.f32 %v9076, %v9085
        %v9101 = vadd.f32 %v9080, %v9085
        %s9102 = sld [smem:[#allocation9 + $0x81]]
        %v9103 = vand.u32 2147483647, %v9086
        %v9104 = vand.u32 2147483647, %v9087
        %v9105 = vand.u32 2147483647, %v9088
        %v9106 = vand.u32 2147483647, %v9089
        %v9107 = vand.u32 2147483647, %v9090
        %v9108 = vand.u32 2147483647, %v9091
        %v9109 = vand.u32 2147483647, %v9092
        %v9110 = vand.u32 2147483647, %v9093
        %v9111 = vand.u32 2147483647, %v9094
        %v9112 = vand.u32 2147483647, %v9095
        %v9113 = vand.u32 2147483647, %v9096
        %v9114 = vand.u32 2147483647, %v9097
        %v9115 = vand.u32 2147483647, %v9098
        %v9116 = vand.u32 2147483647, %v9099
        %v9117 = vand.u32 2147483647, %v9100
        %v9118 = vand.u32 2147483647, %v9101
        %v9119 = vstv %s9102
        %v9120 = vmul.f32 %v9119, %v9103
        %v9121 = vmul.f32 %v9119, %v9104
        %v9122 = vmul.f32 %v9119, %v9105
        %v9123 = vmul.f32 %v9119, %v9106
        %v9124 = vmul.f32 %v9119, %v9107
        %v9125 = vmul.f32 %v9119, %v9108
        %v9126 = vmul.f32 %v9119, %v9109
        %v9127 = vmul.f32 %v9119, %v9110
        %v9128 = vmul.f32 %v9119, %v9111
        %v9129 = vmul.f32 %v9119, %v9112
        %v9130 = vmul.f32 %v9119, %v9113
        %v9131 = vmul.f32 %v9119, %v9114
        %v9132 = vmul.f32 %v9119, %v9115
        %v9133 = vmul.f32 %v9119, %v9116
        %v9134 = vmul.f32 %v9119, %v9117
        %v9135 = vmul.f32 %v9119, %v9118
        %v9136 = vadd.f32 %v9002, %v9120
        %v9137 = vadd.f32 %v9003, %v9121
        %v9138 = vadd.f32 %v9004, %v9122
        %v9139 = vadd.f32 %v9005, %v9123
        %v9140 = vadd.f32 %v9006, %v9124
        %v9141 = vadd.f32 %v9007, %v9125
        %v9142 = vadd.f32 %v9008, %v9126
        %v9143 = vadd.f32 %v9009, %v9127
        %v9144 = vadd.f32 %v9010, %v9128
        %v9145 = vadd.f32 %v9011, %v9129
        %v9146 = vadd.f32 %v9012, %v9130
        %v9147 = vadd.f32 %v9013, %v9131
        %v9148 = vadd.f32 %v9014, %v9132
        %v9149 = vadd.f32 %v9015, %v9133
        %v9150 = vadd.f32 %v9016, %v9134
        %v9151 = vadd.f32 %v9017, %v9135
        %9152 = vset.pattern.permute.xlu0 10
        %9153 = vperm.xlu0 %9152, %v5769
        %v9154 = vpop.permute.xlu0 %9153
        %9156 = vset.pattern.permute.xlu0 10
        %9157 = vperm.xlu0 %9156, %v5774
        %v9158 = vpop.permute.xlu0 %9157
        %9160 = vset.pattern.permute.xlu0 10
        %9161 = vperm.xlu0 %9160, %v5779
        %v9162 = vpop.permute.xlu0 %9161
        %9164 = vset.pattern.permute.xlu0 10
        %9165 = vperm.xlu0 %9164, %v5784
        %v9166 = vpop.permute.xlu0 %9165
        %9168 = vset.pattern.permute.xlu0 10
        %9169 = vperm.xlu0 %9168, %v5789
        %v9170 = vpop.permute.xlu0 %9169
        %9172 = vset.pattern.permute.xlu0 10
        %9173 = vperm.xlu0 %9172, %v5794
        %v9174 = vpop.permute.xlu0 %9173
        %9176 = vset.pattern.permute.xlu0 10
        %9177 = vperm.xlu0 %9176, %v5799
        %v9178 = vpop.permute.xlu0 %9177
        %9180 = vset.pattern.permute.xlu0 10
        %9181 = vperm.xlu0 %9180, %v5804
        %v9182 = vpop.permute.xlu0 %9181
        %9184 = vset.pattern.permute.xlu0 10
        %9185 = vperm.xlu0 %9184, %v5809
        %v9186 = vpop.permute.xlu0 %9185
        %9188 = vset.pattern.permute.xlu0 10
        %9189 = vperm.xlu0 %9188, %v5814
        %v9190 = vpop.permute.xlu0 %9189
        %9192 = vset.pattern.permute.xlu0 10
        %9193 = vperm.xlu0 %9192, %v5819
        %v9194 = vpop.permute.xlu0 %9193
        %9196 = vset.pattern.permute.xlu0 10
        %9197 = vperm.xlu0 %9196, %v5824
        %v9198 = vpop.permute.xlu0 %9197
        %9200 = vset.pattern.permute.xlu0 10
        %9201 = vperm.xlu0 %9200, %v5829
        %v9202 = vpop.permute.xlu0 %9201
        %9204 = vset.pattern.permute.xlu0 10
        %9205 = vperm.xlu0 %9204, %v5834
        %v9206 = vpop.permute.xlu0 %9205
        %9208 = vset.pattern.permute.xlu0 10
        %9209 = vperm.xlu0 %9208, %v5839
        %v9210 = vpop.permute.xlu0 %9209
        %9212 = vset.pattern.permute.xlu0 10
        %9213 = vperm.xlu0 %9212, %v5844
        %v9214 = vpop.permute.xlu0 %9213
        %v9216 = vlaneseq
        %v9217 = vshrl.u32 %v9216, 7
        %v9218 = vsub.s32 2, %v9217
        %v9219 = vrot.slane %v5690, %v9218
        %v9220 = vadd.f32 %v9154, %v9219
        %v9221 = vadd.f32 %v9158, %v9219
        %v9222 = vadd.f32 %v9162, %v9219
        %v9223 = vadd.f32 %v9166, %v9219
        %v9224 = vadd.f32 %v9170, %v9219
        %v9225 = vadd.f32 %v9174, %v9219
        %v9226 = vadd.f32 %v9178, %v9219
        %v9227 = vadd.f32 %v9182, %v9219
        %v9228 = vadd.f32 %v9186, %v9219
        %v9229 = vadd.f32 %v9190, %v9219
        %v9230 = vadd.f32 %v9194, %v9219
        %v9231 = vadd.f32 %v9198, %v9219
        %v9232 = vadd.f32 %v9202, %v9219
        %v9233 = vadd.f32 %v9206, %v9219
        %v9234 = vadd.f32 %v9210, %v9219
        %v9235 = vadd.f32 %v9214, %v9219
        %s9236 = sld [smem:[#allocation9 + $0x82]]
        %v9237 = vand.u32 2147483647, %v9220
        %v9238 = vand.u32 2147483647, %v9221
        %v9239 = vand.u32 2147483647, %v9222
        %v9240 = vand.u32 2147483647, %v9223
        %v9241 = vand.u32 2147483647, %v9224
        %v9242 = vand.u32 2147483647, %v9225
        %v9243 = vand.u32 2147483647, %v9226
        %v9244 = vand.u32 2147483647, %v9227
        %v9245 = vand.u32 2147483647, %v9228
        %v9246 = vand.u32 2147483647, %v9229
        %v9247 = vand.u32 2147483647, %v9230
        %v9248 = vand.u32 2147483647, %v9231
        %v9249 = vand.u32 2147483647, %v9232
        %v9250 = vand.u32 2147483647, %v9233
        %v9251 = vand.u32 2147483647, %v9234
        %v9252 = vand.u32 2147483647, %v9235
        %v9253 = vstv %s9236
        %v9254 = vmul.f32 %v9253, %v9237
        %v9255 = vmul.f32 %v9253, %v9238
        %v9256 = vmul.f32 %v9253, %v9239
        %v9257 = vmul.f32 %v9253, %v9240
        %v9258 = vmul.f32 %v9253, %v9241
        %v9259 = vmul.f32 %v9253, %v9242
        %v9260 = vmul.f32 %v9253, %v9243
        %v9261 = vmul.f32 %v9253, %v9244
        %v9262 = vmul.f32 %v9253, %v9245
        %v9263 = vmul.f32 %v9253, %v9246
        %v9264 = vmul.f32 %v9253, %v9247
        %v9265 = vmul.f32 %v9253, %v9248
        %v9266 = vmul.f32 %v9253, %v9249
        %v9267 = vmul.f32 %v9253, %v9250
        %v9268 = vmul.f32 %v9253, %v9251
        %v9269 = vmul.f32 %v9253, %v9252
        %v9270 = vadd.f32 %v9136, %v9254
        %v9271 = vadd.f32 %v9137, %v9255
        %v9272 = vadd.f32 %v9138, %v9256
        %v9273 = vadd.f32 %v9139, %v9257
        %v9274 = vadd.f32 %v9140, %v9258
        %v9275 = vadd.f32 %v9141, %v9259
        %v9276 = vadd.f32 %v9142, %v9260
        %v9277 = vadd.f32 %v9143, %v9261
        %v9278 = vadd.f32 %v9144, %v9262
        %v9279 = vadd.f32 %v9145, %v9263
        %v9280 = vadd.f32 %v9146, %v9264
        %v9281 = vadd.f32 %v9147, %v9265
        %v9282 = vadd.f32 %v9148, %v9266
        %v9283 = vadd.f32 %v9149, %v9267
        %v9284 = vadd.f32 %v9150, %v9268
        %v9285 = vadd.f32 %v9151, %v9269
        %9286 = vset.pattern.permute.xlu0 11
        %9287 = vperm.xlu0 %9286, %v5769
        %v9288 = vpop.permute.xlu0 %9287
        %9290 = vset.pattern.permute.xlu0 11
        %9291 = vperm.xlu0 %9290, %v5774
        %v9292 = vpop.permute.xlu0 %9291
        %9294 = vset.pattern.permute.xlu0 11
        %9295 = vperm.xlu0 %9294, %v5779
        %v9296 = vpop.permute.xlu0 %9295
        %9298 = vset.pattern.permute.xlu0 11
        %9299 = vperm.xlu0 %9298, %v5784
        %v9300 = vpop.permute.xlu0 %9299
        %9302 = vset.pattern.permute.xlu0 11
        %9303 = vperm.xlu0 %9302, %v5789
        %v9304 = vpop.permute.xlu0 %9303
        %9306 = vset.pattern.permute.xlu0 11
        %9307 = vperm.xlu0 %9306, %v5794
        %v9308 = vpop.permute.xlu0 %9307
        %9310 = vset.pattern.permute.xlu0 11
        %9311 = vperm.xlu0 %9310, %v5799
        %v9312 = vpop.permute.xlu0 %9311
        %9314 = vset.pattern.permute.xlu0 11
        %9315 = vperm.xlu0 %9314, %v5804
        %v9316 = vpop.permute.xlu0 %9315
        %9318 = vset.pattern.permute.xlu0 11
        %9319 = vperm.xlu0 %9318, %v5809
        %v9320 = vpop.permute.xlu0 %9319
        %9322 = vset.pattern.permute.xlu0 11
        %9323 = vperm.xlu0 %9322, %v5814
        %v9324 = vpop.permute.xlu0 %9323
        %9326 = vset.pattern.permute.xlu0 11
        %9327 = vperm.xlu0 %9326, %v5819
        %v9328 = vpop.permute.xlu0 %9327
        %9330 = vset.pattern.permute.xlu0 11
        %9331 = vperm.xlu0 %9330, %v5824
        %v9332 = vpop.permute.xlu0 %9331
        %9334 = vset.pattern.permute.xlu0 11
        %9335 = vperm.xlu0 %9334, %v5829
        %v9336 = vpop.permute.xlu0 %9335
        %9338 = vset.pattern.permute.xlu0 11
        %9339 = vperm.xlu0 %9338, %v5834
        %v9340 = vpop.permute.xlu0 %9339
        %9342 = vset.pattern.permute.xlu0 11
        %9343 = vperm.xlu0 %9342, %v5839
        %v9344 = vpop.permute.xlu0 %9343
        %9346 = vset.pattern.permute.xlu0 11
        %9347 = vperm.xlu0 %9346, %v5844
        %v9348 = vpop.permute.xlu0 %9347
        %v9350 = vlaneseq
        %v9351 = vshrl.u32 %v9350, 7
        %v9352 = vsub.s32 3, %v9351
        %v9353 = vrot.slane %v5690, %v9352
        %v9354 = vadd.f32 %v9288, %v9353
        %v9355 = vadd.f32 %v9292, %v9353
        %v9356 = vadd.f32 %v9296, %v9353
        %v9357 = vadd.f32 %v9300, %v9353
        %v9358 = vadd.f32 %v9304, %v9353
        %v9359 = vadd.f32 %v9308, %v9353
        %v9360 = vadd.f32 %v9312, %v9353
        %v9361 = vadd.f32 %v9316, %v9353
        %v9362 = vadd.f32 %v9320, %v9353
        %v9363 = vadd.f32 %v9324, %v9353
        %v9364 = vadd.f32 %v9328, %v9353
        %v9365 = vadd.f32 %v9332, %v9353
        %v9366 = vadd.f32 %v9336, %v9353
        %v9367 = vadd.f32 %v9340, %v9353
        %v9368 = vadd.f32 %v9344, %v9353
        %v9369 = vadd.f32 %v9348, %v9353
        %s9370 = sld [smem:[#allocation9 + $0x83]]
        %v9371 = vand.u32 2147483647, %v9354
        %v9372 = vand.u32 2147483647, %v9355
        %v9373 = vand.u32 2147483647, %v9356
        %v9374 = vand.u32 2147483647, %v9357
        %v9375 = vand.u32 2147483647, %v9358
        %v9376 = vand.u32 2147483647, %v9359
        %v9377 = vand.u32 2147483647, %v9360
        %v9378 = vand.u32 2147483647, %v9361
        %v9379 = vand.u32 2147483647, %v9362
        %v9380 = vand.u32 2147483647, %v9363
        %v9381 = vand.u32 2147483647, %v9364
        %v9382 = vand.u32 2147483647, %v9365
        %v9383 = vand.u32 2147483647, %v9366
        %v9384 = vand.u32 2147483647, %v9367
        %v9385 = vand.u32 2147483647, %v9368
        %v9386 = vand.u32 2147483647, %v9369
        %v9387 = vstv %s9370
        %v9388 = vmul.f32 %v9387, %v9371
        %v9389 = vmul.f32 %v9387, %v9372
        %v9390 = vmul.f32 %v9387, %v9373
        %v9391 = vmul.f32 %v9387, %v9374
        %v9392 = vmul.f32 %v9387, %v9375
        %v9393 = vmul.f32 %v9387, %v9376
        %v9394 = vmul.f32 %v9387, %v9377
        %v9395 = vmul.f32 %v9387, %v9378
        %v9396 = vmul.f32 %v9387, %v9379
        %v9397 = vmul.f32 %v9387, %v9380
        %v9398 = vmul.f32 %v9387, %v9381
        %v9399 = vmul.f32 %v9387, %v9382
        %v9400 = vmul.f32 %v9387, %v9383
        %v9401 = vmul.f32 %v9387, %v9384
        %v9402 = vmul.f32 %v9387, %v9385
        %v9403 = vmul.f32 %v9387, %v9386
        %v9404 = vadd.f32 %v9270, %v9388
        %v9405 = vadd.f32 %v9271, %v9389
        %v9406 = vadd.f32 %v9272, %v9390
        %v9407 = vadd.f32 %v9273, %v9391
        %v9408 = vadd.f32 %v9274, %v9392
        %v9409 = vadd.f32 %v9275, %v9393
        %v9410 = vadd.f32 %v9276, %v9394
        %v9411 = vadd.f32 %v9277, %v9395
        %v9412 = vadd.f32 %v9278, %v9396
        %v9413 = vadd.f32 %v9279, %v9397
        %v9414 = vadd.f32 %v9280, %v9398
        %v9415 = vadd.f32 %v9281, %v9399
        %v9416 = vadd.f32 %v9282, %v9400
        %v9417 = vadd.f32 %v9283, %v9401
        %v9418 = vadd.f32 %v9284, %v9402
        %v9419 = vadd.f32 %v9285, %v9403
        %9420 = vset.pattern.permute.xlu0 12
        %9421 = vperm.xlu0 %9420, %v5769
        %v9422 = vpop.permute.xlu0 %9421
        %9424 = vset.pattern.permute.xlu0 12
        %9425 = vperm.xlu0 %9424, %v5774
        %v9426 = vpop.permute.xlu0 %9425
        %9428 = vset.pattern.permute.xlu0 12
        %9429 = vperm.xlu0 %9428, %v5779
        %v9430 = vpop.permute.xlu0 %9429
        %9432 = vset.pattern.permute.xlu0 12
        %9433 = vperm.xlu0 %9432, %v5784
        %v9434 = vpop.permute.xlu0 %9433
        %9436 = vset.pattern.permute.xlu0 12
        %9437 = vperm.xlu0 %9436, %v5789
        %v9438 = vpop.permute.xlu0 %9437
        %9440 = vset.pattern.permute.xlu0 12
        %9441 = vperm.xlu0 %9440, %v5794
        %v9442 = vpop.permute.xlu0 %9441
        %9444 = vset.pattern.permute.xlu0 12
        %9445 = vperm.xlu0 %9444, %v5799
        %v9446 = vpop.permute.xlu0 %9445
        %9448 = vset.pattern.permute.xlu0 12
        %9449 = vperm.xlu0 %9448, %v5804
        %v9450 = vpop.permute.xlu0 %9449
        %9452 = vset.pattern.permute.xlu0 12
        %9453 = vperm.xlu0 %9452, %v5809
        %v9454 = vpop.permute.xlu0 %9453
        %9456 = vset.pattern.permute.xlu0 12
        %9457 = vperm.xlu0 %9456, %v5814
        %v9458 = vpop.permute.xlu0 %9457
        %9460 = vset.pattern.permute.xlu0 12
        %9461 = vperm.xlu0 %9460, %v5819
        %v9462 = vpop.permute.xlu0 %9461
        %9464 = vset.pattern.permute.xlu0 12
        %9465 = vperm.xlu0 %9464, %v5824
        %v9466 = vpop.permute.xlu0 %9465
        %9468 = vset.pattern.permute.xlu0 12
        %9469 = vperm.xlu0 %9468, %v5829
        %v9470 = vpop.permute.xlu0 %9469
        %9472 = vset.pattern.permute.xlu0 12
        %9473 = vperm.xlu0 %9472, %v5834
        %v9474 = vpop.permute.xlu0 %9473
        %9476 = vset.pattern.permute.xlu0 12
        %9477 = vperm.xlu0 %9476, %v5839
        %v9478 = vpop.permute.xlu0 %9477
        %9480 = vset.pattern.permute.xlu0 12
        %9481 = vperm.xlu0 %9480, %v5844
        %v9482 = vpop.permute.xlu0 %9481
        %v9484 = vlaneseq
        %v9485 = vshrl.u32 %v9484, 7
        %v9486 = vsub.s32 4, %v9485
        %v9487 = vrot.slane %v5690, %v9486
        %v9488 = vadd.f32 %v9422, %v9487
        %v9489 = vadd.f32 %v9426, %v9487
        %v9490 = vadd.f32 %v9430, %v9487
        %v9491 = vadd.f32 %v9434, %v9487
        %v9492 = vadd.f32 %v9438, %v9487
        %v9493 = vadd.f32 %v9442, %v9487
        %v9494 = vadd.f32 %v9446, %v9487
        %v9495 = vadd.f32 %v9450, %v9487
        %v9496 = vadd.f32 %v9454, %v9487
        %v9497 = vadd.f32 %v9458, %v9487
        %v9498 = vadd.f32 %v9462, %v9487
        %v9499 = vadd.f32 %v9466, %v9487
        %v9500 = vadd.f32 %v9470, %v9487
        %v9501 = vadd.f32 %v9474, %v9487
        %v9502 = vadd.f32 %v9478, %v9487
        %v9503 = vadd.f32 %v9482, %v9487
        %s9504 = sld [smem:[#allocation9 + $0x84]]
        %v9505 = vand.u32 2147483647, %v9488
        %v9506 = vand.u32 2147483647, %v9489
        %v9507 = vand.u32 2147483647, %v9490
        %v9508 = vand.u32 2147483647, %v9491
        %v9509 = vand.u32 2147483647, %v9492
        %v9510 = vand.u32 2147483647, %v9493
        %v9511 = vand.u32 2147483647, %v9494
        %v9512 = vand.u32 2147483647, %v9495
        %v9513 = vand.u32 2147483647, %v9496
        %v9514 = vand.u32 2147483647, %v9497
        %v9515 = vand.u32 2147483647, %v9498
        %v9516 = vand.u32 2147483647, %v9499
        %v9517 = vand.u32 2147483647, %v9500
        %v9518 = vand.u32 2147483647, %v9501
        %v9519 = vand.u32 2147483647, %v9502
        %v9520 = vand.u32 2147483647, %v9503
        %v9521 = vstv %s9504
        %v9522 = vmul.f32 %v9521, %v9505
        %v9523 = vmul.f32 %v9521, %v9506
        %v9524 = vmul.f32 %v9521, %v9507
        %v9525 = vmul.f32 %v9521, %v9508
        %v9526 = vmul.f32 %v9521, %v9509
        %v9527 = vmul.f32 %v9521, %v9510
        %v9528 = vmul.f32 %v9521, %v9511
        %v9529 = vmul.f32 %v9521, %v9512
        %v9530 = vmul.f32 %v9521, %v9513
        %v9531 = vmul.f32 %v9521, %v9514
        %v9532 = vmul.f32 %v9521, %v9515
        %v9533 = vmul.f32 %v9521, %v9516
        %v9534 = vmul.f32 %v9521, %v9517
        %v9535 = vmul.f32 %v9521, %v9518
        %v9536 = vmul.f32 %v9521, %v9519
        %v9537 = vmul.f32 %v9521, %v9520
        %v9538 = vadd.f32 %v9404, %v9522
        %v9539 = vadd.f32 %v9405, %v9523
        %v9540 = vadd.f32 %v9406, %v9524
        %v9541 = vadd.f32 %v9407, %v9525
        %v9542 = vadd.f32 %v9408, %v9526
        %v9543 = vadd.f32 %v9409, %v9527
        %v9544 = vadd.f32 %v9410, %v9528
        %v9545 = vadd.f32 %v9411, %v9529
        %v9546 = vadd.f32 %v9412, %v9530
        %v9547 = vadd.f32 %v9413, %v9531
        %v9548 = vadd.f32 %v9414, %v9532
        %v9549 = vadd.f32 %v9415, %v9533
        %v9550 = vadd.f32 %v9416, %v9534
        %v9551 = vadd.f32 %v9417, %v9535
        %v9552 = vadd.f32 %v9418, %v9536
        %v9553 = vadd.f32 %v9419, %v9537
        %9554 = vset.pattern.permute.xlu0 13
        %9555 = vperm.xlu0 %9554, %v5769
        %v9556 = vpop.permute.xlu0 %9555
        %9558 = vset.pattern.permute.xlu0 13
        %9559 = vperm.xlu0 %9558, %v5774
        %v9560 = vpop.permute.xlu0 %9559
        %9562 = vset.pattern.permute.xlu0 13
        %9563 = vperm.xlu0 %9562, %v5779
        %v9564 = vpop.permute.xlu0 %9563
        %9566 = vset.pattern.permute.xlu0 13
        %9567 = vperm.xlu0 %9566, %v5784
        %v9568 = vpop.permute.xlu0 %9567
        %9570 = vset.pattern.permute.xlu0 13
        %9571 = vperm.xlu0 %9570, %v5789
        %v9572 = vpop.permute.xlu0 %9571
        %9574 = vset.pattern.permute.xlu0 13
        %9575 = vperm.xlu0 %9574, %v5794
        %v9576 = vpop.permute.xlu0 %9575
        %9578 = vset.pattern.permute.xlu0 13
        %9579 = vperm.xlu0 %9578, %v5799
        %v9580 = vpop.permute.xlu0 %9579
        %9582 = vset.pattern.permute.xlu0 13
        %9583 = vperm.xlu0 %9582, %v5804
        %v9584 = vpop.permute.xlu0 %9583
        %9586 = vset.pattern.permute.xlu0 13
        %9587 = vperm.xlu0 %9586, %v5809
        %v9588 = vpop.permute.xlu0 %9587
        %9590 = vset.pattern.permute.xlu0 13
        %9591 = vperm.xlu0 %9590, %v5814
        %v9592 = vpop.permute.xlu0 %9591
        %9594 = vset.pattern.permute.xlu0 13
        %9595 = vperm.xlu0 %9594, %v5819
        %v9596 = vpop.permute.xlu0 %9595
        %9598 = vset.pattern.permute.xlu0 13
        %9599 = vperm.xlu0 %9598, %v5824
        %v9600 = vpop.permute.xlu0 %9599
        %9602 = vset.pattern.permute.xlu0 13
        %9603 = vperm.xlu0 %9602, %v5829
        %v9604 = vpop.permute.xlu0 %9603
        %9606 = vset.pattern.permute.xlu0 13
        %9607 = vperm.xlu0 %9606, %v5834
        %v9608 = vpop.permute.xlu0 %9607
        %9610 = vset.pattern.permute.xlu0 13
        %9611 = vperm.xlu0 %9610, %v5839
        %v9612 = vpop.permute.xlu0 %9611
        %9614 = vset.pattern.permute.xlu0 13
        %9615 = vperm.xlu0 %9614, %v5844
        %v9616 = vpop.permute.xlu0 %9615
        %v9618 = vlaneseq
        %v9619 = vshrl.u32 %v9618, 7
        %v9620 = vsub.s32 5, %v9619
        %v9621 = vrot.slane %v5690, %v9620
        %v9622 = vadd.f32 %v9556, %v9621
        %v9623 = vadd.f32 %v9560, %v9621
        %v9624 = vadd.f32 %v9564, %v9621
        %v9625 = vadd.f32 %v9568, %v9621
        %v9626 = vadd.f32 %v9572, %v9621
        %v9627 = vadd.f32 %v9576, %v9621
        %v9628 = vadd.f32 %v9580, %v9621
        %v9629 = vadd.f32 %v9584, %v9621
        %v9630 = vadd.f32 %v9588, %v9621
        %v9631 = vadd.f32 %v9592, %v9621
        %v9632 = vadd.f32 %v9596, %v9621
        %v9633 = vadd.f32 %v9600, %v9621
        %v9634 = vadd.f32 %v9604, %v9621
        %v9635 = vadd.f32 %v9608, %v9621
        %v9636 = vadd.f32 %v9612, %v9621
        %v9637 = vadd.f32 %v9616, %v9621
        %s9638 = sld [smem:[#allocation9 + $0x85]]
        %v9639 = vand.u32 2147483647, %v9622
        %v9640 = vand.u32 2147483647, %v9623
        %v9641 = vand.u32 2147483647, %v9624
        %v9642 = vand.u32 2147483647, %v9625
        %v9643 = vand.u32 2147483647, %v9626
        %v9644 = vand.u32 2147483647, %v9627
        %v9645 = vand.u32 2147483647, %v9628
        %v9646 = vand.u32 2147483647, %v9629
        %v9647 = vand.u32 2147483647, %v9630
        %v9648 = vand.u32 2147483647, %v9631
        %v9649 = vand.u32 2147483647, %v9632
        %v9650 = vand.u32 2147483647, %v9633
        %v9651 = vand.u32 2147483647, %v9634
        %v9652 = vand.u32 2147483647, %v9635
        %v9653 = vand.u32 2147483647, %v9636
        %v9654 = vand.u32 2147483647, %v9637
        %v9655 = vstv %s9638
        %v9656 = vmul.f32 %v9655, %v9639
        %v9657 = vmul.f32 %v9655, %v9640
        %v9658 = vmul.f32 %v9655, %v9641
        %v9659 = vmul.f32 %v9655, %v9642
        %v9660 = vmul.f32 %v9655, %v9643
        %v9661 = vmul.f32 %v9655, %v9644
        %v9662 = vmul.f32 %v9655, %v9645
        %v9663 = vmul.f32 %v9655, %v9646
        %v9664 = vmul.f32 %v9655, %v9647
        %v9665 = vmul.f32 %v9655, %v9648
        %v9666 = vmul.f32 %v9655, %v9649
        %v9667 = vmul.f32 %v9655, %v9650
        %v9668 = vmul.f32 %v9655, %v9651
        %v9669 = vmul.f32 %v9655, %v9652
        %v9670 = vmul.f32 %v9655, %v9653
        %v9671 = vmul.f32 %v9655, %v9654
        %v9672 = vadd.f32 %v9538, %v9656
        %v9673 = vadd.f32 %v9539, %v9657
        %v9674 = vadd.f32 %v9540, %v9658
        %v9675 = vadd.f32 %v9541, %v9659
        %v9676 = vadd.f32 %v9542, %v9660
        %v9677 = vadd.f32 %v9543, %v9661
        %v9678 = vadd.f32 %v9544, %v9662
        %v9679 = vadd.f32 %v9545, %v9663
        %v9680 = vadd.f32 %v9546, %v9664
        %v9681 = vadd.f32 %v9547, %v9665
        %v9682 = vadd.f32 %v9548, %v9666
        %v9683 = vadd.f32 %v9549, %v9667
        %v9684 = vadd.f32 %v9550, %v9668
        %v9685 = vadd.f32 %v9551, %v9669
        %v9686 = vadd.f32 %v9552, %v9670
        %v9687 = vadd.f32 %v9553, %v9671
        %9688 = vset.pattern.permute.xlu0 14
        %9689 = vperm.xlu0 %9688, %v5769
        %v9690 = vpop.permute.xlu0 %9689
        %9692 = vset.pattern.permute.xlu0 14
        %9693 = vperm.xlu0 %9692, %v5774
        %v9694 = vpop.permute.xlu0 %9693
        %9696 = vset.pattern.permute.xlu0 14
        %9697 = vperm.xlu0 %9696, %v5779
        %v9698 = vpop.permute.xlu0 %9697
        %9700 = vset.pattern.permute.xlu0 14
        %9701 = vperm.xlu0 %9700, %v5784
        %v9702 = vpop.permute.xlu0 %9701
        %9704 = vset.pattern.permute.xlu0 14
        %9705 = vperm.xlu0 %9704, %v5789
        %v9706 = vpop.permute.xlu0 %9705
        %9708 = vset.pattern.permute.xlu0 14
        %9709 = vperm.xlu0 %9708, %v5794
        %v9710 = vpop.permute.xlu0 %9709
        %9712 = vset.pattern.permute.xlu0 14
        %9713 = vperm.xlu0 %9712, %v5799
        %v9714 = vpop.permute.xlu0 %9713
        %9716 = vset.pattern.permute.xlu0 14
        %9717 = vperm.xlu0 %9716, %v5804
        %v9718 = vpop.permute.xlu0 %9717
        %9720 = vset.pattern.permute.xlu0 14
        %9721 = vperm.xlu0 %9720, %v5809
        %v9722 = vpop.permute.xlu0 %9721
        %9724 = vset.pattern.permute.xlu0 14
        %9725 = vperm.xlu0 %9724, %v5814
        %v9726 = vpop.permute.xlu0 %9725
        %9728 = vset.pattern.permute.xlu0 14
        %9729 = vperm.xlu0 %9728, %v5819
        %v9730 = vpop.permute.xlu0 %9729
        %9732 = vset.pattern.permute.xlu0 14
        %9733 = vperm.xlu0 %9732, %v5824
        %v9734 = vpop.permute.xlu0 %9733
        %9736 = vset.pattern.permute.xlu0 14
        %9737 = vperm.xlu0 %9736, %v5829
        %v9738 = vpop.permute.xlu0 %9737
        %9740 = vset.pattern.permute.xlu0 14
        %9741 = vperm.xlu0 %9740, %v5834
        %v9742 = vpop.permute.xlu0 %9741
        %9744 = vset.pattern.permute.xlu0 14
        %9745 = vperm.xlu0 %9744, %v5839
        %v9746 = vpop.permute.xlu0 %9745
        %9748 = vset.pattern.permute.xlu0 14
        %9749 = vperm.xlu0 %9748, %v5844
        %v9750 = vpop.permute.xlu0 %9749
        %v9752 = vlaneseq
        %v9753 = vshrl.u32 %v9752, 7
        %v9754 = vsub.s32 6, %v9753
        %v9755 = vrot.slane %v5690, %v9754
        %v9756 = vadd.f32 %v9690, %v9755
        %v9757 = vadd.f32 %v9694, %v9755
        %v9758 = vadd.f32 %v9698, %v9755
        %v9759 = vadd.f32 %v9702, %v9755
        %v9760 = vadd.f32 %v9706, %v9755
        %v9761 = vadd.f32 %v9710, %v9755
        %v9762 = vadd.f32 %v9714, %v9755
        %v9763 = vadd.f32 %v9718, %v9755
        %v9764 = vadd.f32 %v9722, %v9755
        %v9765 = vadd.f32 %v9726, %v9755
        %v9766 = vadd.f32 %v9730, %v9755
        %v9767 = vadd.f32 %v9734, %v9755
        %v9768 = vadd.f32 %v9738, %v9755
        %v9769 = vadd.f32 %v9742, %v9755
        %v9770 = vadd.f32 %v9746, %v9755
        %v9771 = vadd.f32 %v9750, %v9755
        %s9772 = sld [smem:[#allocation9 + $0x86]]
        %v9773 = vand.u32 2147483647, %v9756
        %v9774 = vand.u32 2147483647, %v9757
        %v9775 = vand.u32 2147483647, %v9758
        %v9776 = vand.u32 2147483647, %v9759
        %v9777 = vand.u32 2147483647, %v9760
        %v9778 = vand.u32 2147483647, %v9761
        %v9779 = vand.u32 2147483647, %v9762
        %v9780 = vand.u32 2147483647, %v9763
        %v9781 = vand.u32 2147483647, %v9764
        %v9782 = vand.u32 2147483647, %v9765
        %v9783 = vand.u32 2147483647, %v9766
        %v9784 = vand.u32 2147483647, %v9767
        %v9785 = vand.u32 2147483647, %v9768
        %v9786 = vand.u32 2147483647, %v9769
        %v9787 = vand.u32 2147483647, %v9770
        %v9788 = vand.u32 2147483647, %v9771
        %v9789 = vstv %s9772
        %v9790 = vmul.f32 %v9789, %v9773
        %v9791 = vmul.f32 %v9789, %v9774
        %v9792 = vmul.f32 %v9789, %v9775
        %v9793 = vmul.f32 %v9789, %v9776
        %v9794 = vmul.f32 %v9789, %v9777
        %v9795 = vmul.f32 %v9789, %v9778
        %v9796 = vmul.f32 %v9789, %v9779
        %v9797 = vmul.f32 %v9789, %v9780
        %v9798 = vmul.f32 %v9789, %v9781
        %v9799 = vmul.f32 %v9789, %v9782
        %v9800 = vmul.f32 %v9789, %v9783
        %v9801 = vmul.f32 %v9789, %v9784
        %v9802 = vmul.f32 %v9789, %v9785
        %v9803 = vmul.f32 %v9789, %v9786
        %v9804 = vmul.f32 %v9789, %v9787
        %v9805 = vmul.f32 %v9789, %v9788
        %v9806 = vadd.f32 %v9672, %v9790
        %v9807 = vadd.f32 %v9673, %v9791
        %v9808 = vadd.f32 %v9674, %v9792
        %v9809 = vadd.f32 %v9675, %v9793
        %v9810 = vadd.f32 %v9676, %v9794
        %v9811 = vadd.f32 %v9677, %v9795
        %v9812 = vadd.f32 %v9678, %v9796
        %v9813 = vadd.f32 %v9679, %v9797
        %v9814 = vadd.f32 %v9680, %v9798
        %v9815 = vadd.f32 %v9681, %v9799
        %v9816 = vadd.f32 %v9682, %v9800
        %v9817 = vadd.f32 %v9683, %v9801
        %v9818 = vadd.f32 %v9684, %v9802
        %v9819 = vadd.f32 %v9685, %v9803
        %v9820 = vadd.f32 %v9686, %v9804
        %v9821 = vadd.f32 %v9687, %v9805
        %9822 = vset.pattern.permute.xlu0 15
        %9823 = vperm.xlu0 %9822, %v5769
        %v9824 = vpop.permute.xlu0 %9823
        %9826 = vset.pattern.permute.xlu0 15
        %9827 = vperm.xlu0 %9826, %v5774
        %v9828 = vpop.permute.xlu0 %9827
        %9830 = vset.pattern.permute.xlu0 15
        %9831 = vperm.xlu0 %9830, %v5779
        %v9832 = vpop.permute.xlu0 %9831
        %9834 = vset.pattern.permute.xlu0 15
        %9835 = vperm.xlu0 %9834, %v5784
        %v9836 = vpop.permute.xlu0 %9835
        %9838 = vset.pattern.permute.xlu0 15
        %9839 = vperm.xlu0 %9838, %v5789
        %v9840 = vpop.permute.xlu0 %9839
        %9842 = vset.pattern.permute.xlu0 15
        %9843 = vperm.xlu0 %9842, %v5794
        %v9844 = vpop.permute.xlu0 %9843
        %9846 = vset.pattern.permute.xlu0 15
        %9847 = vperm.xlu0 %9846, %v5799
        %v9848 = vpop.permute.xlu0 %9847
        %9850 = vset.pattern.permute.xlu0 15
        %9851 = vperm.xlu0 %9850, %v5804
        %v9852 = vpop.permute.xlu0 %9851
        %9854 = vset.pattern.permute.xlu0 15
        %9855 = vperm.xlu0 %9854, %v5809
        %v9856 = vpop.permute.xlu0 %9855
        %9858 = vset.pattern.permute.xlu0 15
        %9859 = vperm.xlu0 %9858, %v5814
        %v9860 = vpop.permute.xlu0 %9859
        %9862 = vset.pattern.permute.xlu0 15
        %9863 = vperm.xlu0 %9862, %v5819
        %v9864 = vpop.permute.xlu0 %9863
        %9866 = vset.pattern.permute.xlu0 15
        %9867 = vperm.xlu0 %9866, %v5824
        %v9868 = vpop.permute.xlu0 %9867
        %9870 = vset.pattern.permute.xlu0 15
        %9871 = vperm.xlu0 %9870, %v5829
        %v9872 = vpop.permute.xlu0 %9871
        %9874 = vset.pattern.permute.xlu0 15
        %9875 = vperm.xlu0 %9874, %v5834
        %v9876 = vpop.permute.xlu0 %9875
        %9878 = vset.pattern.permute.xlu0 15
        %9879 = vperm.xlu0 %9878, %v5839
        %v9880 = vpop.permute.xlu0 %9879
        %9882 = vset.pattern.permute.xlu0 15
        %9883 = vperm.xlu0 %9882, %v5844
        %v9884 = vpop.permute.xlu0 %9883
        %v9886 = vlaneseq
        %v9887 = vshrl.u32 %v9886, 7
        %v9888 = vsub.s32 7, %v9887
        %v9889 = vrot.slane %v5690, %v9888
        %v9890 = vadd.f32 %v9824, %v9889
        %v9891 = vadd.f32 %v9828, %v9889
        %v9892 = vadd.f32 %v9832, %v9889
        %v9893 = vadd.f32 %v9836, %v9889
        %v9894 = vadd.f32 %v9840, %v9889
        %v9895 = vadd.f32 %v9844, %v9889
        %v9896 = vadd.f32 %v9848, %v9889
        %v9897 = vadd.f32 %v9852, %v9889
        %v9898 = vadd.f32 %v9856, %v9889
        %v9899 = vadd.f32 %v9860, %v9889
        %v9900 = vadd.f32 %v9864, %v9889
        %v9901 = vadd.f32 %v9868, %v9889
        %v9902 = vadd.f32 %v9872, %v9889
        %v9903 = vadd.f32 %v9876, %v9889
        %v9904 = vadd.f32 %v9880, %v9889
        %v9905 = vadd.f32 %v9884, %v9889
        %s9906 = sld [smem:[#allocation9 + $0x87]]
        %v9907 = vand.u32 2147483647, %v9890
        %v9908 = vand.u32 2147483647, %v9891
        %v9909 = vand.u32 2147483647, %v9892
        %v9910 = vand.u32 2147483647, %v9893
        %v9911 = vand.u32 2147483647, %v9894
        %v9912 = vand.u32 2147483647, %v9895
        %v9913 = vand.u32 2147483647, %v9896
        %v9914 = vand.u32 2147483647, %v9897
        %v9915 = vand.u32 2147483647, %v9898
        %v9916 = vand.u32 2147483647, %v9899
        %v9917 = vand.u32 2147483647, %v9900
        %v9918 = vand.u32 2147483647, %v9901
        %v9919 = vand.u32 2147483647, %v9902
        %v9920 = vand.u32 2147483647, %v9903
        %v9921 = vand.u32 2147483647, %v9904
        %v9922 = vand.u32 2147483647, %v9905
        %v9923 = vstv %s9906
        %v9924 = vmul.f32 %v9923, %v9907
        %v9925 = vmul.f32 %v9923, %v9908
        %v9926 = vmul.f32 %v9923, %v9909
        %v9927 = vmul.f32 %v9923, %v9910
        %v9928 = vmul.f32 %v9923, %v9911
        %v9929 = vmul.f32 %v9923, %v9912
        %v9930 = vmul.f32 %v9923, %v9913
        %v9931 = vmul.f32 %v9923, %v9914
        %v9932 = vmul.f32 %v9923, %v9915
        %v9933 = vmul.f32 %v9923, %v9916
        %v9934 = vmul.f32 %v9923, %v9917
        %v9935 = vmul.f32 %v9923, %v9918
        %v9936 = vmul.f32 %v9923, %v9919
        %v9937 = vmul.f32 %v9923, %v9920
        %v9938 = vmul.f32 %v9923, %v9921
        %v9939 = vmul.f32 %v9923, %v9922
        %v9940 = vadd.f32 %v9806, %v9924
        %v9941 = vadd.f32 %v9807, %v9925
        %v9942 = vadd.f32 %v9808, %v9926
        %v9943 = vadd.f32 %v9809, %v9927
        %v9944 = vadd.f32 %v9810, %v9928
        %v9945 = vadd.f32 %v9811, %v9929
        %v9946 = vadd.f32 %v9812, %v9930
        %v9947 = vadd.f32 %v9813, %v9931
        %v9948 = vadd.f32 %v9814, %v9932
        %v9949 = vadd.f32 %v9815, %v9933
        %v9950 = vadd.f32 %v9816, %v9934
        %v9951 = vadd.f32 %v9817, %v9935
        %v9952 = vadd.f32 %v9818, %v9936
        %v9953 = vadd.f32 %v9819, %v9937
        %v9954 = vadd.f32 %v9820, %v9938
        %v9955 = vadd.f32 %v9821, %v9939
        %9956 = vmax.xlane.f32.xlu0 %v9940
        %v9957 = vpop.xlane.xlu0 %9956
        %9958 = vmax.xlane.f32.xlu0 %v9941
        %v9959 = vpop.xlane.xlu0 %9958
        %9960 = vmax.xlane.f32.xlu0 %v9942
        %v9961 = vpop.xlane.xlu0 %9960
        %9962 = vmax.xlane.f32.xlu0 %v9943
        %v9963 = vpop.xlane.xlu0 %9962
        %9964 = vmax.xlane.f32.xlu0 %v9944
        %v9965 = vpop.xlane.xlu0 %9964
        %9966 = vmax.xlane.f32.xlu0 %v9945
        %v9967 = vpop.xlane.xlu0 %9966
        %9968 = vmax.xlane.f32.xlu0 %v9946
        %v9969 = vpop.xlane.xlu0 %9968
        %9970 = vmax.xlane.f32.xlu0 %v9947
        %v9971 = vpop.xlane.xlu0 %9970
        %9972 = vmax.xlane.f32.xlu0 %v9948
        %v9973 = vpop.xlane.xlu0 %9972
        %9974 = vmax.xlane.f32.xlu0 %v9949
        %v9975 = vpop.xlane.xlu0 %9974
        %9976 = vmax.xlane.f32.xlu0 %v9950
        %v9977 = vpop.xlane.xlu0 %9976
        %9978 = vmax.xlane.f32.xlu0 %v9951
        %v9979 = vpop.xlane.xlu0 %9978
        %9980 = vmax.xlane.f32.xlu0 %v9952
        %v9981 = vpop.xlane.xlu0 %9980
        %9982 = vmax.xlane.f32.xlu0 %v9953
        %v9983 = vpop.xlane.xlu0 %9982
        %9984 = vmax.xlane.f32.xlu0 %v9954
        %v9985 = vpop.xlane.xlu0 %9984
        %9986 = vmax.xlane.f32.xlu0 %v9955
        %v9987 = vpop.xlane.xlu0 %9986
        %v9988 = vsub.f32 %v9940, %v9957
        %v9989 = vsub.f32 %v9941, %v9959
        %v9990 = vsub.f32 %v9942, %v9961
        %v9991 = vsub.f32 %v9943, %v9963
        %v9992 = vsub.f32 %v9944, %v9965
        %v9993 = vsub.f32 %v9945, %v9967
        %v9994 = vsub.f32 %v9946, %v9969
        %v9995 = vsub.f32 %v9947, %v9971
        %v9996 = vsub.f32 %v9948, %v9973
        %v9997 = vsub.f32 %v9949, %v9975
        %v9998 = vsub.f32 %v9950, %v9977
        %v9999 = vsub.f32 %v9951, %v9979
        %v10000 = vsub.f32 %v9952, %v9981
        %v10001 = vsub.f32 %v9953, %v9983
        %v10002 = vsub.f32 %v9954, %v9985
        %v10003 = vsub.f32 %v9955, %v9987
        %v10004 = vmul.f32 %v9988, 1.442695
        %v10005 = vpow.pop %v10004
        %v10006 = vmul.f32 %v9989, 1.442695
        %v10007 = vpow.pop %v10006
        %v10008 = vmul.f32 %v9990, 1.442695
        %v10009 = vpow.pop %v10008
        %v10010 = vmul.f32 %v9991, 1.442695
        %v10011 = vpow.pop %v10010
        %v10012 = vmul.f32 %v9992, 1.442695
        %v10013 = vpow.pop %v10012
        %v10014 = vmul.f32 %v9993, 1.442695
        %v10015 = vpow.pop %v10014
        %v10016 = vmul.f32 %v9994, 1.442695
        %v10017 = vpow.pop %v10016
        %v10018 = vmul.f32 %v9995, 1.442695
        %v10019 = vpow.pop %v10018
        %v10020 = vmul.f32 %v9996, 1.442695
        %v10021 = vpow.pop %v10020
        %v10022 = vmul.f32 %v9997, 1.442695
        %v10023 = vpow.pop %v10022
        %v10024 = vmul.f32 %v9998, 1.442695
        %v10025 = vpow.pop %v10024
        %v10026 = vmul.f32 %v9999, 1.442695
        %v10027 = vpow.pop %v10026
        %v10028 = vmul.f32 %v10000, 1.442695
        %v10029 = vpow.pop %v10028
        %v10030 = vmul.f32 %v10001, 1.442695
        %v10031 = vpow.pop %v10030
        %v10032 = vmul.f32 %v10002, 1.442695
        %v10033 = vpow.pop %v10032
        %v10034 = vmul.f32 %v10003, 1.442695
        %v10035 = vpow.pop %v10034
        %10036 = vadd.xlane.f32.xlu0 %v10005
        %v10037 = vpop.xlane.xlu0 %10036
        %10038 = vadd.xlane.f32.xlu0 %v10007
        %v10039 = vpop.xlane.xlu0 %10038
        %10040 = vadd.xlane.f32.xlu0 %v10009
        %v10041 = vpop.xlane.xlu0 %10040
        %10042 = vadd.xlane.f32.xlu0 %v10011
        %v10043 = vpop.xlane.xlu0 %10042
        %10044 = vadd.xlane.f32.xlu0 %v10013
        %v10045 = vpop.xlane.xlu0 %10044
        %10046 = vadd.xlane.f32.xlu0 %v10015
        %v10047 = vpop.xlane.xlu0 %10046
        %10048 = vadd.xlane.f32.xlu0 %v10017
        %v10049 = vpop.xlane.xlu0 %10048
        %10050 = vadd.xlane.f32.xlu0 %v10019
        %v10051 = vpop.xlane.xlu0 %10050
        %10052 = vadd.xlane.f32.xlu0 %v10021
        %v10053 = vpop.xlane.xlu0 %10052
        %10054 = vadd.xlane.f32.xlu0 %v10023
        %v10055 = vpop.xlane.xlu0 %10054
        %10056 = vadd.xlane.f32.xlu0 %v10025
        %v10057 = vpop.xlane.xlu0 %10056
        %10058 = vadd.xlane.f32.xlu0 %v10027
        %v10059 = vpop.xlane.xlu0 %10058
        %10060 = vadd.xlane.f32.xlu0 %v10029
        %v10061 = vpop.xlane.xlu0 %10060
        %10062 = vadd.xlane.f32.xlu0 %v10031
        %v10063 = vpop.xlane.xlu0 %10062
        %10064 = vadd.xlane.f32.xlu0 %v10033
        %v10065 = vpop.xlane.xlu0 %10064
        %10066 = vadd.xlane.f32.xlu0 %v10035
        %v10067 = vpop.xlane.xlu0 %10066
        %v10068 = vrcp.pop %v10037
        %v10069 = vmul.f32 1.0, %v10068
        %v10070 = vrcp.pop %v10039
        %v10071 = vmul.f32 1.0, %v10070
        %v10072 = vrcp.pop %v10041
        %v10073 = vmul.f32 1.0, %v10072
        %v10074 = vrcp.pop %v10043
        %v10075 = vmul.f32 1.0, %v10074
        %v10076 = vrcp.pop %v10045
        %v10077 = vmul.f32 1.0, %v10076
        %v10078 = vrcp.pop %v10047
        %v10079 = vmul.f32 1.0, %v10078
        %v10080 = vrcp.pop %v10049
        %v10081 = vmul.f32 1.0, %v10080
        %v10082 = vrcp.pop %v10051
        %v10083 = vmul.f32 1.0, %v10082
        %v10084 = vrcp.pop %v10053
        %v10085 = vmul.f32 1.0, %v10084
        %v10086 = vrcp.pop %v10055
        %v10087 = vmul.f32 1.0, %v10086
        %v10088 = vrcp.pop %v10057
        %v10089 = vmul.f32 1.0, %v10088
        %v10090 = vrcp.pop %v10059
        %v10091 = vmul.f32 1.0, %v10090
        %v10092 = vrcp.pop %v10061
        %v10093 = vmul.f32 1.0, %v10092
        %v10094 = vrcp.pop %v10063
        %v10095 = vmul.f32 1.0, %v10094
        %v10096 = vrcp.pop %v10065
        %v10097 = vmul.f32 1.0, %v10096
        %v10098 = vrcp.pop %v10067
        %v10099 = vmul.f32 1.0, %v10098
        %v10100 = vmul.f32 %v10005, %v10069
        %v10101 = vmul.f32 %v10007, %v10071
        %v10102 = vmul.f32 %v10009, %v10073
        %v10103 = vmul.f32 %v10011, %v10075
        %v10104 = vmul.f32 %v10013, %v10077
        %v10105 = vmul.f32 %v10015, %v10079
        %v10106 = vmul.f32 %v10017, %v10081
        %v10107 = vmul.f32 %v10019, %v10083
        %v10108 = vmul.f32 %v10021, %v10085
        %v10109 = vmul.f32 %v10023, %v10087
        %v10110 = vmul.f32 %v10025, %v10089
        %v10111 = vmul.f32 %v10027, %v10091
        %v10112 = vmul.f32 %v10029, %v10093
        %v10113 = vmul.f32 %v10031, %v10095
        %v10114 = vmul.f32 %v10033, %v10097
        %v10115 = vmul.f32 %v10035, %v10099
        %v10116 = vld [vmem:[%s15 + $0x8] sm:$0xff]
        %10118 = vset.pattern.permute.xlu0 0
        %10119 = vperm.xlu0 %10118, %v10116
        %v10120 = vpop.permute.xlu0 %10119
        %10122 = vmatprep.subr.mxu0 0.0
        %10123 = vmatpush1.xpose.msra.mxu0 %v10115
        %10124 = vmatprep.subr.mxu0 0.0
        %10125 = vmatpush1.xpose.msra.mxu0 %v10114
        %10126 = vmatprep.subr.mxu0 0.0
        %10127 = vmatpush1.xpose.msra.mxu0 %v10113
        %10128 = vmatprep.subr.mxu0 0.0
        %10129 = vmatpush1.xpose.msra.mxu0 %v10112
        %10130 = vmatprep.subr.mxu0 0.0
        %10131 = vmatpush1.xpose.msra.mxu0 %v10111
        %10132 = vmatprep.subr.mxu0 0.0
        %10133 = vmatpush1.xpose.msra.mxu0 %v10110
        %10134 = vmatprep.subr.mxu0 0.0
        %10135 = vmatpush1.xpose.msra.mxu0 %v10109
        %10136 = vmatprep.subr.mxu0 0.0
        %10137 = vmatpush1.xpose.msra.mxu0 %v10108
        %10138 = vmatprep.subr.mxu0 0.0
        %10139 = vmatpush1.xpose.msra.mxu0 %v10107
        %10140 = vmatprep.subr.mxu0 0.0
        %10141 = vmatpush1.xpose.msra.mxu0 %v10106
        %10142 = vmatprep.subr.mxu0 0.0
        %10143 = vmatpush1.xpose.msra.mxu0 %v10105
        %10144 = vmatprep.subr.mxu0 0.0
        %10145 = vmatpush1.xpose.msra.mxu0 %v10104
        %10146 = vmatprep.subr.mxu0 0.0
        %10147 = vmatpush1.xpose.msra.mxu0 %v10103
        %10148 = vmatprep.subr.mxu0 0.0
        %10149 = vmatpush1.xpose.msra.mxu0 %v10102
        %10150 = vmatprep.subr.mxu0 0.0
        %10151 = vmatpush1.xpose.msra.mxu0 %v10101
        %10152 = vmatprep.subr.mxu0 0.0
        %10153 = vmatpush1.xpose.msra.mxu0 %v10100
        %10154 = vmatprep.subr.mxu0 0.0
        %10155 = vmatpush2.xpose.msra.mxu0 0.0
        %10156 = vmatprep.subr.mxu0 0.0
        %10157 = vmatpush2.xpose.msra.mxu0 0.0
        %10158 = vmatprep.subr.mxu0 0.0
        %10159 = vmatpush2.xpose.msra.mxu0 0.0
        %10160 = vmatprep.subr.mxu0 0.0
        %10161 = vmatpush2.xpose.msra.mxu0 0.0
        %10162 = vmatprep.subr.mxu0 0.0
        %10163 = vmatpush2.xpose.msra.mxu0 0.0
        %10164 = vmatprep.subr.mxu0 0.0
        %10165 = vmatpush2.xpose.msra.mxu0 0.0
        %10166 = vmatprep.subr.mxu0 0.0
        %10167 = vmatpush2.xpose.msra.mxu0 0.0
        %10168 = vmatprep.subr.mxu0 0.0
        %10169 = vmatpush2.xpose.msra.mxu0 0.0
        %10170 = vmatprep.subr.mxu0 0.0
        %10171 = vmatpush2.xpose.msra.mxu0 0.0
        %10172 = vmatprep.subr.mxu0 0.0
        %10173 = vmatpush2.xpose.msra.mxu0 0.0
        %10174 = vmatprep.subr.mxu0 0.0
        %10175 = vmatpush2.xpose.msra.mxu0 0.0
        %10176 = vmatprep.subr.mxu0 0.0
        %10177 = vmatpush2.xpose.msra.mxu0 0.0
        %10178 = vmatprep.subr.mxu0 0.0
        %10179 = vmatpush2.xpose.msra.mxu0 0.0
        %10180 = vmatprep.subr.mxu0 0.0
        %10181 = vmatpush2.xpose.msra.mxu0 0.0
        %10182 = vmatprep.subr.mxu0 0.0
        %10183 = vmatpush2.xpose.msra.mxu0 0.0
        %10184 = vmatprep.subr.mxu0 0.0
        %10185 = vmatpush2.xpose.msra.mxu0 0.0
        %10186 = vmatprep.mubr.f32.mxu0 0.0
        %10187 = vmatmul.mubr.f32.gmra.mxu0 %v5690
        %v10188 = vpop.f32.mrf.mxu0
        %v10189 = vadd.f32 %v10120, %v10188
        %v10190 = vpop.f32.mrf.mxu0
        %10191 = vdwg.mxu0
        %10192 = vst [vmem:[%s566 + $0x8] sm:$0xff] %v10189
        %s10193 = sand.u32 %s382, 1
        %s10194 = scalar_lea.sflag [#allocation4], %s10193
        %s10195 = sand.u32 %s382, 1
        %s10196 = smul.addr %s10195, 16
        %s10197 = scalar_lea.vmem [#allocation11], %s10196
        // Predicated region
        $region101: #{tpu_custom_call.1} parent=83 // pred_check
          %p10198 = pneg %p392
        $region102: #{tpu_custom_call.1} parent=83 // pred_check_branch
          %10200 = sbr.rel (%p10198) target = $region104
        $region103: #{tpu_custom_call.1} parent=83 // pred_region
          %s10202 = ssub.s32 256, 256
          %10203 = vsyncadd %s10194, %s10202
          %s10204 = smul.addr %s33, 2
          %s10205 = smul.addr %s10204, 128
          %s10206 = scalar_lea.hbm %s16, %s10205
          %s10207 = sshll.u32 %s10197, 4
          %s10208 = int_to_ptr.vmem [resolvable:$true] %s10207
          %10213 = dma.vmem_to_hbm [thread:$0]  %s10208, 256, %s10206, %s10194, 128, 128, 8
        $region104: #{tpu_custom_call.1} parent=83 // pred_fallthru
          _
      $region84: #{tpu_custom_call.1} parent=5 // pred_fallthru
        _
      %p10214 = scmp.le.s32.totalorder 2, %s28
      // Predicated region
      $region105: #{tpu_custom_call.1} parent=5 // pred_check
        %p10215 = pneg %p10214
      $region106: #{tpu_custom_call.1} parent=5 // pred_check_branch
        %10217 = sbr.rel (%p10215) target = $region108
      $region107: #{tpu_custom_call.1} parent=5 // pred_region
        %s10218 = ssub.s32 %s28, 2
        // Predicated region
        $region109: #{tpu_custom_call.1} parent=107 // pred_check
          %p10219 = pneg %p398
        $region110: #{tpu_custom_call.1} parent=107 // pred_check_branch
          %10221 = sbr.rel (%p10219) target = $region112
        $region111: #{tpu_custom_call.1} parent=107 // pred_region
          %s10222 = sand.u32 %s383, 1
          %s10223 = scalar_lea.sflag [#allocation4], %s10222
          %s10224 = sand.u32 %s383, 1
          %s10225 = smul.addr %s10224, 16
          %s10226 = scalar_lea.vmem [#allocation11], %s10225
          %10227 = dma.done %s10223, 256
        $region112: #{tpu_custom_call.1} parent=107 // pred_fallthru
          _
      $region108: #{tpu_custom_call.1} parent=5 // pred_fallthru
        _
    $region6: #{tpu_custom_call.1} parent=1 // loop_footer
      %s32 = sadd.s32 1, %s28
    $region7: #{tpu_custom_call.1} parent=1 // loop_footer_branch
      %27 = sbr.rel target = $region3
    $region8: #{tpu_custom_call.1} parent=1 // loop_exit
      _
    %10228 = vsyncpa [#allocation4], 1
    %s10229 = scalar_lea.sflag [#allocation4], 1
    %10230 = vsyncpa %s10229, 1
    %10231 = vsyncpa [#allocation5], 1
    %s10232 = scalar_lea.sflag [#allocation5], 1
    %10233 = vsyncpa %s10232, 1
    %10234 = vsyncpa [#allocation7], 1
    %10235 = vsyncpa [#allocation10], 1

</llo_original>
